<compile_context>
chip_gen: v7x
topology: tpu7x:2x2x1
jax: 0.10.0
libtpu: 0.0.40
codegen_flags: <defaults>
</compile_context>

<pallas_src>
import functools

import numpy as np
import jax
import jax.numpy as jnp
from jax.experimental import pallas as pl
from jax.experimental.pallas import tpu as pltpu

HIDDEN = 128
EMBED_NUM_POS = 6
EMBED_NUM_DIR = 6


def embed_len_3d(embed_num: int) -> int:
    return 3 + 3 * 2 * embed_num


IN_DIM = embed_len_3d(EMBED_NUM_POS) + embed_len_3d(EMBED_NUM_DIR)  # 78
IN_PAD = 128                                                        # padded feature rows
OUT_DIM = 4
OUT_PAD = 8                                                         # padded output rows

HALF_PI = float(np.pi / 2.0)


# ---------------------------------------------------------------------------
# Encoding layout tables (static, numpy).
#
# Kernel feature row r = 8*g + w  (g = group 0..15, w = 0..7):
#   w in {6,7}          -> zero padding row
#   g == 0              -> raw query component        (p0,p1,p2,d0,d1,d2)
#   g in 1..6  (f=g-1)  -> sin(component * 2**f)
#   g in 7..12 (f=g-7)  -> cos(component * 2**f) == sin(component * 2**f + pi/2)
#   g >= 13             -> zero padding row
# perm[r] maps a kernel row to the torch-ordering column of the 78-dim encoding
# so W1 can be permuted in the wrapper; valid[r]=0 marks padding rows.
# ---------------------------------------------------------------------------
def _encoding_tables():
    scale = np.zeros((IN_PAD, 1), np.float32)
    offset = np.zeros((IN_PAD, 1), np.float32)
    m_raw = np.zeros((IN_PAD, 1), np.float32)
    m_trig = np.zeros((IN_PAD, 1), np.float32)
    perm = np.zeros((IN_PAD,), np.int64)
    valid = np.zeros((IN_PAD,), np.float32)
    for r in range(IN_PAD):
        g, w = divmod(r, 8)
        if w >= 6 or g > 12:
            continue
        c = w % 3
        tbase = 39 if w >= 3 else 0     # dirs block starts at torch column 39
        if g == 0:
            m_raw[r, 0] = 1.0
            perm[r] = tbase + c
        elif g <= 6:
            f = g - 1
            scale[r, 0] = float(2.0 ** f)
            m_trig[r, 0] = 1.0
            perm[r] = tbase + 3 + 6 * f + c
        else:
            f = g - 7
            scale[r, 0] = float(2.0 ** f)
            offset[r, 0] = HALF_PI
            m_trig[r, 0] = 1.0
            perm[r] = tbase + 3 + 6 * f + 3 + c
        valid[r] = 1.0
    return scale, offset, m_raw, m_trig, perm, valid


def _sinusoidal_encoding(p, embed_num):
    # torch: freqs = 2 ** linspace(0, embed_num-1, embed_num) == [1,2,4,...]
    parts = [p]
    for i in range(embed_num):
        f = 2.0 ** i
        parts.append(jnp.sin(p * f))
        parts.append(jnp.cos(p * f))
    return jnp.concatenate(parts, axis=-1)


# ---------------------------------------------------------------------------
# Kernel: everything lane-dense, rays along lanes.
# ---------------------------------------------------------------------------
def nerf_kernel(q_ref, scale_ref, off_ref, mraw_ref, mtrig_ref,
                w1_ref, b1_ref, w2_ref, b2_ref, w3_ref, b3_ref,
                w4_ref, b4_ref, o_ref):
    q = q_ref[...]                                     # (8, tile_n) f32
    # 16 aligned sublane copies -> (128, tile_n).
    rep = jnp.concatenate([q] * 16, axis=0)            # (128, tile_n)
    # Single dense sin covers both sin and cos rows (cos(x) == sin(x + pi/2));
    # exact power-of-two scales, f32 row masks select raw vs trig rows.
    ang = rep * scale_ref[...] + off_ref[...]
    x = mraw_ref[...] * rep + mtrig_ref[...] * jnp.sin(ang)   # (128, tile_n) f32

    h = x.astype(jnp.bfloat16)
    h = jnp.dot(w1_ref[...], h, preferred_element_type=jnp.float32) + b1_ref[...]
    h = jnp.maximum(h, 0.0).astype(jnp.bfloat16)
    h = jnp.dot(w2_ref[...], h, preferred_element_type=jnp.float32) + b2_ref[...]
    h = jnp.maximum(h, 0.0).astype(jnp.bfloat16)
    h = jnp.dot(w3_ref[...], h, preferred_element_type=jnp.float32) + b3_ref[...]
    h = jnp.maximum(h, 0.0).astype(jnp.bfloat16)
    out = jnp.dot(w4_ref[...], h, preferred_element_type=jnp.float32) + b4_ref[...]
    o_ref[...] = out.astype(o_ref.dtype)               # (8, tile_n) lane-dense store


@functools.partial(jax.jit, static_argnames=("tile_n",))
def simple_nerf_forward(queries, params, *, tile_n=512):
    assert tile_n % 128 == 0, "tile_n must be a multiple of 128 (lane width)"
    N, F = queries.shape
    assert F == 6
    w1, b1, w2, b2, w3, b3, w4, b4 = params

    scale, offset, m_raw, m_trig, perm, valid = _encoding_tables()
    scale, offset, m_raw, m_trig = map(jnp.asarray, (scale, offset, m_raw, m_trig))

    # Weights in "transposed" (out, in) layout; W1 rows permuted to the kernel's
    # feature ordering and zero-padded 78 -> 128.  MXU feeds are bf16.
    w1k = (w1[perm, :] * valid[:, None]).T.astype(jnp.bfloat16)       # (128, 128)
    w2k = w2.T.astype(jnp.bfloat16)                                   # (128, 128)
    w3k = w3.T.astype(jnp.bfloat16)                                   # (128, 128)
    w4k = jnp.zeros((OUT_PAD, HIDDEN), jnp.float32).at[:OUT_DIM].set(w4.T)
    w4k = w4k.astype(jnp.bfloat16)                                    # (8, 128)
    b1k = b1.reshape(HIDDEN, 1).astype(jnp.float32)
    b2k = b2.reshape(HIDDEN, 1).astype(jnp.float32)
    b3k = b3.reshape(HIDDEN, 1).astype(jnp.float32)
    b4k = jnp.zeros((OUT_PAD, 1), jnp.float32).at[:OUT_DIM, 0].set(b4.reshape(-1))

    # Pad rays to a multiple of tile_n and transpose: rays on the lane axis.
    n_pad = pl.cdiv(N, tile_n) * tile_n
    qT = jnp.zeros((8, n_pad), jnp.float32).at[:6, :N].set(
        queries.astype(jnp.float32).T)

    grid = (n_pad // tile_n,)

    def _const_spec(arr):
        return pl.BlockSpec(arr.shape, lambda i: (0, 0))

    flops = int(n_pad) * (3 * 2 * HIDDEN * IN_PAD + 2 * OUT_PAD * HIDDEN + 8 * IN_PAD)
    transcendentals = int(n_pad) * IN_PAD            # one dense sin per block
    weight_bytes = (IN_PAD * HIDDEN * 3 + OUT_PAD * HIDDEN) * 2 \
        + (HIDDEN * 3 + OUT_PAD) * 4 + 4 * IN_PAD * 4
    bytes_accessed = int(n_pad) * (8 * 4 + OUT_PAD * 4) + weight_bytes

    out_t = pl.pallas_call(
        nerf_kernel,
        out_shape=jax.ShapeDtypeStruct((OUT_PAD, n_pad), jnp.float32),
        grid_spec=pltpu.PrefetchScalarGridSpec(
            num_scalar_prefetch=0,
            grid=grid,
            in_specs=[
                pl.BlockSpec((8, tile_n), lambda i: (0, i)),   # queries (transposed)
                _const_spec(scale), _const_spec(offset),
                _const_spec(m_raw), _const_spec(m_trig),
                _const_spec(w1k), _const_spec(b1k),
                _const_spec(w2k), _const_spec(b2k),
                _const_spec(w3k), _const_spec(b3k),
                _const_spec(w4k), _const_spec(b4k),
            ],
            out_specs=pl.BlockSpec((OUT_PAD, tile_n), lambda i: (0, i)),
        ),
        compiler_params=pltpu.CompilerParams(
            dimension_semantics=("parallel",),
            vmem_limit_bytes=32 * 1024 * 1024,
        ),
        cost_estimate=pl.CostEstimate(
            flops=flops,
            transcendentals=transcendentals,
            bytes_accessed=bytes_accessed,
        ),
    )(qT, scale, offset, m_raw, m_trig,
      w1k, b1k, w2k, b2k, w3k, b3k, w4k, b4k)

    return out_t[:OUT_DIM, :N].T                       # (N, 4)


# ---------------------------------------------------------------------------
# Params / reference
# ---------------------------------------------------------------------------
def init_params(key):
    """Deterministic init. Weights stored as (in, out); biases as (1, out)."""
    ks = jax.random.split(key, 8)

    def lin(kw, kb, din, dout):
        w = jax.random.normal(kw, (din, dout), jnp.float32) * (1.0 / jnp.sqrt(din))
        b = jax.random.normal(kb, (1, dout), jnp.float32) * 0.01
        return w, b

    w1, b1 = lin(ks[0], ks[1], IN_DIM, HIDDEN)
    w2, b2 = lin(ks[2], ks[3], HIDDEN, HIDDEN)
    w3, b3 = lin(ks[4], ks[5], HIDDEN, HIDDEN)
    w4, b4 = lin(ks[6], ks[7], HIDDEN, OUT_DIM)
    return (w1, b1, w2, b2, w3, b3, w4, b4)


def reference_forward(queries, params):
    """Pure-JAX f32 reference mirroring the PyTorch module."""
    w1, b1, w2, b2, w3, b3, w4, b4 = params
    pts, dirs = queries[..., :3], queries[..., 3:]
    x = jnp.concatenate([_sinusoidal_encoding(pts, EMBED_NUM_POS),
                         _sinusoidal_encoding(dirs, EMBED_NUM_DIR)], axis=-1)
    h = jax.nn.relu(x @ w1 + b1)
    h = jax.nn.relu(h @ w2 + b2)
    h = jax.nn.relu(h @ w3 + b3)
    return h @ w4 + b4


if __name__ == "__main__":
    key = jax.random.PRNGKey(0)
    k_q, k_p = jax.random.split(key)

    N = 2048  # number of rays / query points (4 grid steps at tile_n=512)
    queries = jax.random.uniform(k_q, (N, 6), jnp.float32, minval=-1.0, maxval=1.0)
    params = init_params(k_p)

    out = simple_nerf_forward(queries, params, tile_n=512)
    out = jax.block_until_ready(out)

    ref = reference_forward(queries, params)
    assert out.shape == (N, 4)
    # bf16 MXU feeds with f32 accumulation: tolerance loosened vs a pure-f32 run.
    err = float(jnp.max(jnp.abs(out - ref)))
    assert jnp.allclose(out, ref, atol=5e-2, rtol=5e-2), f"mismatch vs reference (max abs err {err})"

    print("KERNEL_OK")
</pallas_src>

<mosaic_0001>
module attributes {stable_mosaic.version = 11 : i64} {
  func.func @nerf_kernel(%arg0: i32, %arg1: memref<8x512xf32, #tpu.memory_space<vmem>>, %arg2: memref<128x1xf32, #tpu.memory_space<vmem>>, %arg3: memref<128x1xf32, #tpu.memory_space<vmem>>, %arg4: memref<128x1xf32, #tpu.memory_space<vmem>>, %arg5: memref<128x1xf32, #tpu.memory_space<vmem>>, %arg6: memref<128x128xbf16, #tpu.memory_space<vmem>>, %arg7: memref<128x1xf32, #tpu.memory_space<vmem>>, %arg8: memref<128x128xbf16, #tpu.memory_space<vmem>>, %arg9: memref<128x1xf32, #tpu.memory_space<vmem>>, %arg10: memref<128x128xbf16, #tpu.memory_space<vmem>>, %arg11: memref<128x1xf32, #tpu.memory_space<vmem>>, %arg12: memref<8x128xbf16, #tpu.memory_space<vmem>>, %arg13: memref<8x1xf32, #tpu.memory_space<vmem>>, %arg14: memref<8x512xf32, #tpu.memory_space<vmem>>) attributes {dimension_semantics = [#tpu.dimension_semantics<parallel>], iteration_bounds = array<i64: 4>, scalar_prefetch = 0 : i64, scratch_operands = 0 : i64, tpu.core_type = #tpu.core_type<tc>, window_params = [{transform_indices = @transform_0, window_bounds = array<i64: 8, 512>}, {pipeline_mode = #tpu.pipeline_mode<synchronous>, transform_indices = @transform_1, window_bounds = array<i64: 128, 1>}, {pipeline_mode = #tpu.pipeline_mode<synchronous>, transform_indices = @transform_2, window_bounds = array<i64: 128, 1>}, {pipeline_mode = #tpu.pipeline_mode<synchronous>, transform_indices = @transform_3, window_bounds = array<i64: 128, 1>}, {pipeline_mode = #tpu.pipeline_mode<synchronous>, transform_indices = @transform_4, window_bounds = array<i64: 128, 1>}, {pipeline_mode = #tpu.pipeline_mode<synchronous>, transform_indices = @transform_5, window_bounds = array<i64: 128, 128>}, {pipeline_mode = #tpu.pipeline_mode<synchronous>, transform_indices = @transform_6, window_bounds = array<i64: 128, 1>}, {pipeline_mode = #tpu.pipeline_mode<synchronous>, transform_indices = @transform_7, window_bounds = array<i64: 128, 128>}, {pipeline_mode = #tpu.pipeline_mode<synchronous>, transform_indices = @transform_8, window_bounds = array<i64: 128, 1>}, {pipeline_mode = #tpu.pipeline_mode<synchronous>, transform_indices = @transform_9, window_bounds = array<i64: 128, 128>}, {pipeline_mode = #tpu.pipeline_mode<synchronous>, transform_indices = @transform_10, window_bounds = array<i64: 128, 1>}, {pipeline_mode = #tpu.pipeline_mode<synchronous>, transform_indices = @transform_11, window_bounds = array<i64: 8, 128>}, {pipeline_mode = #tpu.pipeline_mode<synchronous>, transform_indices = @transform_12, window_bounds = array<i64: 8, 1>}, {transform_indices = @transform_13, window_bounds = array<i64: 8, 512>}]} {
    %c0 = arith.constant 0 : index
    %c0_0 = arith.constant 0 : index
    %0 = vector.load %arg1[%c0, %c0_0] : memref<8x512xf32, #tpu.memory_space<vmem>>, vector<8x512xf32>
    %1 = tpu.concatenate %0, %0, %0, %0, %0, %0, %0, %0, %0, %0, %0, %0, %0, %0, %0, %0 in 0 : vector<8x512xf32>, vector<8x512xf32>, vector<8x512xf32>, vector<8x512xf32>, vector<8x512xf32>, vector<8x512xf32>, vector<8x512xf32>, vector<8x512xf32>, vector<8x512xf32>, vector<8x512xf32>, vector<8x512xf32>, vector<8x512xf32>, vector<8x512xf32>, vector<8x512xf32>, vector<8x512xf32>, vector<8x512xf32> -> vector<128x512xf32>
    %c0_1 = arith.constant 0 : index
    %c0_2 = arith.constant 0 : index
    %2 = vector.load %arg2[%c0_1, %c0_2] : memref<128x1xf32, #tpu.memory_space<vmem>>, vector<128x1xf32>
    %3 = vector.broadcast %2 : vector<128x1xf32> to vector<128x512xf32>
    %4 = arith.mulf %1, %3 : vector<128x512xf32>
    %c0_3 = arith.constant 0 : index
    %c0_4 = arith.constant 0 : index
    %5 = vector.load %arg3[%c0_3, %c0_4] : memref<128x1xf32, #tpu.memory_space<vmem>>, vector<128x1xf32>
    %6 = vector.broadcast %5 : vector<128x1xf32> to vector<128x512xf32>
    %7 = arith.addf %4, %6 : vector<128x512xf32>
    %c0_5 = arith.constant 0 : index
    %c0_6 = arith.constant 0 : index
    %8 = vector.load %arg4[%c0_5, %c0_6] : memref<128x1xf32, #tpu.memory_space<vmem>>, vector<128x1xf32>
    %9 = vector.broadcast %8 : vector<128x1xf32> to vector<128x512xf32>
    %10 = arith.mulf %9, %1 : vector<128x512xf32>
    %c0_7 = arith.constant 0 : index
    %c0_8 = arith.constant 0 : index
    %11 = vector.load %arg5[%c0_7, %c0_8] : memref<128x1xf32, #tpu.memory_space<vmem>>, vector<128x1xf32>
    %12 = math.sin %7 : vector<128x512xf32>
    %13 = vector.broadcast %11 : vector<128x1xf32> to vector<128x512xf32>
    %14 = arith.mulf %13, %12 : vector<128x512xf32>
    %15 = arith.addf %10, %14 : vector<128x512xf32>
    %16 = arith.truncf %15 : vector<128x512xf32> to vector<128x512xbf16>
    %c0_9 = arith.constant 0 : index
    %c0_10 = arith.constant 0 : index
    %17 = vector.load %arg6[%c0_9, %c0_10] : memref<128x128xbf16, #tpu.memory_space<vmem>>, vector<128x128xbf16>
    %cst = arith.constant dense<0.000000e+00> : vector<128x512xf32>
    %18 = tpu.matmul %17, %16, %cst {dimension_numbers = #tpu.dot_dimension_numbers<[1], [0], [0], [1], [0, 0, 1, 1], [], []>} : vector<128x128xbf16>, vector<128x512xbf16>, vector<128x512xf32> -> vector<128x512xf32>
    %c0_11 = arith.constant 0 : index
    %c0_12 = arith.constant 0 : index
    %19 = vector.load %arg7[%c0_11, %c0_12] : memref<128x1xf32, #tpu.memory_space<vmem>>, vector<128x1xf32>
    %20 = vector.broadcast %19 : vector<128x1xf32> to vector<128x512xf32>
    %21 = arith.addf %18, %20 : vector<128x512xf32>
    %cst_13 = arith.constant 0.000000e+00 : f32
    %22 = vector.broadcast %cst_13 : f32 to vector<128x512xf32>
    %23 = arith.maximumf %21, %22 : vector<128x512xf32>
    %24 = arith.truncf %23 : vector<128x512xf32> to vector<128x512xbf16>
    %c0_14 = arith.constant 0 : index
    %c0_15 = arith.constant 0 : index
    %25 = vector.load %arg8[%c0_14, %c0_15] : memref<128x128xbf16, #tpu.memory_space<vmem>>, vector<128x128xbf16>
    %cst_16 = arith.constant dense<0.000000e+00> : vector<128x512xf32>
    %26 = tpu.matmul %25, %24, %cst_16 {dimension_numbers = #tpu.dot_dimension_numbers<[1], [0], [0], [1], [0, 0, 1, 1], [], []>} : vector<128x128xbf16>, vector<128x512xbf16>, vector<128x512xf32> -> vector<128x512xf32>
    %c0_17 = arith.constant 0 : index
    %c0_18 = arith.constant 0 : index
    %27 = vector.load %arg9[%c0_17, %c0_18] : memref<128x1xf32, #tpu.memory_space<vmem>>, vector<128x1xf32>
    %28 = vector.broadcast %27 : vector<128x1xf32> to vector<128x512xf32>
    %29 = arith.addf %26, %28 : vector<128x512xf32>
    %cst_19 = arith.constant 0.000000e+00 : f32
    %30 = vector.broadcast %cst_19 : f32 to vector<128x512xf32>
    %31 = arith.maximumf %29, %30 : vector<128x512xf32>
    %32 = arith.truncf %31 : vector<128x512xf32> to vector<128x512xbf16>
    %c0_20 = arith.constant 0 : index
    %c0_21 = arith.constant 0 : index
    %33 = vector.load %arg10[%c0_20, %c0_21] : memref<128x128xbf16, #tpu.memory_space<vmem>>, vector<128x128xbf16>
    %cst_22 = arith.constant dense<0.000000e+00> : vector<128x512xf32>
    %34 = tpu.matmul %33, %32, %cst_22 {dimension_numbers = #tpu.dot_dimension_numbers<[1], [0], [0], [1], [0, 0, 1, 1], [], []>} : vector<128x128xbf16>, vector<128x512xbf16>, vector<128x512xf32> -> vector<128x512xf32>
    %c0_23 = arith.constant 0 : index
    %c0_24 = arith.constant 0 : index
    %35 = vector.load %arg11[%c0_23, %c0_24] : memref<128x1xf32, #tpu.memory_space<vmem>>, vector<128x1xf32>
    %36 = vector.broadcast %35 : vector<128x1xf32> to vector<128x512xf32>
    %37 = arith.addf %34, %36 : vector<128x512xf32>
    %cst_25 = arith.constant 0.000000e+00 : f32
    %38 = vector.broadcast %cst_25 : f32 to vector<128x512xf32>
    %39 = arith.maximumf %37, %38 : vector<128x512xf32>
    %40 = arith.truncf %39 : vector<128x512xf32> to vector<128x512xbf16>
    %c0_26 = arith.constant 0 : index
    %c0_27 = arith.constant 0 : index
    %41 = vector.load %arg12[%c0_26, %c0_27] : memref<8x128xbf16, #tpu.memory_space<vmem>>, vector<8x128xbf16>
    %cst_28 = arith.constant dense<0.000000e+00> : vector<8x512xf32>
    %42 = tpu.matmul %41, %40, %cst_28 {dimension_numbers = #tpu.dot_dimension_numbers<[1], [0], [0], [1], [0, 0, 1, 1], [], []>} : vector<8x128xbf16>, vector<128x512xbf16>, vector<8x512xf32> -> vector<8x512xf32>
    %c0_29 = arith.constant 0 : index
    %c0_30 = arith.constant 0 : index
    %43 = vector.load %arg13[%c0_29, %c0_30] : memref<8x1xf32, #tpu.memory_space<vmem>>, vector<8x1xf32>
    %44 = vector.broadcast %43 : vector<8x1xf32> to vector<8x512xf32>
    %45 = arith.addf %42, %44 : vector<8x512xf32>
    %c0_31 = arith.constant 0 : index
    %c0_32 = arith.constant 0 : index
    %46 = vector.load %arg14[%c0_31, %c0_32] : memref<8x512xf32, #tpu.memory_space<vmem>>, vector<8x512xf32>
    tpu.vector_store %arg14[%c0_31, %c0_32], %45 {strides = array<i32>} : memref<8x512xf32, #tpu.memory_space<vmem>>, vector<8x512xf32>,
    return
  }
  func.func @transform_0(%arg0: i32) -> (i32, i32) {
    %c0_i32 = arith.constant 0 : i32
    %c0_i32_0 = arith.constant 0 : i32
    return %c0_i32, %arg0 : i32, i32
  }
  func.func @transform_1(%arg0: i32) -> (i32, i32) {
    %c0_i32 = arith.constant 0 : i32
    %c0_i32_0 = arith.constant 0 : i32
    %c0_i32_1 = arith.constant 0 : i32
    return %c0_i32, %c0_i32_0 : i32, i32
  }
  func.func @transform_2(%arg0: i32) -> (i32, i32) {
    %c0_i32 = arith.constant 0 : i32
    %c0_i32_0 = arith.constant 0 : i32
    %c0_i32_1 = arith.constant 0 : i32
    return %c0_i32, %c0_i32_0 : i32, i32
  }
  func.func @transform_3(%arg0: i32) -> (i32, i32) {
    %c0_i32 = arith.constant 0 : i32
    %c0_i32_0 = arith.constant 0 : i32
    %c0_i32_1 = arith.constant 0 : i32
    return %c0_i32, %c0_i32_0 : i32, i32
  }
  func.func @transform_4(%arg0: i32) -> (i32, i32) {
    %c0_i32 = arith.constant 0 : i32
    %c0_i32_0 = arith.constant 0 : i32
    %c0_i32_1 = arith.constant 0 : i32
    return %c0_i32, %c0_i32_0 : i32, i32
  }
  func.func @transform_5(%arg0: i32) -> (i32, i32) {
    %c0_i32 = arith.constant 0 : i32
    %c0_i32_0 = arith.constant 0 : i32
    %c0_i32_1 = arith.constant 0 : i32
    return %c0_i32, %c0_i32_0 : i32, i32
  }
  func.func @transform_6(%arg0: i32) -> (i32, i32) {
    %c0_i32 = arith.constant 0 : i32
    %c0_i32_0 = arith.constant 0 : i32
    %c0_i32_1 = arith.constant 0 : i32
    return %c0_i32, %c0_i32_0 : i32, i32
  }
  func.func @transform_7(%arg0: i32) -> (i32, i32) {
    %c0_i32 = arith.constant 0 : i32
    %c0_i32_0 = arith.constant 0 : i32
    %c0_i32_1 = arith.constant 0 : i32
    return %c0_i32, %c0_i32_0 : i32, i32
  }
  func.func @transform_8(%arg0: i32) -> (i32, i32) {
    %c0_i32 = arith.constant 0 : i32
    %c0_i32_0 = arith.constant 0 : i32
    %c0_i32_1 = arith.constant 0 : i32
    return %c0_i32, %c0_i32_0 : i32, i32
  }
  func.func @transform_9(%arg0: i32) -> (i32, i32) {
    %c0_i32 = arith.constant 0 : i32
    %c0_i32_0 = arith.constant 0 : i32
    %c0_i32_1 = arith.constant 0 : i32
    return %c0_i32, %c0_i32_0 : i32, i32
  }
  func.func @transform_10(%arg0: i32) -> (i32, i32) {
    %c0_i32 = arith.constant 0 : i32
    %c0_i32_0 = arith.constant 0 : i32
    %c0_i32_1 = arith.constant 0 : i32
    return %c0_i32, %c0_i32_0 : i32, i32
  }
  func.func @transform_11(%arg0: i32) -> (i32, i32) {
    %c0_i32 = arith.constant 0 : i32
    %c0_i32_0 = arith.constant 0 : i32
    %c0_i32_1 = arith.constant 0 : i32
    return %c0_i32, %c0_i32_0 : i32, i32
  }
  func.func @transform_12(%arg0: i32) -> (i32, i32) {
    %c0_i32 = arith.constant 0 : i32
    %c0_i32_0 = arith.constant 0 : i32
    %c0_i32_1 = arith.constant 0 : i32
    return %c0_i32, %c0_i32_0 : i32, i32
  }
  func.func @transform_13(%arg0: i32) -> (i32, i32) {
    %c0_i32 = arith.constant 0 : i32
    %c0_i32_0 = arith.constant 0 : i32
    return %c0_i32, %arg0 : i32, i32
  }
}

</mosaic_0001>

<llo_original>
// kernel: simple_nerf_forward.1
$region0: #{simple_nerf_forward.1}
  #allocation0 [shape = 'u32[]', space=smem, size = 0x4, offset = 0x4, fixed_abs, tag = 'smem constant byte address 0x4 - core index']
  #allocation1 [shape = 'u32[144,128]{1,0:T(1,128)}', space=vmem, size = 0x12000, scoped, tag = 'internal scratch']
  %s0 = inlined_call_operand.vmem [shape: f32[8,2048], index: 0, kind: input, shape index: {}]
  %s1 = inlined_call_operand.vmem [shape: f32[128,1], index: 1, kind: input, shape index: {}]
  %s2 = inlined_call_operand.vmem [shape: f32[128,1], index: 2, kind: input, shape index: {}]
  %s3 = inlined_call_operand.vmem [shape: f32[128,1], index: 3, kind: input, shape index: {}]
  %s4 = inlined_call_operand.vmem [shape: f32[128,1], index: 4, kind: input, shape index: {}]
  %s5 = inlined_call_operand.vmem [shape: bf16[128,128], index: 5, kind: input, shape index: {}]
  %s6 = inlined_call_operand.vmem [shape: f32[128,1], index: 6, kind: input, shape index: {}]
  %s7 = inlined_call_operand.vmem [shape: bf16[128,128], index: 7, kind: input, shape index: {}]
  %s8 = inlined_call_operand.vmem [shape: f32[128,1], index: 8, kind: input, shape index: {}]
  %s9 = inlined_call_operand.vmem [shape: bf16[128,128], index: 9, kind: input, shape index: {}]
  %s10 = inlined_call_operand.vmem [shape: f32[128,1], index: 10, kind: input, shape index: {}]
  %s11 = inlined_call_operand.vmem [shape: bf16[8,128], index: 11, kind: input, shape index: {}]
  %s12 = inlined_call_operand.vmem [shape: f32[8,1], index: 12, kind: input, shape index: {}]
  %s13 = inlined_call_operand.vmem [shape: f32[8,2048], index: 13, kind: output, shape index: {}]
  %s14 = sld [smem:[#allocation0]]
  $region85: #{simple_nerf_forward.1} parent=0
    _
  %s16 = ssub.s32 1, %s14
  %s17 = scalar_select 0, %s16, %s14
  loop: start=0, step=1, limit=6
  $region2: #{simple_nerf_forward.1} parent=0 // loop_pre_header
    _
  $region3: #{simple_nerf_forward.1} parent=0 // loop_header
    %s19 = sphi 0, %s23
    %p20 = scmp.ge.s32.totalorder %s19, 6
    %s29 = sphi 0, %s31
    %s32 = sphi 0, %s29
    %s33 = sphi 0, %s32
    %s49 = sphi 0, %s33
    %s53 = sphi 0, %s53
    %s55 = sphi 0, %s53
    %s56 = sphi 0, %s55
    %s70 = sphi 0, %s56
    %s74 = sphi 0, %s74
    %s76 = sphi 0, %s74
    %s77 = sphi 0, %s76
    %s91 = sphi 0, %s77
    %s95 = sphi 0, %s95
    %s97 = sphi 0, %s95
    %s98 = sphi 0, %s97
    %s112 = sphi 0, %s98
    %s116 = sphi 0, %s116
    %s118 = sphi 0, %s116
    %s119 = sphi 0, %s118
    %s133 = sphi 0, %s119
    %s137 = sphi 0, %s137
    %s139 = sphi 0, %s137
    %s140 = sphi 0, %s139
    %s154 = sphi 0, %s140
    %s158 = sphi 0, %s158
    %s160 = sphi 0, %s158
    %s161 = sphi 0, %s160
    %s175 = sphi 0, %s161
    %s179 = sphi 0, %s179
    %s181 = sphi 0, %s179
    %s182 = sphi 0, %s181
    %s196 = sphi 0, %s182
    %s200 = sphi 0, %s200
    %s202 = sphi 0, %s200
    %s203 = sphi 0, %s202
    %s217 = sphi 0, %s203
    %s221 = sphi 0, %s221
    %s223 = sphi 0, %s221
    %s224 = sphi 0, %s223
    %s238 = sphi 0, %s224
    %s242 = sphi 0, %s242
    %s244 = sphi 0, %s242
    %s245 = sphi 0, %s244
    %s259 = sphi 0, %s245
    %s263 = sphi 0, %s263
    %s265 = sphi 0, %s263
    %s266 = sphi 0, %s265
    %s280 = sphi 0, %s266
    %s284 = sphi 0, %s284
    %s286 = sphi 0, %s284
    %s287 = sphi 0, %s286
    %s301 = sphi 0, %s287
    %s307 = sphi 0, %s309
    %s310 = sphi 0, %s307
    %s311 = sphi 0, %s310
    %s327 = sphi 0, %s311
  $region4: #{simple_nerf_forward.1} parent=0 // loop_header_branch
    %22 = sbr.rel (%p20) target = $region8
  $region5: #{simple_nerf_forward.1} parent=0 // loop_body
    %s24 = ssub.s32 %s19, 1
    %s25 = ssub.s32 %s19, 2
    %s26 = sadd.s32 %s19, 1
    %s27 = ssub.s32 %s19, %s26
    %p28 = scmp.eq.s32.totalorder %s27, 0
    %s30 = sadd.s32 %s29, 1
    %s31 = scalar_select %p28, %s29, %s30
    %p34 = pneg %p28
    %p35 = scmp.eq.s32.totalorder %s19, 3
    %p36 = por %p34, %p35
    %p37 = scmp.ne.s32.totalorder %s29, %s32
    %p38 = scmp.eq.s32.totalorder %s19, 0
    %p39 = por %p37, %p38
    %p40 = scmp.ne.s32.totalorder %s29, %s32
    %p41 = scmp.eq.s32.totalorder %s24, 3
    %p42 = por %p40, %p41
    %p43 = scmp.ne.s32.totalorder %s32, %s33
    %p44 = scmp.eq.s32.totalorder %s24, 0
    %p45 = por %p43, %p44
    %p46 = scmp.ne.s32.totalorder %s32, %s33
    %p47 = scmp.eq.s32.totalorder %s25, 3
    %p48 = por %p46, %p47
    %p50 = scmp.ne.s32.totalorder %s33, %s49
    %p51 = scmp.eq.s32.totalorder %s25, 0
    %p52 = por %p50, %p51
    %s54 = sadd.s32 %s53, 1
    %p57 = scmp.eq.s32.totalorder %s19, 3
    %p58 = scmp.ne.s32.totalorder %s53, %s55
    %p59 = scmp.eq.s32.totalorder %s19, 0
    %p60 = por %p58, %p59
    %p61 = scmp.ne.s32.totalorder %s53, %s55
    %p62 = scmp.eq.s32.totalorder %s24, 3
    %p63 = por %p61, %p62
    %p64 = scmp.ne.s32.totalorder %s55, %s56
    %p65 = scmp.eq.s32.totalorder %s24, 0
    %p66 = por %p64, %p65
    %p67 = scmp.ne.s32.totalorder %s55, %s56
    %p68 = scmp.eq.s32.totalorder %s25, 3
    %p69 = por %p67, %p68
    %p71 = scmp.ne.s32.totalorder %s56, %s70
    %p72 = scmp.eq.s32.totalorder %s25, 0
    %p73 = por %p71, %p72
    %s75 = sadd.s32 %s74, 1
    %p78 = scmp.eq.s32.totalorder %s19, 3
    %p79 = scmp.ne.s32.totalorder %s74, %s76
    %p80 = scmp.eq.s32.totalorder %s19, 0
    %p81 = por %p79, %p80
    %p82 = scmp.ne.s32.totalorder %s74, %s76
    %p83 = scmp.eq.s32.totalorder %s24, 3
    %p84 = por %p82, %p83
    %p85 = scmp.ne.s32.totalorder %s76, %s77
    %p86 = scmp.eq.s32.totalorder %s24, 0
    %p87 = por %p85, %p86
    %p88 = scmp.ne.s32.totalorder %s76, %s77
    %p89 = scmp.eq.s32.totalorder %s25, 3
    %p90 = por %p88, %p89
    %p92 = scmp.ne.s32.totalorder %s77, %s91
    %p93 = scmp.eq.s32.totalorder %s25, 0
    %p94 = por %p92, %p93
    %s96 = sadd.s32 %s95, 1
    %p99 = scmp.eq.s32.totalorder %s19, 3
    %p100 = scmp.ne.s32.totalorder %s95, %s97
    %p101 = scmp.eq.s32.totalorder %s19, 0
    %p102 = por %p100, %p101
    %p103 = scmp.ne.s32.totalorder %s95, %s97
    %p104 = scmp.eq.s32.totalorder %s24, 3
    %p105 = por %p103, %p104
    %p106 = scmp.ne.s32.totalorder %s97, %s98
    %p107 = scmp.eq.s32.totalorder %s24, 0
    %p108 = por %p106, %p107
    %p109 = scmp.ne.s32.totalorder %s97, %s98
    %p110 = scmp.eq.s32.totalorder %s25, 3
    %p111 = por %p109, %p110
    %p113 = scmp.ne.s32.totalorder %s98, %s112
    %p114 = scmp.eq.s32.totalorder %s25, 0
    %p115 = por %p113, %p114
    %s117 = sadd.s32 %s116, 1
    %p120 = scmp.eq.s32.totalorder %s19, 3
    %p121 = scmp.ne.s32.totalorder %s116, %s118
    %p122 = scmp.eq.s32.totalorder %s19, 0
    %p123 = por %p121, %p122
    %p124 = scmp.ne.s32.totalorder %s116, %s118
    %p125 = scmp.eq.s32.totalorder %s24, 3
    %p126 = por %p124, %p125
    %p127 = scmp.ne.s32.totalorder %s118, %s119
    %p128 = scmp.eq.s32.totalorder %s24, 0
    %p129 = por %p127, %p128
    %p130 = scmp.ne.s32.totalorder %s118, %s119
    %p131 = scmp.eq.s32.totalorder %s25, 3
    %p132 = por %p130, %p131
    %p134 = scmp.ne.s32.totalorder %s119, %s133
    %p135 = scmp.eq.s32.totalorder %s25, 0
    %p136 = por %p134, %p135
    %s138 = sadd.s32 %s137, 1
    %p141 = scmp.eq.s32.totalorder %s19, 3
    %p142 = scmp.ne.s32.totalorder %s137, %s139
    %p143 = scmp.eq.s32.totalorder %s19, 0
    %p144 = por %p142, %p143
    %p145 = scmp.ne.s32.totalorder %s137, %s139
    %p146 = scmp.eq.s32.totalorder %s24, 3
    %p147 = por %p145, %p146
    %p148 = scmp.ne.s32.totalorder %s139, %s140
    %p149 = scmp.eq.s32.totalorder %s24, 0
    %p150 = por %p148, %p149
    %p151 = scmp.ne.s32.totalorder %s139, %s140
    %p152 = scmp.eq.s32.totalorder %s25, 3
    %p153 = por %p151, %p152
    %p155 = scmp.ne.s32.totalorder %s140, %s154
    %p156 = scmp.eq.s32.totalorder %s25, 0
    %p157 = por %p155, %p156
    %s159 = sadd.s32 %s158, 1
    %p162 = scmp.eq.s32.totalorder %s19, 3
    %p163 = scmp.ne.s32.totalorder %s158, %s160
    %p164 = scmp.eq.s32.totalorder %s19, 0
    %p165 = por %p163, %p164
    %p166 = scmp.ne.s32.totalorder %s158, %s160
    %p167 = scmp.eq.s32.totalorder %s24, 3
    %p168 = por %p166, %p167
    %p169 = scmp.ne.s32.totalorder %s160, %s161
    %p170 = scmp.eq.s32.totalorder %s24, 0
    %p171 = por %p169, %p170
    %p172 = scmp.ne.s32.totalorder %s160, %s161
    %p173 = scmp.eq.s32.totalorder %s25, 3
    %p174 = por %p172, %p173
    %p176 = scmp.ne.s32.totalorder %s161, %s175
    %p177 = scmp.eq.s32.totalorder %s25, 0
    %p178 = por %p176, %p177
    %s180 = sadd.s32 %s179, 1
    %p183 = scmp.eq.s32.totalorder %s19, 3
    %p184 = scmp.ne.s32.totalorder %s179, %s181
    %p185 = scmp.eq.s32.totalorder %s19, 0
    %p186 = por %p184, %p185
    %p187 = scmp.ne.s32.totalorder %s179, %s181
    %p188 = scmp.eq.s32.totalorder %s24, 3
    %p189 = por %p187, %p188
    %p190 = scmp.ne.s32.totalorder %s181, %s182
    %p191 = scmp.eq.s32.totalorder %s24, 0
    %p192 = por %p190, %p191
    %p193 = scmp.ne.s32.totalorder %s181, %s182
    %p194 = scmp.eq.s32.totalorder %s25, 3
    %p195 = por %p193, %p194
    %p197 = scmp.ne.s32.totalorder %s182, %s196
    %p198 = scmp.eq.s32.totalorder %s25, 0
    %p199 = por %p197, %p198
    %s201 = sadd.s32 %s200, 1
    %p204 = scmp.eq.s32.totalorder %s19, 3
    %p205 = scmp.ne.s32.totalorder %s200, %s202
    %p206 = scmp.eq.s32.totalorder %s19, 0
    %p207 = por %p205, %p206
    %p208 = scmp.ne.s32.totalorder %s200, %s202
    %p209 = scmp.eq.s32.totalorder %s24, 3
    %p210 = por %p208, %p209
    %p211 = scmp.ne.s32.totalorder %s202, %s203
    %p212 = scmp.eq.s32.totalorder %s24, 0
    %p213 = por %p211, %p212
    %p214 = scmp.ne.s32.totalorder %s202, %s203
    %p215 = scmp.eq.s32.totalorder %s25, 3
    %p216 = por %p214, %p215
    %p218 = scmp.ne.s32.totalorder %s203, %s217
    %p219 = scmp.eq.s32.totalorder %s25, 0
    %p220 = por %p218, %p219
    %s222 = sadd.s32 %s221, 1
    %p225 = scmp.eq.s32.totalorder %s19, 3
    %p226 = scmp.ne.s32.totalorder %s221, %s223
    %p227 = scmp.eq.s32.totalorder %s19, 0
    %p228 = por %p226, %p227
    %p229 = scmp.ne.s32.totalorder %s221, %s223
    %p230 = scmp.eq.s32.totalorder %s24, 3
    %p231 = por %p229, %p230
    %p232 = scmp.ne.s32.totalorder %s223, %s224
    %p233 = scmp.eq.s32.totalorder %s24, 0
    %p234 = por %p232, %p233
    %p235 = scmp.ne.s32.totalorder %s223, %s224
    %p236 = scmp.eq.s32.totalorder %s25, 3
    %p237 = por %p235, %p236
    %p239 = scmp.ne.s32.totalorder %s224, %s238
    %p240 = scmp.eq.s32.totalorder %s25, 0
    %p241 = por %p239, %p240
    %s243 = sadd.s32 %s242, 1
    %p246 = scmp.eq.s32.totalorder %s19, 3
    %p247 = scmp.ne.s32.totalorder %s242, %s244
    %p248 = scmp.eq.s32.totalorder %s19, 0
    %p249 = por %p247, %p248
    %p250 = scmp.ne.s32.totalorder %s242, %s244
    %p251 = scmp.eq.s32.totalorder %s24, 3
    %p252 = por %p250, %p251
    %p253 = scmp.ne.s32.totalorder %s244, %s245
    %p254 = scmp.eq.s32.totalorder %s24, 0
    %p255 = por %p253, %p254
    %p256 = scmp.ne.s32.totalorder %s244, %s245
    %p257 = scmp.eq.s32.totalorder %s25, 3
    %p258 = por %p256, %p257
    %p260 = scmp.ne.s32.totalorder %s245, %s259
    %p261 = scmp.eq.s32.totalorder %s25, 0
    %p262 = por %p260, %p261
    %s264 = sadd.s32 %s263, 1
    %p267 = scmp.eq.s32.totalorder %s19, 3
    %p268 = scmp.ne.s32.totalorder %s263, %s265
    %p269 = scmp.eq.s32.totalorder %s19, 0
    %p270 = por %p268, %p269
    %p271 = scmp.ne.s32.totalorder %s263, %s265
    %p272 = scmp.eq.s32.totalorder %s24, 3
    %p273 = por %p271, %p272
    %p274 = scmp.ne.s32.totalorder %s265, %s266
    %p275 = scmp.eq.s32.totalorder %s24, 0
    %p276 = por %p274, %p275
    %p277 = scmp.ne.s32.totalorder %s265, %s266
    %p278 = scmp.eq.s32.totalorder %s25, 3
    %p279 = por %p277, %p278
    %p281 = scmp.ne.s32.totalorder %s266, %s280
    %p282 = scmp.eq.s32.totalorder %s25, 0
    %p283 = por %p281, %p282
    %s285 = sadd.s32 %s284, 1
    %p288 = scmp.eq.s32.totalorder %s19, 3
    %p289 = scmp.ne.s32.totalorder %s284, %s286
    %p290 = scmp.eq.s32.totalorder %s19, 0
    %p291 = por %p289, %p290
    %p292 = scmp.ne.s32.totalorder %s284, %s286
    %p293 = scmp.eq.s32.totalorder %s24, 3
    %p294 = por %p292, %p293
    %p295 = scmp.ne.s32.totalorder %s286, %s287
    %p296 = scmp.eq.s32.totalorder %s24, 0
    %p297 = por %p295, %p296
    %p298 = scmp.ne.s32.totalorder %s286, %s287
    %p299 = scmp.eq.s32.totalorder %s25, 3
    %p300 = por %p298, %p299
    %p302 = scmp.ne.s32.totalorder %s287, %s301
    %p303 = scmp.eq.s32.totalorder %s25, 0
    %p304 = por %p302, %p303
    %s305 = ssub.s32 %s19, %s26
    %p306 = scmp.eq.s32.totalorder %s305, 0
    %s308 = sadd.s32 %s307, 1
    %s309 = scalar_select %p306, %s307, %s308
    %p312 = pneg %p306
    %p313 = scmp.eq.s32.totalorder %s19, 3
    %p314 = por %p312, %p313
    %p315 = scmp.ne.s32.totalorder %s307, %s310
    %p316 = scmp.eq.s32.totalorder %s19, 0
    %p317 = por %p315, %p316
    %p318 = scmp.ne.s32.totalorder %s307, %s310
    %p319 = scmp.eq.s32.totalorder %s24, 3
    %p320 = por %p318, %p319
    %p321 = scmp.ne.s32.totalorder %s310, %s311
    %p322 = scmp.eq.s32.totalorder %s24, 0
    %p323 = por %p321, %p322
    %p324 = scmp.ne.s32.totalorder %s310, %s311
    %p325 = scmp.eq.s32.totalorder %s25, 3
    %p326 = por %p324, %p325
    %p328 = scmp.ne.s32.totalorder %s311, %s327
    %p329 = scmp.eq.s32.totalorder %s25, 0
    %p330 = por %p328, %p329
    %p331 = scmp.le.s32.totalorder 1, %s19
    %p332 = scmp.lt.s32.totalorder %s19, 5
    %p333 = pnand %p331, %p332
    %p334 = pneg %p333
    // Predicated region
    $region9: #{simple_nerf_forward.1} parent=5 // pred_check
      _
    $region10: #{simple_nerf_forward.1} parent=5 // pred_check_branch
      %336 = sbr.rel (%p333) target = $region12
    $region11: #{simple_nerf_forward.1} parent=5 // pred_region
      %s337 = ssub.s32 %s19, 1
      // Predicated region
      $region13: #{simple_nerf_forward.1} parent=11 // pred_check
        %p338 = pneg %p66
      $region14: #{simple_nerf_forward.1} parent=11 // pred_check_branch
        %340 = sbr.rel (%p338) target = $region16
      $region15: #{simple_nerf_forward.1} parent=11 // pred_region
        _
      $region16: #{simple_nerf_forward.1} parent=11 // pred_fallthru
        _
      // Predicated region
      $region17: #{simple_nerf_forward.1} parent=11 // pred_check
        %p341 = pneg %p87
      $region18: #{simple_nerf_forward.1} parent=11 // pred_check_branch
        %343 = sbr.rel (%p341) target = $region20
      $region19: #{simple_nerf_forward.1} parent=11 // pred_region
        _
      $region20: #{simple_nerf_forward.1} parent=11 // pred_fallthru
        _
      // Predicated region
      $region21: #{simple_nerf_forward.1} parent=11 // pred_check
        %p344 = pneg %p108
      $region22: #{simple_nerf_forward.1} parent=11 // pred_check_branch
        %346 = sbr.rel (%p344) target = $region24
      $region23: #{simple_nerf_forward.1} parent=11 // pred_region
        _
      $region24: #{simple_nerf_forward.1} parent=11 // pred_fallthru
        _
      // Predicated region
      $region25: #{simple_nerf_forward.1} parent=11 // pred_check
        %p347 = pneg %p129
      $region26: #{simple_nerf_forward.1} parent=11 // pred_check_branch
        %349 = sbr.rel (%p347) target = $region28
      $region27: #{simple_nerf_forward.1} parent=11 // pred_region
        _
      $region28: #{simple_nerf_forward.1} parent=11 // pred_fallthru
        _
      // Predicated region
      $region29: #{simple_nerf_forward.1} parent=11 // pred_check
        %p350 = pneg %p150
      $region30: #{simple_nerf_forward.1} parent=11 // pred_check_branch
        %352 = sbr.rel (%p350) target = $region32
      $region31: #{simple_nerf_forward.1} parent=11 // pred_region
        _
      $region32: #{simple_nerf_forward.1} parent=11 // pred_fallthru
        _
      // Predicated region
      $region33: #{simple_nerf_forward.1} parent=11 // pred_check
        %p353 = pneg %p171
      $region34: #{simple_nerf_forward.1} parent=11 // pred_check_branch
        %355 = sbr.rel (%p353) target = $region36
      $region35: #{simple_nerf_forward.1} parent=11 // pred_region
        _
      $region36: #{simple_nerf_forward.1} parent=11 // pred_fallthru
        _
      // Predicated region
      $region37: #{simple_nerf_forward.1} parent=11 // pred_check
        %p356 = pneg %p192
      $region38: #{simple_nerf_forward.1} parent=11 // pred_check_branch
        %358 = sbr.rel (%p356) target = $region40
      $region39: #{simple_nerf_forward.1} parent=11 // pred_region
        _
      $region40: #{simple_nerf_forward.1} parent=11 // pred_fallthru
        _
      // Predicated region
      $region41: #{simple_nerf_forward.1} parent=11 // pred_check
        %p359 = pneg %p213
      $region42: #{simple_nerf_forward.1} parent=11 // pred_check_branch
        %361 = sbr.rel (%p359) target = $region44
      $region43: #{simple_nerf_forward.1} parent=11 // pred_region
        _
      $region44: #{simple_nerf_forward.1} parent=11 // pred_fallthru
        _
      // Predicated region
      $region45: #{simple_nerf_forward.1} parent=11 // pred_check
        %p362 = pneg %p234
      $region46: #{simple_nerf_forward.1} parent=11 // pred_check_branch
        %364 = sbr.rel (%p362) target = $region48
      $region47: #{simple_nerf_forward.1} parent=11 // pred_region
        _
      $region48: #{simple_nerf_forward.1} parent=11 // pred_fallthru
        _
      // Predicated region
      $region49: #{simple_nerf_forward.1} parent=11 // pred_check
        %p365 = pneg %p255
      $region50: #{simple_nerf_forward.1} parent=11 // pred_check_branch
        %367 = sbr.rel (%p365) target = $region52
      $region51: #{simple_nerf_forward.1} parent=11 // pred_region
        _
      $region52: #{simple_nerf_forward.1} parent=11 // pred_fallthru
        _
      // Predicated region
      $region53: #{simple_nerf_forward.1} parent=11 // pred_check
        %p368 = pneg %p276
      $region54: #{simple_nerf_forward.1} parent=11 // pred_check_branch
        %370 = sbr.rel (%p368) target = $region56
      $region55: #{simple_nerf_forward.1} parent=11 // pred_region
        _
      $region56: #{simple_nerf_forward.1} parent=11 // pred_fallthru
        _
      // Predicated region
      $region57: #{simple_nerf_forward.1} parent=11 // pred_check
        %p371 = pneg %p297
      $region58: #{simple_nerf_forward.1} parent=11 // pred_check_branch
        %373 = sbr.rel (%p371) target = $region60
      $region59: #{simple_nerf_forward.1} parent=11 // pred_region
        _
      $region60: #{simple_nerf_forward.1} parent=11 // pred_fallthru
        _
    $region12: #{simple_nerf_forward.1} parent=5 // pred_fallthru
      _
    %p374 = scmp.lt.s32.totalorder %s19, 4
    // Predicated region
    $region61: #{simple_nerf_forward.1} parent=5 // pred_check
      %p375 = pneg %p374
    $region62: #{simple_nerf_forward.1} parent=5 // pred_check_branch
      %377 = sbr.rel (%p375) target = $region64
    $region63: #{simple_nerf_forward.1} parent=5 // pred_region
      // Predicated region
      $region65: #{simple_nerf_forward.1} parent=63 // pred_check
        %p378 = pneg %p39
      $region66: #{simple_nerf_forward.1} parent=63 // pred_check_branch
        %380 = sbr.rel (%p378) target = $region68
      $region67: #{simple_nerf_forward.1} parent=63 // pred_region
        %s381 = smul.u32 4, %s19
        %p382 = scmp.lt.s32.totalorder %s381, 15
        %s383 = scalar_select %p382, %s381, 15
        %s384 = smul.addr %s383, 8
        %s385 = scalar_lea.vmem %s0, %s384
        %s386 = smul.u32 4, %s19
      $region68: #{simple_nerf_forward.1} parent=63 // pred_fallthru
        _
    $region64: #{simple_nerf_forward.1} parent=5 // pred_fallthru
      _
    %p387 = scmp.le.s32.totalorder 1, %s19
    %p388 = scmp.lt.s32.totalorder %s19, 5
    %p389 = pnand %p387, %p388
    %p390 = pneg %p389
    // Predicated region
    $region69: #{simple_nerf_forward.1} parent=5 // pred_check
      _
    $region70: #{simple_nerf_forward.1} parent=5 // pred_check_branch
      %392 = sbr.rel (%p389) target = $region72
    $region71: #{simple_nerf_forward.1} parent=5 // pred_region
      %s393 = ssub.s32 %s19, 1
      %s394 = smul.u32 4, %s24
      %p395 = scmp.lt.s32.totalorder %s394, 15
      %s396 = scalar_select %p395, %s394, 15
      %s397 = smul.addr %s396, 8
      %s398 = scalar_lea.vmem %s0, %s397
      %p399 = pneg %p45
      %p400 = pneg %p42
      %p401 = pneg %p66
      %p402 = pneg %p63
      %p403 = pneg %p87
      %p404 = pneg %p84
      %p405 = pneg %p108
      %p406 = pneg %p105
      %p407 = pneg %p129
      %p408 = pneg %p126
      %p409 = pneg %p150
      %p410 = pneg %p147
      %p411 = pneg %p171
      %p412 = pneg %p168
      %p413 = pneg %p192
      %p414 = pneg %p189
      %p415 = pneg %p213
      %p416 = pneg %p210
      %p417 = pneg %p234
      %p418 = pneg %p231
      %p419 = pneg %p255
      %p420 = pneg %p252
      %p421 = pneg %p276
      %p422 = pneg %p273
      %p423 = pneg %p297
      %p424 = pneg %p294
      %p425 = pneg %p323
      %p426 = pneg %p320
      %s427 = smul.u32 4, %s24
      %p428 = scmp.lt.s32.totalorder %s427, 15
      %s429 = scalar_select %p428, %s427, 15
      %s430 = smul.addr %s429, 8
      %s431 = scalar_lea.vmem %s13, %s430
      %s432 = smul.u32 4, %s24
      %p433 = scmp.lt.s32.totalorder %s432, 15
      %s434 = scalar_select %p433, %s432, 15
      %s435 = smul.addr %s434, 8
      %s436 = scalar_lea.vmem %s0, %s435
      %s437 = smul.u32 4, %s24
      %s438 = smul.u32 4, %s24
      %p439 = scmp.lt.s32.totalorder %s438, 15
      %s440 = scalar_select %p439, %s438, 15
      %s441 = smul.addr %s440, 8
      %s442 = scalar_lea.vmem %s13, %s441
      %s443 = smul.u32 4, %s24
      %v445 = vld [vmem:[%s436] sm:$0xff]
      %v446 = vld [vmem:[%s436 + $0x8] sm:$0xff]
      %v447 = vld [vmem:[%s436 + $0x10] sm:$0xff]
      %v448 = vld [vmem:[%s436 + $0x18] sm:$0xff]
      %v449 = vld [vmem:[%s1] sm:$0xff]
      %v450 = vld [vmem:[%s1 + $0x8] sm:$0xff]
      %v451 = vld [vmem:[%s1 + $0x10] sm:$0xff]
      %v452 = vld [vmem:[%s1 + $0x18] sm:$0xff]
      %v453 = vld [vmem:[%s1 + $0x20] sm:$0xff]
      %v454 = vld [vmem:[%s1 + $0x28] sm:$0xff]
      %v455 = vld [vmem:[%s1 + $0x30] sm:$0xff]
      %v456 = vld [vmem:[%s1 + $0x38] sm:$0xff]
      %v457 = vld [vmem:[%s1 + $0x40] sm:$0xff]
      %v458 = vld [vmem:[%s1 + $0x48] sm:$0xff]
      %v459 = vld [vmem:[%s1 + $0x50] sm:$0xff]
      %v460 = vld [vmem:[%s1 + $0x58] sm:$0xff]
      %v461 = vld [vmem:[%s1 + $0x60] sm:$0xff]
      %v462 = vld [vmem:[%s1 + $0x68] sm:$0xff]
      %v463 = vld [vmem:[%s1 + $0x70] sm:$0xff]
      %v464 = vld [vmem:[%s1 + $0x78] sm:$0xff]
      %466 = vset.pattern.permute.xlu0 0
      %467 = vperm.xlu0 %466, %v449
      %v468 = vpop.permute.xlu0 %467
      %471 = vset.pattern.permute.xlu0 0
      %472 = vperm.xlu0 %471, %v450
      %v473 = vpop.permute.xlu0 %472
      %476 = vset.pattern.permute.xlu0 0
      %477 = vperm.xlu0 %476, %v451
      %v478 = vpop.permute.xlu0 %477
      %481 = vset.pattern.permute.xlu0 0
      %482 = vperm.xlu0 %481, %v452
      %v483 = vpop.permute.xlu0 %482
      %486 = vset.pattern.permute.xlu0 0
      %487 = vperm.xlu0 %486, %v453
      %v488 = vpop.permute.xlu0 %487
      %491 = vset.pattern.permute.xlu0 0
      %492 = vperm.xlu0 %491, %v454
      %v493 = vpop.permute.xlu0 %492
      %496 = vset.pattern.permute.xlu0 0
      %497 = vperm.xlu0 %496, %v455
      %v498 = vpop.permute.xlu0 %497
      %501 = vset.pattern.permute.xlu0 0
      %502 = vperm.xlu0 %501, %v456
      %v503 = vpop.permute.xlu0 %502
      %506 = vset.pattern.permute.xlu0 0
      %507 = vperm.xlu0 %506, %v457
      %v508 = vpop.permute.xlu0 %507
      %511 = vset.pattern.permute.xlu0 0
      %512 = vperm.xlu0 %511, %v458
      %v513 = vpop.permute.xlu0 %512
      %516 = vset.pattern.permute.xlu0 0
      %517 = vperm.xlu0 %516, %v459
      %v518 = vpop.permute.xlu0 %517
      %521 = vset.pattern.permute.xlu0 0
      %522 = vperm.xlu0 %521, %v460
      %v523 = vpop.permute.xlu0 %522
      %526 = vset.pattern.permute.xlu0 0
      %527 = vperm.xlu0 %526, %v461
      %v528 = vpop.permute.xlu0 %527
      %531 = vset.pattern.permute.xlu0 0
      %532 = vperm.xlu0 %531, %v462
      %v533 = vpop.permute.xlu0 %532
      %536 = vset.pattern.permute.xlu0 0
      %537 = vperm.xlu0 %536, %v463
      %v538 = vpop.permute.xlu0 %537
      %541 = vset.pattern.permute.xlu0 0
      %542 = vperm.xlu0 %541, %v464
      %v543 = vpop.permute.xlu0 %542
      %v545 = vmul.f32 %v445, %v468
      %v546 = vmul.f32 %v446, %v468
      %v547 = vmul.f32 %v447, %v468
      %v548 = vmul.f32 %v448, %v468
      %v549 = vmul.f32 %v445, %v473
      %v550 = vmul.f32 %v446, %v473
      %v551 = vmul.f32 %v447, %v473
      %v552 = vmul.f32 %v448, %v473
      %v553 = vmul.f32 %v445, %v478
      %v554 = vmul.f32 %v446, %v478
      %v555 = vmul.f32 %v447, %v478
      %v556 = vmul.f32 %v448, %v478
      %v557 = vmul.f32 %v445, %v483
      %v558 = vmul.f32 %v446, %v483
      %v559 = vmul.f32 %v447, %v483
      %v560 = vmul.f32 %v448, %v483
      %v561 = vmul.f32 %v445, %v488
      %v562 = vmul.f32 %v446, %v488
      %v563 = vmul.f32 %v447, %v488
      %v564 = vmul.f32 %v448, %v488
      %v565 = vmul.f32 %v445, %v493
      %v566 = vmul.f32 %v446, %v493
      %v567 = vmul.f32 %v447, %v493
      %v568 = vmul.f32 %v448, %v493
      %v569 = vmul.f32 %v445, %v498
      %v570 = vmul.f32 %v446, %v498
      %v571 = vmul.f32 %v447, %v498
      %v572 = vmul.f32 %v448, %v498
      %v573 = vmul.f32 %v445, %v503
      %v574 = vmul.f32 %v446, %v503
      %v575 = vmul.f32 %v447, %v503
      %v576 = vmul.f32 %v448, %v503
      %v577 = vmul.f32 %v445, %v508
      %v578 = vmul.f32 %v446, %v508
      %v579 = vmul.f32 %v447, %v508
      %v580 = vmul.f32 %v448, %v508
      %v581 = vmul.f32 %v445, %v513
      %v582 = vmul.f32 %v446, %v513
      %v583 = vmul.f32 %v447, %v513
      %v584 = vmul.f32 %v448, %v513
      %v585 = vmul.f32 %v445, %v518
      %v586 = vmul.f32 %v446, %v518
      %v587 = vmul.f32 %v447, %v518
      %v588 = vmul.f32 %v448, %v518
      %v589 = vmul.f32 %v445, %v523
      %v590 = vmul.f32 %v446, %v523
      %v591 = vmul.f32 %v447, %v523
      %v592 = vmul.f32 %v448, %v523
      %v593 = vmul.f32 %v445, %v528
      %v594 = vmul.f32 %v446, %v528
      %v595 = vmul.f32 %v447, %v528
      %v596 = vmul.f32 %v448, %v528
      %v597 = vmul.f32 %v445, %v533
      %v598 = vmul.f32 %v446, %v533
      %v599 = vmul.f32 %v447, %v533
      %v600 = vmul.f32 %v448, %v533
      %v601 = vmul.f32 %v445, %v538
      %v602 = vmul.f32 %v446, %v538
      %v603 = vmul.f32 %v447, %v538
      %v604 = vmul.f32 %v448, %v538
      %v605 = vmul.f32 %v445, %v543
      %v606 = vmul.f32 %v446, %v543
      %v607 = vmul.f32 %v447, %v543
      %v608 = vmul.f32 %v448, %v543
      %v609 = vld [vmem:[%s2] sm:$0xff]
      %v610 = vld [vmem:[%s2 + $0x8] sm:$0xff]
      %v611 = vld [vmem:[%s2 + $0x10] sm:$0xff]
      %v612 = vld [vmem:[%s2 + $0x18] sm:$0xff]
      %v613 = vld [vmem:[%s2 + $0x20] sm:$0xff]
      %v614 = vld [vmem:[%s2 + $0x28] sm:$0xff]
      %v615 = vld [vmem:[%s2 + $0x30] sm:$0xff]
      %v616 = vld [vmem:[%s2 + $0x38] sm:$0xff]
      %v617 = vld [vmem:[%s2 + $0x40] sm:$0xff]
      %v618 = vld [vmem:[%s2 + $0x48] sm:$0xff]
      %v619 = vld [vmem:[%s2 + $0x50] sm:$0xff]
      %v620 = vld [vmem:[%s2 + $0x58] sm:$0xff]
      %v621 = vld [vmem:[%s2 + $0x60] sm:$0xff]
      %v622 = vld [vmem:[%s2 + $0x68] sm:$0xff]
      %v623 = vld [vmem:[%s2 + $0x70] sm:$0xff]
      %v624 = vld [vmem:[%s2 + $0x78] sm:$0xff]
      %626 = vset.pattern.permute.xlu0 0
      %627 = vperm.xlu0 %626, %v609
      %v628 = vpop.permute.xlu0 %627
      %631 = vset.pattern.permute.xlu0 0
      %632 = vperm.xlu0 %631, %v610
      %v633 = vpop.permute.xlu0 %632
      %636 = vset.pattern.permute.xlu0 0
      %637 = vperm.xlu0 %636, %v611
      %v638 = vpop.permute.xlu0 %637
      %641 = vset.pattern.permute.xlu0 0
      %642 = vperm.xlu0 %641, %v612
      %v643 = vpop.permute.xlu0 %642
      %646 = vset.pattern.permute.xlu0 0
      %647 = vperm.xlu0 %646, %v613
      %v648 = vpop.permute.xlu0 %647
      %651 = vset.pattern.permute.xlu0 0
      %652 = vperm.xlu0 %651, %v614
      %v653 = vpop.permute.xlu0 %652
      %656 = vset.pattern.permute.xlu0 0
      %657 = vperm.xlu0 %656, %v615
      %v658 = vpop.permute.xlu0 %657
      %661 = vset.pattern.permute.xlu0 0
      %662 = vperm.xlu0 %661, %v616
      %v663 = vpop.permute.xlu0 %662
      %666 = vset.pattern.permute.xlu0 0
      %667 = vperm.xlu0 %666, %v617
      %v668 = vpop.permute.xlu0 %667
      %671 = vset.pattern.permute.xlu0 0
      %672 = vperm.xlu0 %671, %v618
      %v673 = vpop.permute.xlu0 %672
      %676 = vset.pattern.permute.xlu0 0
      %677 = vperm.xlu0 %676, %v619
      %v678 = vpop.permute.xlu0 %677
      %681 = vset.pattern.permute.xlu0 0
      %682 = vperm.xlu0 %681, %v620
      %v683 = vpop.permute.xlu0 %682
      %686 = vset.pattern.permute.xlu0 0
      %687 = vperm.xlu0 %686, %v621
      %v688 = vpop.permute.xlu0 %687
      %691 = vset.pattern.permute.xlu0 0
      %692 = vperm.xlu0 %691, %v622
      %v693 = vpop.permute.xlu0 %692
      %696 = vset.pattern.permute.xlu0 0
      %697 = vperm.xlu0 %696, %v623
      %v698 = vpop.permute.xlu0 %697
      %701 = vset.pattern.permute.xlu0 0
      %702 = vperm.xlu0 %701, %v624
      %v703 = vpop.permute.xlu0 %702
      %v705 = vadd.f32 %v545, %v628
      %v706 = vadd.f32 %v546, %v628
      %v707 = vadd.f32 %v547, %v628
      %v708 = vadd.f32 %v548, %v628
      %v709 = vadd.f32 %v549, %v633
      %v710 = vadd.f32 %v550, %v633
      %v711 = vadd.f32 %v551, %v633
      %v712 = vadd.f32 %v552, %v633
      %v713 = vadd.f32 %v553, %v638
      %v714 = vadd.f32 %v554, %v638
      %v715 = vadd.f32 %v555, %v638
      %v716 = vadd.f32 %v556, %v638
      %v717 = vadd.f32 %v557, %v643
      %v718 = vadd.f32 %v558, %v643
      %v719 = vadd.f32 %v559, %v643
      %v720 = vadd.f32 %v560, %v643
      %v721 = vadd.f32 %v561, %v648
      %v722 = vadd.f32 %v562, %v648
      %v723 = vadd.f32 %v563, %v648
      %v724 = vadd.f32 %v564, %v648
      %v725 = vadd.f32 %v565, %v653
      %v726 = vadd.f32 %v566, %v653
      %v727 = vadd.f32 %v567, %v653
      %v728 = vadd.f32 %v568, %v653
      %v729 = vadd.f32 %v569, %v658
      %v730 = vadd.f32 %v570, %v658
      %v731 = vadd.f32 %v571, %v658
      %v732 = vadd.f32 %v572, %v658
      %v733 = vadd.f32 %v573, %v663
      %v734 = vadd.f32 %v574, %v663
      %v735 = vadd.f32 %v575, %v663
      %v736 = vadd.f32 %v576, %v663
      %v737 = vadd.f32 %v577, %v668
      %v738 = vadd.f32 %v578, %v668
      %v739 = vadd.f32 %v579, %v668
      %v740 = vadd.f32 %v580, %v668
      %v741 = vadd.f32 %v581, %v673
      %v742 = vadd.f32 %v582, %v673
      %v743 = vadd.f32 %v583, %v673
      %v744 = vadd.f32 %v584, %v673
      %v745 = vadd.f32 %v585, %v678
      %v746 = vadd.f32 %v586, %v678
      %v747 = vadd.f32 %v587, %v678
      %v748 = vadd.f32 %v588, %v678
      %v749 = vadd.f32 %v589, %v683
      %v750 = vadd.f32 %v590, %v683
      %v751 = vadd.f32 %v591, %v683
      %v752 = vadd.f32 %v592, %v683
      %v753 = vadd.f32 %v593, %v688
      %v754 = vadd.f32 %v594, %v688
      %v755 = vadd.f32 %v595, %v688
      %v756 = vadd.f32 %v596, %v688
      %v757 = vadd.f32 %v597, %v693
      %v758 = vadd.f32 %v598, %v693
      %v759 = vadd.f32 %v599, %v693
      %v760 = vadd.f32 %v600, %v693
      %v761 = vadd.f32 %v601, %v698
      %v762 = vadd.f32 %v602, %v698
      %v763 = vadd.f32 %v603, %v698
      %v764 = vadd.f32 %v604, %v698
      %v765 = vadd.f32 %v605, %v703
      %v766 = vadd.f32 %v606, %v703
      %v767 = vadd.f32 %v607, %v703
      %v768 = vadd.f32 %v608, %v703
      %v769 = vld [vmem:[%s3] sm:$0xff]
      %v770 = vld [vmem:[%s3 + $0x8] sm:$0xff]
      %v771 = vld [vmem:[%s3 + $0x10] sm:$0xff]
      %v772 = vld [vmem:[%s3 + $0x18] sm:$0xff]
      %v773 = vld [vmem:[%s3 + $0x20] sm:$0xff]
      %v774 = vld [vmem:[%s3 + $0x28] sm:$0xff]
      %v775 = vld [vmem:[%s3 + $0x30] sm:$0xff]
      %v776 = vld [vmem:[%s3 + $0x38] sm:$0xff]
      %v777 = vld [vmem:[%s3 + $0x40] sm:$0xff]
      %v778 = vld [vmem:[%s3 + $0x48] sm:$0xff]
      %v779 = vld [vmem:[%s3 + $0x50] sm:$0xff]
      %v780 = vld [vmem:[%s3 + $0x58] sm:$0xff]
      %v781 = vld [vmem:[%s3 + $0x60] sm:$0xff]
      %v782 = vld [vmem:[%s3 + $0x68] sm:$0xff]
      %v783 = vld [vmem:[%s3 + $0x70] sm:$0xff]
      %v784 = vld [vmem:[%s3 + $0x78] sm:$0xff]
      %786 = vset.pattern.permute.xlu0 0
      %787 = vperm.xlu0 %786, %v769
      %v788 = vpop.permute.xlu0 %787
      %791 = vset.pattern.permute.xlu0 0
      %792 = vperm.xlu0 %791, %v770
      %v793 = vpop.permute.xlu0 %792
      %796 = vset.pattern.permute.xlu0 0
      %797 = vperm.xlu0 %796, %v771
      %v798 = vpop.permute.xlu0 %797
      %801 = vset.pattern.permute.xlu0 0
      %802 = vperm.xlu0 %801, %v772
      %v803 = vpop.permute.xlu0 %802
      %806 = vset.pattern.permute.xlu0 0
      %807 = vperm.xlu0 %806, %v773
      %v808 = vpop.permute.xlu0 %807
      %811 = vset.pattern.permute.xlu0 0
      %812 = vperm.xlu0 %811, %v774
      %v813 = vpop.permute.xlu0 %812
      %816 = vset.pattern.permute.xlu0 0
      %817 = vperm.xlu0 %816, %v775
      %v818 = vpop.permute.xlu0 %817
      %821 = vset.pattern.permute.xlu0 0
      %822 = vperm.xlu0 %821, %v776
      %v823 = vpop.permute.xlu0 %822
      %826 = vset.pattern.permute.xlu0 0
      %827 = vperm.xlu0 %826, %v777
      %v828 = vpop.permute.xlu0 %827
      %831 = vset.pattern.permute.xlu0 0
      %832 = vperm.xlu0 %831, %v778
      %v833 = vpop.permute.xlu0 %832
      %836 = vset.pattern.permute.xlu0 0
      %837 = vperm.xlu0 %836, %v779
      %v838 = vpop.permute.xlu0 %837
      %841 = vset.pattern.permute.xlu0 0
      %842 = vperm.xlu0 %841, %v780
      %v843 = vpop.permute.xlu0 %842
      %846 = vset.pattern.permute.xlu0 0
      %847 = vperm.xlu0 %846, %v781
      %v848 = vpop.permute.xlu0 %847
      %851 = vset.pattern.permute.xlu0 0
      %852 = vperm.xlu0 %851, %v782
      %v853 = vpop.permute.xlu0 %852
      %856 = vset.pattern.permute.xlu0 0
      %857 = vperm.xlu0 %856, %v783
      %v858 = vpop.permute.xlu0 %857
      %861 = vset.pattern.permute.xlu0 0
      %862 = vperm.xlu0 %861, %v784
      %v863 = vpop.permute.xlu0 %862
      %v865 = vmul.f32 %v788, %v445
      %v866 = vmul.f32 %v788, %v446
      %v867 = vmul.f32 %v788, %v447
      %v868 = vmul.f32 %v788, %v448
      %v869 = vmul.f32 %v793, %v445
      %v870 = vmul.f32 %v793, %v446
      %v871 = vmul.f32 %v793, %v447
      %v872 = vmul.f32 %v793, %v448
      %v873 = vmul.f32 %v798, %v445
      %v874 = vmul.f32 %v798, %v446
      %v875 = vmul.f32 %v798, %v447
      %v876 = vmul.f32 %v798, %v448
      %v877 = vmul.f32 %v803, %v445
      %v878 = vmul.f32 %v803, %v446
      %v879 = vmul.f32 %v803, %v447
      %v880 = vmul.f32 %v803, %v448
      %v881 = vmul.f32 %v808, %v445
      %v882 = vmul.f32 %v808, %v446
      %v883 = vmul.f32 %v808, %v447
      %v884 = vmul.f32 %v808, %v448
      %v885 = vmul.f32 %v813, %v445
      %v886 = vmul.f32 %v813, %v446
      %v887 = vmul.f32 %v813, %v447
      %v888 = vmul.f32 %v813, %v448
      %v889 = vmul.f32 %v818, %v445
      %v890 = vmul.f32 %v818, %v446
      %v891 = vmul.f32 %v818, %v447
      %v892 = vmul.f32 %v818, %v448
      %v893 = vmul.f32 %v823, %v445
      %v894 = vmul.f32 %v823, %v446
      %v895 = vmul.f32 %v823, %v447
      %v896 = vmul.f32 %v823, %v448
      %v897 = vmul.f32 %v828, %v445
      %v898 = vmul.f32 %v828, %v446
      %v899 = vmul.f32 %v828, %v447
      %v900 = vmul.f32 %v828, %v448
      %v901 = vmul.f32 %v833, %v445
      %v902 = vmul.f32 %v833, %v446
      %v903 = vmul.f32 %v833, %v447
      %v904 = vmul.f32 %v833, %v448
      %v905 = vmul.f32 %v838, %v445
      %v906 = vmul.f32 %v838, %v446
      %v907 = vmul.f32 %v838, %v447
      %v908 = vmul.f32 %v838, %v448
      %v909 = vmul.f32 %v843, %v445
      %v910 = vmul.f32 %v843, %v446
      %v911 = vmul.f32 %v843, %v447
      %v912 = vmul.f32 %v843, %v448
      %v913 = vmul.f32 %v848, %v445
      %v914 = vmul.f32 %v848, %v446
      %v915 = vmul.f32 %v848, %v447
      %v916 = vmul.f32 %v848, %v448
      %v917 = vmul.f32 %v853, %v445
      %v918 = vmul.f32 %v853, %v446
      %v919 = vmul.f32 %v853, %v447
      %v920 = vmul.f32 %v853, %v448
      %v921 = vmul.f32 %v858, %v445
      %v922 = vmul.f32 %v858, %v446
      %v923 = vmul.f32 %v858, %v447
      %v924 = vmul.f32 %v858, %v448
      %v925 = vmul.f32 %v863, %v445
      %v926 = vmul.f32 %v863, %v446
      %v927 = vmul.f32 %v863, %v447
      %v928 = vmul.f32 %v863, %v448
      %v929 = vld [vmem:[%s4] sm:$0xff]
      %v930 = vld [vmem:[%s4 + $0x8] sm:$0xff]
      %v931 = vld [vmem:[%s4 + $0x10] sm:$0xff]
      %v932 = vld [vmem:[%s4 + $0x18] sm:$0xff]
      %v933 = vld [vmem:[%s4 + $0x20] sm:$0xff]
      %v934 = vld [vmem:[%s4 + $0x28] sm:$0xff]
      %v935 = vld [vmem:[%s4 + $0x30] sm:$0xff]
      %v936 = vld [vmem:[%s4 + $0x38] sm:$0xff]
      %v937 = vld [vmem:[%s4 + $0x40] sm:$0xff]
      %v938 = vld [vmem:[%s4 + $0x48] sm:$0xff]
      %v939 = vld [vmem:[%s4 + $0x50] sm:$0xff]
      %v940 = vld [vmem:[%s4 + $0x58] sm:$0xff]
      %v941 = vld [vmem:[%s4 + $0x60] sm:$0xff]
      %v942 = vld [vmem:[%s4 + $0x68] sm:$0xff]
      %v943 = vld [vmem:[%s4 + $0x70] sm:$0xff]
      %v944 = vld [vmem:[%s4 + $0x78] sm:$0xff]
      %v945 = vand.u32 2147483647, %v705
      %vm946 = vcmp.le.f32.partialorder %v945, 0.7853982
      %vm947 = vcmp.lt.s32.totalorder %v705, 0
      %v948 = vand.u32 %v705, 2139095040
      %v949 = vshrl.u32 %v948, 23
      %v950 = vsub.s32 %v949, 127
      %v951 = vand.u32 2147483647, %v705
      %v952 = vand.u32 %v951, 8388607
      %v953 = vor.u32 %v952, 8388608
      %v954 = vsub.s32 0, %v953
      %v955 = vadd.s32 %v950, 1
      %vm956 = vcmp.gt.s32.totalorder %v955, 0
      %v957 = vsel %vm956, %v955, 0
      %v958 = vshrl.u32 %v957, 5
      %v959 = vand.u32 %v957, 31
      %v960 = vsub.s32 32, %v959
      %v961 = vshrl.u32 683565275, %v960
      %v962 = vshll.u32 683565275, %v959
      %v963 = vshrl.u32 2475754826, %v960
      %v964 = vor.u32 %v962, %v963
      %v965 = vshll.u32 2475754826, %v959
      %v966 = vshrl.u32 2131351028, %v960
      %v967 = vor.u32 %v965, %v966
      %v968 = vshll.u32 2131351028, %v959
      %v969 = vshrl.u32 2102212464, %v960
      %v970 = vor.u32 %v968, %v969
      %v971 = vshll.u32 2102212464, %v959
      %v972 = vshrl.u32 920167782, %v960
      %v973 = vor.u32 %v971, %v972
      %v974 = vshll.u32 920167782, %v959
      %v975 = vshrl.u32 1326507024, %v960
      %v976 = vor.u32 %v974, %v975
      %vm977 = vcmp.lt.s32.totalorder %v958, 1
      %vm978 = vcmp.lt.s32.totalorder %v958, 2
      %vm979 = vcmp.lt.s32.totalorder %v958, 3
      %vm980 = vcmp.lt.s32.totalorder %v958, 4
      %v981 = vsel %vm977, %v961, %v964
      %v982 = vsel %vm980, %v970, 2102212464
      %v983 = vsel %vm979, %v967, %v982
      %v984 = vsel %vm978, %v981, %v983
      %v985 = vsel %vm977, %v964, %v967
      %v986 = vsel %vm980, %v973, 920167782
      %v987 = vsel %vm979, %v970, %v986
      %v988 = vsel %vm978, %v985, %v987
      %v989 = vsel %vm977, %v967, %v970
      %v990 = vsel %vm980, %v976, 1326507024
      %v991 = vsel %vm979, %v973, %v990
      %v992 = vsel %vm978, %v989, %v991
      %v993 = vshll.u32 %v953, 8
      %v994 = vmul.u32.u64.compose %v993, %v992
      %v995 = vextract.low.u32 %v994
      %v996 = vextract.high.u32 %v994
      %v997 = vmul.u32.u64.compose %v993, %v988
      %v998 = vextract.low.u32 %v997
      %v999 = vextract.high.u32 %v997
      %v1000 = vmul.u32 %v993, %v984
      %v1001 = vadd.s32 %v996, %v998
      %vm1002 = vc.u32 %v996, %v998
      %v1003 = vadd.s32 %v999, 1
      %v1004 = vsel %vm1002, %v1003, %v999
      %v1005 = vadd.s32 %v1000, %v1004
      %v1006 = vadd.s32 %v1005, 536870912
      %v1007 = vshrl.u32 %v1006, 30
      %v1008 = vshll.u32 %v1007, 30
      %v1009 = vsub.s32 %v1005, %v1008
      %vm1010 = vcmp.lt.s32.totalorder %v1009, 0
      %v1011 = vsub.s32 0, %v1009
      %v1012 = vsel %vm1010, %v1011, %v1009
      %v1013 = vclz %v1012
      %v1014 = vsub.s32 %v1013, 2
      %vm1015 = vcmp.gt.s32.totalorder 0, %v1014
      %v1016 = vsel %vm1015, 0, %v1014
      %v1017 = vsub.s32 32, %v1016
      %v1018 = vshll.u32 %v1009, %v1016
      %v1019 = vshrl.u32 %v1001, %v1017
      %v1020 = vor.u32 %v1018, %v1019
      %v1021 = vsub.s32 4294967266, %v1016
      %v1022 = vadd.s32 %v1021, 127
      %v1023 = vshll.u32 %v1022, 23
      %v1024 = vor.u32 4788187, %v1023
      %v1025 = vand.u32 2147483647, %v1024
      %v1027 = vcvt.s32.f32 %v1020
      %v1028 = vmul.f32 %v1027, %v1025
      %v1029 = vxor.u32 %v1028, 2147483648
      %v1030 = vsel %vm947, %v1029, %v1028
      %v1031 = vsub.s32 4, %v1007
      %v1032 = vsel %vm947, %v1031, %v1007
      %v1033 = vsel %vm946, %v705, %v1030
      %v1034 = vsel %vm946, 0, %v1032
      %v1035 = vcosq.f32.pop %v1033
      %v1036 = vsinq.f32.pop %v1033
      %vm1037 = vweird.f32 %v705
      %v1038 = vadd.s32 %v1034, 3
      %v1039 = vand.u32 %v1038, 3
      %vm1040 = vcmp.lt.s32.totalorder %v1039, 2
      %vm1041 = vcmp.eq.s32.totalorder %v1039, 0
      %v1042 = vxor.u32 %v1036, 2147483648
      %v1043 = vsel %vm1041, %v1035, %v1042
      %vm1044 = vcmp.eq.s32.totalorder %v1039, 2
      %v1045 = vxor.u32 %v1035, 2147483648
      %v1046 = vsel %vm1044, %v1045, %v1036
      %v1047 = vsel %vm1040, %v1043, %v1046
      %v1048 = vsel %vm1037, nan, %v1047
      %v1049 = vand.u32 2147483647, %v706
      %vm1050 = vcmp.le.f32.partialorder %v1049, 0.7853982
      %vm1051 = vcmp.lt.s32.totalorder %v706, 0
      %v1052 = vand.u32 %v706, 2139095040
      %v1053 = vshrl.u32 %v1052, 23
      %v1054 = vsub.s32 %v1053, 127
      %v1055 = vand.u32 2147483647, %v706
      %v1056 = vand.u32 %v1055, 8388607
      %v1057 = vor.u32 %v1056, 8388608
      %v1058 = vsub.s32 0, %v1057
      %v1059 = vadd.s32 %v1054, 1
      %vm1060 = vcmp.gt.s32.totalorder %v1059, 0
      %v1061 = vsel %vm1060, %v1059, 0
      %v1062 = vshrl.u32 %v1061, 5
      %v1063 = vand.u32 %v1061, 31
      %v1064 = vsub.s32 32, %v1063
      %v1065 = vshrl.u32 683565275, %v1064
      %v1066 = vshll.u32 683565275, %v1063
      %v1067 = vshrl.u32 2475754826, %v1064
      %v1068 = vor.u32 %v1066, %v1067
      %v1069 = vshll.u32 2475754826, %v1063
      %v1070 = vshrl.u32 2131351028, %v1064
      %v1071 = vor.u32 %v1069, %v1070
      %v1072 = vshll.u32 2131351028, %v1063
      %v1073 = vshrl.u32 2102212464, %v1064
      %v1074 = vor.u32 %v1072, %v1073
      %v1075 = vshll.u32 2102212464, %v1063
      %v1076 = vshrl.u32 920167782, %v1064
      %v1077 = vor.u32 %v1075, %v1076
      %v1078 = vshll.u32 920167782, %v1063
      %v1079 = vshrl.u32 1326507024, %v1064
      %v1080 = vor.u32 %v1078, %v1079
      %vm1081 = vcmp.lt.s32.totalorder %v1062, 1
      %vm1082 = vcmp.lt.s32.totalorder %v1062, 2
      %vm1083 = vcmp.lt.s32.totalorder %v1062, 3
      %vm1084 = vcmp.lt.s32.totalorder %v1062, 4
      %v1085 = vsel %vm1081, %v1065, %v1068
      %v1086 = vsel %vm1084, %v1074, 2102212464
      %v1087 = vsel %vm1083, %v1071, %v1086
      %v1088 = vsel %vm1082, %v1085, %v1087
      %v1089 = vsel %vm1081, %v1068, %v1071
      %v1090 = vsel %vm1084, %v1077, 920167782
      %v1091 = vsel %vm1083, %v1074, %v1090
      %v1092 = vsel %vm1082, %v1089, %v1091
      %v1093 = vsel %vm1081, %v1071, %v1074
      %v1094 = vsel %vm1084, %v1080, 1326507024
      %v1095 = vsel %vm1083, %v1077, %v1094
      %v1096 = vsel %vm1082, %v1093, %v1095
      %v1097 = vshll.u32 %v1057, 8
      %v1098 = vmul.u32.u64.compose %v1097, %v1096
      %v1099 = vextract.low.u32 %v1098
      %v1100 = vextract.high.u32 %v1098
      %v1101 = vmul.u32.u64.compose %v1097, %v1092
      %v1102 = vextract.low.u32 %v1101
      %v1103 = vextract.high.u32 %v1101
      %v1104 = vmul.u32 %v1097, %v1088
      %v1105 = vadd.s32 %v1100, %v1102
      %vm1106 = vc.u32 %v1100, %v1102
      %v1107 = vadd.s32 %v1103, 1
      %v1108 = vsel %vm1106, %v1107, %v1103
      %v1109 = vadd.s32 %v1104, %v1108
      %v1110 = vadd.s32 %v1109, 536870912
      %v1111 = vshrl.u32 %v1110, 30
      %v1112 = vshll.u32 %v1111, 30
      %v1113 = vsub.s32 %v1109, %v1112
      %vm1114 = vcmp.lt.s32.totalorder %v1113, 0
      %v1115 = vsub.s32 0, %v1113
      %v1116 = vsel %vm1114, %v1115, %v1113
      %v1117 = vclz %v1116
      %v1118 = vsub.s32 %v1117, 2
      %vm1119 = vcmp.gt.s32.totalorder 0, %v1118
      %v1120 = vsel %vm1119, 0, %v1118
      %v1121 = vsub.s32 32, %v1120
      %v1122 = vshll.u32 %v1113, %v1120
      %v1123 = vshrl.u32 %v1105, %v1121
      %v1124 = vor.u32 %v1122, %v1123
      %v1125 = vsub.s32 4294967266, %v1120
      %v1126 = vadd.s32 %v1125, 127
      %v1127 = vshll.u32 %v1126, 23
      %v1128 = vor.u32 4788187, %v1127
      %v1129 = vand.u32 2147483647, %v1128
      %v1131 = vcvt.s32.f32 %v1124
      %v1132 = vmul.f32 %v1131, %v1129
      %v1133 = vxor.u32 %v1132, 2147483648
      %v1134 = vsel %vm1051, %v1133, %v1132
      %v1135 = vsub.s32 4, %v1111
      %v1136 = vsel %vm1051, %v1135, %v1111
      %v1137 = vsel %vm1050, %v706, %v1134
      %v1138 = vsel %vm1050, 0, %v1136
      %v1139 = vcosq.f32.pop %v1137
      %v1140 = vsinq.f32.pop %v1137
      %vm1141 = vweird.f32 %v706
      %v1142 = vadd.s32 %v1138, 3
      %v1143 = vand.u32 %v1142, 3
      %vm1144 = vcmp.lt.s32.totalorder %v1143, 2
      %vm1145 = vcmp.eq.s32.totalorder %v1143, 0
      %v1146 = vxor.u32 %v1140, 2147483648
      %v1147 = vsel %vm1145, %v1139, %v1146
      %vm1148 = vcmp.eq.s32.totalorder %v1143, 2
      %v1149 = vxor.u32 %v1139, 2147483648
      %v1150 = vsel %vm1148, %v1149, %v1140
      %v1151 = vsel %vm1144, %v1147, %v1150
      %v1152 = vsel %vm1141, nan, %v1151
      %v1153 = vand.u32 2147483647, %v707
      %vm1154 = vcmp.le.f32.partialorder %v1153, 0.7853982
      %vm1155 = vcmp.lt.s32.totalorder %v707, 0
      %v1156 = vand.u32 %v707, 2139095040
      %v1157 = vshrl.u32 %v1156, 23
      %v1158 = vsub.s32 %v1157, 127
      %v1159 = vand.u32 2147483647, %v707
      %v1160 = vand.u32 %v1159, 8388607
      %v1161 = vor.u32 %v1160, 8388608
      %v1162 = vsub.s32 0, %v1161
      %v1163 = vadd.s32 %v1158, 1
      %vm1164 = vcmp.gt.s32.totalorder %v1163, 0
      %v1165 = vsel %vm1164, %v1163, 0
      %v1166 = vshrl.u32 %v1165, 5
      %v1167 = vand.u32 %v1165, 31
      %v1168 = vsub.s32 32, %v1167
      %v1169 = vshrl.u32 683565275, %v1168
      %v1170 = vshll.u32 683565275, %v1167
      %v1171 = vshrl.u32 2475754826, %v1168
      %v1172 = vor.u32 %v1170, %v1171
      %v1173 = vshll.u32 2475754826, %v1167
      %v1174 = vshrl.u32 2131351028, %v1168
      %v1175 = vor.u32 %v1173, %v1174
      %v1176 = vshll.u32 2131351028, %v1167
      %v1177 = vshrl.u32 2102212464, %v1168
      %v1178 = vor.u32 %v1176, %v1177
      %v1179 = vshll.u32 2102212464, %v1167
      %v1180 = vshrl.u32 920167782, %v1168
      %v1181 = vor.u32 %v1179, %v1180
      %v1182 = vshll.u32 920167782, %v1167
      %v1183 = vshrl.u32 1326507024, %v1168
      %v1184 = vor.u32 %v1182, %v1183
      %vm1185 = vcmp.lt.s32.totalorder %v1166, 1
      %vm1186 = vcmp.lt.s32.totalorder %v1166, 2
      %vm1187 = vcmp.lt.s32.totalorder %v1166, 3
      %vm1188 = vcmp.lt.s32.totalorder %v1166, 4
      %v1189 = vsel %vm1185, %v1169, %v1172
      %v1190 = vsel %vm1188, %v1178, 2102212464
      %v1191 = vsel %vm1187, %v1175, %v1190
      %v1192 = vsel %vm1186, %v1189, %v1191
      %v1193 = vsel %vm1185, %v1172, %v1175
      %v1194 = vsel %vm1188, %v1181, 920167782
      %v1195 = vsel %vm1187, %v1178, %v1194
      %v1196 = vsel %vm1186, %v1193, %v1195
      %v1197 = vsel %vm1185, %v1175, %v1178
      %v1198 = vsel %vm1188, %v1184, 1326507024
      %v1199 = vsel %vm1187, %v1181, %v1198
      %v1200 = vsel %vm1186, %v1197, %v1199
      %v1201 = vshll.u32 %v1161, 8
      %v1202 = vmul.u32.u64.compose %v1201, %v1200
      %v1203 = vextract.low.u32 %v1202
      %v1204 = vextract.high.u32 %v1202
      %v1205 = vmul.u32.u64.compose %v1201, %v1196
      %v1206 = vextract.low.u32 %v1205
      %v1207 = vextract.high.u32 %v1205
      %v1208 = vmul.u32 %v1201, %v1192
      %v1209 = vadd.s32 %v1204, %v1206
      %vm1210 = vc.u32 %v1204, %v1206
      %v1211 = vadd.s32 %v1207, 1
      %v1212 = vsel %vm1210, %v1211, %v1207
      %v1213 = vadd.s32 %v1208, %v1212
      %v1214 = vadd.s32 %v1213, 536870912
      %v1215 = vshrl.u32 %v1214, 30
      %v1216 = vshll.u32 %v1215, 30
      %v1217 = vsub.s32 %v1213, %v1216
      %vm1218 = vcmp.lt.s32.totalorder %v1217, 0
      %v1219 = vsub.s32 0, %v1217
      %v1220 = vsel %vm1218, %v1219, %v1217
      %v1221 = vclz %v1220
      %v1222 = vsub.s32 %v1221, 2
      %vm1223 = vcmp.gt.s32.totalorder 0, %v1222
      %v1224 = vsel %vm1223, 0, %v1222
      %v1225 = vsub.s32 32, %v1224
      %v1226 = vshll.u32 %v1217, %v1224
      %v1227 = vshrl.u32 %v1209, %v1225
      %v1228 = vor.u32 %v1226, %v1227
      %v1229 = vsub.s32 4294967266, %v1224
      %v1230 = vadd.s32 %v1229, 127
      %v1231 = vshll.u32 %v1230, 23
      %v1232 = vor.u32 4788187, %v1231
      %v1233 = vand.u32 2147483647, %v1232
      %v1235 = vcvt.s32.f32 %v1228
      %v1236 = vmul.f32 %v1235, %v1233
      %v1237 = vxor.u32 %v1236, 2147483648
      %v1238 = vsel %vm1155, %v1237, %v1236
      %v1239 = vsub.s32 4, %v1215
      %v1240 = vsel %vm1155, %v1239, %v1215
      %v1241 = vsel %vm1154, %v707, %v1238
      %v1242 = vsel %vm1154, 0, %v1240
      %v1243 = vcosq.f32.pop %v1241
      %v1244 = vsinq.f32.pop %v1241
      %vm1245 = vweird.f32 %v707
      %v1246 = vadd.s32 %v1242, 3
      %v1247 = vand.u32 %v1246, 3
      %vm1248 = vcmp.lt.s32.totalorder %v1247, 2
      %vm1249 = vcmp.eq.s32.totalorder %v1247, 0
      %v1250 = vxor.u32 %v1244, 2147483648
      %v1251 = vsel %vm1249, %v1243, %v1250
      %vm1252 = vcmp.eq.s32.totalorder %v1247, 2
      %v1253 = vxor.u32 %v1243, 2147483648
      %v1254 = vsel %vm1252, %v1253, %v1244
      %v1255 = vsel %vm1248, %v1251, %v1254
      %v1256 = vsel %vm1245, nan, %v1255
      %v1257 = vand.u32 2147483647, %v708
      %vm1258 = vcmp.le.f32.partialorder %v1257, 0.7853982
      %vm1259 = vcmp.lt.s32.totalorder %v708, 0
      %v1260 = vand.u32 %v708, 2139095040
      %v1261 = vshrl.u32 %v1260, 23
      %v1262 = vsub.s32 %v1261, 127
      %v1263 = vand.u32 2147483647, %v708
      %v1264 = vand.u32 %v1263, 8388607
      %v1265 = vor.u32 %v1264, 8388608
      %v1266 = vsub.s32 0, %v1265
      %v1267 = vadd.s32 %v1262, 1
      %vm1268 = vcmp.gt.s32.totalorder %v1267, 0
      %v1269 = vsel %vm1268, %v1267, 0
      %v1270 = vshrl.u32 %v1269, 5
      %v1271 = vand.u32 %v1269, 31
      %v1272 = vsub.s32 32, %v1271
      %v1273 = vshrl.u32 683565275, %v1272
      %v1274 = vshll.u32 683565275, %v1271
      %v1275 = vshrl.u32 2475754826, %v1272
      %v1276 = vor.u32 %v1274, %v1275
      %v1277 = vshll.u32 2475754826, %v1271
      %v1278 = vshrl.u32 2131351028, %v1272
      %v1279 = vor.u32 %v1277, %v1278
      %v1280 = vshll.u32 2131351028, %v1271
      %v1281 = vshrl.u32 2102212464, %v1272
      %v1282 = vor.u32 %v1280, %v1281
      %v1283 = vshll.u32 2102212464, %v1271
      %v1284 = vshrl.u32 920167782, %v1272
      %v1285 = vor.u32 %v1283, %v1284
      %v1286 = vshll.u32 920167782, %v1271
      %v1287 = vshrl.u32 1326507024, %v1272
      %v1288 = vor.u32 %v1286, %v1287
      %vm1289 = vcmp.lt.s32.totalorder %v1270, 1
      %vm1290 = vcmp.lt.s32.totalorder %v1270, 2
      %vm1291 = vcmp.lt.s32.totalorder %v1270, 3
      %vm1292 = vcmp.lt.s32.totalorder %v1270, 4
      %v1293 = vsel %vm1289, %v1273, %v1276
      %v1294 = vsel %vm1292, %v1282, 2102212464
      %v1295 = vsel %vm1291, %v1279, %v1294
      %v1296 = vsel %vm1290, %v1293, %v1295
      %v1297 = vsel %vm1289, %v1276, %v1279
      %v1298 = vsel %vm1292, %v1285, 920167782
      %v1299 = vsel %vm1291, %v1282, %v1298
      %v1300 = vsel %vm1290, %v1297, %v1299
      %v1301 = vsel %vm1289, %v1279, %v1282
      %v1302 = vsel %vm1292, %v1288, 1326507024
      %v1303 = vsel %vm1291, %v1285, %v1302
      %v1304 = vsel %vm1290, %v1301, %v1303
      %v1305 = vshll.u32 %v1265, 8
      %v1306 = vmul.u32.u64.compose %v1305, %v1304
      %v1307 = vextract.low.u32 %v1306
      %v1308 = vextract.high.u32 %v1306
      %v1309 = vmul.u32.u64.compose %v1305, %v1300
      %v1310 = vextract.low.u32 %v1309
      %v1311 = vextract.high.u32 %v1309
      %v1312 = vmul.u32 %v1305, %v1296
      %v1313 = vadd.s32 %v1308, %v1310
      %vm1314 = vc.u32 %v1308, %v1310
      %v1315 = vadd.s32 %v1311, 1
      %v1316 = vsel %vm1314, %v1315, %v1311
      %v1317 = vadd.s32 %v1312, %v1316
      %v1318 = vadd.s32 %v1317, 536870912
      %v1319 = vshrl.u32 %v1318, 30
      %v1320 = vshll.u32 %v1319, 30
      %v1321 = vsub.s32 %v1317, %v1320
      %vm1322 = vcmp.lt.s32.totalorder %v1321, 0
      %v1323 = vsub.s32 0, %v1321
      %v1324 = vsel %vm1322, %v1323, %v1321
      %v1325 = vclz %v1324
      %v1326 = vsub.s32 %v1325, 2
      %vm1327 = vcmp.gt.s32.totalorder 0, %v1326
      %v1328 = vsel %vm1327, 0, %v1326
      %v1329 = vsub.s32 32, %v1328
      %v1330 = vshll.u32 %v1321, %v1328
      %v1331 = vshrl.u32 %v1313, %v1329
      %v1332 = vor.u32 %v1330, %v1331
      %v1333 = vsub.s32 4294967266, %v1328
      %v1334 = vadd.s32 %v1333, 127
      %v1335 = vshll.u32 %v1334, 23
      %v1336 = vor.u32 4788187, %v1335
      %v1337 = vand.u32 2147483647, %v1336
      %v1339 = vcvt.s32.f32 %v1332
      %v1340 = vmul.f32 %v1339, %v1337
      %v1341 = vxor.u32 %v1340, 2147483648
      %v1342 = vsel %vm1259, %v1341, %v1340
      %v1343 = vsub.s32 4, %v1319
      %v1344 = vsel %vm1259, %v1343, %v1319
      %v1345 = vsel %vm1258, %v708, %v1342
      %v1346 = vsel %vm1258, 0, %v1344
      %v1347 = vcosq.f32.pop %v1345
      %v1348 = vsinq.f32.pop %v1345
      %vm1349 = vweird.f32 %v708
      %v1350 = vadd.s32 %v1346, 3
      %v1351 = vand.u32 %v1350, 3
      %vm1352 = vcmp.lt.s32.totalorder %v1351, 2
      %vm1353 = vcmp.eq.s32.totalorder %v1351, 0
      %v1354 = vxor.u32 %v1348, 2147483648
      %v1355 = vsel %vm1353, %v1347, %v1354
      %vm1356 = vcmp.eq.s32.totalorder %v1351, 2
      %v1357 = vxor.u32 %v1347, 2147483648
      %v1358 = vsel %vm1356, %v1357, %v1348
      %v1359 = vsel %vm1352, %v1355, %v1358
      %v1360 = vsel %vm1349, nan, %v1359
      %v1361 = vand.u32 2147483647, %v709
      %vm1362 = vcmp.le.f32.partialorder %v1361, 0.7853982
      %vm1363 = vcmp.lt.s32.totalorder %v709, 0
      %v1364 = vand.u32 %v709, 2139095040
      %v1365 = vshrl.u32 %v1364, 23
      %v1366 = vsub.s32 %v1365, 127
      %v1367 = vand.u32 2147483647, %v709
      %v1368 = vand.u32 %v1367, 8388607
      %v1369 = vor.u32 %v1368, 8388608
      %v1370 = vsub.s32 0, %v1369
      %v1371 = vadd.s32 %v1366, 1
      %vm1372 = vcmp.gt.s32.totalorder %v1371, 0
      %v1373 = vsel %vm1372, %v1371, 0
      %v1374 = vshrl.u32 %v1373, 5
      %v1375 = vand.u32 %v1373, 31
      %v1376 = vsub.s32 32, %v1375
      %v1377 = vshrl.u32 683565275, %v1376
      %v1378 = vshll.u32 683565275, %v1375
      %v1379 = vshrl.u32 2475754826, %v1376
      %v1380 = vor.u32 %v1378, %v1379
      %v1381 = vshll.u32 2475754826, %v1375
      %v1382 = vshrl.u32 2131351028, %v1376
      %v1383 = vor.u32 %v1381, %v1382
      %v1384 = vshll.u32 2131351028, %v1375
      %v1385 = vshrl.u32 2102212464, %v1376
      %v1386 = vor.u32 %v1384, %v1385
      %v1387 = vshll.u32 2102212464, %v1375
      %v1388 = vshrl.u32 920167782, %v1376
      %v1389 = vor.u32 %v1387, %v1388
      %v1390 = vshll.u32 920167782, %v1375
      %v1391 = vshrl.u32 1326507024, %v1376
      %v1392 = vor.u32 %v1390, %v1391
      %vm1393 = vcmp.lt.s32.totalorder %v1374, 1
      %vm1394 = vcmp.lt.s32.totalorder %v1374, 2
      %vm1395 = vcmp.lt.s32.totalorder %v1374, 3
      %vm1396 = vcmp.lt.s32.totalorder %v1374, 4
      %v1397 = vsel %vm1393, %v1377, %v1380
      %v1398 = vsel %vm1396, %v1386, 2102212464
      %v1399 = vsel %vm1395, %v1383, %v1398
      %v1400 = vsel %vm1394, %v1397, %v1399
      %v1401 = vsel %vm1393, %v1380, %v1383
      %v1402 = vsel %vm1396, %v1389, 920167782
      %v1403 = vsel %vm1395, %v1386, %v1402
      %v1404 = vsel %vm1394, %v1401, %v1403
      %v1405 = vsel %vm1393, %v1383, %v1386
      %v1406 = vsel %vm1396, %v1392, 1326507024
      %v1407 = vsel %vm1395, %v1389, %v1406
      %v1408 = vsel %vm1394, %v1405, %v1407
      %v1409 = vshll.u32 %v1369, 8
      %v1410 = vmul.u32.u64.compose %v1409, %v1408
      %v1411 = vextract.low.u32 %v1410
      %v1412 = vextract.high.u32 %v1410
      %v1413 = vmul.u32.u64.compose %v1409, %v1404
      %v1414 = vextract.low.u32 %v1413
      %v1415 = vextract.high.u32 %v1413
      %v1416 = vmul.u32 %v1409, %v1400
      %v1417 = vadd.s32 %v1412, %v1414
      %vm1418 = vc.u32 %v1412, %v1414
      %v1419 = vadd.s32 %v1415, 1
      %v1420 = vsel %vm1418, %v1419, %v1415
      %v1421 = vadd.s32 %v1416, %v1420
      %v1422 = vadd.s32 %v1421, 536870912
      %v1423 = vshrl.u32 %v1422, 30
      %v1424 = vshll.u32 %v1423, 30
      %v1425 = vsub.s32 %v1421, %v1424
      %vm1426 = vcmp.lt.s32.totalorder %v1425, 0
      %v1427 = vsub.s32 0, %v1425
      %v1428 = vsel %vm1426, %v1427, %v1425
      %v1429 = vclz %v1428
      %v1430 = vsub.s32 %v1429, 2
      %vm1431 = vcmp.gt.s32.totalorder 0, %v1430
      %v1432 = vsel %vm1431, 0, %v1430
      %v1433 = vsub.s32 32, %v1432
      %v1434 = vshll.u32 %v1425, %v1432
      %v1435 = vshrl.u32 %v1417, %v1433
      %v1436 = vor.u32 %v1434, %v1435
      %v1437 = vsub.s32 4294967266, %v1432
      %v1438 = vadd.s32 %v1437, 127
      %v1439 = vshll.u32 %v1438, 23
      %v1440 = vor.u32 4788187, %v1439
      %v1441 = vand.u32 2147483647, %v1440
      %v1443 = vcvt.s32.f32 %v1436
      %v1444 = vmul.f32 %v1443, %v1441
      %v1445 = vxor.u32 %v1444, 2147483648
      %v1446 = vsel %vm1363, %v1445, %v1444
      %v1447 = vsub.s32 4, %v1423
      %v1448 = vsel %vm1363, %v1447, %v1423
      %v1449 = vsel %vm1362, %v709, %v1446
      %v1450 = vsel %vm1362, 0, %v1448
      %v1451 = vcosq.f32.pop %v1449
      %v1452 = vsinq.f32.pop %v1449
      %vm1453 = vweird.f32 %v709
      %v1454 = vadd.s32 %v1450, 3
      %v1455 = vand.u32 %v1454, 3
      %vm1456 = vcmp.lt.s32.totalorder %v1455, 2
      %vm1457 = vcmp.eq.s32.totalorder %v1455, 0
      %v1458 = vxor.u32 %v1452, 2147483648
      %v1459 = vsel %vm1457, %v1451, %v1458
      %vm1460 = vcmp.eq.s32.totalorder %v1455, 2
      %v1461 = vxor.u32 %v1451, 2147483648
      %v1462 = vsel %vm1460, %v1461, %v1452
      %v1463 = vsel %vm1456, %v1459, %v1462
      %v1464 = vsel %vm1453, nan, %v1463
      %v1465 = vand.u32 2147483647, %v710
      %vm1466 = vcmp.le.f32.partialorder %v1465, 0.7853982
      %vm1467 = vcmp.lt.s32.totalorder %v710, 0
      %v1468 = vand.u32 %v710, 2139095040
      %v1469 = vshrl.u32 %v1468, 23
      %v1470 = vsub.s32 %v1469, 127
      %v1471 = vand.u32 2147483647, %v710
      %v1472 = vand.u32 %v1471, 8388607
      %v1473 = vor.u32 %v1472, 8388608
      %v1474 = vsub.s32 0, %v1473
      %v1475 = vadd.s32 %v1470, 1
      %vm1476 = vcmp.gt.s32.totalorder %v1475, 0
      %v1477 = vsel %vm1476, %v1475, 0
      %v1478 = vshrl.u32 %v1477, 5
      %v1479 = vand.u32 %v1477, 31
      %v1480 = vsub.s32 32, %v1479
      %v1481 = vshrl.u32 683565275, %v1480
      %v1482 = vshll.u32 683565275, %v1479
      %v1483 = vshrl.u32 2475754826, %v1480
      %v1484 = vor.u32 %v1482, %v1483
      %v1485 = vshll.u32 2475754826, %v1479
      %v1486 = vshrl.u32 2131351028, %v1480
      %v1487 = vor.u32 %v1485, %v1486
      %v1488 = vshll.u32 2131351028, %v1479
      %v1489 = vshrl.u32 2102212464, %v1480
      %v1490 = vor.u32 %v1488, %v1489
      %v1491 = vshll.u32 2102212464, %v1479
      %v1492 = vshrl.u32 920167782, %v1480
      %v1493 = vor.u32 %v1491, %v1492
      %v1494 = vshll.u32 920167782, %v1479
      %v1495 = vshrl.u32 1326507024, %v1480
      %v1496 = vor.u32 %v1494, %v1495
      %vm1497 = vcmp.lt.s32.totalorder %v1478, 1
      %vm1498 = vcmp.lt.s32.totalorder %v1478, 2
      %vm1499 = vcmp.lt.s32.totalorder %v1478, 3
      %vm1500 = vcmp.lt.s32.totalorder %v1478, 4
      %v1501 = vsel %vm1497, %v1481, %v1484
      %v1502 = vsel %vm1500, %v1490, 2102212464
      %v1503 = vsel %vm1499, %v1487, %v1502
      %v1504 = vsel %vm1498, %v1501, %v1503
      %v1505 = vsel %vm1497, %v1484, %v1487
      %v1506 = vsel %vm1500, %v1493, 920167782
      %v1507 = vsel %vm1499, %v1490, %v1506
      %v1508 = vsel %vm1498, %v1505, %v1507
      %v1509 = vsel %vm1497, %v1487, %v1490
      %v1510 = vsel %vm1500, %v1496, 1326507024
      %v1511 = vsel %vm1499, %v1493, %v1510
      %v1512 = vsel %vm1498, %v1509, %v1511
      %v1513 = vshll.u32 %v1473, 8
      %v1514 = vmul.u32.u64.compose %v1513, %v1512
      %v1515 = vextract.low.u32 %v1514
      %v1516 = vextract.high.u32 %v1514
      %v1517 = vmul.u32.u64.compose %v1513, %v1508
      %v1518 = vextract.low.u32 %v1517
      %v1519 = vextract.high.u32 %v1517
      %v1520 = vmul.u32 %v1513, %v1504
      %v1521 = vadd.s32 %v1516, %v1518
      %vm1522 = vc.u32 %v1516, %v1518
      %v1523 = vadd.s32 %v1519, 1
      %v1524 = vsel %vm1522, %v1523, %v1519
      %v1525 = vadd.s32 %v1520, %v1524
      %v1526 = vadd.s32 %v1525, 536870912
      %v1527 = vshrl.u32 %v1526, 30
      %v1528 = vshll.u32 %v1527, 30
      %v1529 = vsub.s32 %v1525, %v1528
      %vm1530 = vcmp.lt.s32.totalorder %v1529, 0
      %v1531 = vsub.s32 0, %v1529
      %v1532 = vsel %vm1530, %v1531, %v1529
      %v1533 = vclz %v1532
      %v1534 = vsub.s32 %v1533, 2
      %vm1535 = vcmp.gt.s32.totalorder 0, %v1534
      %v1536 = vsel %vm1535, 0, %v1534
      %v1537 = vsub.s32 32, %v1536
      %v1538 = vshll.u32 %v1529, %v1536
      %v1539 = vshrl.u32 %v1521, %v1537
      %v1540 = vor.u32 %v1538, %v1539
      %v1541 = vsub.s32 4294967266, %v1536
      %v1542 = vadd.s32 %v1541, 127
      %v1543 = vshll.u32 %v1542, 23
      %v1544 = vor.u32 4788187, %v1543
      %v1545 = vand.u32 2147483647, %v1544
      %v1547 = vcvt.s32.f32 %v1540
      %v1548 = vmul.f32 %v1547, %v1545
      %v1549 = vxor.u32 %v1548, 2147483648
      %v1550 = vsel %vm1467, %v1549, %v1548
      %v1551 = vsub.s32 4, %v1527
      %v1552 = vsel %vm1467, %v1551, %v1527
      %v1553 = vsel %vm1466, %v710, %v1550
      %v1554 = vsel %vm1466, 0, %v1552
      %v1555 = vcosq.f32.pop %v1553
      %v1556 = vsinq.f32.pop %v1553
      %vm1557 = vweird.f32 %v710
      %v1558 = vadd.s32 %v1554, 3
      %v1559 = vand.u32 %v1558, 3
      %vm1560 = vcmp.lt.s32.totalorder %v1559, 2
      %vm1561 = vcmp.eq.s32.totalorder %v1559, 0
      %v1562 = vxor.u32 %v1556, 2147483648
      %v1563 = vsel %vm1561, %v1555, %v1562
      %vm1564 = vcmp.eq.s32.totalorder %v1559, 2
      %v1565 = vxor.u32 %v1555, 2147483648
      %v1566 = vsel %vm1564, %v1565, %v1556
      %v1567 = vsel %vm1560, %v1563, %v1566
      %v1568 = vsel %vm1557, nan, %v1567
      %v1569 = vand.u32 2147483647, %v711
      %vm1570 = vcmp.le.f32.partialorder %v1569, 0.7853982
      %vm1571 = vcmp.lt.s32.totalorder %v711, 0
      %v1572 = vand.u32 %v711, 2139095040
      %v1573 = vshrl.u32 %v1572, 23
      %v1574 = vsub.s32 %v1573, 127
      %v1575 = vand.u32 2147483647, %v711
      %v1576 = vand.u32 %v1575, 8388607
      %v1577 = vor.u32 %v1576, 8388608
      %v1578 = vsub.s32 0, %v1577
      %v1579 = vadd.s32 %v1574, 1
      %vm1580 = vcmp.gt.s32.totalorder %v1579, 0
      %v1581 = vsel %vm1580, %v1579, 0
      %v1582 = vshrl.u32 %v1581, 5
      %v1583 = vand.u32 %v1581, 31
      %v1584 = vsub.s32 32, %v1583
      %v1585 = vshrl.u32 683565275, %v1584
      %v1586 = vshll.u32 683565275, %v1583
      %v1587 = vshrl.u32 2475754826, %v1584
      %v1588 = vor.u32 %v1586, %v1587
      %v1589 = vshll.u32 2475754826, %v1583
      %v1590 = vshrl.u32 2131351028, %v1584
      %v1591 = vor.u32 %v1589, %v1590
      %v1592 = vshll.u32 2131351028, %v1583
      %v1593 = vshrl.u32 2102212464, %v1584
      %v1594 = vor.u32 %v1592, %v1593
      %v1595 = vshll.u32 2102212464, %v1583
      %v1596 = vshrl.u32 920167782, %v1584
      %v1597 = vor.u32 %v1595, %v1596
      %v1598 = vshll.u32 920167782, %v1583
      %v1599 = vshrl.u32 1326507024, %v1584
      %v1600 = vor.u32 %v1598, %v1599
      %vm1601 = vcmp.lt.s32.totalorder %v1582, 1
      %vm1602 = vcmp.lt.s32.totalorder %v1582, 2
      %vm1603 = vcmp.lt.s32.totalorder %v1582, 3
      %vm1604 = vcmp.lt.s32.totalorder %v1582, 4
      %v1605 = vsel %vm1601, %v1585, %v1588
      %v1606 = vsel %vm1604, %v1594, 2102212464
      %v1607 = vsel %vm1603, %v1591, %v1606
      %v1608 = vsel %vm1602, %v1605, %v1607
      %v1609 = vsel %vm1601, %v1588, %v1591
      %v1610 = vsel %vm1604, %v1597, 920167782
      %v1611 = vsel %vm1603, %v1594, %v1610
      %v1612 = vsel %vm1602, %v1609, %v1611
      %v1613 = vsel %vm1601, %v1591, %v1594
      %v1614 = vsel %vm1604, %v1600, 1326507024
      %v1615 = vsel %vm1603, %v1597, %v1614
      %v1616 = vsel %vm1602, %v1613, %v1615
      %v1617 = vshll.u32 %v1577, 8
      %v1618 = vmul.u32.u64.compose %v1617, %v1616
      %v1619 = vextract.low.u32 %v1618
      %v1620 = vextract.high.u32 %v1618
      %v1621 = vmul.u32.u64.compose %v1617, %v1612
      %v1622 = vextract.low.u32 %v1621
      %v1623 = vextract.high.u32 %v1621
      %v1624 = vmul.u32 %v1617, %v1608
      %v1625 = vadd.s32 %v1620, %v1622
      %vm1626 = vc.u32 %v1620, %v1622
      %v1627 = vadd.s32 %v1623, 1
      %v1628 = vsel %vm1626, %v1627, %v1623
      %v1629 = vadd.s32 %v1624, %v1628
      %v1630 = vadd.s32 %v1629, 536870912
      %v1631 = vshrl.u32 %v1630, 30
      %v1632 = vshll.u32 %v1631, 30
      %v1633 = vsub.s32 %v1629, %v1632
      %vm1634 = vcmp.lt.s32.totalorder %v1633, 0
      %v1635 = vsub.s32 0, %v1633
      %v1636 = vsel %vm1634, %v1635, %v1633
      %v1637 = vclz %v1636
      %v1638 = vsub.s32 %v1637, 2
      %vm1639 = vcmp.gt.s32.totalorder 0, %v1638
      %v1640 = vsel %vm1639, 0, %v1638
      %v1641 = vsub.s32 32, %v1640
      %v1642 = vshll.u32 %v1633, %v1640
      %v1643 = vshrl.u32 %v1625, %v1641
      %v1644 = vor.u32 %v1642, %v1643
      %v1645 = vsub.s32 4294967266, %v1640
      %v1646 = vadd.s32 %v1645, 127
      %v1647 = vshll.u32 %v1646, 23
      %v1648 = vor.u32 4788187, %v1647
      %v1649 = vand.u32 2147483647, %v1648
      %v1651 = vcvt.s32.f32 %v1644
      %v1652 = vmul.f32 %v1651, %v1649
      %v1653 = vxor.u32 %v1652, 2147483648
      %v1654 = vsel %vm1571, %v1653, %v1652
      %v1655 = vsub.s32 4, %v1631
      %v1656 = vsel %vm1571, %v1655, %v1631
      %v1657 = vsel %vm1570, %v711, %v1654
      %v1658 = vsel %vm1570, 0, %v1656
      %v1659 = vcosq.f32.pop %v1657
      %v1660 = vsinq.f32.pop %v1657
      %vm1661 = vweird.f32 %v711
      %v1662 = vadd.s32 %v1658, 3
      %v1663 = vand.u32 %v1662, 3
      %vm1664 = vcmp.lt.s32.totalorder %v1663, 2
      %vm1665 = vcmp.eq.s32.totalorder %v1663, 0
      %v1666 = vxor.u32 %v1660, 2147483648
      %v1667 = vsel %vm1665, %v1659, %v1666
      %vm1668 = vcmp.eq.s32.totalorder %v1663, 2
      %v1669 = vxor.u32 %v1659, 2147483648
      %v1670 = vsel %vm1668, %v1669, %v1660
      %v1671 = vsel %vm1664, %v1667, %v1670
      %v1672 = vsel %vm1661, nan, %v1671
      %v1673 = vand.u32 2147483647, %v712
      %vm1674 = vcmp.le.f32.partialorder %v1673, 0.7853982
      %vm1675 = vcmp.lt.s32.totalorder %v712, 0
      %v1676 = vand.u32 %v712, 2139095040
      %v1677 = vshrl.u32 %v1676, 23
      %v1678 = vsub.s32 %v1677, 127
      %v1679 = vand.u32 2147483647, %v712
      %v1680 = vand.u32 %v1679, 8388607
      %v1681 = vor.u32 %v1680, 8388608
      %v1682 = vsub.s32 0, %v1681
      %v1683 = vadd.s32 %v1678, 1
      %vm1684 = vcmp.gt.s32.totalorder %v1683, 0
      %v1685 = vsel %vm1684, %v1683, 0
      %v1686 = vshrl.u32 %v1685, 5
      %v1687 = vand.u32 %v1685, 31
      %v1688 = vsub.s32 32, %v1687
      %v1689 = vshrl.u32 683565275, %v1688
      %v1690 = vshll.u32 683565275, %v1687
      %v1691 = vshrl.u32 2475754826, %v1688
      %v1692 = vor.u32 %v1690, %v1691
      %v1693 = vshll.u32 2475754826, %v1687
      %v1694 = vshrl.u32 2131351028, %v1688
      %v1695 = vor.u32 %v1693, %v1694
      %v1696 = vshll.u32 2131351028, %v1687
      %v1697 = vshrl.u32 2102212464, %v1688
      %v1698 = vor.u32 %v1696, %v1697
      %v1699 = vshll.u32 2102212464, %v1687
      %v1700 = vshrl.u32 920167782, %v1688
      %v1701 = vor.u32 %v1699, %v1700
      %v1702 = vshll.u32 920167782, %v1687
      %v1703 = vshrl.u32 1326507024, %v1688
      %v1704 = vor.u32 %v1702, %v1703
      %vm1705 = vcmp.lt.s32.totalorder %v1686, 1
      %vm1706 = vcmp.lt.s32.totalorder %v1686, 2
      %vm1707 = vcmp.lt.s32.totalorder %v1686, 3
      %vm1708 = vcmp.lt.s32.totalorder %v1686, 4
      %v1709 = vsel %vm1705, %v1689, %v1692
      %v1710 = vsel %vm1708, %v1698, 2102212464
      %v1711 = vsel %vm1707, %v1695, %v1710
      %v1712 = vsel %vm1706, %v1709, %v1711
      %v1713 = vsel %vm1705, %v1692, %v1695
      %v1714 = vsel %vm1708, %v1701, 920167782
      %v1715 = vsel %vm1707, %v1698, %v1714
      %v1716 = vsel %vm1706, %v1713, %v1715
      %v1717 = vsel %vm1705, %v1695, %v1698
      %v1718 = vsel %vm1708, %v1704, 1326507024
      %v1719 = vsel %vm1707, %v1701, %v1718
      %v1720 = vsel %vm1706, %v1717, %v1719
      %v1721 = vshll.u32 %v1681, 8
      %v1722 = vmul.u32.u64.compose %v1721, %v1720
      %v1723 = vextract.low.u32 %v1722
      %v1724 = vextract.high.u32 %v1722
      %v1725 = vmul.u32.u64.compose %v1721, %v1716
      %v1726 = vextract.low.u32 %v1725
      %v1727 = vextract.high.u32 %v1725
      %v1728 = vmul.u32 %v1721, %v1712
      %v1729 = vadd.s32 %v1724, %v1726
      %vm1730 = vc.u32 %v1724, %v1726
      %v1731 = vadd.s32 %v1727, 1
      %v1732 = vsel %vm1730, %v1731, %v1727
      %v1733 = vadd.s32 %v1728, %v1732
      %v1734 = vadd.s32 %v1733, 536870912
      %v1735 = vshrl.u32 %v1734, 30
      %v1736 = vshll.u32 %v1735, 30
      %v1737 = vsub.s32 %v1733, %v1736
      %vm1738 = vcmp.lt.s32.totalorder %v1737, 0
      %v1739 = vsub.s32 0, %v1737
      %v1740 = vsel %vm1738, %v1739, %v1737
      %v1741 = vclz %v1740
      %v1742 = vsub.s32 %v1741, 2
      %vm1743 = vcmp.gt.s32.totalorder 0, %v1742
      %v1744 = vsel %vm1743, 0, %v1742
      %v1745 = vsub.s32 32, %v1744
      %v1746 = vshll.u32 %v1737, %v1744
      %v1747 = vshrl.u32 %v1729, %v1745
      %v1748 = vor.u32 %v1746, %v1747
      %v1749 = vsub.s32 4294967266, %v1744
      %v1750 = vadd.s32 %v1749, 127
      %v1751 = vshll.u32 %v1750, 23
      %v1752 = vor.u32 4788187, %v1751
      %v1753 = vand.u32 2147483647, %v1752
      %v1755 = vcvt.s32.f32 %v1748
      %v1756 = vmul.f32 %v1755, %v1753
      %v1757 = vxor.u32 %v1756, 2147483648
      %v1758 = vsel %vm1675, %v1757, %v1756
      %v1759 = vsub.s32 4, %v1735
      %v1760 = vsel %vm1675, %v1759, %v1735
      %v1761 = vsel %vm1674, %v712, %v1758
      %v1762 = vsel %vm1674, 0, %v1760
      %v1763 = vcosq.f32.pop %v1761
      %v1764 = vsinq.f32.pop %v1761
      %vm1765 = vweird.f32 %v712
      %v1766 = vadd.s32 %v1762, 3
      %v1767 = vand.u32 %v1766, 3
      %vm1768 = vcmp.lt.s32.totalorder %v1767, 2
      %vm1769 = vcmp.eq.s32.totalorder %v1767, 0
      %v1770 = vxor.u32 %v1764, 2147483648
      %v1771 = vsel %vm1769, %v1763, %v1770
      %vm1772 = vcmp.eq.s32.totalorder %v1767, 2
      %v1773 = vxor.u32 %v1763, 2147483648
      %v1774 = vsel %vm1772, %v1773, %v1764
      %v1775 = vsel %vm1768, %v1771, %v1774
      %v1776 = vsel %vm1765, nan, %v1775
      %v1777 = vand.u32 2147483647, %v713
      %vm1778 = vcmp.le.f32.partialorder %v1777, 0.7853982
      %vm1779 = vcmp.lt.s32.totalorder %v713, 0
      %v1780 = vand.u32 %v713, 2139095040
      %v1781 = vshrl.u32 %v1780, 23
      %v1782 = vsub.s32 %v1781, 127
      %v1783 = vand.u32 2147483647, %v713
      %v1784 = vand.u32 %v1783, 8388607
      %v1785 = vor.u32 %v1784, 8388608
      %v1786 = vsub.s32 0, %v1785
      %v1787 = vadd.s32 %v1782, 1
      %vm1788 = vcmp.gt.s32.totalorder %v1787, 0
      %v1789 = vsel %vm1788, %v1787, 0
      %v1790 = vshrl.u32 %v1789, 5
      %v1791 = vand.u32 %v1789, 31
      %v1792 = vsub.s32 32, %v1791
      %v1793 = vshrl.u32 683565275, %v1792
      %v1794 = vshll.u32 683565275, %v1791
      %v1795 = vshrl.u32 2475754826, %v1792
      %v1796 = vor.u32 %v1794, %v1795
      %v1797 = vshll.u32 2475754826, %v1791
      %v1798 = vshrl.u32 2131351028, %v1792
      %v1799 = vor.u32 %v1797, %v1798
      %v1800 = vshll.u32 2131351028, %v1791
      %v1801 = vshrl.u32 2102212464, %v1792
      %v1802 = vor.u32 %v1800, %v1801
      %v1803 = vshll.u32 2102212464, %v1791
      %v1804 = vshrl.u32 920167782, %v1792
      %v1805 = vor.u32 %v1803, %v1804
      %v1806 = vshll.u32 920167782, %v1791
      %v1807 = vshrl.u32 1326507024, %v1792
      %v1808 = vor.u32 %v1806, %v1807
      %vm1809 = vcmp.lt.s32.totalorder %v1790, 1
      %vm1810 = vcmp.lt.s32.totalorder %v1790, 2
      %vm1811 = vcmp.lt.s32.totalorder %v1790, 3
      %vm1812 = vcmp.lt.s32.totalorder %v1790, 4
      %v1813 = vsel %vm1809, %v1793, %v1796
      %v1814 = vsel %vm1812, %v1802, 2102212464
      %v1815 = vsel %vm1811, %v1799, %v1814
      %v1816 = vsel %vm1810, %v1813, %v1815
      %v1817 = vsel %vm1809, %v1796, %v1799
      %v1818 = vsel %vm1812, %v1805, 920167782
      %v1819 = vsel %vm1811, %v1802, %v1818
      %v1820 = vsel %vm1810, %v1817, %v1819
      %v1821 = vsel %vm1809, %v1799, %v1802
      %v1822 = vsel %vm1812, %v1808, 1326507024
      %v1823 = vsel %vm1811, %v1805, %v1822
      %v1824 = vsel %vm1810, %v1821, %v1823
      %v1825 = vshll.u32 %v1785, 8
      %v1826 = vmul.u32.u64.compose %v1825, %v1824
      %v1827 = vextract.low.u32 %v1826
      %v1828 = vextract.high.u32 %v1826
      %v1829 = vmul.u32.u64.compose %v1825, %v1820
      %v1830 = vextract.low.u32 %v1829
      %v1831 = vextract.high.u32 %v1829
      %v1832 = vmul.u32 %v1825, %v1816
      %v1833 = vadd.s32 %v1828, %v1830
      %vm1834 = vc.u32 %v1828, %v1830
      %v1835 = vadd.s32 %v1831, 1
      %v1836 = vsel %vm1834, %v1835, %v1831
      %v1837 = vadd.s32 %v1832, %v1836
      %v1838 = vadd.s32 %v1837, 536870912
      %v1839 = vshrl.u32 %v1838, 30
      %v1840 = vshll.u32 %v1839, 30
      %v1841 = vsub.s32 %v1837, %v1840
      %vm1842 = vcmp.lt.s32.totalorder %v1841, 0
      %v1843 = vsub.s32 0, %v1841
      %v1844 = vsel %vm1842, %v1843, %v1841
      %v1845 = vclz %v1844
      %v1846 = vsub.s32 %v1845, 2
      %vm1847 = vcmp.gt.s32.totalorder 0, %v1846
      %v1848 = vsel %vm1847, 0, %v1846
      %v1849 = vsub.s32 32, %v1848
      %v1850 = vshll.u32 %v1841, %v1848
      %v1851 = vshrl.u32 %v1833, %v1849
      %v1852 = vor.u32 %v1850, %v1851
      %v1853 = vsub.s32 4294967266, %v1848
      %v1854 = vadd.s32 %v1853, 127
      %v1855 = vshll.u32 %v1854, 23
      %v1856 = vor.u32 4788187, %v1855
      %v1857 = vand.u32 2147483647, %v1856
      %v1859 = vcvt.s32.f32 %v1852
      %v1860 = vmul.f32 %v1859, %v1857
      %v1861 = vxor.u32 %v1860, 2147483648
      %v1862 = vsel %vm1779, %v1861, %v1860
      %v1863 = vsub.s32 4, %v1839
      %v1864 = vsel %vm1779, %v1863, %v1839
      %v1865 = vsel %vm1778, %v713, %v1862
      %v1866 = vsel %vm1778, 0, %v1864
      %v1867 = vcosq.f32.pop %v1865
      %v1868 = vsinq.f32.pop %v1865
      %vm1869 = vweird.f32 %v713
      %v1870 = vadd.s32 %v1866, 3
      %v1871 = vand.u32 %v1870, 3
      %vm1872 = vcmp.lt.s32.totalorder %v1871, 2
      %vm1873 = vcmp.eq.s32.totalorder %v1871, 0
      %v1874 = vxor.u32 %v1868, 2147483648
      %v1875 = vsel %vm1873, %v1867, %v1874
      %vm1876 = vcmp.eq.s32.totalorder %v1871, 2
      %v1877 = vxor.u32 %v1867, 2147483648
      %v1878 = vsel %vm1876, %v1877, %v1868
      %v1879 = vsel %vm1872, %v1875, %v1878
      %v1880 = vsel %vm1869, nan, %v1879
      %v1881 = vand.u32 2147483647, %v714
      %vm1882 = vcmp.le.f32.partialorder %v1881, 0.7853982
      %vm1883 = vcmp.lt.s32.totalorder %v714, 0
      %v1884 = vand.u32 %v714, 2139095040
      %v1885 = vshrl.u32 %v1884, 23
      %v1886 = vsub.s32 %v1885, 127
      %v1887 = vand.u32 2147483647, %v714
      %v1888 = vand.u32 %v1887, 8388607
      %v1889 = vor.u32 %v1888, 8388608
      %v1890 = vsub.s32 0, %v1889
      %v1891 = vadd.s32 %v1886, 1
      %vm1892 = vcmp.gt.s32.totalorder %v1891, 0
      %v1893 = vsel %vm1892, %v1891, 0
      %v1894 = vshrl.u32 %v1893, 5
      %v1895 = vand.u32 %v1893, 31
      %v1896 = vsub.s32 32, %v1895
      %v1897 = vshrl.u32 683565275, %v1896
      %v1898 = vshll.u32 683565275, %v1895
      %v1899 = vshrl.u32 2475754826, %v1896
      %v1900 = vor.u32 %v1898, %v1899
      %v1901 = vshll.u32 2475754826, %v1895
      %v1902 = vshrl.u32 2131351028, %v1896
      %v1903 = vor.u32 %v1901, %v1902
      %v1904 = vshll.u32 2131351028, %v1895
      %v1905 = vshrl.u32 2102212464, %v1896
      %v1906 = vor.u32 %v1904, %v1905
      %v1907 = vshll.u32 2102212464, %v1895
      %v1908 = vshrl.u32 920167782, %v1896
      %v1909 = vor.u32 %v1907, %v1908
      %v1910 = vshll.u32 920167782, %v1895
      %v1911 = vshrl.u32 1326507024, %v1896
      %v1912 = vor.u32 %v1910, %v1911
      %vm1913 = vcmp.lt.s32.totalorder %v1894, 1
      %vm1914 = vcmp.lt.s32.totalorder %v1894, 2
      %vm1915 = vcmp.lt.s32.totalorder %v1894, 3
      %vm1916 = vcmp.lt.s32.totalorder %v1894, 4
      %v1917 = vsel %vm1913, %v1897, %v1900
      %v1918 = vsel %vm1916, %v1906, 2102212464
      %v1919 = vsel %vm1915, %v1903, %v1918
      %v1920 = vsel %vm1914, %v1917, %v1919
      %v1921 = vsel %vm1913, %v1900, %v1903
      %v1922 = vsel %vm1916, %v1909, 920167782
      %v1923 = vsel %vm1915, %v1906, %v1922
      %v1924 = vsel %vm1914, %v1921, %v1923
      %v1925 = vsel %vm1913, %v1903, %v1906
      %v1926 = vsel %vm1916, %v1912, 1326507024
      %v1927 = vsel %vm1915, %v1909, %v1926
      %v1928 = vsel %vm1914, %v1925, %v1927
      %v1929 = vshll.u32 %v1889, 8
      %v1930 = vmul.u32.u64.compose %v1929, %v1928
      %v1931 = vextract.low.u32 %v1930
      %v1932 = vextract.high.u32 %v1930
      %v1933 = vmul.u32.u64.compose %v1929, %v1924
      %v1934 = vextract.low.u32 %v1933
      %v1935 = vextract.high.u32 %v1933
      %v1936 = vmul.u32 %v1929, %v1920
      %v1937 = vadd.s32 %v1932, %v1934
      %vm1938 = vc.u32 %v1932, %v1934
      %v1939 = vadd.s32 %v1935, 1
      %v1940 = vsel %vm1938, %v1939, %v1935
      %v1941 = vadd.s32 %v1936, %v1940
      %v1942 = vadd.s32 %v1941, 536870912
      %v1943 = vshrl.u32 %v1942, 30
      %v1944 = vshll.u32 %v1943, 30
      %v1945 = vsub.s32 %v1941, %v1944
      %vm1946 = vcmp.lt.s32.totalorder %v1945, 0
      %v1947 = vsub.s32 0, %v1945
      %v1948 = vsel %vm1946, %v1947, %v1945
      %v1949 = vclz %v1948
      %v1950 = vsub.s32 %v1949, 2
      %vm1951 = vcmp.gt.s32.totalorder 0, %v1950
      %v1952 = vsel %vm1951, 0, %v1950
      %v1953 = vsub.s32 32, %v1952
      %v1954 = vshll.u32 %v1945, %v1952
      %v1955 = vshrl.u32 %v1937, %v1953
      %v1956 = vor.u32 %v1954, %v1955
      %v1957 = vsub.s32 4294967266, %v1952
      %v1958 = vadd.s32 %v1957, 127
      %v1959 = vshll.u32 %v1958, 23
      %v1960 = vor.u32 4788187, %v1959
      %v1961 = vand.u32 2147483647, %v1960
      %v1963 = vcvt.s32.f32 %v1956
      %v1964 = vmul.f32 %v1963, %v1961
      %v1965 = vxor.u32 %v1964, 2147483648
      %v1966 = vsel %vm1883, %v1965, %v1964
      %v1967 = vsub.s32 4, %v1943
      %v1968 = vsel %vm1883, %v1967, %v1943
      %v1969 = vsel %vm1882, %v714, %v1966
      %v1970 = vsel %vm1882, 0, %v1968
      %v1971 = vcosq.f32.pop %v1969
      %v1972 = vsinq.f32.pop %v1969
      %vm1973 = vweird.f32 %v714
      %v1974 = vadd.s32 %v1970, 3
      %v1975 = vand.u32 %v1974, 3
      %vm1976 = vcmp.lt.s32.totalorder %v1975, 2
      %vm1977 = vcmp.eq.s32.totalorder %v1975, 0
      %v1978 = vxor.u32 %v1972, 2147483648
      %v1979 = vsel %vm1977, %v1971, %v1978
      %vm1980 = vcmp.eq.s32.totalorder %v1975, 2
      %v1981 = vxor.u32 %v1971, 2147483648
      %v1982 = vsel %vm1980, %v1981, %v1972
      %v1983 = vsel %vm1976, %v1979, %v1982
      %v1984 = vsel %vm1973, nan, %v1983
      %v1985 = vand.u32 2147483647, %v715
      %vm1986 = vcmp.le.f32.partialorder %v1985, 0.7853982
      %vm1987 = vcmp.lt.s32.totalorder %v715, 0
      %v1988 = vand.u32 %v715, 2139095040
      %v1989 = vshrl.u32 %v1988, 23
      %v1990 = vsub.s32 %v1989, 127
      %v1991 = vand.u32 2147483647, %v715
      %v1992 = vand.u32 %v1991, 8388607
      %v1993 = vor.u32 %v1992, 8388608
      %v1994 = vsub.s32 0, %v1993
      %v1995 = vadd.s32 %v1990, 1
      %vm1996 = vcmp.gt.s32.totalorder %v1995, 0
      %v1997 = vsel %vm1996, %v1995, 0
      %v1998 = vshrl.u32 %v1997, 5
      %v1999 = vand.u32 %v1997, 31
      %v2000 = vsub.s32 32, %v1999
      %v2001 = vshrl.u32 683565275, %v2000
      %v2002 = vshll.u32 683565275, %v1999
      %v2003 = vshrl.u32 2475754826, %v2000
      %v2004 = vor.u32 %v2002, %v2003
      %v2005 = vshll.u32 2475754826, %v1999
      %v2006 = vshrl.u32 2131351028, %v2000
      %v2007 = vor.u32 %v2005, %v2006
      %v2008 = vshll.u32 2131351028, %v1999
      %v2009 = vshrl.u32 2102212464, %v2000
      %v2010 = vor.u32 %v2008, %v2009
      %v2011 = vshll.u32 2102212464, %v1999
      %v2012 = vshrl.u32 920167782, %v2000
      %v2013 = vor.u32 %v2011, %v2012
      %v2014 = vshll.u32 920167782, %v1999
      %v2015 = vshrl.u32 1326507024, %v2000
      %v2016 = vor.u32 %v2014, %v2015
      %vm2017 = vcmp.lt.s32.totalorder %v1998, 1
      %vm2018 = vcmp.lt.s32.totalorder %v1998, 2
      %vm2019 = vcmp.lt.s32.totalorder %v1998, 3
      %vm2020 = vcmp.lt.s32.totalorder %v1998, 4
      %v2021 = vsel %vm2017, %v2001, %v2004
      %v2022 = vsel %vm2020, %v2010, 2102212464
      %v2023 = vsel %vm2019, %v2007, %v2022
      %v2024 = vsel %vm2018, %v2021, %v2023
      %v2025 = vsel %vm2017, %v2004, %v2007
      %v2026 = vsel %vm2020, %v2013, 920167782
      %v2027 = vsel %vm2019, %v2010, %v2026
      %v2028 = vsel %vm2018, %v2025, %v2027
      %v2029 = vsel %vm2017, %v2007, %v2010
      %v2030 = vsel %vm2020, %v2016, 1326507024
      %v2031 = vsel %vm2019, %v2013, %v2030
      %v2032 = vsel %vm2018, %v2029, %v2031
      %v2033 = vshll.u32 %v1993, 8
      %v2034 = vmul.u32.u64.compose %v2033, %v2032
      %v2035 = vextract.low.u32 %v2034
      %v2036 = vextract.high.u32 %v2034
      %v2037 = vmul.u32.u64.compose %v2033, %v2028
      %v2038 = vextract.low.u32 %v2037
      %v2039 = vextract.high.u32 %v2037
      %v2040 = vmul.u32 %v2033, %v2024
      %v2041 = vadd.s32 %v2036, %v2038
      %vm2042 = vc.u32 %v2036, %v2038
      %v2043 = vadd.s32 %v2039, 1
      %v2044 = vsel %vm2042, %v2043, %v2039
      %v2045 = vadd.s32 %v2040, %v2044
      %v2046 = vadd.s32 %v2045, 536870912
      %v2047 = vshrl.u32 %v2046, 30
      %v2048 = vshll.u32 %v2047, 30
      %v2049 = vsub.s32 %v2045, %v2048
      %vm2050 = vcmp.lt.s32.totalorder %v2049, 0
      %v2051 = vsub.s32 0, %v2049
      %v2052 = vsel %vm2050, %v2051, %v2049
      %v2053 = vclz %v2052
      %v2054 = vsub.s32 %v2053, 2
      %vm2055 = vcmp.gt.s32.totalorder 0, %v2054
      %v2056 = vsel %vm2055, 0, %v2054
      %v2057 = vsub.s32 32, %v2056
      %v2058 = vshll.u32 %v2049, %v2056
      %v2059 = vshrl.u32 %v2041, %v2057
      %v2060 = vor.u32 %v2058, %v2059
      %v2061 = vsub.s32 4294967266, %v2056
      %v2062 = vadd.s32 %v2061, 127
      %v2063 = vshll.u32 %v2062, 23
      %v2064 = vor.u32 4788187, %v2063
      %v2065 = vand.u32 2147483647, %v2064
      %v2067 = vcvt.s32.f32 %v2060
      %v2068 = vmul.f32 %v2067, %v2065
      %v2069 = vxor.u32 %v2068, 2147483648
      %v2070 = vsel %vm1987, %v2069, %v2068
      %v2071 = vsub.s32 4, %v2047
      %v2072 = vsel %vm1987, %v2071, %v2047
      %v2073 = vsel %vm1986, %v715, %v2070
      %v2074 = vsel %vm1986, 0, %v2072
      %v2075 = vcosq.f32.pop %v2073
      %v2076 = vsinq.f32.pop %v2073
      %vm2077 = vweird.f32 %v715
      %v2078 = vadd.s32 %v2074, 3
      %v2079 = vand.u32 %v2078, 3
      %vm2080 = vcmp.lt.s32.totalorder %v2079, 2
      %vm2081 = vcmp.eq.s32.totalorder %v2079, 0
      %v2082 = vxor.u32 %v2076, 2147483648
      %v2083 = vsel %vm2081, %v2075, %v2082
      %vm2084 = vcmp.eq.s32.totalorder %v2079, 2
      %v2085 = vxor.u32 %v2075, 2147483648
      %v2086 = vsel %vm2084, %v2085, %v2076
      %v2087 = vsel %vm2080, %v2083, %v2086
      %v2088 = vsel %vm2077, nan, %v2087
      %v2089 = vand.u32 2147483647, %v716
      %vm2090 = vcmp.le.f32.partialorder %v2089, 0.7853982
      %vm2091 = vcmp.lt.s32.totalorder %v716, 0
      %v2092 = vand.u32 %v716, 2139095040
      %v2093 = vshrl.u32 %v2092, 23
      %v2094 = vsub.s32 %v2093, 127
      %v2095 = vand.u32 2147483647, %v716
      %v2096 = vand.u32 %v2095, 8388607
      %v2097 = vor.u32 %v2096, 8388608
      %v2098 = vsub.s32 0, %v2097
      %v2099 = vadd.s32 %v2094, 1
      %vm2100 = vcmp.gt.s32.totalorder %v2099, 0
      %v2101 = vsel %vm2100, %v2099, 0
      %v2102 = vshrl.u32 %v2101, 5
      %v2103 = vand.u32 %v2101, 31
      %v2104 = vsub.s32 32, %v2103
      %v2105 = vshrl.u32 683565275, %v2104
      %v2106 = vshll.u32 683565275, %v2103
      %v2107 = vshrl.u32 2475754826, %v2104
      %v2108 = vor.u32 %v2106, %v2107
      %v2109 = vshll.u32 2475754826, %v2103
      %v2110 = vshrl.u32 2131351028, %v2104
      %v2111 = vor.u32 %v2109, %v2110
      %v2112 = vshll.u32 2131351028, %v2103
      %v2113 = vshrl.u32 2102212464, %v2104
      %v2114 = vor.u32 %v2112, %v2113
      %v2115 = vshll.u32 2102212464, %v2103
      %v2116 = vshrl.u32 920167782, %v2104
      %v2117 = vor.u32 %v2115, %v2116
      %v2118 = vshll.u32 920167782, %v2103
      %v2119 = vshrl.u32 1326507024, %v2104
      %v2120 = vor.u32 %v2118, %v2119
      %vm2121 = vcmp.lt.s32.totalorder %v2102, 1
      %vm2122 = vcmp.lt.s32.totalorder %v2102, 2
      %vm2123 = vcmp.lt.s32.totalorder %v2102, 3
      %vm2124 = vcmp.lt.s32.totalorder %v2102, 4
      %v2125 = vsel %vm2121, %v2105, %v2108
      %v2126 = vsel %vm2124, %v2114, 2102212464
      %v2127 = vsel %vm2123, %v2111, %v2126
      %v2128 = vsel %vm2122, %v2125, %v2127
      %v2129 = vsel %vm2121, %v2108, %v2111
      %v2130 = vsel %vm2124, %v2117, 920167782
      %v2131 = vsel %vm2123, %v2114, %v2130
      %v2132 = vsel %vm2122, %v2129, %v2131
      %v2133 = vsel %vm2121, %v2111, %v2114
      %v2134 = vsel %vm2124, %v2120, 1326507024
      %v2135 = vsel %vm2123, %v2117, %v2134
      %v2136 = vsel %vm2122, %v2133, %v2135
      %v2137 = vshll.u32 %v2097, 8
      %v2138 = vmul.u32.u64.compose %v2137, %v2136
      %v2139 = vextract.low.u32 %v2138
      %v2140 = vextract.high.u32 %v2138
      %v2141 = vmul.u32.u64.compose %v2137, %v2132
      %v2142 = vextract.low.u32 %v2141
      %v2143 = vextract.high.u32 %v2141
      %v2144 = vmul.u32 %v2137, %v2128
      %v2145 = vadd.s32 %v2140, %v2142
      %vm2146 = vc.u32 %v2140, %v2142
      %v2147 = vadd.s32 %v2143, 1
      %v2148 = vsel %vm2146, %v2147, %v2143
      %v2149 = vadd.s32 %v2144, %v2148
      %v2150 = vadd.s32 %v2149, 536870912
      %v2151 = vshrl.u32 %v2150, 30
      %v2152 = vshll.u32 %v2151, 30
      %v2153 = vsub.s32 %v2149, %v2152
      %vm2154 = vcmp.lt.s32.totalorder %v2153, 0
      %v2155 = vsub.s32 0, %v2153
      %v2156 = vsel %vm2154, %v2155, %v2153
      %v2157 = vclz %v2156
      %v2158 = vsub.s32 %v2157, 2
      %vm2159 = vcmp.gt.s32.totalorder 0, %v2158
      %v2160 = vsel %vm2159, 0, %v2158
      %v2161 = vsub.s32 32, %v2160
      %v2162 = vshll.u32 %v2153, %v2160
      %v2163 = vshrl.u32 %v2145, %v2161
      %v2164 = vor.u32 %v2162, %v2163
      %v2165 = vsub.s32 4294967266, %v2160
      %v2166 = vadd.s32 %v2165, 127
      %v2167 = vshll.u32 %v2166, 23
      %v2168 = vor.u32 4788187, %v2167
      %v2169 = vand.u32 2147483647, %v2168
      %v2171 = vcvt.s32.f32 %v2164
      %v2172 = vmul.f32 %v2171, %v2169
      %v2173 = vxor.u32 %v2172, 2147483648
      %v2174 = vsel %vm2091, %v2173, %v2172
      %v2175 = vsub.s32 4, %v2151
      %v2176 = vsel %vm2091, %v2175, %v2151
      %v2177 = vsel %vm2090, %v716, %v2174
      %v2178 = vsel %vm2090, 0, %v2176
      %v2179 = vcosq.f32.pop %v2177
      %v2180 = vsinq.f32.pop %v2177
      %vm2181 = vweird.f32 %v716
      %v2182 = vadd.s32 %v2178, 3
      %v2183 = vand.u32 %v2182, 3
      %vm2184 = vcmp.lt.s32.totalorder %v2183, 2
      %vm2185 = vcmp.eq.s32.totalorder %v2183, 0
      %v2186 = vxor.u32 %v2180, 2147483648
      %v2187 = vsel %vm2185, %v2179, %v2186
      %vm2188 = vcmp.eq.s32.totalorder %v2183, 2
      %v2189 = vxor.u32 %v2179, 2147483648
      %v2190 = vsel %vm2188, %v2189, %v2180
      %v2191 = vsel %vm2184, %v2187, %v2190
      %v2192 = vsel %vm2181, nan, %v2191
      %v2193 = vand.u32 2147483647, %v717
      %vm2194 = vcmp.le.f32.partialorder %v2193, 0.7853982
      %vm2195 = vcmp.lt.s32.totalorder %v717, 0
      %v2196 = vand.u32 %v717, 2139095040
      %v2197 = vshrl.u32 %v2196, 23
      %v2198 = vsub.s32 %v2197, 127
      %v2199 = vand.u32 2147483647, %v717
      %v2200 = vand.u32 %v2199, 8388607
      %v2201 = vor.u32 %v2200, 8388608
      %v2202 = vsub.s32 0, %v2201
      %v2203 = vadd.s32 %v2198, 1
      %vm2204 = vcmp.gt.s32.totalorder %v2203, 0
      %v2205 = vsel %vm2204, %v2203, 0
      %v2206 = vshrl.u32 %v2205, 5
      %v2207 = vand.u32 %v2205, 31
      %v2208 = vsub.s32 32, %v2207
      %v2209 = vshrl.u32 683565275, %v2208
      %v2210 = vshll.u32 683565275, %v2207
      %v2211 = vshrl.u32 2475754826, %v2208
      %v2212 = vor.u32 %v2210, %v2211
      %v2213 = vshll.u32 2475754826, %v2207
      %v2214 = vshrl.u32 2131351028, %v2208
      %v2215 = vor.u32 %v2213, %v2214
      %v2216 = vshll.u32 2131351028, %v2207
      %v2217 = vshrl.u32 2102212464, %v2208
      %v2218 = vor.u32 %v2216, %v2217
      %v2219 = vshll.u32 2102212464, %v2207
      %v2220 = vshrl.u32 920167782, %v2208
      %v2221 = vor.u32 %v2219, %v2220
      %v2222 = vshll.u32 920167782, %v2207
      %v2223 = vshrl.u32 1326507024, %v2208
      %v2224 = vor.u32 %v2222, %v2223
      %vm2225 = vcmp.lt.s32.totalorder %v2206, 1
      %vm2226 = vcmp.lt.s32.totalorder %v2206, 2
      %vm2227 = vcmp.lt.s32.totalorder %v2206, 3
      %vm2228 = vcmp.lt.s32.totalorder %v2206, 4
      %v2229 = vsel %vm2225, %v2209, %v2212
      %v2230 = vsel %vm2228, %v2218, 2102212464
      %v2231 = vsel %vm2227, %v2215, %v2230
      %v2232 = vsel %vm2226, %v2229, %v2231
      %v2233 = vsel %vm2225, %v2212, %v2215
      %v2234 = vsel %vm2228, %v2221, 920167782
      %v2235 = vsel %vm2227, %v2218, %v2234
      %v2236 = vsel %vm2226, %v2233, %v2235
      %v2237 = vsel %vm2225, %v2215, %v2218
      %v2238 = vsel %vm2228, %v2224, 1326507024
      %v2239 = vsel %vm2227, %v2221, %v2238
      %v2240 = vsel %vm2226, %v2237, %v2239
      %v2241 = vshll.u32 %v2201, 8
      %v2242 = vmul.u32.u64.compose %v2241, %v2240
      %v2243 = vextract.low.u32 %v2242
      %v2244 = vextract.high.u32 %v2242
      %v2245 = vmul.u32.u64.compose %v2241, %v2236
      %v2246 = vextract.low.u32 %v2245
      %v2247 = vextract.high.u32 %v2245
      %v2248 = vmul.u32 %v2241, %v2232
      %v2249 = vadd.s32 %v2244, %v2246
      %vm2250 = vc.u32 %v2244, %v2246
      %v2251 = vadd.s32 %v2247, 1
      %v2252 = vsel %vm2250, %v2251, %v2247
      %v2253 = vadd.s32 %v2248, %v2252
      %v2254 = vadd.s32 %v2253, 536870912
      %v2255 = vshrl.u32 %v2254, 30
      %v2256 = vshll.u32 %v2255, 30
      %v2257 = vsub.s32 %v2253, %v2256
      %vm2258 = vcmp.lt.s32.totalorder %v2257, 0
      %v2259 = vsub.s32 0, %v2257
      %v2260 = vsel %vm2258, %v2259, %v2257
      %v2261 = vclz %v2260
      %v2262 = vsub.s32 %v2261, 2
      %vm2263 = vcmp.gt.s32.totalorder 0, %v2262
      %v2264 = vsel %vm2263, 0, %v2262
      %v2265 = vsub.s32 32, %v2264
      %v2266 = vshll.u32 %v2257, %v2264
      %v2267 = vshrl.u32 %v2249, %v2265
      %v2268 = vor.u32 %v2266, %v2267
      %v2269 = vsub.s32 4294967266, %v2264
      %v2270 = vadd.s32 %v2269, 127
      %v2271 = vshll.u32 %v2270, 23
      %v2272 = vor.u32 4788187, %v2271
      %v2273 = vand.u32 2147483647, %v2272
      %v2275 = vcvt.s32.f32 %v2268
      %v2276 = vmul.f32 %v2275, %v2273
      %v2277 = vxor.u32 %v2276, 2147483648
      %v2278 = vsel %vm2195, %v2277, %v2276
      %v2279 = vsub.s32 4, %v2255
      %v2280 = vsel %vm2195, %v2279, %v2255
      %v2281 = vsel %vm2194, %v717, %v2278
      %v2282 = vsel %vm2194, 0, %v2280
      %v2283 = vcosq.f32.pop %v2281
      %v2284 = vsinq.f32.pop %v2281
      %vm2285 = vweird.f32 %v717
      %v2286 = vadd.s32 %v2282, 3
      %v2287 = vand.u32 %v2286, 3
      %vm2288 = vcmp.lt.s32.totalorder %v2287, 2
      %vm2289 = vcmp.eq.s32.totalorder %v2287, 0
      %v2290 = vxor.u32 %v2284, 2147483648
      %v2291 = vsel %vm2289, %v2283, %v2290
      %vm2292 = vcmp.eq.s32.totalorder %v2287, 2
      %v2293 = vxor.u32 %v2283, 2147483648
      %v2294 = vsel %vm2292, %v2293, %v2284
      %v2295 = vsel %vm2288, %v2291, %v2294
      %v2296 = vsel %vm2285, nan, %v2295
      %v2297 = vand.u32 2147483647, %v718
      %vm2298 = vcmp.le.f32.partialorder %v2297, 0.7853982
      %vm2299 = vcmp.lt.s32.totalorder %v718, 0
      %v2300 = vand.u32 %v718, 2139095040
      %v2301 = vshrl.u32 %v2300, 23
      %v2302 = vsub.s32 %v2301, 127
      %v2303 = vand.u32 2147483647, %v718
      %v2304 = vand.u32 %v2303, 8388607
      %v2305 = vor.u32 %v2304, 8388608
      %v2306 = vsub.s32 0, %v2305
      %v2307 = vadd.s32 %v2302, 1
      %vm2308 = vcmp.gt.s32.totalorder %v2307, 0
      %v2309 = vsel %vm2308, %v2307, 0
      %v2310 = vshrl.u32 %v2309, 5
      %v2311 = vand.u32 %v2309, 31
      %v2312 = vsub.s32 32, %v2311
      %v2313 = vshrl.u32 683565275, %v2312
      %v2314 = vshll.u32 683565275, %v2311
      %v2315 = vshrl.u32 2475754826, %v2312
      %v2316 = vor.u32 %v2314, %v2315
      %v2317 = vshll.u32 2475754826, %v2311
      %v2318 = vshrl.u32 2131351028, %v2312
      %v2319 = vor.u32 %v2317, %v2318
      %v2320 = vshll.u32 2131351028, %v2311
      %v2321 = vshrl.u32 2102212464, %v2312
      %v2322 = vor.u32 %v2320, %v2321
      %v2323 = vshll.u32 2102212464, %v2311
      %v2324 = vshrl.u32 920167782, %v2312
      %v2325 = vor.u32 %v2323, %v2324
      %v2326 = vshll.u32 920167782, %v2311
      %v2327 = vshrl.u32 1326507024, %v2312
      %v2328 = vor.u32 %v2326, %v2327
      %vm2329 = vcmp.lt.s32.totalorder %v2310, 1
      %vm2330 = vcmp.lt.s32.totalorder %v2310, 2
      %vm2331 = vcmp.lt.s32.totalorder %v2310, 3
      %vm2332 = vcmp.lt.s32.totalorder %v2310, 4
      %v2333 = vsel %vm2329, %v2313, %v2316
      %v2334 = vsel %vm2332, %v2322, 2102212464
      %v2335 = vsel %vm2331, %v2319, %v2334
      %v2336 = vsel %vm2330, %v2333, %v2335
      %v2337 = vsel %vm2329, %v2316, %v2319
      %v2338 = vsel %vm2332, %v2325, 920167782
      %v2339 = vsel %vm2331, %v2322, %v2338
      %v2340 = vsel %vm2330, %v2337, %v2339
      %v2341 = vsel %vm2329, %v2319, %v2322
      %v2342 = vsel %vm2332, %v2328, 1326507024
      %v2343 = vsel %vm2331, %v2325, %v2342
      %v2344 = vsel %vm2330, %v2341, %v2343
      %v2345 = vshll.u32 %v2305, 8
      %v2346 = vmul.u32.u64.compose %v2345, %v2344
      %v2347 = vextract.low.u32 %v2346
      %v2348 = vextract.high.u32 %v2346
      %v2349 = vmul.u32.u64.compose %v2345, %v2340
      %v2350 = vextract.low.u32 %v2349
      %v2351 = vextract.high.u32 %v2349
      %v2352 = vmul.u32 %v2345, %v2336
      %v2353 = vadd.s32 %v2348, %v2350
      %vm2354 = vc.u32 %v2348, %v2350
      %v2355 = vadd.s32 %v2351, 1
      %v2356 = vsel %vm2354, %v2355, %v2351
      %v2357 = vadd.s32 %v2352, %v2356
      %v2358 = vadd.s32 %v2357, 536870912
      %v2359 = vshrl.u32 %v2358, 30
      %v2360 = vshll.u32 %v2359, 30
      %v2361 = vsub.s32 %v2357, %v2360
      %vm2362 = vcmp.lt.s32.totalorder %v2361, 0
      %v2363 = vsub.s32 0, %v2361
      %v2364 = vsel %vm2362, %v2363, %v2361
      %v2365 = vclz %v2364
      %v2366 = vsub.s32 %v2365, 2
      %vm2367 = vcmp.gt.s32.totalorder 0, %v2366
      %v2368 = vsel %vm2367, 0, %v2366
      %v2369 = vsub.s32 32, %v2368
      %v2370 = vshll.u32 %v2361, %v2368
      %v2371 = vshrl.u32 %v2353, %v2369
      %v2372 = vor.u32 %v2370, %v2371
      %v2373 = vsub.s32 4294967266, %v2368
      %v2374 = vadd.s32 %v2373, 127
      %v2375 = vshll.u32 %v2374, 23
      %v2376 = vor.u32 4788187, %v2375
      %v2377 = vand.u32 2147483647, %v2376
      %v2379 = vcvt.s32.f32 %v2372
      %v2380 = vmul.f32 %v2379, %v2377
      %v2381 = vxor.u32 %v2380, 2147483648
      %v2382 = vsel %vm2299, %v2381, %v2380
      %v2383 = vsub.s32 4, %v2359
      %v2384 = vsel %vm2299, %v2383, %v2359
      %v2385 = vsel %vm2298, %v718, %v2382
      %v2386 = vsel %vm2298, 0, %v2384
      %v2387 = vcosq.f32.pop %v2385
      %v2388 = vsinq.f32.pop %v2385
      %vm2389 = vweird.f32 %v718
      %v2390 = vadd.s32 %v2386, 3
      %v2391 = vand.u32 %v2390, 3
      %vm2392 = vcmp.lt.s32.totalorder %v2391, 2
      %vm2393 = vcmp.eq.s32.totalorder %v2391, 0
      %v2394 = vxor.u32 %v2388, 2147483648
      %v2395 = vsel %vm2393, %v2387, %v2394
      %vm2396 = vcmp.eq.s32.totalorder %v2391, 2
      %v2397 = vxor.u32 %v2387, 2147483648
      %v2398 = vsel %vm2396, %v2397, %v2388
      %v2399 = vsel %vm2392, %v2395, %v2398
      %v2400 = vsel %vm2389, nan, %v2399
      %v2401 = vand.u32 2147483647, %v719
      %vm2402 = vcmp.le.f32.partialorder %v2401, 0.7853982
      %vm2403 = vcmp.lt.s32.totalorder %v719, 0
      %v2404 = vand.u32 %v719, 2139095040
      %v2405 = vshrl.u32 %v2404, 23
      %v2406 = vsub.s32 %v2405, 127
      %v2407 = vand.u32 2147483647, %v719
      %v2408 = vand.u32 %v2407, 8388607
      %v2409 = vor.u32 %v2408, 8388608
      %v2410 = vsub.s32 0, %v2409
      %v2411 = vadd.s32 %v2406, 1
      %vm2412 = vcmp.gt.s32.totalorder %v2411, 0
      %v2413 = vsel %vm2412, %v2411, 0
      %v2414 = vshrl.u32 %v2413, 5
      %v2415 = vand.u32 %v2413, 31
      %v2416 = vsub.s32 32, %v2415
      %v2417 = vshrl.u32 683565275, %v2416
      %v2418 = vshll.u32 683565275, %v2415
      %v2419 = vshrl.u32 2475754826, %v2416
      %v2420 = vor.u32 %v2418, %v2419
      %v2421 = vshll.u32 2475754826, %v2415
      %v2422 = vshrl.u32 2131351028, %v2416
      %v2423 = vor.u32 %v2421, %v2422
      %v2424 = vshll.u32 2131351028, %v2415
      %v2425 = vshrl.u32 2102212464, %v2416
      %v2426 = vor.u32 %v2424, %v2425
      %v2427 = vshll.u32 2102212464, %v2415
      %v2428 = vshrl.u32 920167782, %v2416
      %v2429 = vor.u32 %v2427, %v2428
      %v2430 = vshll.u32 920167782, %v2415
      %v2431 = vshrl.u32 1326507024, %v2416
      %v2432 = vor.u32 %v2430, %v2431
      %vm2433 = vcmp.lt.s32.totalorder %v2414, 1
      %vm2434 = vcmp.lt.s32.totalorder %v2414, 2
      %vm2435 = vcmp.lt.s32.totalorder %v2414, 3
      %vm2436 = vcmp.lt.s32.totalorder %v2414, 4
      %v2437 = vsel %vm2433, %v2417, %v2420
      %v2438 = vsel %vm2436, %v2426, 2102212464
      %v2439 = vsel %vm2435, %v2423, %v2438
      %v2440 = vsel %vm2434, %v2437, %v2439
      %v2441 = vsel %vm2433, %v2420, %v2423
      %v2442 = vsel %vm2436, %v2429, 920167782
      %v2443 = vsel %vm2435, %v2426, %v2442
      %v2444 = vsel %vm2434, %v2441, %v2443
      %v2445 = vsel %vm2433, %v2423, %v2426
      %v2446 = vsel %vm2436, %v2432, 1326507024
      %v2447 = vsel %vm2435, %v2429, %v2446
      %v2448 = vsel %vm2434, %v2445, %v2447
      %v2449 = vshll.u32 %v2409, 8
      %v2450 = vmul.u32.u64.compose %v2449, %v2448
      %v2451 = vextract.low.u32 %v2450
      %v2452 = vextract.high.u32 %v2450
      %v2453 = vmul.u32.u64.compose %v2449, %v2444
      %v2454 = vextract.low.u32 %v2453
      %v2455 = vextract.high.u32 %v2453
      %v2456 = vmul.u32 %v2449, %v2440
      %v2457 = vadd.s32 %v2452, %v2454
      %vm2458 = vc.u32 %v2452, %v2454
      %v2459 = vadd.s32 %v2455, 1
      %v2460 = vsel %vm2458, %v2459, %v2455
      %v2461 = vadd.s32 %v2456, %v2460
      %v2462 = vadd.s32 %v2461, 536870912
      %v2463 = vshrl.u32 %v2462, 30
      %v2464 = vshll.u32 %v2463, 30
      %v2465 = vsub.s32 %v2461, %v2464
      %vm2466 = vcmp.lt.s32.totalorder %v2465, 0
      %v2467 = vsub.s32 0, %v2465
      %v2468 = vsel %vm2466, %v2467, %v2465
      %v2469 = vclz %v2468
      %v2470 = vsub.s32 %v2469, 2
      %vm2471 = vcmp.gt.s32.totalorder 0, %v2470
      %v2472 = vsel %vm2471, 0, %v2470
      %v2473 = vsub.s32 32, %v2472
      %v2474 = vshll.u32 %v2465, %v2472
      %v2475 = vshrl.u32 %v2457, %v2473
      %v2476 = vor.u32 %v2474, %v2475
      %v2477 = vsub.s32 4294967266, %v2472
      %v2478 = vadd.s32 %v2477, 127
      %v2479 = vshll.u32 %v2478, 23
      %v2480 = vor.u32 4788187, %v2479
      %v2481 = vand.u32 2147483647, %v2480
      %v2483 = vcvt.s32.f32 %v2476
      %v2484 = vmul.f32 %v2483, %v2481
      %v2485 = vxor.u32 %v2484, 2147483648
      %v2486 = vsel %vm2403, %v2485, %v2484
      %v2487 = vsub.s32 4, %v2463
      %v2488 = vsel %vm2403, %v2487, %v2463
      %v2489 = vsel %vm2402, %v719, %v2486
      %v2490 = vsel %vm2402, 0, %v2488
      %v2491 = vcosq.f32.pop %v2489
      %v2492 = vsinq.f32.pop %v2489
      %vm2493 = vweird.f32 %v719
      %v2494 = vadd.s32 %v2490, 3
      %v2495 = vand.u32 %v2494, 3
      %vm2496 = vcmp.lt.s32.totalorder %v2495, 2
      %vm2497 = vcmp.eq.s32.totalorder %v2495, 0
      %v2498 = vxor.u32 %v2492, 2147483648
      %v2499 = vsel %vm2497, %v2491, %v2498
      %vm2500 = vcmp.eq.s32.totalorder %v2495, 2
      %v2501 = vxor.u32 %v2491, 2147483648
      %v2502 = vsel %vm2500, %v2501, %v2492
      %v2503 = vsel %vm2496, %v2499, %v2502
      %v2504 = vsel %vm2493, nan, %v2503
      %v2505 = vand.u32 2147483647, %v720
      %vm2506 = vcmp.le.f32.partialorder %v2505, 0.7853982
      %vm2507 = vcmp.lt.s32.totalorder %v720, 0
      %v2508 = vand.u32 %v720, 2139095040
      %v2509 = vshrl.u32 %v2508, 23
      %v2510 = vsub.s32 %v2509, 127
      %v2511 = vand.u32 2147483647, %v720
      %v2512 = vand.u32 %v2511, 8388607
      %v2513 = vor.u32 %v2512, 8388608
      %v2514 = vsub.s32 0, %v2513
      %v2515 = vadd.s32 %v2510, 1
      %vm2516 = vcmp.gt.s32.totalorder %v2515, 0
      %v2517 = vsel %vm2516, %v2515, 0
      %v2518 = vshrl.u32 %v2517, 5
      %v2519 = vand.u32 %v2517, 31
      %v2520 = vsub.s32 32, %v2519
      %v2521 = vshrl.u32 683565275, %v2520
      %v2522 = vshll.u32 683565275, %v2519
      %v2523 = vshrl.u32 2475754826, %v2520
      %v2524 = vor.u32 %v2522, %v2523
      %v2525 = vshll.u32 2475754826, %v2519
      %v2526 = vshrl.u32 2131351028, %v2520
      %v2527 = vor.u32 %v2525, %v2526
      %v2528 = vshll.u32 2131351028, %v2519
      %v2529 = vshrl.u32 2102212464, %v2520
      %v2530 = vor.u32 %v2528, %v2529
      %v2531 = vshll.u32 2102212464, %v2519
      %v2532 = vshrl.u32 920167782, %v2520
      %v2533 = vor.u32 %v2531, %v2532
      %v2534 = vshll.u32 920167782, %v2519
      %v2535 = vshrl.u32 1326507024, %v2520
      %v2536 = vor.u32 %v2534, %v2535
      %vm2537 = vcmp.lt.s32.totalorder %v2518, 1
      %vm2538 = vcmp.lt.s32.totalorder %v2518, 2
      %vm2539 = vcmp.lt.s32.totalorder %v2518, 3
      %vm2540 = vcmp.lt.s32.totalorder %v2518, 4
      %v2541 = vsel %vm2537, %v2521, %v2524
      %v2542 = vsel %vm2540, %v2530, 2102212464
      %v2543 = vsel %vm2539, %v2527, %v2542
      %v2544 = vsel %vm2538, %v2541, %v2543
      %v2545 = vsel %vm2537, %v2524, %v2527
      %v2546 = vsel %vm2540, %v2533, 920167782
      %v2547 = vsel %vm2539, %v2530, %v2546
      %v2548 = vsel %vm2538, %v2545, %v2547
      %v2549 = vsel %vm2537, %v2527, %v2530
      %v2550 = vsel %vm2540, %v2536, 1326507024
      %v2551 = vsel %vm2539, %v2533, %v2550
      %v2552 = vsel %vm2538, %v2549, %v2551
      %v2553 = vshll.u32 %v2513, 8
      %v2554 = vmul.u32.u64.compose %v2553, %v2552
      %v2555 = vextract.low.u32 %v2554
      %v2556 = vextract.high.u32 %v2554
      %v2557 = vmul.u32.u64.compose %v2553, %v2548
      %v2558 = vextract.low.u32 %v2557
      %v2559 = vextract.high.u32 %v2557
      %v2560 = vmul.u32 %v2553, %v2544
      %v2561 = vadd.s32 %v2556, %v2558
      %vm2562 = vc.u32 %v2556, %v2558
      %v2563 = vadd.s32 %v2559, 1
      %v2564 = vsel %vm2562, %v2563, %v2559
      %v2565 = vadd.s32 %v2560, %v2564
      %v2566 = vadd.s32 %v2565, 536870912
      %v2567 = vshrl.u32 %v2566, 30
      %v2568 = vshll.u32 %v2567, 30
      %v2569 = vsub.s32 %v2565, %v2568
      %vm2570 = vcmp.lt.s32.totalorder %v2569, 0
      %v2571 = vsub.s32 0, %v2569
      %v2572 = vsel %vm2570, %v2571, %v2569
      %v2573 = vclz %v2572
      %v2574 = vsub.s32 %v2573, 2
      %vm2575 = vcmp.gt.s32.totalorder 0, %v2574
      %v2576 = vsel %vm2575, 0, %v2574
      %v2577 = vsub.s32 32, %v2576
      %v2578 = vshll.u32 %v2569, %v2576
      %v2579 = vshrl.u32 %v2561, %v2577
      %v2580 = vor.u32 %v2578, %v2579
      %v2581 = vsub.s32 4294967266, %v2576
      %v2582 = vadd.s32 %v2581, 127
      %v2583 = vshll.u32 %v2582, 23
      %v2584 = vor.u32 4788187, %v2583
      %v2585 = vand.u32 2147483647, %v2584
      %v2587 = vcvt.s32.f32 %v2580
      %v2588 = vmul.f32 %v2587, %v2585
      %v2589 = vxor.u32 %v2588, 2147483648
      %v2590 = vsel %vm2507, %v2589, %v2588
      %v2591 = vsub.s32 4, %v2567
      %v2592 = vsel %vm2507, %v2591, %v2567
      %v2593 = vsel %vm2506, %v720, %v2590
      %v2594 = vsel %vm2506, 0, %v2592
      %v2595 = vcosq.f32.pop %v2593
      %v2596 = vsinq.f32.pop %v2593
      %vm2597 = vweird.f32 %v720
      %v2598 = vadd.s32 %v2594, 3
      %v2599 = vand.u32 %v2598, 3
      %vm2600 = vcmp.lt.s32.totalorder %v2599, 2
      %vm2601 = vcmp.eq.s32.totalorder %v2599, 0
      %v2602 = vxor.u32 %v2596, 2147483648
      %v2603 = vsel %vm2601, %v2595, %v2602
      %vm2604 = vcmp.eq.s32.totalorder %v2599, 2
      %v2605 = vxor.u32 %v2595, 2147483648
      %v2606 = vsel %vm2604, %v2605, %v2596
      %v2607 = vsel %vm2600, %v2603, %v2606
      %v2608 = vsel %vm2597, nan, %v2607
      %v2609 = vand.u32 2147483647, %v721
      %vm2610 = vcmp.le.f32.partialorder %v2609, 0.7853982
      %vm2611 = vcmp.lt.s32.totalorder %v721, 0
      %v2612 = vand.u32 %v721, 2139095040
      %v2613 = vshrl.u32 %v2612, 23
      %v2614 = vsub.s32 %v2613, 127
      %v2615 = vand.u32 2147483647, %v721
      %v2616 = vand.u32 %v2615, 8388607
      %v2617 = vor.u32 %v2616, 8388608
      %v2618 = vsub.s32 0, %v2617
      %v2619 = vadd.s32 %v2614, 1
      %vm2620 = vcmp.gt.s32.totalorder %v2619, 0
      %v2621 = vsel %vm2620, %v2619, 0
      %v2622 = vshrl.u32 %v2621, 5
      %v2623 = vand.u32 %v2621, 31
      %v2624 = vsub.s32 32, %v2623
      %v2625 = vshrl.u32 683565275, %v2624
      %v2626 = vshll.u32 683565275, %v2623
      %v2627 = vshrl.u32 2475754826, %v2624
      %v2628 = vor.u32 %v2626, %v2627
      %v2629 = vshll.u32 2475754826, %v2623
      %v2630 = vshrl.u32 2131351028, %v2624
      %v2631 = vor.u32 %v2629, %v2630
      %v2632 = vshll.u32 2131351028, %v2623
      %v2633 = vshrl.u32 2102212464, %v2624
      %v2634 = vor.u32 %v2632, %v2633
      %v2635 = vshll.u32 2102212464, %v2623
      %v2636 = vshrl.u32 920167782, %v2624
      %v2637 = vor.u32 %v2635, %v2636
      %v2638 = vshll.u32 920167782, %v2623
      %v2639 = vshrl.u32 1326507024, %v2624
      %v2640 = vor.u32 %v2638, %v2639
      %vm2641 = vcmp.lt.s32.totalorder %v2622, 1
      %vm2642 = vcmp.lt.s32.totalorder %v2622, 2
      %vm2643 = vcmp.lt.s32.totalorder %v2622, 3
      %vm2644 = vcmp.lt.s32.totalorder %v2622, 4
      %v2645 = vsel %vm2641, %v2625, %v2628
      %v2646 = vsel %vm2644, %v2634, 2102212464
      %v2647 = vsel %vm2643, %v2631, %v2646
      %v2648 = vsel %vm2642, %v2645, %v2647
      %v2649 = vsel %vm2641, %v2628, %v2631
      %v2650 = vsel %vm2644, %v2637, 920167782
      %v2651 = vsel %vm2643, %v2634, %v2650
      %v2652 = vsel %vm2642, %v2649, %v2651
      %v2653 = vsel %vm2641, %v2631, %v2634
      %v2654 = vsel %vm2644, %v2640, 1326507024
      %v2655 = vsel %vm2643, %v2637, %v2654
      %v2656 = vsel %vm2642, %v2653, %v2655
      %v2657 = vshll.u32 %v2617, 8
      %v2658 = vmul.u32.u64.compose %v2657, %v2656
      %v2659 = vextract.low.u32 %v2658
      %v2660 = vextract.high.u32 %v2658
      %v2661 = vmul.u32.u64.compose %v2657, %v2652
      %v2662 = vextract.low.u32 %v2661
      %v2663 = vextract.high.u32 %v2661
      %v2664 = vmul.u32 %v2657, %v2648
      %v2665 = vadd.s32 %v2660, %v2662
      %vm2666 = vc.u32 %v2660, %v2662
      %v2667 = vadd.s32 %v2663, 1
      %v2668 = vsel %vm2666, %v2667, %v2663
      %v2669 = vadd.s32 %v2664, %v2668
      %v2670 = vadd.s32 %v2669, 536870912
      %v2671 = vshrl.u32 %v2670, 30
      %v2672 = vshll.u32 %v2671, 30
      %v2673 = vsub.s32 %v2669, %v2672
      %vm2674 = vcmp.lt.s32.totalorder %v2673, 0
      %v2675 = vsub.s32 0, %v2673
      %v2676 = vsel %vm2674, %v2675, %v2673
      %v2677 = vclz %v2676
      %v2678 = vsub.s32 %v2677, 2
      %vm2679 = vcmp.gt.s32.totalorder 0, %v2678
      %v2680 = vsel %vm2679, 0, %v2678
      %v2681 = vsub.s32 32, %v2680
      %v2682 = vshll.u32 %v2673, %v2680
      %v2683 = vshrl.u32 %v2665, %v2681
      %v2684 = vor.u32 %v2682, %v2683
      %v2685 = vsub.s32 4294967266, %v2680
      %v2686 = vadd.s32 %v2685, 127
      %v2687 = vshll.u32 %v2686, 23
      %v2688 = vor.u32 4788187, %v2687
      %v2689 = vand.u32 2147483647, %v2688
      %v2691 = vcvt.s32.f32 %v2684
      %v2692 = vmul.f32 %v2691, %v2689
      %v2693 = vxor.u32 %v2692, 2147483648
      %v2694 = vsel %vm2611, %v2693, %v2692
      %v2695 = vsub.s32 4, %v2671
      %v2696 = vsel %vm2611, %v2695, %v2671
      %v2697 = vsel %vm2610, %v721, %v2694
      %v2698 = vsel %vm2610, 0, %v2696
      %v2699 = vcosq.f32.pop %v2697
      %v2700 = vsinq.f32.pop %v2697
      %vm2701 = vweird.f32 %v721
      %v2702 = vadd.s32 %v2698, 3
      %v2703 = vand.u32 %v2702, 3
      %vm2704 = vcmp.lt.s32.totalorder %v2703, 2
      %vm2705 = vcmp.eq.s32.totalorder %v2703, 0
      %v2706 = vxor.u32 %v2700, 2147483648
      %v2707 = vsel %vm2705, %v2699, %v2706
      %vm2708 = vcmp.eq.s32.totalorder %v2703, 2
      %v2709 = vxor.u32 %v2699, 2147483648
      %v2710 = vsel %vm2708, %v2709, %v2700
      %v2711 = vsel %vm2704, %v2707, %v2710
      %v2712 = vsel %vm2701, nan, %v2711
      %v2713 = vand.u32 2147483647, %v722
      %vm2714 = vcmp.le.f32.partialorder %v2713, 0.7853982
      %vm2715 = vcmp.lt.s32.totalorder %v722, 0
      %v2716 = vand.u32 %v722, 2139095040
      %v2717 = vshrl.u32 %v2716, 23
      %v2718 = vsub.s32 %v2717, 127
      %v2719 = vand.u32 2147483647, %v722
      %v2720 = vand.u32 %v2719, 8388607
      %v2721 = vor.u32 %v2720, 8388608
      %v2722 = vsub.s32 0, %v2721
      %v2723 = vadd.s32 %v2718, 1
      %vm2724 = vcmp.gt.s32.totalorder %v2723, 0
      %v2725 = vsel %vm2724, %v2723, 0
      %v2726 = vshrl.u32 %v2725, 5
      %v2727 = vand.u32 %v2725, 31
      %v2728 = vsub.s32 32, %v2727
      %v2729 = vshrl.u32 683565275, %v2728
      %v2730 = vshll.u32 683565275, %v2727
      %v2731 = vshrl.u32 2475754826, %v2728
      %v2732 = vor.u32 %v2730, %v2731
      %v2733 = vshll.u32 2475754826, %v2727
      %v2734 = vshrl.u32 2131351028, %v2728
      %v2735 = vor.u32 %v2733, %v2734
      %v2736 = vshll.u32 2131351028, %v2727
      %v2737 = vshrl.u32 2102212464, %v2728
      %v2738 = vor.u32 %v2736, %v2737
      %v2739 = vshll.u32 2102212464, %v2727
      %v2740 = vshrl.u32 920167782, %v2728
      %v2741 = vor.u32 %v2739, %v2740
      %v2742 = vshll.u32 920167782, %v2727
      %v2743 = vshrl.u32 1326507024, %v2728
      %v2744 = vor.u32 %v2742, %v2743
      %vm2745 = vcmp.lt.s32.totalorder %v2726, 1
      %vm2746 = vcmp.lt.s32.totalorder %v2726, 2
      %vm2747 = vcmp.lt.s32.totalorder %v2726, 3
      %vm2748 = vcmp.lt.s32.totalorder %v2726, 4
      %v2749 = vsel %vm2745, %v2729, %v2732
      %v2750 = vsel %vm2748, %v2738, 2102212464
      %v2751 = vsel %vm2747, %v2735, %v2750
      %v2752 = vsel %vm2746, %v2749, %v2751
      %v2753 = vsel %vm2745, %v2732, %v2735
      %v2754 = vsel %vm2748, %v2741, 920167782
      %v2755 = vsel %vm2747, %v2738, %v2754
      %v2756 = vsel %vm2746, %v2753, %v2755
      %v2757 = vsel %vm2745, %v2735, %v2738
      %v2758 = vsel %vm2748, %v2744, 1326507024
      %v2759 = vsel %vm2747, %v2741, %v2758
      %v2760 = vsel %vm2746, %v2757, %v2759
      %v2761 = vshll.u32 %v2721, 8
      %v2762 = vmul.u32.u64.compose %v2761, %v2760
      %v2763 = vextract.low.u32 %v2762
      %v2764 = vextract.high.u32 %v2762
      %v2765 = vmul.u32.u64.compose %v2761, %v2756
      %v2766 = vextract.low.u32 %v2765
      %v2767 = vextract.high.u32 %v2765
      %v2768 = vmul.u32 %v2761, %v2752
      %v2769 = vadd.s32 %v2764, %v2766
      %vm2770 = vc.u32 %v2764, %v2766
      %v2771 = vadd.s32 %v2767, 1
      %v2772 = vsel %vm2770, %v2771, %v2767
      %v2773 = vadd.s32 %v2768, %v2772
      %v2774 = vadd.s32 %v2773, 536870912
      %v2775 = vshrl.u32 %v2774, 30
      %v2776 = vshll.u32 %v2775, 30
      %v2777 = vsub.s32 %v2773, %v2776
      %vm2778 = vcmp.lt.s32.totalorder %v2777, 0
      %v2779 = vsub.s32 0, %v2777
      %v2780 = vsel %vm2778, %v2779, %v2777
      %v2781 = vclz %v2780
      %v2782 = vsub.s32 %v2781, 2
      %vm2783 = vcmp.gt.s32.totalorder 0, %v2782
      %v2784 = vsel %vm2783, 0, %v2782
      %v2785 = vsub.s32 32, %v2784
      %v2786 = vshll.u32 %v2777, %v2784
      %v2787 = vshrl.u32 %v2769, %v2785
      %v2788 = vor.u32 %v2786, %v2787
      %v2789 = vsub.s32 4294967266, %v2784
      %v2790 = vadd.s32 %v2789, 127
      %v2791 = vshll.u32 %v2790, 23
      %v2792 = vor.u32 4788187, %v2791
      %v2793 = vand.u32 2147483647, %v2792
      %v2795 = vcvt.s32.f32 %v2788
      %v2796 = vmul.f32 %v2795, %v2793
      %v2797 = vxor.u32 %v2796, 2147483648
      %v2798 = vsel %vm2715, %v2797, %v2796
      %v2799 = vsub.s32 4, %v2775
      %v2800 = vsel %vm2715, %v2799, %v2775
      %v2801 = vsel %vm2714, %v722, %v2798
      %v2802 = vsel %vm2714, 0, %v2800
      %v2803 = vcosq.f32.pop %v2801
      %v2804 = vsinq.f32.pop %v2801
      %vm2805 = vweird.f32 %v722
      %v2806 = vadd.s32 %v2802, 3
      %v2807 = vand.u32 %v2806, 3
      %vm2808 = vcmp.lt.s32.totalorder %v2807, 2
      %vm2809 = vcmp.eq.s32.totalorder %v2807, 0
      %v2810 = vxor.u32 %v2804, 2147483648
      %v2811 = vsel %vm2809, %v2803, %v2810
      %vm2812 = vcmp.eq.s32.totalorder %v2807, 2
      %v2813 = vxor.u32 %v2803, 2147483648
      %v2814 = vsel %vm2812, %v2813, %v2804
      %v2815 = vsel %vm2808, %v2811, %v2814
      %v2816 = vsel %vm2805, nan, %v2815
      %v2817 = vand.u32 2147483647, %v723
      %vm2818 = vcmp.le.f32.partialorder %v2817, 0.7853982
      %vm2819 = vcmp.lt.s32.totalorder %v723, 0
      %v2820 = vand.u32 %v723, 2139095040
      %v2821 = vshrl.u32 %v2820, 23
      %v2822 = vsub.s32 %v2821, 127
      %v2823 = vand.u32 2147483647, %v723
      %v2824 = vand.u32 %v2823, 8388607
      %v2825 = vor.u32 %v2824, 8388608
      %v2826 = vsub.s32 0, %v2825
      %v2827 = vadd.s32 %v2822, 1
      %vm2828 = vcmp.gt.s32.totalorder %v2827, 0
      %v2829 = vsel %vm2828, %v2827, 0
      %v2830 = vshrl.u32 %v2829, 5
      %v2831 = vand.u32 %v2829, 31
      %v2832 = vsub.s32 32, %v2831
      %v2833 = vshrl.u32 683565275, %v2832
      %v2834 = vshll.u32 683565275, %v2831
      %v2835 = vshrl.u32 2475754826, %v2832
      %v2836 = vor.u32 %v2834, %v2835
      %v2837 = vshll.u32 2475754826, %v2831
      %v2838 = vshrl.u32 2131351028, %v2832
      %v2839 = vor.u32 %v2837, %v2838
      %v2840 = vshll.u32 2131351028, %v2831
      %v2841 = vshrl.u32 2102212464, %v2832
      %v2842 = vor.u32 %v2840, %v2841
      %v2843 = vshll.u32 2102212464, %v2831
      %v2844 = vshrl.u32 920167782, %v2832
      %v2845 = vor.u32 %v2843, %v2844
      %v2846 = vshll.u32 920167782, %v2831
      %v2847 = vshrl.u32 1326507024, %v2832
      %v2848 = vor.u32 %v2846, %v2847
      %vm2849 = vcmp.lt.s32.totalorder %v2830, 1
      %vm2850 = vcmp.lt.s32.totalorder %v2830, 2
      %vm2851 = vcmp.lt.s32.totalorder %v2830, 3
      %vm2852 = vcmp.lt.s32.totalorder %v2830, 4
      %v2853 = vsel %vm2849, %v2833, %v2836
      %v2854 = vsel %vm2852, %v2842, 2102212464
      %v2855 = vsel %vm2851, %v2839, %v2854
      %v2856 = vsel %vm2850, %v2853, %v2855
      %v2857 = vsel %vm2849, %v2836, %v2839
      %v2858 = vsel %vm2852, %v2845, 920167782
      %v2859 = vsel %vm2851, %v2842, %v2858
      %v2860 = vsel %vm2850, %v2857, %v2859
      %v2861 = vsel %vm2849, %v2839, %v2842
      %v2862 = vsel %vm2852, %v2848, 1326507024
      %v2863 = vsel %vm2851, %v2845, %v2862
      %v2864 = vsel %vm2850, %v2861, %v2863
      %v2865 = vshll.u32 %v2825, 8
      %v2866 = vmul.u32.u64.compose %v2865, %v2864
      %v2867 = vextract.low.u32 %v2866
      %v2868 = vextract.high.u32 %v2866
      %v2869 = vmul.u32.u64.compose %v2865, %v2860
      %v2870 = vextract.low.u32 %v2869
      %v2871 = vextract.high.u32 %v2869
      %v2872 = vmul.u32 %v2865, %v2856
      %v2873 = vadd.s32 %v2868, %v2870
      %vm2874 = vc.u32 %v2868, %v2870
      %v2875 = vadd.s32 %v2871, 1
      %v2876 = vsel %vm2874, %v2875, %v2871
      %v2877 = vadd.s32 %v2872, %v2876
      %v2878 = vadd.s32 %v2877, 536870912
      %v2879 = vshrl.u32 %v2878, 30
      %v2880 = vshll.u32 %v2879, 30
      %v2881 = vsub.s32 %v2877, %v2880
      %vm2882 = vcmp.lt.s32.totalorder %v2881, 0
      %v2883 = vsub.s32 0, %v2881
      %v2884 = vsel %vm2882, %v2883, %v2881
      %v2885 = vclz %v2884
      %v2886 = vsub.s32 %v2885, 2
      %vm2887 = vcmp.gt.s32.totalorder 0, %v2886
      %v2888 = vsel %vm2887, 0, %v2886
      %v2889 = vsub.s32 32, %v2888
      %v2890 = vshll.u32 %v2881, %v2888
      %v2891 = vshrl.u32 %v2873, %v2889
      %v2892 = vor.u32 %v2890, %v2891
      %v2893 = vsub.s32 4294967266, %v2888
      %v2894 = vadd.s32 %v2893, 127
      %v2895 = vshll.u32 %v2894, 23
      %v2896 = vor.u32 4788187, %v2895
      %v2897 = vand.u32 2147483647, %v2896
      %v2899 = vcvt.s32.f32 %v2892
      %v2900 = vmul.f32 %v2899, %v2897
      %v2901 = vxor.u32 %v2900, 2147483648
      %v2902 = vsel %vm2819, %v2901, %v2900
      %v2903 = vsub.s32 4, %v2879
      %v2904 = vsel %vm2819, %v2903, %v2879
      %v2905 = vsel %vm2818, %v723, %v2902
      %v2906 = vsel %vm2818, 0, %v2904
      %v2907 = vcosq.f32.pop %v2905
      %v2908 = vsinq.f32.pop %v2905
      %vm2909 = vweird.f32 %v723
      %v2910 = vadd.s32 %v2906, 3
      %v2911 = vand.u32 %v2910, 3
      %vm2912 = vcmp.lt.s32.totalorder %v2911, 2
      %vm2913 = vcmp.eq.s32.totalorder %v2911, 0
      %v2914 = vxor.u32 %v2908, 2147483648
      %v2915 = vsel %vm2913, %v2907, %v2914
      %vm2916 = vcmp.eq.s32.totalorder %v2911, 2
      %v2917 = vxor.u32 %v2907, 2147483648
      %v2918 = vsel %vm2916, %v2917, %v2908
      %v2919 = vsel %vm2912, %v2915, %v2918
      %v2920 = vsel %vm2909, nan, %v2919
      %v2921 = vand.u32 2147483647, %v724
      %vm2922 = vcmp.le.f32.partialorder %v2921, 0.7853982
      %vm2923 = vcmp.lt.s32.totalorder %v724, 0
      %v2924 = vand.u32 %v724, 2139095040
      %v2925 = vshrl.u32 %v2924, 23
      %v2926 = vsub.s32 %v2925, 127
      %v2927 = vand.u32 2147483647, %v724
      %v2928 = vand.u32 %v2927, 8388607
      %v2929 = vor.u32 %v2928, 8388608
      %v2930 = vsub.s32 0, %v2929
      %v2931 = vadd.s32 %v2926, 1
      %vm2932 = vcmp.gt.s32.totalorder %v2931, 0
      %v2933 = vsel %vm2932, %v2931, 0
      %v2934 = vshrl.u32 %v2933, 5
      %v2935 = vand.u32 %v2933, 31
      %v2936 = vsub.s32 32, %v2935
      %v2937 = vshrl.u32 683565275, %v2936
      %v2938 = vshll.u32 683565275, %v2935
      %v2939 = vshrl.u32 2475754826, %v2936
      %v2940 = vor.u32 %v2938, %v2939
      %v2941 = vshll.u32 2475754826, %v2935
      %v2942 = vshrl.u32 2131351028, %v2936
      %v2943 = vor.u32 %v2941, %v2942
      %v2944 = vshll.u32 2131351028, %v2935
      %v2945 = vshrl.u32 2102212464, %v2936
      %v2946 = vor.u32 %v2944, %v2945
      %v2947 = vshll.u32 2102212464, %v2935
      %v2948 = vshrl.u32 920167782, %v2936
      %v2949 = vor.u32 %v2947, %v2948
      %v2950 = vshll.u32 920167782, %v2935
      %v2951 = vshrl.u32 1326507024, %v2936
      %v2952 = vor.u32 %v2950, %v2951
      %vm2953 = vcmp.lt.s32.totalorder %v2934, 1
      %vm2954 = vcmp.lt.s32.totalorder %v2934, 2
      %vm2955 = vcmp.lt.s32.totalorder %v2934, 3
      %vm2956 = vcmp.lt.s32.totalorder %v2934, 4
      %v2957 = vsel %vm2953, %v2937, %v2940
      %v2958 = vsel %vm2956, %v2946, 2102212464
      %v2959 = vsel %vm2955, %v2943, %v2958
      %v2960 = vsel %vm2954, %v2957, %v2959
      %v2961 = vsel %vm2953, %v2940, %v2943
      %v2962 = vsel %vm2956, %v2949, 920167782
      %v2963 = vsel %vm2955, %v2946, %v2962
      %v2964 = vsel %vm2954, %v2961, %v2963
      %v2965 = vsel %vm2953, %v2943, %v2946
      %v2966 = vsel %vm2956, %v2952, 1326507024
      %v2967 = vsel %vm2955, %v2949, %v2966
      %v2968 = vsel %vm2954, %v2965, %v2967
      %v2969 = vshll.u32 %v2929, 8
      %v2970 = vmul.u32.u64.compose %v2969, %v2968
      %v2971 = vextract.low.u32 %v2970
      %v2972 = vextract.high.u32 %v2970
      %v2973 = vmul.u32.u64.compose %v2969, %v2964
      %v2974 = vextract.low.u32 %v2973
      %v2975 = vextract.high.u32 %v2973
      %v2976 = vmul.u32 %v2969, %v2960
      %v2977 = vadd.s32 %v2972, %v2974
      %vm2978 = vc.u32 %v2972, %v2974
      %v2979 = vadd.s32 %v2975, 1
      %v2980 = vsel %vm2978, %v2979, %v2975
      %v2981 = vadd.s32 %v2976, %v2980
      %v2982 = vadd.s32 %v2981, 536870912
      %v2983 = vshrl.u32 %v2982, 30
      %v2984 = vshll.u32 %v2983, 30
      %v2985 = vsub.s32 %v2981, %v2984
      %vm2986 = vcmp.lt.s32.totalorder %v2985, 0
      %v2987 = vsub.s32 0, %v2985
      %v2988 = vsel %vm2986, %v2987, %v2985
      %v2989 = vclz %v2988
      %v2990 = vsub.s32 %v2989, 2
      %vm2991 = vcmp.gt.s32.totalorder 0, %v2990
      %v2992 = vsel %vm2991, 0, %v2990
      %v2993 = vsub.s32 32, %v2992
      %v2994 = vshll.u32 %v2985, %v2992
      %v2995 = vshrl.u32 %v2977, %v2993
      %v2996 = vor.u32 %v2994, %v2995
      %v2997 = vsub.s32 4294967266, %v2992
      %v2998 = vadd.s32 %v2997, 127
      %v2999 = vshll.u32 %v2998, 23
      %v3000 = vor.u32 4788187, %v2999
      %v3001 = vand.u32 2147483647, %v3000
      %v3003 = vcvt.s32.f32 %v2996
      %v3004 = vmul.f32 %v3003, %v3001
      %v3005 = vxor.u32 %v3004, 2147483648
      %v3006 = vsel %vm2923, %v3005, %v3004
      %v3007 = vsub.s32 4, %v2983
      %v3008 = vsel %vm2923, %v3007, %v2983
      %v3009 = vsel %vm2922, %v724, %v3006
      %v3010 = vsel %vm2922, 0, %v3008
      %v3011 = vcosq.f32.pop %v3009
      %v3012 = vsinq.f32.pop %v3009
      %vm3013 = vweird.f32 %v724
      %v3014 = vadd.s32 %v3010, 3
      %v3015 = vand.u32 %v3014, 3
      %vm3016 = vcmp.lt.s32.totalorder %v3015, 2
      %vm3017 = vcmp.eq.s32.totalorder %v3015, 0
      %v3018 = vxor.u32 %v3012, 2147483648
      %v3019 = vsel %vm3017, %v3011, %v3018
      %vm3020 = vcmp.eq.s32.totalorder %v3015, 2
      %v3021 = vxor.u32 %v3011, 2147483648
      %v3022 = vsel %vm3020, %v3021, %v3012
      %v3023 = vsel %vm3016, %v3019, %v3022
      %v3024 = vsel %vm3013, nan, %v3023
      %v3025 = vand.u32 2147483647, %v725
      %vm3026 = vcmp.le.f32.partialorder %v3025, 0.7853982
      %vm3027 = vcmp.lt.s32.totalorder %v725, 0
      %v3028 = vand.u32 %v725, 2139095040
      %v3029 = vshrl.u32 %v3028, 23
      %v3030 = vsub.s32 %v3029, 127
      %v3031 = vand.u32 2147483647, %v725
      %v3032 = vand.u32 %v3031, 8388607
      %v3033 = vor.u32 %v3032, 8388608
      %v3034 = vsub.s32 0, %v3033
      %v3035 = vadd.s32 %v3030, 1
      %vm3036 = vcmp.gt.s32.totalorder %v3035, 0
      %v3037 = vsel %vm3036, %v3035, 0
      %v3038 = vshrl.u32 %v3037, 5
      %v3039 = vand.u32 %v3037, 31
      %v3040 = vsub.s32 32, %v3039
      %v3041 = vshrl.u32 683565275, %v3040
      %v3042 = vshll.u32 683565275, %v3039
      %v3043 = vshrl.u32 2475754826, %v3040
      %v3044 = vor.u32 %v3042, %v3043
      %v3045 = vshll.u32 2475754826, %v3039
      %v3046 = vshrl.u32 2131351028, %v3040
      %v3047 = vor.u32 %v3045, %v3046
      %v3048 = vshll.u32 2131351028, %v3039
      %v3049 = vshrl.u32 2102212464, %v3040
      %v3050 = vor.u32 %v3048, %v3049
      %v3051 = vshll.u32 2102212464, %v3039
      %v3052 = vshrl.u32 920167782, %v3040
      %v3053 = vor.u32 %v3051, %v3052
      %v3054 = vshll.u32 920167782, %v3039
      %v3055 = vshrl.u32 1326507024, %v3040
      %v3056 = vor.u32 %v3054, %v3055
      %vm3057 = vcmp.lt.s32.totalorder %v3038, 1
      %vm3058 = vcmp.lt.s32.totalorder %v3038, 2
      %vm3059 = vcmp.lt.s32.totalorder %v3038, 3
      %vm3060 = vcmp.lt.s32.totalorder %v3038, 4
      %v3061 = vsel %vm3057, %v3041, %v3044
      %v3062 = vsel %vm3060, %v3050, 2102212464
      %v3063 = vsel %vm3059, %v3047, %v3062
      %v3064 = vsel %vm3058, %v3061, %v3063
      %v3065 = vsel %vm3057, %v3044, %v3047
      %v3066 = vsel %vm3060, %v3053, 920167782
      %v3067 = vsel %vm3059, %v3050, %v3066
      %v3068 = vsel %vm3058, %v3065, %v3067
      %v3069 = vsel %vm3057, %v3047, %v3050
      %v3070 = vsel %vm3060, %v3056, 1326507024
      %v3071 = vsel %vm3059, %v3053, %v3070
      %v3072 = vsel %vm3058, %v3069, %v3071
      %v3073 = vshll.u32 %v3033, 8
      %v3074 = vmul.u32.u64.compose %v3073, %v3072
      %v3075 = vextract.low.u32 %v3074
      %v3076 = vextract.high.u32 %v3074
      %v3077 = vmul.u32.u64.compose %v3073, %v3068
      %v3078 = vextract.low.u32 %v3077
      %v3079 = vextract.high.u32 %v3077
      %v3080 = vmul.u32 %v3073, %v3064
      %v3081 = vadd.s32 %v3076, %v3078
      %vm3082 = vc.u32 %v3076, %v3078
      %v3083 = vadd.s32 %v3079, 1
      %v3084 = vsel %vm3082, %v3083, %v3079
      %v3085 = vadd.s32 %v3080, %v3084
      %v3086 = vadd.s32 %v3085, 536870912
      %v3087 = vshrl.u32 %v3086, 30
      %v3088 = vshll.u32 %v3087, 30
      %v3089 = vsub.s32 %v3085, %v3088
      %vm3090 = vcmp.lt.s32.totalorder %v3089, 0
      %v3091 = vsub.s32 0, %v3089
      %v3092 = vsel %vm3090, %v3091, %v3089
      %v3093 = vclz %v3092
      %v3094 = vsub.s32 %v3093, 2
      %vm3095 = vcmp.gt.s32.totalorder 0, %v3094
      %v3096 = vsel %vm3095, 0, %v3094
      %v3097 = vsub.s32 32, %v3096
      %v3098 = vshll.u32 %v3089, %v3096
      %v3099 = vshrl.u32 %v3081, %v3097
      %v3100 = vor.u32 %v3098, %v3099
      %v3101 = vsub.s32 4294967266, %v3096
      %v3102 = vadd.s32 %v3101, 127
      %v3103 = vshll.u32 %v3102, 23
      %v3104 = vor.u32 4788187, %v3103
      %v3105 = vand.u32 2147483647, %v3104
      %v3107 = vcvt.s32.f32 %v3100
      %v3108 = vmul.f32 %v3107, %v3105
      %v3109 = vxor.u32 %v3108, 2147483648
      %v3110 = vsel %vm3027, %v3109, %v3108
      %v3111 = vsub.s32 4, %v3087
      %v3112 = vsel %vm3027, %v3111, %v3087
      %v3113 = vsel %vm3026, %v725, %v3110
      %v3114 = vsel %vm3026, 0, %v3112
      %v3115 = vcosq.f32.pop %v3113
      %v3116 = vsinq.f32.pop %v3113
      %vm3117 = vweird.f32 %v725
      %v3118 = vadd.s32 %v3114, 3
      %v3119 = vand.u32 %v3118, 3
      %vm3120 = vcmp.lt.s32.totalorder %v3119, 2
      %vm3121 = vcmp.eq.s32.totalorder %v3119, 0
      %v3122 = vxor.u32 %v3116, 2147483648
      %v3123 = vsel %vm3121, %v3115, %v3122
      %vm3124 = vcmp.eq.s32.totalorder %v3119, 2
      %v3125 = vxor.u32 %v3115, 2147483648
      %v3126 = vsel %vm3124, %v3125, %v3116
      %v3127 = vsel %vm3120, %v3123, %v3126
      %v3128 = vsel %vm3117, nan, %v3127
      %v3129 = vand.u32 2147483647, %v726
      %vm3130 = vcmp.le.f32.partialorder %v3129, 0.7853982
      %vm3131 = vcmp.lt.s32.totalorder %v726, 0
      %v3132 = vand.u32 %v726, 2139095040
      %v3133 = vshrl.u32 %v3132, 23
      %v3134 = vsub.s32 %v3133, 127
      %v3135 = vand.u32 2147483647, %v726
      %v3136 = vand.u32 %v3135, 8388607
      %v3137 = vor.u32 %v3136, 8388608
      %v3138 = vsub.s32 0, %v3137
      %v3139 = vadd.s32 %v3134, 1
      %vm3140 = vcmp.gt.s32.totalorder %v3139, 0
      %v3141 = vsel %vm3140, %v3139, 0
      %v3142 = vshrl.u32 %v3141, 5
      %v3143 = vand.u32 %v3141, 31
      %v3144 = vsub.s32 32, %v3143
      %v3145 = vshrl.u32 683565275, %v3144
      %v3146 = vshll.u32 683565275, %v3143
      %v3147 = vshrl.u32 2475754826, %v3144
      %v3148 = vor.u32 %v3146, %v3147
      %v3149 = vshll.u32 2475754826, %v3143
      %v3150 = vshrl.u32 2131351028, %v3144
      %v3151 = vor.u32 %v3149, %v3150
      %v3152 = vshll.u32 2131351028, %v3143
      %v3153 = vshrl.u32 2102212464, %v3144
      %v3154 = vor.u32 %v3152, %v3153
      %v3155 = vshll.u32 2102212464, %v3143
      %v3156 = vshrl.u32 920167782, %v3144
      %v3157 = vor.u32 %v3155, %v3156
      %v3158 = vshll.u32 920167782, %v3143
      %v3159 = vshrl.u32 1326507024, %v3144
      %v3160 = vor.u32 %v3158, %v3159
      %vm3161 = vcmp.lt.s32.totalorder %v3142, 1
      %vm3162 = vcmp.lt.s32.totalorder %v3142, 2
      %vm3163 = vcmp.lt.s32.totalorder %v3142, 3
      %vm3164 = vcmp.lt.s32.totalorder %v3142, 4
      %v3165 = vsel %vm3161, %v3145, %v3148
      %v3166 = vsel %vm3164, %v3154, 2102212464
      %v3167 = vsel %vm3163, %v3151, %v3166
      %v3168 = vsel %vm3162, %v3165, %v3167
      %v3169 = vsel %vm3161, %v3148, %v3151
      %v3170 = vsel %vm3164, %v3157, 920167782
      %v3171 = vsel %vm3163, %v3154, %v3170
      %v3172 = vsel %vm3162, %v3169, %v3171
      %v3173 = vsel %vm3161, %v3151, %v3154
      %v3174 = vsel %vm3164, %v3160, 1326507024
      %v3175 = vsel %vm3163, %v3157, %v3174
      %v3176 = vsel %vm3162, %v3173, %v3175
      %v3177 = vshll.u32 %v3137, 8
      %v3178 = vmul.u32.u64.compose %v3177, %v3176
      %v3179 = vextract.low.u32 %v3178
      %v3180 = vextract.high.u32 %v3178
      %v3181 = vmul.u32.u64.compose %v3177, %v3172
      %v3182 = vextract.low.u32 %v3181
      %v3183 = vextract.high.u32 %v3181
      %v3184 = vmul.u32 %v3177, %v3168
      %v3185 = vadd.s32 %v3180, %v3182
      %vm3186 = vc.u32 %v3180, %v3182
      %v3187 = vadd.s32 %v3183, 1
      %v3188 = vsel %vm3186, %v3187, %v3183
      %v3189 = vadd.s32 %v3184, %v3188
      %v3190 = vadd.s32 %v3189, 536870912
      %v3191 = vshrl.u32 %v3190, 30
      %v3192 = vshll.u32 %v3191, 30
      %v3193 = vsub.s32 %v3189, %v3192
      %vm3194 = vcmp.lt.s32.totalorder %v3193, 0
      %v3195 = vsub.s32 0, %v3193
      %v3196 = vsel %vm3194, %v3195, %v3193
      %v3197 = vclz %v3196
      %v3198 = vsub.s32 %v3197, 2
      %vm3199 = vcmp.gt.s32.totalorder 0, %v3198
      %v3200 = vsel %vm3199, 0, %v3198
      %v3201 = vsub.s32 32, %v3200
      %v3202 = vshll.u32 %v3193, %v3200
      %v3203 = vshrl.u32 %v3185, %v3201
      %v3204 = vor.u32 %v3202, %v3203
      %v3205 = vsub.s32 4294967266, %v3200
      %v3206 = vadd.s32 %v3205, 127
      %v3207 = vshll.u32 %v3206, 23
      %v3208 = vor.u32 4788187, %v3207
      %v3209 = vand.u32 2147483647, %v3208
      %v3211 = vcvt.s32.f32 %v3204
      %v3212 = vmul.f32 %v3211, %v3209
      %v3213 = vxor.u32 %v3212, 2147483648
      %v3214 = vsel %vm3131, %v3213, %v3212
      %v3215 = vsub.s32 4, %v3191
      %v3216 = vsel %vm3131, %v3215, %v3191
      %v3217 = vsel %vm3130, %v726, %v3214
      %v3218 = vsel %vm3130, 0, %v3216
      %v3219 = vcosq.f32.pop %v3217
      %v3220 = vsinq.f32.pop %v3217
      %vm3221 = vweird.f32 %v726
      %v3222 = vadd.s32 %v3218, 3
      %v3223 = vand.u32 %v3222, 3
      %vm3224 = vcmp.lt.s32.totalorder %v3223, 2
      %vm3225 = vcmp.eq.s32.totalorder %v3223, 0
      %v3226 = vxor.u32 %v3220, 2147483648
      %v3227 = vsel %vm3225, %v3219, %v3226
      %vm3228 = vcmp.eq.s32.totalorder %v3223, 2
      %v3229 = vxor.u32 %v3219, 2147483648
      %v3230 = vsel %vm3228, %v3229, %v3220
      %v3231 = vsel %vm3224, %v3227, %v3230
      %v3232 = vsel %vm3221, nan, %v3231
      %v3233 = vand.u32 2147483647, %v727
      %vm3234 = vcmp.le.f32.partialorder %v3233, 0.7853982
      %vm3235 = vcmp.lt.s32.totalorder %v727, 0
      %v3236 = vand.u32 %v727, 2139095040
      %v3237 = vshrl.u32 %v3236, 23
      %v3238 = vsub.s32 %v3237, 127
      %v3239 = vand.u32 2147483647, %v727
      %v3240 = vand.u32 %v3239, 8388607
      %v3241 = vor.u32 %v3240, 8388608
      %v3242 = vsub.s32 0, %v3241
      %v3243 = vadd.s32 %v3238, 1
      %vm3244 = vcmp.gt.s32.totalorder %v3243, 0
      %v3245 = vsel %vm3244, %v3243, 0
      %v3246 = vshrl.u32 %v3245, 5
      %v3247 = vand.u32 %v3245, 31
      %v3248 = vsub.s32 32, %v3247
      %v3249 = vshrl.u32 683565275, %v3248
      %v3250 = vshll.u32 683565275, %v3247
      %v3251 = vshrl.u32 2475754826, %v3248
      %v3252 = vor.u32 %v3250, %v3251
      %v3253 = vshll.u32 2475754826, %v3247
      %v3254 = vshrl.u32 2131351028, %v3248
      %v3255 = vor.u32 %v3253, %v3254
      %v3256 = vshll.u32 2131351028, %v3247
      %v3257 = vshrl.u32 2102212464, %v3248
      %v3258 = vor.u32 %v3256, %v3257
      %v3259 = vshll.u32 2102212464, %v3247
      %v3260 = vshrl.u32 920167782, %v3248
      %v3261 = vor.u32 %v3259, %v3260
      %v3262 = vshll.u32 920167782, %v3247
      %v3263 = vshrl.u32 1326507024, %v3248
      %v3264 = vor.u32 %v3262, %v3263
      %vm3265 = vcmp.lt.s32.totalorder %v3246, 1
      %vm3266 = vcmp.lt.s32.totalorder %v3246, 2
      %vm3267 = vcmp.lt.s32.totalorder %v3246, 3
      %vm3268 = vcmp.lt.s32.totalorder %v3246, 4
      %v3269 = vsel %vm3265, %v3249, %v3252
      %v3270 = vsel %vm3268, %v3258, 2102212464
      %v3271 = vsel %vm3267, %v3255, %v3270
      %v3272 = vsel %vm3266, %v3269, %v3271
      %v3273 = vsel %vm3265, %v3252, %v3255
      %v3274 = vsel %vm3268, %v3261, 920167782
      %v3275 = vsel %vm3267, %v3258, %v3274
      %v3276 = vsel %vm3266, %v3273, %v3275
      %v3277 = vsel %vm3265, %v3255, %v3258
      %v3278 = vsel %vm3268, %v3264, 1326507024
      %v3279 = vsel %vm3267, %v3261, %v3278
      %v3280 = vsel %vm3266, %v3277, %v3279
      %v3281 = vshll.u32 %v3241, 8
      %v3282 = vmul.u32.u64.compose %v3281, %v3280
      %v3283 = vextract.low.u32 %v3282
      %v3284 = vextract.high.u32 %v3282
      %v3285 = vmul.u32.u64.compose %v3281, %v3276
      %v3286 = vextract.low.u32 %v3285
      %v3287 = vextract.high.u32 %v3285
      %v3288 = vmul.u32 %v3281, %v3272
      %v3289 = vadd.s32 %v3284, %v3286
      %vm3290 = vc.u32 %v3284, %v3286
      %v3291 = vadd.s32 %v3287, 1
      %v3292 = vsel %vm3290, %v3291, %v3287
      %v3293 = vadd.s32 %v3288, %v3292
      %v3294 = vadd.s32 %v3293, 536870912
      %v3295 = vshrl.u32 %v3294, 30
      %v3296 = vshll.u32 %v3295, 30
      %v3297 = vsub.s32 %v3293, %v3296
      %vm3298 = vcmp.lt.s32.totalorder %v3297, 0
      %v3299 = vsub.s32 0, %v3297
      %v3300 = vsel %vm3298, %v3299, %v3297
      %v3301 = vclz %v3300
      %v3302 = vsub.s32 %v3301, 2
      %vm3303 = vcmp.gt.s32.totalorder 0, %v3302
      %v3304 = vsel %vm3303, 0, %v3302
      %v3305 = vsub.s32 32, %v3304
      %v3306 = vshll.u32 %v3297, %v3304
      %v3307 = vshrl.u32 %v3289, %v3305
      %v3308 = vor.u32 %v3306, %v3307
      %v3309 = vsub.s32 4294967266, %v3304
      %v3310 = vadd.s32 %v3309, 127
      %v3311 = vshll.u32 %v3310, 23
      %v3312 = vor.u32 4788187, %v3311
      %v3313 = vand.u32 2147483647, %v3312
      %v3315 = vcvt.s32.f32 %v3308
      %v3316 = vmul.f32 %v3315, %v3313
      %v3317 = vxor.u32 %v3316, 2147483648
      %v3318 = vsel %vm3235, %v3317, %v3316
      %v3319 = vsub.s32 4, %v3295
      %v3320 = vsel %vm3235, %v3319, %v3295
      %v3321 = vsel %vm3234, %v727, %v3318
      %v3322 = vsel %vm3234, 0, %v3320
      %v3323 = vcosq.f32.pop %v3321
      %v3324 = vsinq.f32.pop %v3321
      %vm3325 = vweird.f32 %v727
      %v3326 = vadd.s32 %v3322, 3
      %v3327 = vand.u32 %v3326, 3
      %vm3328 = vcmp.lt.s32.totalorder %v3327, 2
      %vm3329 = vcmp.eq.s32.totalorder %v3327, 0
      %v3330 = vxor.u32 %v3324, 2147483648
      %v3331 = vsel %vm3329, %v3323, %v3330
      %vm3332 = vcmp.eq.s32.totalorder %v3327, 2
      %v3333 = vxor.u32 %v3323, 2147483648
      %v3334 = vsel %vm3332, %v3333, %v3324
      %v3335 = vsel %vm3328, %v3331, %v3334
      %v3336 = vsel %vm3325, nan, %v3335
      %v3337 = vand.u32 2147483647, %v728
      %vm3338 = vcmp.le.f32.partialorder %v3337, 0.7853982
      %vm3339 = vcmp.lt.s32.totalorder %v728, 0
      %v3340 = vand.u32 %v728, 2139095040
      %v3341 = vshrl.u32 %v3340, 23
      %v3342 = vsub.s32 %v3341, 127
      %v3343 = vand.u32 2147483647, %v728
      %v3344 = vand.u32 %v3343, 8388607
      %v3345 = vor.u32 %v3344, 8388608
      %v3346 = vsub.s32 0, %v3345
      %v3347 = vadd.s32 %v3342, 1
      %vm3348 = vcmp.gt.s32.totalorder %v3347, 0
      %v3349 = vsel %vm3348, %v3347, 0
      %v3350 = vshrl.u32 %v3349, 5
      %v3351 = vand.u32 %v3349, 31
      %v3352 = vsub.s32 32, %v3351
      %v3353 = vshrl.u32 683565275, %v3352
      %v3354 = vshll.u32 683565275, %v3351
      %v3355 = vshrl.u32 2475754826, %v3352
      %v3356 = vor.u32 %v3354, %v3355
      %v3357 = vshll.u32 2475754826, %v3351
      %v3358 = vshrl.u32 2131351028, %v3352
      %v3359 = vor.u32 %v3357, %v3358
      %v3360 = vshll.u32 2131351028, %v3351
      %v3361 = vshrl.u32 2102212464, %v3352
      %v3362 = vor.u32 %v3360, %v3361
      %v3363 = vshll.u32 2102212464, %v3351
      %v3364 = vshrl.u32 920167782, %v3352
      %v3365 = vor.u32 %v3363, %v3364
      %v3366 = vshll.u32 920167782, %v3351
      %v3367 = vshrl.u32 1326507024, %v3352
      %v3368 = vor.u32 %v3366, %v3367
      %vm3369 = vcmp.lt.s32.totalorder %v3350, 1
      %vm3370 = vcmp.lt.s32.totalorder %v3350, 2
      %vm3371 = vcmp.lt.s32.totalorder %v3350, 3
      %vm3372 = vcmp.lt.s32.totalorder %v3350, 4
      %v3373 = vsel %vm3369, %v3353, %v3356
      %v3374 = vsel %vm3372, %v3362, 2102212464
      %v3375 = vsel %vm3371, %v3359, %v3374
      %v3376 = vsel %vm3370, %v3373, %v3375
      %v3377 = vsel %vm3369, %v3356, %v3359
      %v3378 = vsel %vm3372, %v3365, 920167782
      %v3379 = vsel %vm3371, %v3362, %v3378
      %v3380 = vsel %vm3370, %v3377, %v3379
      %v3381 = vsel %vm3369, %v3359, %v3362
      %v3382 = vsel %vm3372, %v3368, 1326507024
      %v3383 = vsel %vm3371, %v3365, %v3382
      %v3384 = vsel %vm3370, %v3381, %v3383
      %v3385 = vshll.u32 %v3345, 8
      %v3386 = vmul.u32.u64.compose %v3385, %v3384
      %v3387 = vextract.low.u32 %v3386
      %v3388 = vextract.high.u32 %v3386
      %v3389 = vmul.u32.u64.compose %v3385, %v3380
      %v3390 = vextract.low.u32 %v3389
      %v3391 = vextract.high.u32 %v3389
      %v3392 = vmul.u32 %v3385, %v3376
      %v3393 = vadd.s32 %v3388, %v3390
      %vm3394 = vc.u32 %v3388, %v3390
      %v3395 = vadd.s32 %v3391, 1
      %v3396 = vsel %vm3394, %v3395, %v3391
      %v3397 = vadd.s32 %v3392, %v3396
      %v3398 = vadd.s32 %v3397, 536870912
      %v3399 = vshrl.u32 %v3398, 30
      %v3400 = vshll.u32 %v3399, 30
      %v3401 = vsub.s32 %v3397, %v3400
      %vm3402 = vcmp.lt.s32.totalorder %v3401, 0
      %v3403 = vsub.s32 0, %v3401
      %v3404 = vsel %vm3402, %v3403, %v3401
      %v3405 = vclz %v3404
      %v3406 = vsub.s32 %v3405, 2
      %vm3407 = vcmp.gt.s32.totalorder 0, %v3406
      %v3408 = vsel %vm3407, 0, %v3406
      %v3409 = vsub.s32 32, %v3408
      %v3410 = vshll.u32 %v3401, %v3408
      %v3411 = vshrl.u32 %v3393, %v3409
      %v3412 = vor.u32 %v3410, %v3411
      %v3413 = vsub.s32 4294967266, %v3408
      %v3414 = vadd.s32 %v3413, 127
      %v3415 = vshll.u32 %v3414, 23
      %v3416 = vor.u32 4788187, %v3415
      %v3417 = vand.u32 2147483647, %v3416
      %v3419 = vcvt.s32.f32 %v3412
      %v3420 = vmul.f32 %v3419, %v3417
      %v3421 = vxor.u32 %v3420, 2147483648
      %v3422 = vsel %vm3339, %v3421, %v3420
      %v3423 = vsub.s32 4, %v3399
      %v3424 = vsel %vm3339, %v3423, %v3399
      %v3425 = vsel %vm3338, %v728, %v3422
      %v3426 = vsel %vm3338, 0, %v3424
      %v3427 = vcosq.f32.pop %v3425
      %v3428 = vsinq.f32.pop %v3425
      %vm3429 = vweird.f32 %v728
      %v3430 = vadd.s32 %v3426, 3
      %v3431 = vand.u32 %v3430, 3
      %vm3432 = vcmp.lt.s32.totalorder %v3431, 2
      %vm3433 = vcmp.eq.s32.totalorder %v3431, 0
      %v3434 = vxor.u32 %v3428, 2147483648
      %v3435 = vsel %vm3433, %v3427, %v3434
      %vm3436 = vcmp.eq.s32.totalorder %v3431, 2
      %v3437 = vxor.u32 %v3427, 2147483648
      %v3438 = vsel %vm3436, %v3437, %v3428
      %v3439 = vsel %vm3432, %v3435, %v3438
      %v3440 = vsel %vm3429, nan, %v3439
      %v3441 = vand.u32 2147483647, %v729
      %vm3442 = vcmp.le.f32.partialorder %v3441, 0.7853982
      %vm3443 = vcmp.lt.s32.totalorder %v729, 0
      %v3444 = vand.u32 %v729, 2139095040
      %v3445 = vshrl.u32 %v3444, 23
      %v3446 = vsub.s32 %v3445, 127
      %v3447 = vand.u32 2147483647, %v729
      %v3448 = vand.u32 %v3447, 8388607
      %v3449 = vor.u32 %v3448, 8388608
      %v3450 = vsub.s32 0, %v3449
      %v3451 = vadd.s32 %v3446, 1
      %vm3452 = vcmp.gt.s32.totalorder %v3451, 0
      %v3453 = vsel %vm3452, %v3451, 0
      %v3454 = vshrl.u32 %v3453, 5
      %v3455 = vand.u32 %v3453, 31
      %v3456 = vsub.s32 32, %v3455
      %v3457 = vshrl.u32 683565275, %v3456
      %v3458 = vshll.u32 683565275, %v3455
      %v3459 = vshrl.u32 2475754826, %v3456
      %v3460 = vor.u32 %v3458, %v3459
      %v3461 = vshll.u32 2475754826, %v3455
      %v3462 = vshrl.u32 2131351028, %v3456
      %v3463 = vor.u32 %v3461, %v3462
      %v3464 = vshll.u32 2131351028, %v3455
      %v3465 = vshrl.u32 2102212464, %v3456
      %v3466 = vor.u32 %v3464, %v3465
      %v3467 = vshll.u32 2102212464, %v3455
      %v3468 = vshrl.u32 920167782, %v3456
      %v3469 = vor.u32 %v3467, %v3468
      %v3470 = vshll.u32 920167782, %v3455
      %v3471 = vshrl.u32 1326507024, %v3456
      %v3472 = vor.u32 %v3470, %v3471
      %vm3473 = vcmp.lt.s32.totalorder %v3454, 1
      %vm3474 = vcmp.lt.s32.totalorder %v3454, 2
      %vm3475 = vcmp.lt.s32.totalorder %v3454, 3
      %vm3476 = vcmp.lt.s32.totalorder %v3454, 4
      %v3477 = vsel %vm3473, %v3457, %v3460
      %v3478 = vsel %vm3476, %v3466, 2102212464
      %v3479 = vsel %vm3475, %v3463, %v3478
      %v3480 = vsel %vm3474, %v3477, %v3479
      %v3481 = vsel %vm3473, %v3460, %v3463
      %v3482 = vsel %vm3476, %v3469, 920167782
      %v3483 = vsel %vm3475, %v3466, %v3482
      %v3484 = vsel %vm3474, %v3481, %v3483
      %v3485 = vsel %vm3473, %v3463, %v3466
      %v3486 = vsel %vm3476, %v3472, 1326507024
      %v3487 = vsel %vm3475, %v3469, %v3486
      %v3488 = vsel %vm3474, %v3485, %v3487
      %v3489 = vshll.u32 %v3449, 8
      %v3490 = vmul.u32.u64.compose %v3489, %v3488
      %v3491 = vextract.low.u32 %v3490
      %v3492 = vextract.high.u32 %v3490
      %v3493 = vmul.u32.u64.compose %v3489, %v3484
      %v3494 = vextract.low.u32 %v3493
      %v3495 = vextract.high.u32 %v3493
      %v3496 = vmul.u32 %v3489, %v3480
      %v3497 = vadd.s32 %v3492, %v3494
      %vm3498 = vc.u32 %v3492, %v3494
      %v3499 = vadd.s32 %v3495, 1
      %v3500 = vsel %vm3498, %v3499, %v3495
      %v3501 = vadd.s32 %v3496, %v3500
      %v3502 = vadd.s32 %v3501, 536870912
      %v3503 = vshrl.u32 %v3502, 30
      %v3504 = vshll.u32 %v3503, 30
      %v3505 = vsub.s32 %v3501, %v3504
      %vm3506 = vcmp.lt.s32.totalorder %v3505, 0
      %v3507 = vsub.s32 0, %v3505
      %v3508 = vsel %vm3506, %v3507, %v3505
      %v3509 = vclz %v3508
      %v3510 = vsub.s32 %v3509, 2
      %vm3511 = vcmp.gt.s32.totalorder 0, %v3510
      %v3512 = vsel %vm3511, 0, %v3510
      %v3513 = vsub.s32 32, %v3512
      %v3514 = vshll.u32 %v3505, %v3512
      %v3515 = vshrl.u32 %v3497, %v3513
      %v3516 = vor.u32 %v3514, %v3515
      %v3517 = vsub.s32 4294967266, %v3512
      %v3518 = vadd.s32 %v3517, 127
      %v3519 = vshll.u32 %v3518, 23
      %v3520 = vor.u32 4788187, %v3519
      %v3521 = vand.u32 2147483647, %v3520
      %v3523 = vcvt.s32.f32 %v3516
      %v3524 = vmul.f32 %v3523, %v3521
      %v3525 = vxor.u32 %v3524, 2147483648
      %v3526 = vsel %vm3443, %v3525, %v3524
      %v3527 = vsub.s32 4, %v3503
      %v3528 = vsel %vm3443, %v3527, %v3503
      %v3529 = vsel %vm3442, %v729, %v3526
      %v3530 = vsel %vm3442, 0, %v3528
      %v3531 = vcosq.f32.pop %v3529
      %v3532 = vsinq.f32.pop %v3529
      %vm3533 = vweird.f32 %v729
      %v3534 = vadd.s32 %v3530, 3
      %v3535 = vand.u32 %v3534, 3
      %vm3536 = vcmp.lt.s32.totalorder %v3535, 2
      %vm3537 = vcmp.eq.s32.totalorder %v3535, 0
      %v3538 = vxor.u32 %v3532, 2147483648
      %v3539 = vsel %vm3537, %v3531, %v3538
      %vm3540 = vcmp.eq.s32.totalorder %v3535, 2
      %v3541 = vxor.u32 %v3531, 2147483648
      %v3542 = vsel %vm3540, %v3541, %v3532
      %v3543 = vsel %vm3536, %v3539, %v3542
      %v3544 = vsel %vm3533, nan, %v3543
      %v3545 = vand.u32 2147483647, %v730
      %vm3546 = vcmp.le.f32.partialorder %v3545, 0.7853982
      %vm3547 = vcmp.lt.s32.totalorder %v730, 0
      %v3548 = vand.u32 %v730, 2139095040
      %v3549 = vshrl.u32 %v3548, 23
      %v3550 = vsub.s32 %v3549, 127
      %v3551 = vand.u32 2147483647, %v730
      %v3552 = vand.u32 %v3551, 8388607
      %v3553 = vor.u32 %v3552, 8388608
      %v3554 = vsub.s32 0, %v3553
      %v3555 = vadd.s32 %v3550, 1
      %vm3556 = vcmp.gt.s32.totalorder %v3555, 0
      %v3557 = vsel %vm3556, %v3555, 0
      %v3558 = vshrl.u32 %v3557, 5
      %v3559 = vand.u32 %v3557, 31
      %v3560 = vsub.s32 32, %v3559
      %v3561 = vshrl.u32 683565275, %v3560
      %v3562 = vshll.u32 683565275, %v3559
      %v3563 = vshrl.u32 2475754826, %v3560
      %v3564 = vor.u32 %v3562, %v3563
      %v3565 = vshll.u32 2475754826, %v3559
      %v3566 = vshrl.u32 2131351028, %v3560
      %v3567 = vor.u32 %v3565, %v3566
      %v3568 = vshll.u32 2131351028, %v3559
      %v3569 = vshrl.u32 2102212464, %v3560
      %v3570 = vor.u32 %v3568, %v3569
      %v3571 = vshll.u32 2102212464, %v3559
      %v3572 = vshrl.u32 920167782, %v3560
      %v3573 = vor.u32 %v3571, %v3572
      %v3574 = vshll.u32 920167782, %v3559
      %v3575 = vshrl.u32 1326507024, %v3560
      %v3576 = vor.u32 %v3574, %v3575
      %vm3577 = vcmp.lt.s32.totalorder %v3558, 1
      %vm3578 = vcmp.lt.s32.totalorder %v3558, 2
      %vm3579 = vcmp.lt.s32.totalorder %v3558, 3
      %vm3580 = vcmp.lt.s32.totalorder %v3558, 4
      %v3581 = vsel %vm3577, %v3561, %v3564
      %v3582 = vsel %vm3580, %v3570, 2102212464
      %v3583 = vsel %vm3579, %v3567, %v3582
      %v3584 = vsel %vm3578, %v3581, %v3583
      %v3585 = vsel %vm3577, %v3564, %v3567
      %v3586 = vsel %vm3580, %v3573, 920167782
      %v3587 = vsel %vm3579, %v3570, %v3586
      %v3588 = vsel %vm3578, %v3585, %v3587
      %v3589 = vsel %vm3577, %v3567, %v3570
      %v3590 = vsel %vm3580, %v3576, 1326507024
      %v3591 = vsel %vm3579, %v3573, %v3590
      %v3592 = vsel %vm3578, %v3589, %v3591
      %v3593 = vshll.u32 %v3553, 8
      %v3594 = vmul.u32.u64.compose %v3593, %v3592
      %v3595 = vextract.low.u32 %v3594
      %v3596 = vextract.high.u32 %v3594
      %v3597 = vmul.u32.u64.compose %v3593, %v3588
      %v3598 = vextract.low.u32 %v3597
      %v3599 = vextract.high.u32 %v3597
      %v3600 = vmul.u32 %v3593, %v3584
      %v3601 = vadd.s32 %v3596, %v3598
      %vm3602 = vc.u32 %v3596, %v3598
      %v3603 = vadd.s32 %v3599, 1
      %v3604 = vsel %vm3602, %v3603, %v3599
      %v3605 = vadd.s32 %v3600, %v3604
      %v3606 = vadd.s32 %v3605, 536870912
      %v3607 = vshrl.u32 %v3606, 30
      %v3608 = vshll.u32 %v3607, 30
      %v3609 = vsub.s32 %v3605, %v3608
      %vm3610 = vcmp.lt.s32.totalorder %v3609, 0
      %v3611 = vsub.s32 0, %v3609
      %v3612 = vsel %vm3610, %v3611, %v3609
      %v3613 = vclz %v3612
      %v3614 = vsub.s32 %v3613, 2
      %vm3615 = vcmp.gt.s32.totalorder 0, %v3614
      %v3616 = vsel %vm3615, 0, %v3614
      %v3617 = vsub.s32 32, %v3616
      %v3618 = vshll.u32 %v3609, %v3616
      %v3619 = vshrl.u32 %v3601, %v3617
      %v3620 = vor.u32 %v3618, %v3619
      %v3621 = vsub.s32 4294967266, %v3616
      %v3622 = vadd.s32 %v3621, 127
      %v3623 = vshll.u32 %v3622, 23
      %v3624 = vor.u32 4788187, %v3623
      %v3625 = vand.u32 2147483647, %v3624
      %v3627 = vcvt.s32.f32 %v3620
      %v3628 = vmul.f32 %v3627, %v3625
      %v3629 = vxor.u32 %v3628, 2147483648
      %v3630 = vsel %vm3547, %v3629, %v3628
      %v3631 = vsub.s32 4, %v3607
      %v3632 = vsel %vm3547, %v3631, %v3607
      %v3633 = vsel %vm3546, %v730, %v3630
      %v3634 = vsel %vm3546, 0, %v3632
      %v3635 = vcosq.f32.pop %v3633
      %v3636 = vsinq.f32.pop %v3633
      %vm3637 = vweird.f32 %v730
      %v3638 = vadd.s32 %v3634, 3
      %v3639 = vand.u32 %v3638, 3
      %vm3640 = vcmp.lt.s32.totalorder %v3639, 2
      %vm3641 = vcmp.eq.s32.totalorder %v3639, 0
      %v3642 = vxor.u32 %v3636, 2147483648
      %v3643 = vsel %vm3641, %v3635, %v3642
      %vm3644 = vcmp.eq.s32.totalorder %v3639, 2
      %v3645 = vxor.u32 %v3635, 2147483648
      %v3646 = vsel %vm3644, %v3645, %v3636
      %v3647 = vsel %vm3640, %v3643, %v3646
      %v3648 = vsel %vm3637, nan, %v3647
      %v3649 = vand.u32 2147483647, %v731
      %vm3650 = vcmp.le.f32.partialorder %v3649, 0.7853982
      %vm3651 = vcmp.lt.s32.totalorder %v731, 0
      %v3652 = vand.u32 %v731, 2139095040
      %v3653 = vshrl.u32 %v3652, 23
      %v3654 = vsub.s32 %v3653, 127
      %v3655 = vand.u32 2147483647, %v731
      %v3656 = vand.u32 %v3655, 8388607
      %v3657 = vor.u32 %v3656, 8388608
      %v3658 = vsub.s32 0, %v3657
      %v3659 = vadd.s32 %v3654, 1
      %vm3660 = vcmp.gt.s32.totalorder %v3659, 0
      %v3661 = vsel %vm3660, %v3659, 0
      %v3662 = vshrl.u32 %v3661, 5
      %v3663 = vand.u32 %v3661, 31
      %v3664 = vsub.s32 32, %v3663
      %v3665 = vshrl.u32 683565275, %v3664
      %v3666 = vshll.u32 683565275, %v3663
      %v3667 = vshrl.u32 2475754826, %v3664
      %v3668 = vor.u32 %v3666, %v3667
      %v3669 = vshll.u32 2475754826, %v3663
      %v3670 = vshrl.u32 2131351028, %v3664
      %v3671 = vor.u32 %v3669, %v3670
      %v3672 = vshll.u32 2131351028, %v3663
      %v3673 = vshrl.u32 2102212464, %v3664
      %v3674 = vor.u32 %v3672, %v3673
      %v3675 = vshll.u32 2102212464, %v3663
      %v3676 = vshrl.u32 920167782, %v3664
      %v3677 = vor.u32 %v3675, %v3676
      %v3678 = vshll.u32 920167782, %v3663
      %v3679 = vshrl.u32 1326507024, %v3664
      %v3680 = vor.u32 %v3678, %v3679
      %vm3681 = vcmp.lt.s32.totalorder %v3662, 1
      %vm3682 = vcmp.lt.s32.totalorder %v3662, 2
      %vm3683 = vcmp.lt.s32.totalorder %v3662, 3
      %vm3684 = vcmp.lt.s32.totalorder %v3662, 4
      %v3685 = vsel %vm3681, %v3665, %v3668
      %v3686 = vsel %vm3684, %v3674, 2102212464
      %v3687 = vsel %vm3683, %v3671, %v3686
      %v3688 = vsel %vm3682, %v3685, %v3687
      %v3689 = vsel %vm3681, %v3668, %v3671
      %v3690 = vsel %vm3684, %v3677, 920167782
      %v3691 = vsel %vm3683, %v3674, %v3690
      %v3692 = vsel %vm3682, %v3689, %v3691
      %v3693 = vsel %vm3681, %v3671, %v3674
      %v3694 = vsel %vm3684, %v3680, 1326507024
      %v3695 = vsel %vm3683, %v3677, %v3694
      %v3696 = vsel %vm3682, %v3693, %v3695
      %v3697 = vshll.u32 %v3657, 8
      %v3698 = vmul.u32.u64.compose %v3697, %v3696
      %v3699 = vextract.low.u32 %v3698
      %v3700 = vextract.high.u32 %v3698
      %v3701 = vmul.u32.u64.compose %v3697, %v3692
      %v3702 = vextract.low.u32 %v3701
      %v3703 = vextract.high.u32 %v3701
      %v3704 = vmul.u32 %v3697, %v3688
      %v3705 = vadd.s32 %v3700, %v3702
      %vm3706 = vc.u32 %v3700, %v3702
      %v3707 = vadd.s32 %v3703, 1
      %v3708 = vsel %vm3706, %v3707, %v3703
      %v3709 = vadd.s32 %v3704, %v3708
      %v3710 = vadd.s32 %v3709, 536870912
      %v3711 = vshrl.u32 %v3710, 30
      %v3712 = vshll.u32 %v3711, 30
      %v3713 = vsub.s32 %v3709, %v3712
      %vm3714 = vcmp.lt.s32.totalorder %v3713, 0
      %v3715 = vsub.s32 0, %v3713
      %v3716 = vsel %vm3714, %v3715, %v3713
      %v3717 = vclz %v3716
      %v3718 = vsub.s32 %v3717, 2
      %vm3719 = vcmp.gt.s32.totalorder 0, %v3718
      %v3720 = vsel %vm3719, 0, %v3718
      %v3721 = vsub.s32 32, %v3720
      %v3722 = vshll.u32 %v3713, %v3720
      %v3723 = vshrl.u32 %v3705, %v3721
      %v3724 = vor.u32 %v3722, %v3723
      %v3725 = vsub.s32 4294967266, %v3720
      %v3726 = vadd.s32 %v3725, 127
      %v3727 = vshll.u32 %v3726, 23
      %v3728 = vor.u32 4788187, %v3727
      %v3729 = vand.u32 2147483647, %v3728
      %v3731 = vcvt.s32.f32 %v3724
      %v3732 = vmul.f32 %v3731, %v3729
      %v3733 = vxor.u32 %v3732, 2147483648
      %v3734 = vsel %vm3651, %v3733, %v3732
      %v3735 = vsub.s32 4, %v3711
      %v3736 = vsel %vm3651, %v3735, %v3711
      %v3737 = vsel %vm3650, %v731, %v3734
      %v3738 = vsel %vm3650, 0, %v3736
      %v3739 = vcosq.f32.pop %v3737
      %v3740 = vsinq.f32.pop %v3737
      %vm3741 = vweird.f32 %v731
      %v3742 = vadd.s32 %v3738, 3
      %v3743 = vand.u32 %v3742, 3
      %vm3744 = vcmp.lt.s32.totalorder %v3743, 2
      %vm3745 = vcmp.eq.s32.totalorder %v3743, 0
      %v3746 = vxor.u32 %v3740, 2147483648
      %v3747 = vsel %vm3745, %v3739, %v3746
      %vm3748 = vcmp.eq.s32.totalorder %v3743, 2
      %v3749 = vxor.u32 %v3739, 2147483648
      %v3750 = vsel %vm3748, %v3749, %v3740
      %v3751 = vsel %vm3744, %v3747, %v3750
      %v3752 = vsel %vm3741, nan, %v3751
      %v3753 = vand.u32 2147483647, %v732
      %vm3754 = vcmp.le.f32.partialorder %v3753, 0.7853982
      %vm3755 = vcmp.lt.s32.totalorder %v732, 0
      %v3756 = vand.u32 %v732, 2139095040
      %v3757 = vshrl.u32 %v3756, 23
      %v3758 = vsub.s32 %v3757, 127
      %v3759 = vand.u32 2147483647, %v732
      %v3760 = vand.u32 %v3759, 8388607
      %v3761 = vor.u32 %v3760, 8388608
      %v3762 = vsub.s32 0, %v3761
      %v3763 = vadd.s32 %v3758, 1
      %vm3764 = vcmp.gt.s32.totalorder %v3763, 0
      %v3765 = vsel %vm3764, %v3763, 0
      %v3766 = vshrl.u32 %v3765, 5
      %v3767 = vand.u32 %v3765, 31
      %v3768 = vsub.s32 32, %v3767
      %v3769 = vshrl.u32 683565275, %v3768
      %v3770 = vshll.u32 683565275, %v3767
      %v3771 = vshrl.u32 2475754826, %v3768
      %v3772 = vor.u32 %v3770, %v3771
      %v3773 = vshll.u32 2475754826, %v3767
      %v3774 = vshrl.u32 2131351028, %v3768
      %v3775 = vor.u32 %v3773, %v3774
      %v3776 = vshll.u32 2131351028, %v3767
      %v3777 = vshrl.u32 2102212464, %v3768
      %v3778 = vor.u32 %v3776, %v3777
      %v3779 = vshll.u32 2102212464, %v3767
      %v3780 = vshrl.u32 920167782, %v3768
      %v3781 = vor.u32 %v3779, %v3780
      %v3782 = vshll.u32 920167782, %v3767
      %v3783 = vshrl.u32 1326507024, %v3768
      %v3784 = vor.u32 %v3782, %v3783
      %vm3785 = vcmp.lt.s32.totalorder %v3766, 1
      %vm3786 = vcmp.lt.s32.totalorder %v3766, 2
      %vm3787 = vcmp.lt.s32.totalorder %v3766, 3
      %vm3788 = vcmp.lt.s32.totalorder %v3766, 4
      %v3789 = vsel %vm3785, %v3769, %v3772
      %v3790 = vsel %vm3788, %v3778, 2102212464
      %v3791 = vsel %vm3787, %v3775, %v3790
      %v3792 = vsel %vm3786, %v3789, %v3791
      %v3793 = vsel %vm3785, %v3772, %v3775
      %v3794 = vsel %vm3788, %v3781, 920167782
      %v3795 = vsel %vm3787, %v3778, %v3794
      %v3796 = vsel %vm3786, %v3793, %v3795
      %v3797 = vsel %vm3785, %v3775, %v3778
      %v3798 = vsel %vm3788, %v3784, 1326507024
      %v3799 = vsel %vm3787, %v3781, %v3798
      %v3800 = vsel %vm3786, %v3797, %v3799
      %v3801 = vshll.u32 %v3761, 8
      %v3802 = vmul.u32.u64.compose %v3801, %v3800
      %v3803 = vextract.low.u32 %v3802
      %v3804 = vextract.high.u32 %v3802
      %v3805 = vmul.u32.u64.compose %v3801, %v3796
      %v3806 = vextract.low.u32 %v3805
      %v3807 = vextract.high.u32 %v3805
      %v3808 = vmul.u32 %v3801, %v3792
      %v3809 = vadd.s32 %v3804, %v3806
      %vm3810 = vc.u32 %v3804, %v3806
      %v3811 = vadd.s32 %v3807, 1
      %v3812 = vsel %vm3810, %v3811, %v3807
      %v3813 = vadd.s32 %v3808, %v3812
      %v3814 = vadd.s32 %v3813, 536870912
      %v3815 = vshrl.u32 %v3814, 30
      %v3816 = vshll.u32 %v3815, 30
      %v3817 = vsub.s32 %v3813, %v3816
      %vm3818 = vcmp.lt.s32.totalorder %v3817, 0
      %v3819 = vsub.s32 0, %v3817
      %v3820 = vsel %vm3818, %v3819, %v3817
      %v3821 = vclz %v3820
      %v3822 = vsub.s32 %v3821, 2
      %vm3823 = vcmp.gt.s32.totalorder 0, %v3822
      %v3824 = vsel %vm3823, 0, %v3822
      %v3825 = vsub.s32 32, %v3824
      %v3826 = vshll.u32 %v3817, %v3824
      %v3827 = vshrl.u32 %v3809, %v3825
      %v3828 = vor.u32 %v3826, %v3827
      %v3829 = vsub.s32 4294967266, %v3824
      %v3830 = vadd.s32 %v3829, 127
      %v3831 = vshll.u32 %v3830, 23
      %v3832 = vor.u32 4788187, %v3831
      %v3833 = vand.u32 2147483647, %v3832
      %v3835 = vcvt.s32.f32 %v3828
      %v3836 = vmul.f32 %v3835, %v3833
      %v3837 = vxor.u32 %v3836, 2147483648
      %v3838 = vsel %vm3755, %v3837, %v3836
      %v3839 = vsub.s32 4, %v3815
      %v3840 = vsel %vm3755, %v3839, %v3815
      %v3841 = vsel %vm3754, %v732, %v3838
      %v3842 = vsel %vm3754, 0, %v3840
      %v3843 = vcosq.f32.pop %v3841
      %v3844 = vsinq.f32.pop %v3841
      %vm3845 = vweird.f32 %v732
      %v3846 = vadd.s32 %v3842, 3
      %v3847 = vand.u32 %v3846, 3
      %vm3848 = vcmp.lt.s32.totalorder %v3847, 2
      %vm3849 = vcmp.eq.s32.totalorder %v3847, 0
      %v3850 = vxor.u32 %v3844, 2147483648
      %v3851 = vsel %vm3849, %v3843, %v3850
      %vm3852 = vcmp.eq.s32.totalorder %v3847, 2
      %v3853 = vxor.u32 %v3843, 2147483648
      %v3854 = vsel %vm3852, %v3853, %v3844
      %v3855 = vsel %vm3848, %v3851, %v3854
      %v3856 = vsel %vm3845, nan, %v3855
      %v3857 = vand.u32 2147483647, %v733
      %vm3858 = vcmp.le.f32.partialorder %v3857, 0.7853982
      %vm3859 = vcmp.lt.s32.totalorder %v733, 0
      %v3860 = vand.u32 %v733, 2139095040
      %v3861 = vshrl.u32 %v3860, 23
      %v3862 = vsub.s32 %v3861, 127
      %v3863 = vand.u32 2147483647, %v733
      %v3864 = vand.u32 %v3863, 8388607
      %v3865 = vor.u32 %v3864, 8388608
      %v3866 = vsub.s32 0, %v3865
      %v3867 = vadd.s32 %v3862, 1
      %vm3868 = vcmp.gt.s32.totalorder %v3867, 0
      %v3869 = vsel %vm3868, %v3867, 0
      %v3870 = vshrl.u32 %v3869, 5
      %v3871 = vand.u32 %v3869, 31
      %v3872 = vsub.s32 32, %v3871
      %v3873 = vshrl.u32 683565275, %v3872
      %v3874 = vshll.u32 683565275, %v3871
      %v3875 = vshrl.u32 2475754826, %v3872
      %v3876 = vor.u32 %v3874, %v3875
      %v3877 = vshll.u32 2475754826, %v3871
      %v3878 = vshrl.u32 2131351028, %v3872
      %v3879 = vor.u32 %v3877, %v3878
      %v3880 = vshll.u32 2131351028, %v3871
      %v3881 = vshrl.u32 2102212464, %v3872
      %v3882 = vor.u32 %v3880, %v3881
      %v3883 = vshll.u32 2102212464, %v3871
      %v3884 = vshrl.u32 920167782, %v3872
      %v3885 = vor.u32 %v3883, %v3884
      %v3886 = vshll.u32 920167782, %v3871
      %v3887 = vshrl.u32 1326507024, %v3872
      %v3888 = vor.u32 %v3886, %v3887
      %vm3889 = vcmp.lt.s32.totalorder %v3870, 1
      %vm3890 = vcmp.lt.s32.totalorder %v3870, 2
      %vm3891 = vcmp.lt.s32.totalorder %v3870, 3
      %vm3892 = vcmp.lt.s32.totalorder %v3870, 4
      %v3893 = vsel %vm3889, %v3873, %v3876
      %v3894 = vsel %vm3892, %v3882, 2102212464
      %v3895 = vsel %vm3891, %v3879, %v3894
      %v3896 = vsel %vm3890, %v3893, %v3895
      %v3897 = vsel %vm3889, %v3876, %v3879
      %v3898 = vsel %vm3892, %v3885, 920167782
      %v3899 = vsel %vm3891, %v3882, %v3898
      %v3900 = vsel %vm3890, %v3897, %v3899
      %v3901 = vsel %vm3889, %v3879, %v3882
      %v3902 = vsel %vm3892, %v3888, 1326507024
      %v3903 = vsel %vm3891, %v3885, %v3902
      %v3904 = vsel %vm3890, %v3901, %v3903
      %v3905 = vshll.u32 %v3865, 8
      %v3906 = vmul.u32.u64.compose %v3905, %v3904
      %v3907 = vextract.low.u32 %v3906
      %v3908 = vextract.high.u32 %v3906
      %v3909 = vmul.u32.u64.compose %v3905, %v3900
      %v3910 = vextract.low.u32 %v3909
      %v3911 = vextract.high.u32 %v3909
      %v3912 = vmul.u32 %v3905, %v3896
      %v3913 = vadd.s32 %v3908, %v3910
      %vm3914 = vc.u32 %v3908, %v3910
      %v3915 = vadd.s32 %v3911, 1
      %v3916 = vsel %vm3914, %v3915, %v3911
      %v3917 = vadd.s32 %v3912, %v3916
      %v3918 = vadd.s32 %v3917, 536870912
      %v3919 = vshrl.u32 %v3918, 30
      %v3920 = vshll.u32 %v3919, 30
      %v3921 = vsub.s32 %v3917, %v3920
      %vm3922 = vcmp.lt.s32.totalorder %v3921, 0
      %v3923 = vsub.s32 0, %v3921
      %v3924 = vsel %vm3922, %v3923, %v3921
      %v3925 = vclz %v3924
      %v3926 = vsub.s32 %v3925, 2
      %vm3927 = vcmp.gt.s32.totalorder 0, %v3926
      %v3928 = vsel %vm3927, 0, %v3926
      %v3929 = vsub.s32 32, %v3928
      %v3930 = vshll.u32 %v3921, %v3928
      %v3931 = vshrl.u32 %v3913, %v3929
      %v3932 = vor.u32 %v3930, %v3931
      %v3933 = vsub.s32 4294967266, %v3928
      %v3934 = vadd.s32 %v3933, 127
      %v3935 = vshll.u32 %v3934, 23
      %v3936 = vor.u32 4788187, %v3935
      %v3937 = vand.u32 2147483647, %v3936
      %v3939 = vcvt.s32.f32 %v3932
      %v3940 = vmul.f32 %v3939, %v3937
      %v3941 = vxor.u32 %v3940, 2147483648
      %v3942 = vsel %vm3859, %v3941, %v3940
      %v3943 = vsub.s32 4, %v3919
      %v3944 = vsel %vm3859, %v3943, %v3919
      %v3945 = vsel %vm3858, %v733, %v3942
      %v3946 = vsel %vm3858, 0, %v3944
      %v3947 = vcosq.f32.pop %v3945
      %v3948 = vsinq.f32.pop %v3945
      %vm3949 = vweird.f32 %v733
      %v3950 = vadd.s32 %v3946, 3
      %v3951 = vand.u32 %v3950, 3
      %vm3952 = vcmp.lt.s32.totalorder %v3951, 2
      %vm3953 = vcmp.eq.s32.totalorder %v3951, 0
      %v3954 = vxor.u32 %v3948, 2147483648
      %v3955 = vsel %vm3953, %v3947, %v3954
      %vm3956 = vcmp.eq.s32.totalorder %v3951, 2
      %v3957 = vxor.u32 %v3947, 2147483648
      %v3958 = vsel %vm3956, %v3957, %v3948
      %v3959 = vsel %vm3952, %v3955, %v3958
      %v3960 = vsel %vm3949, nan, %v3959
      %v3961 = vand.u32 2147483647, %v734
      %vm3962 = vcmp.le.f32.partialorder %v3961, 0.7853982
      %vm3963 = vcmp.lt.s32.totalorder %v734, 0
      %v3964 = vand.u32 %v734, 2139095040
      %v3965 = vshrl.u32 %v3964, 23
      %v3966 = vsub.s32 %v3965, 127
      %v3967 = vand.u32 2147483647, %v734
      %v3968 = vand.u32 %v3967, 8388607
      %v3969 = vor.u32 %v3968, 8388608
      %v3970 = vsub.s32 0, %v3969
      %v3971 = vadd.s32 %v3966, 1
      %vm3972 = vcmp.gt.s32.totalorder %v3971, 0
      %v3973 = vsel %vm3972, %v3971, 0
      %v3974 = vshrl.u32 %v3973, 5
      %v3975 = vand.u32 %v3973, 31
      %v3976 = vsub.s32 32, %v3975
      %v3977 = vshrl.u32 683565275, %v3976
      %v3978 = vshll.u32 683565275, %v3975
      %v3979 = vshrl.u32 2475754826, %v3976
      %v3980 = vor.u32 %v3978, %v3979
      %v3981 = vshll.u32 2475754826, %v3975
      %v3982 = vshrl.u32 2131351028, %v3976
      %v3983 = vor.u32 %v3981, %v3982
      %v3984 = vshll.u32 2131351028, %v3975
      %v3985 = vshrl.u32 2102212464, %v3976
      %v3986 = vor.u32 %v3984, %v3985
      %v3987 = vshll.u32 2102212464, %v3975
      %v3988 = vshrl.u32 920167782, %v3976
      %v3989 = vor.u32 %v3987, %v3988
      %v3990 = vshll.u32 920167782, %v3975
      %v3991 = vshrl.u32 1326507024, %v3976
      %v3992 = vor.u32 %v3990, %v3991
      %vm3993 = vcmp.lt.s32.totalorder %v3974, 1
      %vm3994 = vcmp.lt.s32.totalorder %v3974, 2
      %vm3995 = vcmp.lt.s32.totalorder %v3974, 3
      %vm3996 = vcmp.lt.s32.totalorder %v3974, 4
      %v3997 = vsel %vm3993, %v3977, %v3980
      %v3998 = vsel %vm3996, %v3986, 2102212464
      %v3999 = vsel %vm3995, %v3983, %v3998
      %v4000 = vsel %vm3994, %v3997, %v3999
      %v4001 = vsel %vm3993, %v3980, %v3983
      %v4002 = vsel %vm3996, %v3989, 920167782
      %v4003 = vsel %vm3995, %v3986, %v4002
      %v4004 = vsel %vm3994, %v4001, %v4003
      %v4005 = vsel %vm3993, %v3983, %v3986
      %v4006 = vsel %vm3996, %v3992, 1326507024
      %v4007 = vsel %vm3995, %v3989, %v4006
      %v4008 = vsel %vm3994, %v4005, %v4007
      %v4009 = vshll.u32 %v3969, 8
      %v4010 = vmul.u32.u64.compose %v4009, %v4008
      %v4011 = vextract.low.u32 %v4010
      %v4012 = vextract.high.u32 %v4010
      %v4013 = vmul.u32.u64.compose %v4009, %v4004
      %v4014 = vextract.low.u32 %v4013
      %v4015 = vextract.high.u32 %v4013
      %v4016 = vmul.u32 %v4009, %v4000
      %v4017 = vadd.s32 %v4012, %v4014
      %vm4018 = vc.u32 %v4012, %v4014
      %v4019 = vadd.s32 %v4015, 1
      %v4020 = vsel %vm4018, %v4019, %v4015
      %v4021 = vadd.s32 %v4016, %v4020
      %v4022 = vadd.s32 %v4021, 536870912
      %v4023 = vshrl.u32 %v4022, 30
      %v4024 = vshll.u32 %v4023, 30
      %v4025 = vsub.s32 %v4021, %v4024
      %vm4026 = vcmp.lt.s32.totalorder %v4025, 0
      %v4027 = vsub.s32 0, %v4025
      %v4028 = vsel %vm4026, %v4027, %v4025
      %v4029 = vclz %v4028
      %v4030 = vsub.s32 %v4029, 2
      %vm4031 = vcmp.gt.s32.totalorder 0, %v4030
      %v4032 = vsel %vm4031, 0, %v4030
      %v4033 = vsub.s32 32, %v4032
      %v4034 = vshll.u32 %v4025, %v4032
      %v4035 = vshrl.u32 %v4017, %v4033
      %v4036 = vor.u32 %v4034, %v4035
      %v4037 = vsub.s32 4294967266, %v4032
      %v4038 = vadd.s32 %v4037, 127
      %v4039 = vshll.u32 %v4038, 23
      %v4040 = vor.u32 4788187, %v4039
      %v4041 = vand.u32 2147483647, %v4040
      %v4043 = vcvt.s32.f32 %v4036
      %v4044 = vmul.f32 %v4043, %v4041
      %v4045 = vxor.u32 %v4044, 2147483648
      %v4046 = vsel %vm3963, %v4045, %v4044
      %v4047 = vsub.s32 4, %v4023
      %v4048 = vsel %vm3963, %v4047, %v4023
      %v4049 = vsel %vm3962, %v734, %v4046
      %v4050 = vsel %vm3962, 0, %v4048
      %v4051 = vcosq.f32.pop %v4049
      %v4052 = vsinq.f32.pop %v4049
      %vm4053 = vweird.f32 %v734
      %v4054 = vadd.s32 %v4050, 3
      %v4055 = vand.u32 %v4054, 3
      %vm4056 = vcmp.lt.s32.totalorder %v4055, 2
      %vm4057 = vcmp.eq.s32.totalorder %v4055, 0
      %v4058 = vxor.u32 %v4052, 2147483648
      %v4059 = vsel %vm4057, %v4051, %v4058
      %vm4060 = vcmp.eq.s32.totalorder %v4055, 2
      %v4061 = vxor.u32 %v4051, 2147483648
      %v4062 = vsel %vm4060, %v4061, %v4052
      %v4063 = vsel %vm4056, %v4059, %v4062
      %v4064 = vsel %vm4053, nan, %v4063
      %v4065 = vand.u32 2147483647, %v735
      %vm4066 = vcmp.le.f32.partialorder %v4065, 0.7853982
      %vm4067 = vcmp.lt.s32.totalorder %v735, 0
      %v4068 = vand.u32 %v735, 2139095040
      %v4069 = vshrl.u32 %v4068, 23
      %v4070 = vsub.s32 %v4069, 127
      %v4071 = vand.u32 2147483647, %v735
      %v4072 = vand.u32 %v4071, 8388607
      %v4073 = vor.u32 %v4072, 8388608
      %v4074 = vsub.s32 0, %v4073
      %v4075 = vadd.s32 %v4070, 1
      %vm4076 = vcmp.gt.s32.totalorder %v4075, 0
      %v4077 = vsel %vm4076, %v4075, 0
      %v4078 = vshrl.u32 %v4077, 5
      %v4079 = vand.u32 %v4077, 31
      %v4080 = vsub.s32 32, %v4079
      %v4081 = vshrl.u32 683565275, %v4080
      %v4082 = vshll.u32 683565275, %v4079
      %v4083 = vshrl.u32 2475754826, %v4080
      %v4084 = vor.u32 %v4082, %v4083
      %v4085 = vshll.u32 2475754826, %v4079
      %v4086 = vshrl.u32 2131351028, %v4080
      %v4087 = vor.u32 %v4085, %v4086
      %v4088 = vshll.u32 2131351028, %v4079
      %v4089 = vshrl.u32 2102212464, %v4080
      %v4090 = vor.u32 %v4088, %v4089
      %v4091 = vshll.u32 2102212464, %v4079
      %v4092 = vshrl.u32 920167782, %v4080
      %v4093 = vor.u32 %v4091, %v4092
      %v4094 = vshll.u32 920167782, %v4079
      %v4095 = vshrl.u32 1326507024, %v4080
      %v4096 = vor.u32 %v4094, %v4095
      %vm4097 = vcmp.lt.s32.totalorder %v4078, 1
      %vm4098 = vcmp.lt.s32.totalorder %v4078, 2
      %vm4099 = vcmp.lt.s32.totalorder %v4078, 3
      %vm4100 = vcmp.lt.s32.totalorder %v4078, 4
      %v4101 = vsel %vm4097, %v4081, %v4084
      %v4102 = vsel %vm4100, %v4090, 2102212464
      %v4103 = vsel %vm4099, %v4087, %v4102
      %v4104 = vsel %vm4098, %v4101, %v4103
      %v4105 = vsel %vm4097, %v4084, %v4087
      %v4106 = vsel %vm4100, %v4093, 920167782
      %v4107 = vsel %vm4099, %v4090, %v4106
      %v4108 = vsel %vm4098, %v4105, %v4107
      %v4109 = vsel %vm4097, %v4087, %v4090
      %v4110 = vsel %vm4100, %v4096, 1326507024
      %v4111 = vsel %vm4099, %v4093, %v4110
      %v4112 = vsel %vm4098, %v4109, %v4111
      %v4113 = vshll.u32 %v4073, 8
      %v4114 = vmul.u32.u64.compose %v4113, %v4112
      %v4115 = vextract.low.u32 %v4114
      %v4116 = vextract.high.u32 %v4114
      %v4117 = vmul.u32.u64.compose %v4113, %v4108
      %v4118 = vextract.low.u32 %v4117
      %v4119 = vextract.high.u32 %v4117
      %v4120 = vmul.u32 %v4113, %v4104
      %v4121 = vadd.s32 %v4116, %v4118
      %vm4122 = vc.u32 %v4116, %v4118
      %v4123 = vadd.s32 %v4119, 1
      %v4124 = vsel %vm4122, %v4123, %v4119
      %v4125 = vadd.s32 %v4120, %v4124
      %v4126 = vadd.s32 %v4125, 536870912
      %v4127 = vshrl.u32 %v4126, 30
      %v4128 = vshll.u32 %v4127, 30
      %v4129 = vsub.s32 %v4125, %v4128
      %vm4130 = vcmp.lt.s32.totalorder %v4129, 0
      %v4131 = vsub.s32 0, %v4129
      %v4132 = vsel %vm4130, %v4131, %v4129
      %v4133 = vclz %v4132
      %v4134 = vsub.s32 %v4133, 2
      %vm4135 = vcmp.gt.s32.totalorder 0, %v4134
      %v4136 = vsel %vm4135, 0, %v4134
      %v4137 = vsub.s32 32, %v4136
      %v4138 = vshll.u32 %v4129, %v4136
      %v4139 = vshrl.u32 %v4121, %v4137
      %v4140 = vor.u32 %v4138, %v4139
      %v4141 = vsub.s32 4294967266, %v4136
      %v4142 = vadd.s32 %v4141, 127
      %v4143 = vshll.u32 %v4142, 23
      %v4144 = vor.u32 4788187, %v4143
      %v4145 = vand.u32 2147483647, %v4144
      %v4147 = vcvt.s32.f32 %v4140
      %v4148 = vmul.f32 %v4147, %v4145
      %v4149 = vxor.u32 %v4148, 2147483648
      %v4150 = vsel %vm4067, %v4149, %v4148
      %v4151 = vsub.s32 4, %v4127
      %v4152 = vsel %vm4067, %v4151, %v4127
      %v4153 = vsel %vm4066, %v735, %v4150
      %v4154 = vsel %vm4066, 0, %v4152
      %v4155 = vcosq.f32.pop %v4153
      %v4156 = vsinq.f32.pop %v4153
      %vm4157 = vweird.f32 %v735
      %v4158 = vadd.s32 %v4154, 3
      %v4159 = vand.u32 %v4158, 3
      %vm4160 = vcmp.lt.s32.totalorder %v4159, 2
      %vm4161 = vcmp.eq.s32.totalorder %v4159, 0
      %v4162 = vxor.u32 %v4156, 2147483648
      %v4163 = vsel %vm4161, %v4155, %v4162
      %vm4164 = vcmp.eq.s32.totalorder %v4159, 2
      %v4165 = vxor.u32 %v4155, 2147483648
      %v4166 = vsel %vm4164, %v4165, %v4156
      %v4167 = vsel %vm4160, %v4163, %v4166
      %v4168 = vsel %vm4157, nan, %v4167
      %v4169 = vand.u32 2147483647, %v736
      %vm4170 = vcmp.le.f32.partialorder %v4169, 0.7853982
      %vm4171 = vcmp.lt.s32.totalorder %v736, 0
      %v4172 = vand.u32 %v736, 2139095040
      %v4173 = vshrl.u32 %v4172, 23
      %v4174 = vsub.s32 %v4173, 127
      %v4175 = vand.u32 2147483647, %v736
      %v4176 = vand.u32 %v4175, 8388607
      %v4177 = vor.u32 %v4176, 8388608
      %v4178 = vsub.s32 0, %v4177
      %v4179 = vadd.s32 %v4174, 1
      %vm4180 = vcmp.gt.s32.totalorder %v4179, 0
      %v4181 = vsel %vm4180, %v4179, 0
      %v4182 = vshrl.u32 %v4181, 5
      %v4183 = vand.u32 %v4181, 31
      %v4184 = vsub.s32 32, %v4183
      %v4185 = vshrl.u32 683565275, %v4184
      %v4186 = vshll.u32 683565275, %v4183
      %v4187 = vshrl.u32 2475754826, %v4184
      %v4188 = vor.u32 %v4186, %v4187
      %v4189 = vshll.u32 2475754826, %v4183
      %v4190 = vshrl.u32 2131351028, %v4184
      %v4191 = vor.u32 %v4189, %v4190
      %v4192 = vshll.u32 2131351028, %v4183
      %v4193 = vshrl.u32 2102212464, %v4184
      %v4194 = vor.u32 %v4192, %v4193
      %v4195 = vshll.u32 2102212464, %v4183
      %v4196 = vshrl.u32 920167782, %v4184
      %v4197 = vor.u32 %v4195, %v4196
      %v4198 = vshll.u32 920167782, %v4183
      %v4199 = vshrl.u32 1326507024, %v4184
      %v4200 = vor.u32 %v4198, %v4199
      %vm4201 = vcmp.lt.s32.totalorder %v4182, 1
      %vm4202 = vcmp.lt.s32.totalorder %v4182, 2
      %vm4203 = vcmp.lt.s32.totalorder %v4182, 3
      %vm4204 = vcmp.lt.s32.totalorder %v4182, 4
      %v4205 = vsel %vm4201, %v4185, %v4188
      %v4206 = vsel %vm4204, %v4194, 2102212464
      %v4207 = vsel %vm4203, %v4191, %v4206
      %v4208 = vsel %vm4202, %v4205, %v4207
      %v4209 = vsel %vm4201, %v4188, %v4191
      %v4210 = vsel %vm4204, %v4197, 920167782
      %v4211 = vsel %vm4203, %v4194, %v4210
      %v4212 = vsel %vm4202, %v4209, %v4211
      %v4213 = vsel %vm4201, %v4191, %v4194
      %v4214 = vsel %vm4204, %v4200, 1326507024
      %v4215 = vsel %vm4203, %v4197, %v4214
      %v4216 = vsel %vm4202, %v4213, %v4215
      %v4217 = vshll.u32 %v4177, 8
      %v4218 = vmul.u32.u64.compose %v4217, %v4216
      %v4219 = vextract.low.u32 %v4218
      %v4220 = vextract.high.u32 %v4218
      %v4221 = vmul.u32.u64.compose %v4217, %v4212
      %v4222 = vextract.low.u32 %v4221
      %v4223 = vextract.high.u32 %v4221
      %v4224 = vmul.u32 %v4217, %v4208
      %v4225 = vadd.s32 %v4220, %v4222
      %vm4226 = vc.u32 %v4220, %v4222
      %v4227 = vadd.s32 %v4223, 1
      %v4228 = vsel %vm4226, %v4227, %v4223
      %v4229 = vadd.s32 %v4224, %v4228
      %v4230 = vadd.s32 %v4229, 536870912
      %v4231 = vshrl.u32 %v4230, 30
      %v4232 = vshll.u32 %v4231, 30
      %v4233 = vsub.s32 %v4229, %v4232
      %vm4234 = vcmp.lt.s32.totalorder %v4233, 0
      %v4235 = vsub.s32 0, %v4233
      %v4236 = vsel %vm4234, %v4235, %v4233
      %v4237 = vclz %v4236
      %v4238 = vsub.s32 %v4237, 2
      %vm4239 = vcmp.gt.s32.totalorder 0, %v4238
      %v4240 = vsel %vm4239, 0, %v4238
      %v4241 = vsub.s32 32, %v4240
      %v4242 = vshll.u32 %v4233, %v4240
      %v4243 = vshrl.u32 %v4225, %v4241
      %v4244 = vor.u32 %v4242, %v4243
      %v4245 = vsub.s32 4294967266, %v4240
      %v4246 = vadd.s32 %v4245, 127
      %v4247 = vshll.u32 %v4246, 23
      %v4248 = vor.u32 4788187, %v4247
      %v4249 = vand.u32 2147483647, %v4248
      %v4251 = vcvt.s32.f32 %v4244
      %v4252 = vmul.f32 %v4251, %v4249
      %v4253 = vxor.u32 %v4252, 2147483648
      %v4254 = vsel %vm4171, %v4253, %v4252
      %v4255 = vsub.s32 4, %v4231
      %v4256 = vsel %vm4171, %v4255, %v4231
      %v4257 = vsel %vm4170, %v736, %v4254
      %v4258 = vsel %vm4170, 0, %v4256
      %v4259 = vcosq.f32.pop %v4257
      %v4260 = vsinq.f32.pop %v4257
      %vm4261 = vweird.f32 %v736
      %v4262 = vadd.s32 %v4258, 3
      %v4263 = vand.u32 %v4262, 3
      %vm4264 = vcmp.lt.s32.totalorder %v4263, 2
      %vm4265 = vcmp.eq.s32.totalorder %v4263, 0
      %v4266 = vxor.u32 %v4260, 2147483648
      %v4267 = vsel %vm4265, %v4259, %v4266
      %vm4268 = vcmp.eq.s32.totalorder %v4263, 2
      %v4269 = vxor.u32 %v4259, 2147483648
      %v4270 = vsel %vm4268, %v4269, %v4260
      %v4271 = vsel %vm4264, %v4267, %v4270
      %v4272 = vsel %vm4261, nan, %v4271
      %v4273 = vand.u32 2147483647, %v737
      %vm4274 = vcmp.le.f32.partialorder %v4273, 0.7853982
      %vm4275 = vcmp.lt.s32.totalorder %v737, 0
      %v4276 = vand.u32 %v737, 2139095040
      %v4277 = vshrl.u32 %v4276, 23
      %v4278 = vsub.s32 %v4277, 127
      %v4279 = vand.u32 2147483647, %v737
      %v4280 = vand.u32 %v4279, 8388607
      %v4281 = vor.u32 %v4280, 8388608
      %v4282 = vsub.s32 0, %v4281
      %v4283 = vadd.s32 %v4278, 1
      %vm4284 = vcmp.gt.s32.totalorder %v4283, 0
      %v4285 = vsel %vm4284, %v4283, 0
      %v4286 = vshrl.u32 %v4285, 5
      %v4287 = vand.u32 %v4285, 31
      %v4288 = vsub.s32 32, %v4287
      %v4289 = vshrl.u32 683565275, %v4288
      %v4290 = vshll.u32 683565275, %v4287
      %v4291 = vshrl.u32 2475754826, %v4288
      %v4292 = vor.u32 %v4290, %v4291
      %v4293 = vshll.u32 2475754826, %v4287
      %v4294 = vshrl.u32 2131351028, %v4288
      %v4295 = vor.u32 %v4293, %v4294
      %v4296 = vshll.u32 2131351028, %v4287
      %v4297 = vshrl.u32 2102212464, %v4288
      %v4298 = vor.u32 %v4296, %v4297
      %v4299 = vshll.u32 2102212464, %v4287
      %v4300 = vshrl.u32 920167782, %v4288
      %v4301 = vor.u32 %v4299, %v4300
      %v4302 = vshll.u32 920167782, %v4287
      %v4303 = vshrl.u32 1326507024, %v4288
      %v4304 = vor.u32 %v4302, %v4303
      %vm4305 = vcmp.lt.s32.totalorder %v4286, 1
      %vm4306 = vcmp.lt.s32.totalorder %v4286, 2
      %vm4307 = vcmp.lt.s32.totalorder %v4286, 3
      %vm4308 = vcmp.lt.s32.totalorder %v4286, 4
      %v4309 = vsel %vm4305, %v4289, %v4292
      %v4310 = vsel %vm4308, %v4298, 2102212464
      %v4311 = vsel %vm4307, %v4295, %v4310
      %v4312 = vsel %vm4306, %v4309, %v4311
      %v4313 = vsel %vm4305, %v4292, %v4295
      %v4314 = vsel %vm4308, %v4301, 920167782
      %v4315 = vsel %vm4307, %v4298, %v4314
      %v4316 = vsel %vm4306, %v4313, %v4315
      %v4317 = vsel %vm4305, %v4295, %v4298
      %v4318 = vsel %vm4308, %v4304, 1326507024
      %v4319 = vsel %vm4307, %v4301, %v4318
      %v4320 = vsel %vm4306, %v4317, %v4319
      %v4321 = vshll.u32 %v4281, 8
      %v4322 = vmul.u32.u64.compose %v4321, %v4320
      %v4323 = vextract.low.u32 %v4322
      %v4324 = vextract.high.u32 %v4322
      %v4325 = vmul.u32.u64.compose %v4321, %v4316
      %v4326 = vextract.low.u32 %v4325
      %v4327 = vextract.high.u32 %v4325
      %v4328 = vmul.u32 %v4321, %v4312
      %v4329 = vadd.s32 %v4324, %v4326
      %vm4330 = vc.u32 %v4324, %v4326
      %v4331 = vadd.s32 %v4327, 1
      %v4332 = vsel %vm4330, %v4331, %v4327
      %v4333 = vadd.s32 %v4328, %v4332
      %v4334 = vadd.s32 %v4333, 536870912
      %v4335 = vshrl.u32 %v4334, 30
      %v4336 = vshll.u32 %v4335, 30
      %v4337 = vsub.s32 %v4333, %v4336
      %vm4338 = vcmp.lt.s32.totalorder %v4337, 0
      %v4339 = vsub.s32 0, %v4337
      %v4340 = vsel %vm4338, %v4339, %v4337
      %v4341 = vclz %v4340
      %v4342 = vsub.s32 %v4341, 2
      %vm4343 = vcmp.gt.s32.totalorder 0, %v4342
      %v4344 = vsel %vm4343, 0, %v4342
      %v4345 = vsub.s32 32, %v4344
      %v4346 = vshll.u32 %v4337, %v4344
      %v4347 = vshrl.u32 %v4329, %v4345
      %v4348 = vor.u32 %v4346, %v4347
      %v4349 = vsub.s32 4294967266, %v4344
      %v4350 = vadd.s32 %v4349, 127
      %v4351 = vshll.u32 %v4350, 23
      %v4352 = vor.u32 4788187, %v4351
      %v4353 = vand.u32 2147483647, %v4352
      %v4355 = vcvt.s32.f32 %v4348
      %v4356 = vmul.f32 %v4355, %v4353
      %v4357 = vxor.u32 %v4356, 2147483648
      %v4358 = vsel %vm4275, %v4357, %v4356
      %v4359 = vsub.s32 4, %v4335
      %v4360 = vsel %vm4275, %v4359, %v4335
      %v4361 = vsel %vm4274, %v737, %v4358
      %v4362 = vsel %vm4274, 0, %v4360
      %v4363 = vcosq.f32.pop %v4361
      %v4364 = vsinq.f32.pop %v4361
      %vm4365 = vweird.f32 %v737
      %v4366 = vadd.s32 %v4362, 3
      %v4367 = vand.u32 %v4366, 3
      %vm4368 = vcmp.lt.s32.totalorder %v4367, 2
      %vm4369 = vcmp.eq.s32.totalorder %v4367, 0
      %v4370 = vxor.u32 %v4364, 2147483648
      %v4371 = vsel %vm4369, %v4363, %v4370
      %vm4372 = vcmp.eq.s32.totalorder %v4367, 2
      %v4373 = vxor.u32 %v4363, 2147483648
      %v4374 = vsel %vm4372, %v4373, %v4364
      %v4375 = vsel %vm4368, %v4371, %v4374
      %v4376 = vsel %vm4365, nan, %v4375
      %v4377 = vand.u32 2147483647, %v738
      %vm4378 = vcmp.le.f32.partialorder %v4377, 0.7853982
      %vm4379 = vcmp.lt.s32.totalorder %v738, 0
      %v4380 = vand.u32 %v738, 2139095040
      %v4381 = vshrl.u32 %v4380, 23
      %v4382 = vsub.s32 %v4381, 127
      %v4383 = vand.u32 2147483647, %v738
      %v4384 = vand.u32 %v4383, 8388607
      %v4385 = vor.u32 %v4384, 8388608
      %v4386 = vsub.s32 0, %v4385
      %v4387 = vadd.s32 %v4382, 1
      %vm4388 = vcmp.gt.s32.totalorder %v4387, 0
      %v4389 = vsel %vm4388, %v4387, 0
      %v4390 = vshrl.u32 %v4389, 5
      %v4391 = vand.u32 %v4389, 31
      %v4392 = vsub.s32 32, %v4391
      %v4393 = vshrl.u32 683565275, %v4392
      %v4394 = vshll.u32 683565275, %v4391
      %v4395 = vshrl.u32 2475754826, %v4392
      %v4396 = vor.u32 %v4394, %v4395
      %v4397 = vshll.u32 2475754826, %v4391
      %v4398 = vshrl.u32 2131351028, %v4392
      %v4399 = vor.u32 %v4397, %v4398
      %v4400 = vshll.u32 2131351028, %v4391
      %v4401 = vshrl.u32 2102212464, %v4392
      %v4402 = vor.u32 %v4400, %v4401
      %v4403 = vshll.u32 2102212464, %v4391
      %v4404 = vshrl.u32 920167782, %v4392
      %v4405 = vor.u32 %v4403, %v4404
      %v4406 = vshll.u32 920167782, %v4391
      %v4407 = vshrl.u32 1326507024, %v4392
      %v4408 = vor.u32 %v4406, %v4407
      %vm4409 = vcmp.lt.s32.totalorder %v4390, 1
      %vm4410 = vcmp.lt.s32.totalorder %v4390, 2
      %vm4411 = vcmp.lt.s32.totalorder %v4390, 3
      %vm4412 = vcmp.lt.s32.totalorder %v4390, 4
      %v4413 = vsel %vm4409, %v4393, %v4396
      %v4414 = vsel %vm4412, %v4402, 2102212464
      %v4415 = vsel %vm4411, %v4399, %v4414
      %v4416 = vsel %vm4410, %v4413, %v4415
      %v4417 = vsel %vm4409, %v4396, %v4399
      %v4418 = vsel %vm4412, %v4405, 920167782
      %v4419 = vsel %vm4411, %v4402, %v4418
      %v4420 = vsel %vm4410, %v4417, %v4419
      %v4421 = vsel %vm4409, %v4399, %v4402
      %v4422 = vsel %vm4412, %v4408, 1326507024
      %v4423 = vsel %vm4411, %v4405, %v4422
      %v4424 = vsel %vm4410, %v4421, %v4423
      %v4425 = vshll.u32 %v4385, 8
      %v4426 = vmul.u32.u64.compose %v4425, %v4424
      %v4427 = vextract.low.u32 %v4426
      %v4428 = vextract.high.u32 %v4426
      %v4429 = vmul.u32.u64.compose %v4425, %v4420
      %v4430 = vextract.low.u32 %v4429
      %v4431 = vextract.high.u32 %v4429
      %v4432 = vmul.u32 %v4425, %v4416
      %v4433 = vadd.s32 %v4428, %v4430
      %vm4434 = vc.u32 %v4428, %v4430
      %v4435 = vadd.s32 %v4431, 1
      %v4436 = vsel %vm4434, %v4435, %v4431
      %v4437 = vadd.s32 %v4432, %v4436
      %v4438 = vadd.s32 %v4437, 536870912
      %v4439 = vshrl.u32 %v4438, 30
      %v4440 = vshll.u32 %v4439, 30
      %v4441 = vsub.s32 %v4437, %v4440
      %vm4442 = vcmp.lt.s32.totalorder %v4441, 0
      %v4443 = vsub.s32 0, %v4441
      %v4444 = vsel %vm4442, %v4443, %v4441
      %v4445 = vclz %v4444
      %v4446 = vsub.s32 %v4445, 2
      %vm4447 = vcmp.gt.s32.totalorder 0, %v4446
      %v4448 = vsel %vm4447, 0, %v4446
      %v4449 = vsub.s32 32, %v4448
      %v4450 = vshll.u32 %v4441, %v4448
      %v4451 = vshrl.u32 %v4433, %v4449
      %v4452 = vor.u32 %v4450, %v4451
      %v4453 = vsub.s32 4294967266, %v4448
      %v4454 = vadd.s32 %v4453, 127
      %v4455 = vshll.u32 %v4454, 23
      %v4456 = vor.u32 4788187, %v4455
      %v4457 = vand.u32 2147483647, %v4456
      %v4459 = vcvt.s32.f32 %v4452
      %v4460 = vmul.f32 %v4459, %v4457
      %v4461 = vxor.u32 %v4460, 2147483648
      %v4462 = vsel %vm4379, %v4461, %v4460
      %v4463 = vsub.s32 4, %v4439
      %v4464 = vsel %vm4379, %v4463, %v4439
      %v4465 = vsel %vm4378, %v738, %v4462
      %v4466 = vsel %vm4378, 0, %v4464
      %v4467 = vcosq.f32.pop %v4465
      %v4468 = vsinq.f32.pop %v4465
      %vm4469 = vweird.f32 %v738
      %v4470 = vadd.s32 %v4466, 3
      %v4471 = vand.u32 %v4470, 3
      %vm4472 = vcmp.lt.s32.totalorder %v4471, 2
      %vm4473 = vcmp.eq.s32.totalorder %v4471, 0
      %v4474 = vxor.u32 %v4468, 2147483648
      %v4475 = vsel %vm4473, %v4467, %v4474
      %vm4476 = vcmp.eq.s32.totalorder %v4471, 2
      %v4477 = vxor.u32 %v4467, 2147483648
      %v4478 = vsel %vm4476, %v4477, %v4468
      %v4479 = vsel %vm4472, %v4475, %v4478
      %v4480 = vsel %vm4469, nan, %v4479
      %v4481 = vand.u32 2147483647, %v739
      %vm4482 = vcmp.le.f32.partialorder %v4481, 0.7853982
      %vm4483 = vcmp.lt.s32.totalorder %v739, 0
      %v4484 = vand.u32 %v739, 2139095040
      %v4485 = vshrl.u32 %v4484, 23
      %v4486 = vsub.s32 %v4485, 127
      %v4487 = vand.u32 2147483647, %v739
      %v4488 = vand.u32 %v4487, 8388607
      %v4489 = vor.u32 %v4488, 8388608
      %v4490 = vsub.s32 0, %v4489
      %v4491 = vadd.s32 %v4486, 1
      %vm4492 = vcmp.gt.s32.totalorder %v4491, 0
      %v4493 = vsel %vm4492, %v4491, 0
      %v4494 = vshrl.u32 %v4493, 5
      %v4495 = vand.u32 %v4493, 31
      %v4496 = vsub.s32 32, %v4495
      %v4497 = vshrl.u32 683565275, %v4496
      %v4498 = vshll.u32 683565275, %v4495
      %v4499 = vshrl.u32 2475754826, %v4496
      %v4500 = vor.u32 %v4498, %v4499
      %v4501 = vshll.u32 2475754826, %v4495
      %v4502 = vshrl.u32 2131351028, %v4496
      %v4503 = vor.u32 %v4501, %v4502
      %v4504 = vshll.u32 2131351028, %v4495
      %v4505 = vshrl.u32 2102212464, %v4496
      %v4506 = vor.u32 %v4504, %v4505
      %v4507 = vshll.u32 2102212464, %v4495
      %v4508 = vshrl.u32 920167782, %v4496
      %v4509 = vor.u32 %v4507, %v4508
      %v4510 = vshll.u32 920167782, %v4495
      %v4511 = vshrl.u32 1326507024, %v4496
      %v4512 = vor.u32 %v4510, %v4511
      %vm4513 = vcmp.lt.s32.totalorder %v4494, 1
      %vm4514 = vcmp.lt.s32.totalorder %v4494, 2
      %vm4515 = vcmp.lt.s32.totalorder %v4494, 3
      %vm4516 = vcmp.lt.s32.totalorder %v4494, 4
      %v4517 = vsel %vm4513, %v4497, %v4500
      %v4518 = vsel %vm4516, %v4506, 2102212464
      %v4519 = vsel %vm4515, %v4503, %v4518
      %v4520 = vsel %vm4514, %v4517, %v4519
      %v4521 = vsel %vm4513, %v4500, %v4503
      %v4522 = vsel %vm4516, %v4509, 920167782
      %v4523 = vsel %vm4515, %v4506, %v4522
      %v4524 = vsel %vm4514, %v4521, %v4523
      %v4525 = vsel %vm4513, %v4503, %v4506
      %v4526 = vsel %vm4516, %v4512, 1326507024
      %v4527 = vsel %vm4515, %v4509, %v4526
      %v4528 = vsel %vm4514, %v4525, %v4527
      %v4529 = vshll.u32 %v4489, 8
      %v4530 = vmul.u32.u64.compose %v4529, %v4528
      %v4531 = vextract.low.u32 %v4530
      %v4532 = vextract.high.u32 %v4530
      %v4533 = vmul.u32.u64.compose %v4529, %v4524
      %v4534 = vextract.low.u32 %v4533
      %v4535 = vextract.high.u32 %v4533
      %v4536 = vmul.u32 %v4529, %v4520
      %v4537 = vadd.s32 %v4532, %v4534
      %vm4538 = vc.u32 %v4532, %v4534
      %v4539 = vadd.s32 %v4535, 1
      %v4540 = vsel %vm4538, %v4539, %v4535
      %v4541 = vadd.s32 %v4536, %v4540
      %v4542 = vadd.s32 %v4541, 536870912
      %v4543 = vshrl.u32 %v4542, 30
      %v4544 = vshll.u32 %v4543, 30
      %v4545 = vsub.s32 %v4541, %v4544
      %vm4546 = vcmp.lt.s32.totalorder %v4545, 0
      %v4547 = vsub.s32 0, %v4545
      %v4548 = vsel %vm4546, %v4547, %v4545
      %v4549 = vclz %v4548
      %v4550 = vsub.s32 %v4549, 2
      %vm4551 = vcmp.gt.s32.totalorder 0, %v4550
      %v4552 = vsel %vm4551, 0, %v4550
      %v4553 = vsub.s32 32, %v4552
      %v4554 = vshll.u32 %v4545, %v4552
      %v4555 = vshrl.u32 %v4537, %v4553
      %v4556 = vor.u32 %v4554, %v4555
      %v4557 = vsub.s32 4294967266, %v4552
      %v4558 = vadd.s32 %v4557, 127
      %v4559 = vshll.u32 %v4558, 23
      %v4560 = vor.u32 4788187, %v4559
      %v4561 = vand.u32 2147483647, %v4560
      %v4563 = vcvt.s32.f32 %v4556
      %v4564 = vmul.f32 %v4563, %v4561
      %v4565 = vxor.u32 %v4564, 2147483648
      %v4566 = vsel %vm4483, %v4565, %v4564
      %v4567 = vsub.s32 4, %v4543
      %v4568 = vsel %vm4483, %v4567, %v4543
      %v4569 = vsel %vm4482, %v739, %v4566
      %v4570 = vsel %vm4482, 0, %v4568
      %v4571 = vcosq.f32.pop %v4569
      %v4572 = vsinq.f32.pop %v4569
      %vm4573 = vweird.f32 %v739
      %v4574 = vadd.s32 %v4570, 3
      %v4575 = vand.u32 %v4574, 3
      %vm4576 = vcmp.lt.s32.totalorder %v4575, 2
      %vm4577 = vcmp.eq.s32.totalorder %v4575, 0
      %v4578 = vxor.u32 %v4572, 2147483648
      %v4579 = vsel %vm4577, %v4571, %v4578
      %vm4580 = vcmp.eq.s32.totalorder %v4575, 2
      %v4581 = vxor.u32 %v4571, 2147483648
      %v4582 = vsel %vm4580, %v4581, %v4572
      %v4583 = vsel %vm4576, %v4579, %v4582
      %v4584 = vsel %vm4573, nan, %v4583
      %v4585 = vand.u32 2147483647, %v740
      %vm4586 = vcmp.le.f32.partialorder %v4585, 0.7853982
      %vm4587 = vcmp.lt.s32.totalorder %v740, 0
      %v4588 = vand.u32 %v740, 2139095040
      %v4589 = vshrl.u32 %v4588, 23
      %v4590 = vsub.s32 %v4589, 127
      %v4591 = vand.u32 2147483647, %v740
      %v4592 = vand.u32 %v4591, 8388607
      %v4593 = vor.u32 %v4592, 8388608
      %v4594 = vsub.s32 0, %v4593
      %v4595 = vadd.s32 %v4590, 1
      %vm4596 = vcmp.gt.s32.totalorder %v4595, 0
      %v4597 = vsel %vm4596, %v4595, 0
      %v4598 = vshrl.u32 %v4597, 5
      %v4599 = vand.u32 %v4597, 31
      %v4600 = vsub.s32 32, %v4599
      %v4601 = vshrl.u32 683565275, %v4600
      %v4602 = vshll.u32 683565275, %v4599
      %v4603 = vshrl.u32 2475754826, %v4600
      %v4604 = vor.u32 %v4602, %v4603
      %v4605 = vshll.u32 2475754826, %v4599
      %v4606 = vshrl.u32 2131351028, %v4600
      %v4607 = vor.u32 %v4605, %v4606
      %v4608 = vshll.u32 2131351028, %v4599
      %v4609 = vshrl.u32 2102212464, %v4600
      %v4610 = vor.u32 %v4608, %v4609
      %v4611 = vshll.u32 2102212464, %v4599
      %v4612 = vshrl.u32 920167782, %v4600
      %v4613 = vor.u32 %v4611, %v4612
      %v4614 = vshll.u32 920167782, %v4599
      %v4615 = vshrl.u32 1326507024, %v4600
      %v4616 = vor.u32 %v4614, %v4615
      %vm4617 = vcmp.lt.s32.totalorder %v4598, 1
      %vm4618 = vcmp.lt.s32.totalorder %v4598, 2
      %vm4619 = vcmp.lt.s32.totalorder %v4598, 3
      %vm4620 = vcmp.lt.s32.totalorder %v4598, 4
      %v4621 = vsel %vm4617, %v4601, %v4604
      %v4622 = vsel %vm4620, %v4610, 2102212464
      %v4623 = vsel %vm4619, %v4607, %v4622
      %v4624 = vsel %vm4618, %v4621, %v4623
      %v4625 = vsel %vm4617, %v4604, %v4607
      %v4626 = vsel %vm4620, %v4613, 920167782
      %v4627 = vsel %vm4619, %v4610, %v4626
      %v4628 = vsel %vm4618, %v4625, %v4627
      %v4629 = vsel %vm4617, %v4607, %v4610
      %v4630 = vsel %vm4620, %v4616, 1326507024
      %v4631 = vsel %vm4619, %v4613, %v4630
      %v4632 = vsel %vm4618, %v4629, %v4631
      %v4633 = vshll.u32 %v4593, 8
      %v4634 = vmul.u32.u64.compose %v4633, %v4632
      %v4635 = vextract.low.u32 %v4634
      %v4636 = vextract.high.u32 %v4634
      %v4637 = vmul.u32.u64.compose %v4633, %v4628
      %v4638 = vextract.low.u32 %v4637
      %v4639 = vextract.high.u32 %v4637
      %v4640 = vmul.u32 %v4633, %v4624
      %v4641 = vadd.s32 %v4636, %v4638
      %vm4642 = vc.u32 %v4636, %v4638
      %v4643 = vadd.s32 %v4639, 1
      %v4644 = vsel %vm4642, %v4643, %v4639
      %v4645 = vadd.s32 %v4640, %v4644
      %v4646 = vadd.s32 %v4645, 536870912
      %v4647 = vshrl.u32 %v4646, 30
      %v4648 = vshll.u32 %v4647, 30
      %v4649 = vsub.s32 %v4645, %v4648
      %vm4650 = vcmp.lt.s32.totalorder %v4649, 0
      %v4651 = vsub.s32 0, %v4649
      %v4652 = vsel %vm4650, %v4651, %v4649
      %v4653 = vclz %v4652
      %v4654 = vsub.s32 %v4653, 2
      %vm4655 = vcmp.gt.s32.totalorder 0, %v4654
      %v4656 = vsel %vm4655, 0, %v4654
      %v4657 = vsub.s32 32, %v4656
      %v4658 = vshll.u32 %v4649, %v4656
      %v4659 = vshrl.u32 %v4641, %v4657
      %v4660 = vor.u32 %v4658, %v4659
      %v4661 = vsub.s32 4294967266, %v4656
      %v4662 = vadd.s32 %v4661, 127
      %v4663 = vshll.u32 %v4662, 23
      %v4664 = vor.u32 4788187, %v4663
      %v4665 = vand.u32 2147483647, %v4664
      %v4667 = vcvt.s32.f32 %v4660
      %v4668 = vmul.f32 %v4667, %v4665
      %v4669 = vxor.u32 %v4668, 2147483648
      %v4670 = vsel %vm4587, %v4669, %v4668
      %v4671 = vsub.s32 4, %v4647
      %v4672 = vsel %vm4587, %v4671, %v4647
      %v4673 = vsel %vm4586, %v740, %v4670
      %v4674 = vsel %vm4586, 0, %v4672
      %v4675 = vcosq.f32.pop %v4673
      %v4676 = vsinq.f32.pop %v4673
      %vm4677 = vweird.f32 %v740
      %v4678 = vadd.s32 %v4674, 3
      %v4679 = vand.u32 %v4678, 3
      %vm4680 = vcmp.lt.s32.totalorder %v4679, 2
      %vm4681 = vcmp.eq.s32.totalorder %v4679, 0
      %v4682 = vxor.u32 %v4676, 2147483648
      %v4683 = vsel %vm4681, %v4675, %v4682
      %vm4684 = vcmp.eq.s32.totalorder %v4679, 2
      %v4685 = vxor.u32 %v4675, 2147483648
      %v4686 = vsel %vm4684, %v4685, %v4676
      %v4687 = vsel %vm4680, %v4683, %v4686
      %v4688 = vsel %vm4677, nan, %v4687
      %v4689 = vand.u32 2147483647, %v741
      %vm4690 = vcmp.le.f32.partialorder %v4689, 0.7853982
      %vm4691 = vcmp.lt.s32.totalorder %v741, 0
      %v4692 = vand.u32 %v741, 2139095040
      %v4693 = vshrl.u32 %v4692, 23
      %v4694 = vsub.s32 %v4693, 127
      %v4695 = vand.u32 2147483647, %v741
      %v4696 = vand.u32 %v4695, 8388607
      %v4697 = vor.u32 %v4696, 8388608
      %v4698 = vsub.s32 0, %v4697
      %v4699 = vadd.s32 %v4694, 1
      %vm4700 = vcmp.gt.s32.totalorder %v4699, 0
      %v4701 = vsel %vm4700, %v4699, 0
      %v4702 = vshrl.u32 %v4701, 5
      %v4703 = vand.u32 %v4701, 31
      %v4704 = vsub.s32 32, %v4703
      %v4705 = vshrl.u32 683565275, %v4704
      %v4706 = vshll.u32 683565275, %v4703
      %v4707 = vshrl.u32 2475754826, %v4704
      %v4708 = vor.u32 %v4706, %v4707
      %v4709 = vshll.u32 2475754826, %v4703
      %v4710 = vshrl.u32 2131351028, %v4704
      %v4711 = vor.u32 %v4709, %v4710
      %v4712 = vshll.u32 2131351028, %v4703
      %v4713 = vshrl.u32 2102212464, %v4704
      %v4714 = vor.u32 %v4712, %v4713
      %v4715 = vshll.u32 2102212464, %v4703
      %v4716 = vshrl.u32 920167782, %v4704
      %v4717 = vor.u32 %v4715, %v4716
      %v4718 = vshll.u32 920167782, %v4703
      %v4719 = vshrl.u32 1326507024, %v4704
      %v4720 = vor.u32 %v4718, %v4719
      %vm4721 = vcmp.lt.s32.totalorder %v4702, 1
      %vm4722 = vcmp.lt.s32.totalorder %v4702, 2
      %vm4723 = vcmp.lt.s32.totalorder %v4702, 3
      %vm4724 = vcmp.lt.s32.totalorder %v4702, 4
      %v4725 = vsel %vm4721, %v4705, %v4708
      %v4726 = vsel %vm4724, %v4714, 2102212464
      %v4727 = vsel %vm4723, %v4711, %v4726
      %v4728 = vsel %vm4722, %v4725, %v4727
      %v4729 = vsel %vm4721, %v4708, %v4711
      %v4730 = vsel %vm4724, %v4717, 920167782
      %v4731 = vsel %vm4723, %v4714, %v4730
      %v4732 = vsel %vm4722, %v4729, %v4731
      %v4733 = vsel %vm4721, %v4711, %v4714
      %v4734 = vsel %vm4724, %v4720, 1326507024
      %v4735 = vsel %vm4723, %v4717, %v4734
      %v4736 = vsel %vm4722, %v4733, %v4735
      %v4737 = vshll.u32 %v4697, 8
      %v4738 = vmul.u32.u64.compose %v4737, %v4736
      %v4739 = vextract.low.u32 %v4738
      %v4740 = vextract.high.u32 %v4738
      %v4741 = vmul.u32.u64.compose %v4737, %v4732
      %v4742 = vextract.low.u32 %v4741
      %v4743 = vextract.high.u32 %v4741
      %v4744 = vmul.u32 %v4737, %v4728
      %v4745 = vadd.s32 %v4740, %v4742
      %vm4746 = vc.u32 %v4740, %v4742
      %v4747 = vadd.s32 %v4743, 1
      %v4748 = vsel %vm4746, %v4747, %v4743
      %v4749 = vadd.s32 %v4744, %v4748
      %v4750 = vadd.s32 %v4749, 536870912
      %v4751 = vshrl.u32 %v4750, 30
      %v4752 = vshll.u32 %v4751, 30
      %v4753 = vsub.s32 %v4749, %v4752
      %vm4754 = vcmp.lt.s32.totalorder %v4753, 0
      %v4755 = vsub.s32 0, %v4753
      %v4756 = vsel %vm4754, %v4755, %v4753
      %v4757 = vclz %v4756
      %v4758 = vsub.s32 %v4757, 2
      %vm4759 = vcmp.gt.s32.totalorder 0, %v4758
      %v4760 = vsel %vm4759, 0, %v4758
      %v4761 = vsub.s32 32, %v4760
      %v4762 = vshll.u32 %v4753, %v4760
      %v4763 = vshrl.u32 %v4745, %v4761
      %v4764 = vor.u32 %v4762, %v4763
      %v4765 = vsub.s32 4294967266, %v4760
      %v4766 = vadd.s32 %v4765, 127
      %v4767 = vshll.u32 %v4766, 23
      %v4768 = vor.u32 4788187, %v4767
      %v4769 = vand.u32 2147483647, %v4768
      %v4771 = vcvt.s32.f32 %v4764
      %v4772 = vmul.f32 %v4771, %v4769
      %v4773 = vxor.u32 %v4772, 2147483648
      %v4774 = vsel %vm4691, %v4773, %v4772
      %v4775 = vsub.s32 4, %v4751
      %v4776 = vsel %vm4691, %v4775, %v4751
      %v4777 = vsel %vm4690, %v741, %v4774
      %v4778 = vsel %vm4690, 0, %v4776
      %v4779 = vcosq.f32.pop %v4777
      %v4780 = vsinq.f32.pop %v4777
      %vm4781 = vweird.f32 %v741
      %v4782 = vadd.s32 %v4778, 3
      %v4783 = vand.u32 %v4782, 3
      %vm4784 = vcmp.lt.s32.totalorder %v4783, 2
      %vm4785 = vcmp.eq.s32.totalorder %v4783, 0
      %v4786 = vxor.u32 %v4780, 2147483648
      %v4787 = vsel %vm4785, %v4779, %v4786
      %vm4788 = vcmp.eq.s32.totalorder %v4783, 2
      %v4789 = vxor.u32 %v4779, 2147483648
      %v4790 = vsel %vm4788, %v4789, %v4780
      %v4791 = vsel %vm4784, %v4787, %v4790
      %v4792 = vsel %vm4781, nan, %v4791
      %v4793 = vand.u32 2147483647, %v742
      %vm4794 = vcmp.le.f32.partialorder %v4793, 0.7853982
      %vm4795 = vcmp.lt.s32.totalorder %v742, 0
      %v4796 = vand.u32 %v742, 2139095040
      %v4797 = vshrl.u32 %v4796, 23
      %v4798 = vsub.s32 %v4797, 127
      %v4799 = vand.u32 2147483647, %v742
      %v4800 = vand.u32 %v4799, 8388607
      %v4801 = vor.u32 %v4800, 8388608
      %v4802 = vsub.s32 0, %v4801
      %v4803 = vadd.s32 %v4798, 1
      %vm4804 = vcmp.gt.s32.totalorder %v4803, 0
      %v4805 = vsel %vm4804, %v4803, 0
      %v4806 = vshrl.u32 %v4805, 5
      %v4807 = vand.u32 %v4805, 31
      %v4808 = vsub.s32 32, %v4807
      %v4809 = vshrl.u32 683565275, %v4808
      %v4810 = vshll.u32 683565275, %v4807
      %v4811 = vshrl.u32 2475754826, %v4808
      %v4812 = vor.u32 %v4810, %v4811
      %v4813 = vshll.u32 2475754826, %v4807
      %v4814 = vshrl.u32 2131351028, %v4808
      %v4815 = vor.u32 %v4813, %v4814
      %v4816 = vshll.u32 2131351028, %v4807
      %v4817 = vshrl.u32 2102212464, %v4808
      %v4818 = vor.u32 %v4816, %v4817
      %v4819 = vshll.u32 2102212464, %v4807
      %v4820 = vshrl.u32 920167782, %v4808
      %v4821 = vor.u32 %v4819, %v4820
      %v4822 = vshll.u32 920167782, %v4807
      %v4823 = vshrl.u32 1326507024, %v4808
      %v4824 = vor.u32 %v4822, %v4823
      %vm4825 = vcmp.lt.s32.totalorder %v4806, 1
      %vm4826 = vcmp.lt.s32.totalorder %v4806, 2
      %vm4827 = vcmp.lt.s32.totalorder %v4806, 3
      %vm4828 = vcmp.lt.s32.totalorder %v4806, 4
      %v4829 = vsel %vm4825, %v4809, %v4812
      %v4830 = vsel %vm4828, %v4818, 2102212464
      %v4831 = vsel %vm4827, %v4815, %v4830
      %v4832 = vsel %vm4826, %v4829, %v4831
      %v4833 = vsel %vm4825, %v4812, %v4815
      %v4834 = vsel %vm4828, %v4821, 920167782
      %v4835 = vsel %vm4827, %v4818, %v4834
      %v4836 = vsel %vm4826, %v4833, %v4835
      %v4837 = vsel %vm4825, %v4815, %v4818
      %v4838 = vsel %vm4828, %v4824, 1326507024
      %v4839 = vsel %vm4827, %v4821, %v4838
      %v4840 = vsel %vm4826, %v4837, %v4839
      %v4841 = vshll.u32 %v4801, 8
      %v4842 = vmul.u32.u64.compose %v4841, %v4840
      %v4843 = vextract.low.u32 %v4842
      %v4844 = vextract.high.u32 %v4842
      %v4845 = vmul.u32.u64.compose %v4841, %v4836
      %v4846 = vextract.low.u32 %v4845
      %v4847 = vextract.high.u32 %v4845
      %v4848 = vmul.u32 %v4841, %v4832
      %v4849 = vadd.s32 %v4844, %v4846
      %vm4850 = vc.u32 %v4844, %v4846
      %v4851 = vadd.s32 %v4847, 1
      %v4852 = vsel %vm4850, %v4851, %v4847
      %v4853 = vadd.s32 %v4848, %v4852
      %v4854 = vadd.s32 %v4853, 536870912
      %v4855 = vshrl.u32 %v4854, 30
      %v4856 = vshll.u32 %v4855, 30
      %v4857 = vsub.s32 %v4853, %v4856
      %vm4858 = vcmp.lt.s32.totalorder %v4857, 0
      %v4859 = vsub.s32 0, %v4857
      %v4860 = vsel %vm4858, %v4859, %v4857
      %v4861 = vclz %v4860
      %v4862 = vsub.s32 %v4861, 2
      %vm4863 = vcmp.gt.s32.totalorder 0, %v4862
      %v4864 = vsel %vm4863, 0, %v4862
      %v4865 = vsub.s32 32, %v4864
      %v4866 = vshll.u32 %v4857, %v4864
      %v4867 = vshrl.u32 %v4849, %v4865
      %v4868 = vor.u32 %v4866, %v4867
      %v4869 = vsub.s32 4294967266, %v4864
      %v4870 = vadd.s32 %v4869, 127
      %v4871 = vshll.u32 %v4870, 23
      %v4872 = vor.u32 4788187, %v4871
      %v4873 = vand.u32 2147483647, %v4872
      %v4875 = vcvt.s32.f32 %v4868
      %v4876 = vmul.f32 %v4875, %v4873
      %v4877 = vxor.u32 %v4876, 2147483648
      %v4878 = vsel %vm4795, %v4877, %v4876
      %v4879 = vsub.s32 4, %v4855
      %v4880 = vsel %vm4795, %v4879, %v4855
      %v4881 = vsel %vm4794, %v742, %v4878
      %v4882 = vsel %vm4794, 0, %v4880
      %v4883 = vcosq.f32.pop %v4881
      %v4884 = vsinq.f32.pop %v4881
      %vm4885 = vweird.f32 %v742
      %v4886 = vadd.s32 %v4882, 3
      %v4887 = vand.u32 %v4886, 3
      %vm4888 = vcmp.lt.s32.totalorder %v4887, 2
      %vm4889 = vcmp.eq.s32.totalorder %v4887, 0
      %v4890 = vxor.u32 %v4884, 2147483648
      %v4891 = vsel %vm4889, %v4883, %v4890
      %vm4892 = vcmp.eq.s32.totalorder %v4887, 2
      %v4893 = vxor.u32 %v4883, 2147483648
      %v4894 = vsel %vm4892, %v4893, %v4884
      %v4895 = vsel %vm4888, %v4891, %v4894
      %v4896 = vsel %vm4885, nan, %v4895
      %v4897 = vand.u32 2147483647, %v743
      %vm4898 = vcmp.le.f32.partialorder %v4897, 0.7853982
      %vm4899 = vcmp.lt.s32.totalorder %v743, 0
      %v4900 = vand.u32 %v743, 2139095040
      %v4901 = vshrl.u32 %v4900, 23
      %v4902 = vsub.s32 %v4901, 127
      %v4903 = vand.u32 2147483647, %v743
      %v4904 = vand.u32 %v4903, 8388607
      %v4905 = vor.u32 %v4904, 8388608
      %v4906 = vsub.s32 0, %v4905
      %v4907 = vadd.s32 %v4902, 1
      %vm4908 = vcmp.gt.s32.totalorder %v4907, 0
      %v4909 = vsel %vm4908, %v4907, 0
      %v4910 = vshrl.u32 %v4909, 5
      %v4911 = vand.u32 %v4909, 31
      %v4912 = vsub.s32 32, %v4911
      %v4913 = vshrl.u32 683565275, %v4912
      %v4914 = vshll.u32 683565275, %v4911
      %v4915 = vshrl.u32 2475754826, %v4912
      %v4916 = vor.u32 %v4914, %v4915
      %v4917 = vshll.u32 2475754826, %v4911
      %v4918 = vshrl.u32 2131351028, %v4912
      %v4919 = vor.u32 %v4917, %v4918
      %v4920 = vshll.u32 2131351028, %v4911
      %v4921 = vshrl.u32 2102212464, %v4912
      %v4922 = vor.u32 %v4920, %v4921
      %v4923 = vshll.u32 2102212464, %v4911
      %v4924 = vshrl.u32 920167782, %v4912
      %v4925 = vor.u32 %v4923, %v4924
      %v4926 = vshll.u32 920167782, %v4911
      %v4927 = vshrl.u32 1326507024, %v4912
      %v4928 = vor.u32 %v4926, %v4927
      %vm4929 = vcmp.lt.s32.totalorder %v4910, 1
      %vm4930 = vcmp.lt.s32.totalorder %v4910, 2
      %vm4931 = vcmp.lt.s32.totalorder %v4910, 3
      %vm4932 = vcmp.lt.s32.totalorder %v4910, 4
      %v4933 = vsel %vm4929, %v4913, %v4916
      %v4934 = vsel %vm4932, %v4922, 2102212464
      %v4935 = vsel %vm4931, %v4919, %v4934
      %v4936 = vsel %vm4930, %v4933, %v4935
      %v4937 = vsel %vm4929, %v4916, %v4919
      %v4938 = vsel %vm4932, %v4925, 920167782
      %v4939 = vsel %vm4931, %v4922, %v4938
      %v4940 = vsel %vm4930, %v4937, %v4939
      %v4941 = vsel %vm4929, %v4919, %v4922
      %v4942 = vsel %vm4932, %v4928, 1326507024
      %v4943 = vsel %vm4931, %v4925, %v4942
      %v4944 = vsel %vm4930, %v4941, %v4943
      %v4945 = vshll.u32 %v4905, 8
      %v4946 = vmul.u32.u64.compose %v4945, %v4944
      %v4947 = vextract.low.u32 %v4946
      %v4948 = vextract.high.u32 %v4946
      %v4949 = vmul.u32.u64.compose %v4945, %v4940
      %v4950 = vextract.low.u32 %v4949
      %v4951 = vextract.high.u32 %v4949
      %v4952 = vmul.u32 %v4945, %v4936
      %v4953 = vadd.s32 %v4948, %v4950
      %vm4954 = vc.u32 %v4948, %v4950
      %v4955 = vadd.s32 %v4951, 1
      %v4956 = vsel %vm4954, %v4955, %v4951
      %v4957 = vadd.s32 %v4952, %v4956
      %v4958 = vadd.s32 %v4957, 536870912
      %v4959 = vshrl.u32 %v4958, 30
      %v4960 = vshll.u32 %v4959, 30
      %v4961 = vsub.s32 %v4957, %v4960
      %vm4962 = vcmp.lt.s32.totalorder %v4961, 0
      %v4963 = vsub.s32 0, %v4961
      %v4964 = vsel %vm4962, %v4963, %v4961
      %v4965 = vclz %v4964
      %v4966 = vsub.s32 %v4965, 2
      %vm4967 = vcmp.gt.s32.totalorder 0, %v4966
      %v4968 = vsel %vm4967, 0, %v4966
      %v4969 = vsub.s32 32, %v4968
      %v4970 = vshll.u32 %v4961, %v4968
      %v4971 = vshrl.u32 %v4953, %v4969
      %v4972 = vor.u32 %v4970, %v4971
      %v4973 = vsub.s32 4294967266, %v4968
      %v4974 = vadd.s32 %v4973, 127
      %v4975 = vshll.u32 %v4974, 23
      %v4976 = vor.u32 4788187, %v4975
      %v4977 = vand.u32 2147483647, %v4976
      %v4979 = vcvt.s32.f32 %v4972
      %v4980 = vmul.f32 %v4979, %v4977
      %v4981 = vxor.u32 %v4980, 2147483648
      %v4982 = vsel %vm4899, %v4981, %v4980
      %v4983 = vsub.s32 4, %v4959
      %v4984 = vsel %vm4899, %v4983, %v4959
      %v4985 = vsel %vm4898, %v743, %v4982
      %v4986 = vsel %vm4898, 0, %v4984
      %v4987 = vcosq.f32.pop %v4985
      %v4988 = vsinq.f32.pop %v4985
      %vm4989 = vweird.f32 %v743
      %v4990 = vadd.s32 %v4986, 3
      %v4991 = vand.u32 %v4990, 3
      %vm4992 = vcmp.lt.s32.totalorder %v4991, 2
      %vm4993 = vcmp.eq.s32.totalorder %v4991, 0
      %v4994 = vxor.u32 %v4988, 2147483648
      %v4995 = vsel %vm4993, %v4987, %v4994
      %vm4996 = vcmp.eq.s32.totalorder %v4991, 2
      %v4997 = vxor.u32 %v4987, 2147483648
      %v4998 = vsel %vm4996, %v4997, %v4988
      %v4999 = vsel %vm4992, %v4995, %v4998
      %v5000 = vsel %vm4989, nan, %v4999
      %v5001 = vand.u32 2147483647, %v744
      %vm5002 = vcmp.le.f32.partialorder %v5001, 0.7853982
      %vm5003 = vcmp.lt.s32.totalorder %v744, 0
      %v5004 = vand.u32 %v744, 2139095040
      %v5005 = vshrl.u32 %v5004, 23
      %v5006 = vsub.s32 %v5005, 127
      %v5007 = vand.u32 2147483647, %v744
      %v5008 = vand.u32 %v5007, 8388607
      %v5009 = vor.u32 %v5008, 8388608
      %v5010 = vsub.s32 0, %v5009
      %v5011 = vadd.s32 %v5006, 1
      %vm5012 = vcmp.gt.s32.totalorder %v5011, 0
      %v5013 = vsel %vm5012, %v5011, 0
      %v5014 = vshrl.u32 %v5013, 5
      %v5015 = vand.u32 %v5013, 31
      %v5016 = vsub.s32 32, %v5015
      %v5017 = vshrl.u32 683565275, %v5016
      %v5018 = vshll.u32 683565275, %v5015
      %v5019 = vshrl.u32 2475754826, %v5016
      %v5020 = vor.u32 %v5018, %v5019
      %v5021 = vshll.u32 2475754826, %v5015
      %v5022 = vshrl.u32 2131351028, %v5016
      %v5023 = vor.u32 %v5021, %v5022
      %v5024 = vshll.u32 2131351028, %v5015
      %v5025 = vshrl.u32 2102212464, %v5016
      %v5026 = vor.u32 %v5024, %v5025
      %v5027 = vshll.u32 2102212464, %v5015
      %v5028 = vshrl.u32 920167782, %v5016
      %v5029 = vor.u32 %v5027, %v5028
      %v5030 = vshll.u32 920167782, %v5015
      %v5031 = vshrl.u32 1326507024, %v5016
      %v5032 = vor.u32 %v5030, %v5031
      %vm5033 = vcmp.lt.s32.totalorder %v5014, 1
      %vm5034 = vcmp.lt.s32.totalorder %v5014, 2
      %vm5035 = vcmp.lt.s32.totalorder %v5014, 3
      %vm5036 = vcmp.lt.s32.totalorder %v5014, 4
      %v5037 = vsel %vm5033, %v5017, %v5020
      %v5038 = vsel %vm5036, %v5026, 2102212464
      %v5039 = vsel %vm5035, %v5023, %v5038
      %v5040 = vsel %vm5034, %v5037, %v5039
      %v5041 = vsel %vm5033, %v5020, %v5023
      %v5042 = vsel %vm5036, %v5029, 920167782
      %v5043 = vsel %vm5035, %v5026, %v5042
      %v5044 = vsel %vm5034, %v5041, %v5043
      %v5045 = vsel %vm5033, %v5023, %v5026
      %v5046 = vsel %vm5036, %v5032, 1326507024
      %v5047 = vsel %vm5035, %v5029, %v5046
      %v5048 = vsel %vm5034, %v5045, %v5047
      %v5049 = vshll.u32 %v5009, 8
      %v5050 = vmul.u32.u64.compose %v5049, %v5048
      %v5051 = vextract.low.u32 %v5050
      %v5052 = vextract.high.u32 %v5050
      %v5053 = vmul.u32.u64.compose %v5049, %v5044
      %v5054 = vextract.low.u32 %v5053
      %v5055 = vextract.high.u32 %v5053
      %v5056 = vmul.u32 %v5049, %v5040
      %v5057 = vadd.s32 %v5052, %v5054
      %vm5058 = vc.u32 %v5052, %v5054
      %v5059 = vadd.s32 %v5055, 1
      %v5060 = vsel %vm5058, %v5059, %v5055
      %v5061 = vadd.s32 %v5056, %v5060
      %v5062 = vadd.s32 %v5061, 536870912
      %v5063 = vshrl.u32 %v5062, 30
      %v5064 = vshll.u32 %v5063, 30
      %v5065 = vsub.s32 %v5061, %v5064
      %vm5066 = vcmp.lt.s32.totalorder %v5065, 0
      %v5067 = vsub.s32 0, %v5065
      %v5068 = vsel %vm5066, %v5067, %v5065
      %v5069 = vclz %v5068
      %v5070 = vsub.s32 %v5069, 2
      %vm5071 = vcmp.gt.s32.totalorder 0, %v5070
      %v5072 = vsel %vm5071, 0, %v5070
      %v5073 = vsub.s32 32, %v5072
      %v5074 = vshll.u32 %v5065, %v5072
      %v5075 = vshrl.u32 %v5057, %v5073
      %v5076 = vor.u32 %v5074, %v5075
      %v5077 = vsub.s32 4294967266, %v5072
      %v5078 = vadd.s32 %v5077, 127
      %v5079 = vshll.u32 %v5078, 23
      %v5080 = vor.u32 4788187, %v5079
      %v5081 = vand.u32 2147483647, %v5080
      %v5083 = vcvt.s32.f32 %v5076
      %v5084 = vmul.f32 %v5083, %v5081
      %v5085 = vxor.u32 %v5084, 2147483648
      %v5086 = vsel %vm5003, %v5085, %v5084
      %v5087 = vsub.s32 4, %v5063
      %v5088 = vsel %vm5003, %v5087, %v5063
      %v5089 = vsel %vm5002, %v744, %v5086
      %v5090 = vsel %vm5002, 0, %v5088
      %v5091 = vcosq.f32.pop %v5089
      %v5092 = vsinq.f32.pop %v5089
      %vm5093 = vweird.f32 %v744
      %v5094 = vadd.s32 %v5090, 3
      %v5095 = vand.u32 %v5094, 3
      %vm5096 = vcmp.lt.s32.totalorder %v5095, 2
      %vm5097 = vcmp.eq.s32.totalorder %v5095, 0
      %v5098 = vxor.u32 %v5092, 2147483648
      %v5099 = vsel %vm5097, %v5091, %v5098
      %vm5100 = vcmp.eq.s32.totalorder %v5095, 2
      %v5101 = vxor.u32 %v5091, 2147483648
      %v5102 = vsel %vm5100, %v5101, %v5092
      %v5103 = vsel %vm5096, %v5099, %v5102
      %v5104 = vsel %vm5093, nan, %v5103
      %v5105 = vand.u32 2147483647, %v745
      %vm5106 = vcmp.le.f32.partialorder %v5105, 0.7853982
      %vm5107 = vcmp.lt.s32.totalorder %v745, 0
      %v5108 = vand.u32 %v745, 2139095040
      %v5109 = vshrl.u32 %v5108, 23
      %v5110 = vsub.s32 %v5109, 127
      %v5111 = vand.u32 2147483647, %v745
      %v5112 = vand.u32 %v5111, 8388607
      %v5113 = vor.u32 %v5112, 8388608
      %v5114 = vsub.s32 0, %v5113
      %v5115 = vadd.s32 %v5110, 1
      %vm5116 = vcmp.gt.s32.totalorder %v5115, 0
      %v5117 = vsel %vm5116, %v5115, 0
      %v5118 = vshrl.u32 %v5117, 5
      %v5119 = vand.u32 %v5117, 31
      %v5120 = vsub.s32 32, %v5119
      %v5121 = vshrl.u32 683565275, %v5120
      %v5122 = vshll.u32 683565275, %v5119
      %v5123 = vshrl.u32 2475754826, %v5120
      %v5124 = vor.u32 %v5122, %v5123
      %v5125 = vshll.u32 2475754826, %v5119
      %v5126 = vshrl.u32 2131351028, %v5120
      %v5127 = vor.u32 %v5125, %v5126
      %v5128 = vshll.u32 2131351028, %v5119
      %v5129 = vshrl.u32 2102212464, %v5120
      %v5130 = vor.u32 %v5128, %v5129
      %v5131 = vshll.u32 2102212464, %v5119
      %v5132 = vshrl.u32 920167782, %v5120
      %v5133 = vor.u32 %v5131, %v5132
      %v5134 = vshll.u32 920167782, %v5119
      %v5135 = vshrl.u32 1326507024, %v5120
      %v5136 = vor.u32 %v5134, %v5135
      %vm5137 = vcmp.lt.s32.totalorder %v5118, 1
      %vm5138 = vcmp.lt.s32.totalorder %v5118, 2
      %vm5139 = vcmp.lt.s32.totalorder %v5118, 3
      %vm5140 = vcmp.lt.s32.totalorder %v5118, 4
      %v5141 = vsel %vm5137, %v5121, %v5124
      %v5142 = vsel %vm5140, %v5130, 2102212464
      %v5143 = vsel %vm5139, %v5127, %v5142
      %v5144 = vsel %vm5138, %v5141, %v5143
      %v5145 = vsel %vm5137, %v5124, %v5127
      %v5146 = vsel %vm5140, %v5133, 920167782
      %v5147 = vsel %vm5139, %v5130, %v5146
      %v5148 = vsel %vm5138, %v5145, %v5147
      %v5149 = vsel %vm5137, %v5127, %v5130
      %v5150 = vsel %vm5140, %v5136, 1326507024
      %v5151 = vsel %vm5139, %v5133, %v5150
      %v5152 = vsel %vm5138, %v5149, %v5151
      %v5153 = vshll.u32 %v5113, 8
      %v5154 = vmul.u32.u64.compose %v5153, %v5152
      %v5155 = vextract.low.u32 %v5154
      %v5156 = vextract.high.u32 %v5154
      %v5157 = vmul.u32.u64.compose %v5153, %v5148
      %v5158 = vextract.low.u32 %v5157
      %v5159 = vextract.high.u32 %v5157
      %v5160 = vmul.u32 %v5153, %v5144
      %v5161 = vadd.s32 %v5156, %v5158
      %vm5162 = vc.u32 %v5156, %v5158
      %v5163 = vadd.s32 %v5159, 1
      %v5164 = vsel %vm5162, %v5163, %v5159
      %v5165 = vadd.s32 %v5160, %v5164
      %v5166 = vadd.s32 %v5165, 536870912
      %v5167 = vshrl.u32 %v5166, 30
      %v5168 = vshll.u32 %v5167, 30
      %v5169 = vsub.s32 %v5165, %v5168
      %vm5170 = vcmp.lt.s32.totalorder %v5169, 0
      %v5171 = vsub.s32 0, %v5169
      %v5172 = vsel %vm5170, %v5171, %v5169
      %v5173 = vclz %v5172
      %v5174 = vsub.s32 %v5173, 2
      %vm5175 = vcmp.gt.s32.totalorder 0, %v5174
      %v5176 = vsel %vm5175, 0, %v5174
      %v5177 = vsub.s32 32, %v5176
      %v5178 = vshll.u32 %v5169, %v5176
      %v5179 = vshrl.u32 %v5161, %v5177
      %v5180 = vor.u32 %v5178, %v5179
      %v5181 = vsub.s32 4294967266, %v5176
      %v5182 = vadd.s32 %v5181, 127
      %v5183 = vshll.u32 %v5182, 23
      %v5184 = vor.u32 4788187, %v5183
      %v5185 = vand.u32 2147483647, %v5184
      %v5187 = vcvt.s32.f32 %v5180
      %v5188 = vmul.f32 %v5187, %v5185
      %v5189 = vxor.u32 %v5188, 2147483648
      %v5190 = vsel %vm5107, %v5189, %v5188
      %v5191 = vsub.s32 4, %v5167
      %v5192 = vsel %vm5107, %v5191, %v5167
      %v5193 = vsel %vm5106, %v745, %v5190
      %v5194 = vsel %vm5106, 0, %v5192
      %v5195 = vcosq.f32.pop %v5193
      %v5196 = vsinq.f32.pop %v5193
      %vm5197 = vweird.f32 %v745
      %v5198 = vadd.s32 %v5194, 3
      %v5199 = vand.u32 %v5198, 3
      %vm5200 = vcmp.lt.s32.totalorder %v5199, 2
      %vm5201 = vcmp.eq.s32.totalorder %v5199, 0
      %v5202 = vxor.u32 %v5196, 2147483648
      %v5203 = vsel %vm5201, %v5195, %v5202
      %vm5204 = vcmp.eq.s32.totalorder %v5199, 2
      %v5205 = vxor.u32 %v5195, 2147483648
      %v5206 = vsel %vm5204, %v5205, %v5196
      %v5207 = vsel %vm5200, %v5203, %v5206
      %v5208 = vsel %vm5197, nan, %v5207
      %v5209 = vand.u32 2147483647, %v746
      %vm5210 = vcmp.le.f32.partialorder %v5209, 0.7853982
      %vm5211 = vcmp.lt.s32.totalorder %v746, 0
      %v5212 = vand.u32 %v746, 2139095040
      %v5213 = vshrl.u32 %v5212, 23
      %v5214 = vsub.s32 %v5213, 127
      %v5215 = vand.u32 2147483647, %v746
      %v5216 = vand.u32 %v5215, 8388607
      %v5217 = vor.u32 %v5216, 8388608
      %v5218 = vsub.s32 0, %v5217
      %v5219 = vadd.s32 %v5214, 1
      %vm5220 = vcmp.gt.s32.totalorder %v5219, 0
      %v5221 = vsel %vm5220, %v5219, 0
      %v5222 = vshrl.u32 %v5221, 5
      %v5223 = vand.u32 %v5221, 31
      %v5224 = vsub.s32 32, %v5223
      %v5225 = vshrl.u32 683565275, %v5224
      %v5226 = vshll.u32 683565275, %v5223
      %v5227 = vshrl.u32 2475754826, %v5224
      %v5228 = vor.u32 %v5226, %v5227
      %v5229 = vshll.u32 2475754826, %v5223
      %v5230 = vshrl.u32 2131351028, %v5224
      %v5231 = vor.u32 %v5229, %v5230
      %v5232 = vshll.u32 2131351028, %v5223
      %v5233 = vshrl.u32 2102212464, %v5224
      %v5234 = vor.u32 %v5232, %v5233
      %v5235 = vshll.u32 2102212464, %v5223
      %v5236 = vshrl.u32 920167782, %v5224
      %v5237 = vor.u32 %v5235, %v5236
      %v5238 = vshll.u32 920167782, %v5223
      %v5239 = vshrl.u32 1326507024, %v5224
      %v5240 = vor.u32 %v5238, %v5239
      %vm5241 = vcmp.lt.s32.totalorder %v5222, 1
      %vm5242 = vcmp.lt.s32.totalorder %v5222, 2
      %vm5243 = vcmp.lt.s32.totalorder %v5222, 3
      %vm5244 = vcmp.lt.s32.totalorder %v5222, 4
      %v5245 = vsel %vm5241, %v5225, %v5228
      %v5246 = vsel %vm5244, %v5234, 2102212464
      %v5247 = vsel %vm5243, %v5231, %v5246
      %v5248 = vsel %vm5242, %v5245, %v5247
      %v5249 = vsel %vm5241, %v5228, %v5231
      %v5250 = vsel %vm5244, %v5237, 920167782
      %v5251 = vsel %vm5243, %v5234, %v5250
      %v5252 = vsel %vm5242, %v5249, %v5251
      %v5253 = vsel %vm5241, %v5231, %v5234
      %v5254 = vsel %vm5244, %v5240, 1326507024
      %v5255 = vsel %vm5243, %v5237, %v5254
      %v5256 = vsel %vm5242, %v5253, %v5255
      %v5257 = vshll.u32 %v5217, 8
      %v5258 = vmul.u32.u64.compose %v5257, %v5256
      %v5259 = vextract.low.u32 %v5258
      %v5260 = vextract.high.u32 %v5258
      %v5261 = vmul.u32.u64.compose %v5257, %v5252
      %v5262 = vextract.low.u32 %v5261
      %v5263 = vextract.high.u32 %v5261
      %v5264 = vmul.u32 %v5257, %v5248
      %v5265 = vadd.s32 %v5260, %v5262
      %vm5266 = vc.u32 %v5260, %v5262
      %v5267 = vadd.s32 %v5263, 1
      %v5268 = vsel %vm5266, %v5267, %v5263
      %v5269 = vadd.s32 %v5264, %v5268
      %v5270 = vadd.s32 %v5269, 536870912
      %v5271 = vshrl.u32 %v5270, 30
      %v5272 = vshll.u32 %v5271, 30
      %v5273 = vsub.s32 %v5269, %v5272
      %vm5274 = vcmp.lt.s32.totalorder %v5273, 0
      %v5275 = vsub.s32 0, %v5273
      %v5276 = vsel %vm5274, %v5275, %v5273
      %v5277 = vclz %v5276
      %v5278 = vsub.s32 %v5277, 2
      %vm5279 = vcmp.gt.s32.totalorder 0, %v5278
      %v5280 = vsel %vm5279, 0, %v5278
      %v5281 = vsub.s32 32, %v5280
      %v5282 = vshll.u32 %v5273, %v5280
      %v5283 = vshrl.u32 %v5265, %v5281
      %v5284 = vor.u32 %v5282, %v5283
      %v5285 = vsub.s32 4294967266, %v5280
      %v5286 = vadd.s32 %v5285, 127
      %v5287 = vshll.u32 %v5286, 23
      %v5288 = vor.u32 4788187, %v5287
      %v5289 = vand.u32 2147483647, %v5288
      %v5291 = vcvt.s32.f32 %v5284
      %v5292 = vmul.f32 %v5291, %v5289
      %v5293 = vxor.u32 %v5292, 2147483648
      %v5294 = vsel %vm5211, %v5293, %v5292
      %v5295 = vsub.s32 4, %v5271
      %v5296 = vsel %vm5211, %v5295, %v5271
      %v5297 = vsel %vm5210, %v746, %v5294
      %v5298 = vsel %vm5210, 0, %v5296
      %v5299 = vcosq.f32.pop %v5297
      %v5300 = vsinq.f32.pop %v5297
      %vm5301 = vweird.f32 %v746
      %v5302 = vadd.s32 %v5298, 3
      %v5303 = vand.u32 %v5302, 3
      %vm5304 = vcmp.lt.s32.totalorder %v5303, 2
      %vm5305 = vcmp.eq.s32.totalorder %v5303, 0
      %v5306 = vxor.u32 %v5300, 2147483648
      %v5307 = vsel %vm5305, %v5299, %v5306
      %vm5308 = vcmp.eq.s32.totalorder %v5303, 2
      %v5309 = vxor.u32 %v5299, 2147483648
      %v5310 = vsel %vm5308, %v5309, %v5300
      %v5311 = vsel %vm5304, %v5307, %v5310
      %v5312 = vsel %vm5301, nan, %v5311
      %v5313 = vand.u32 2147483647, %v747
      %vm5314 = vcmp.le.f32.partialorder %v5313, 0.7853982
      %vm5315 = vcmp.lt.s32.totalorder %v747, 0
      %v5316 = vand.u32 %v747, 2139095040
      %v5317 = vshrl.u32 %v5316, 23
      %v5318 = vsub.s32 %v5317, 127
      %v5319 = vand.u32 2147483647, %v747
      %v5320 = vand.u32 %v5319, 8388607
      %v5321 = vor.u32 %v5320, 8388608
      %v5322 = vsub.s32 0, %v5321
      %v5323 = vadd.s32 %v5318, 1
      %vm5324 = vcmp.gt.s32.totalorder %v5323, 0
      %v5325 = vsel %vm5324, %v5323, 0
      %v5326 = vshrl.u32 %v5325, 5
      %v5327 = vand.u32 %v5325, 31
      %v5328 = vsub.s32 32, %v5327
      %v5329 = vshrl.u32 683565275, %v5328
      %v5330 = vshll.u32 683565275, %v5327
      %v5331 = vshrl.u32 2475754826, %v5328
      %v5332 = vor.u32 %v5330, %v5331
      %v5333 = vshll.u32 2475754826, %v5327
      %v5334 = vshrl.u32 2131351028, %v5328
      %v5335 = vor.u32 %v5333, %v5334
      %v5336 = vshll.u32 2131351028, %v5327
      %v5337 = vshrl.u32 2102212464, %v5328
      %v5338 = vor.u32 %v5336, %v5337
      %v5339 = vshll.u32 2102212464, %v5327
      %v5340 = vshrl.u32 920167782, %v5328
      %v5341 = vor.u32 %v5339, %v5340
      %v5342 = vshll.u32 920167782, %v5327
      %v5343 = vshrl.u32 1326507024, %v5328
      %v5344 = vor.u32 %v5342, %v5343
      %vm5345 = vcmp.lt.s32.totalorder %v5326, 1
      %vm5346 = vcmp.lt.s32.totalorder %v5326, 2
      %vm5347 = vcmp.lt.s32.totalorder %v5326, 3
      %vm5348 = vcmp.lt.s32.totalorder %v5326, 4
      %v5349 = vsel %vm5345, %v5329, %v5332
      %v5350 = vsel %vm5348, %v5338, 2102212464
      %v5351 = vsel %vm5347, %v5335, %v5350
      %v5352 = vsel %vm5346, %v5349, %v5351
      %v5353 = vsel %vm5345, %v5332, %v5335
      %v5354 = vsel %vm5348, %v5341, 920167782
      %v5355 = vsel %vm5347, %v5338, %v5354
      %v5356 = vsel %vm5346, %v5353, %v5355
      %v5357 = vsel %vm5345, %v5335, %v5338
      %v5358 = vsel %vm5348, %v5344, 1326507024
      %v5359 = vsel %vm5347, %v5341, %v5358
      %v5360 = vsel %vm5346, %v5357, %v5359
      %v5361 = vshll.u32 %v5321, 8
      %v5362 = vmul.u32.u64.compose %v5361, %v5360
      %v5363 = vextract.low.u32 %v5362
      %v5364 = vextract.high.u32 %v5362
      %v5365 = vmul.u32.u64.compose %v5361, %v5356
      %v5366 = vextract.low.u32 %v5365
      %v5367 = vextract.high.u32 %v5365
      %v5368 = vmul.u32 %v5361, %v5352
      %v5369 = vadd.s32 %v5364, %v5366
      %vm5370 = vc.u32 %v5364, %v5366
      %v5371 = vadd.s32 %v5367, 1
      %v5372 = vsel %vm5370, %v5371, %v5367
      %v5373 = vadd.s32 %v5368, %v5372
      %v5374 = vadd.s32 %v5373, 536870912
      %v5375 = vshrl.u32 %v5374, 30
      %v5376 = vshll.u32 %v5375, 30
      %v5377 = vsub.s32 %v5373, %v5376
      %vm5378 = vcmp.lt.s32.totalorder %v5377, 0
      %v5379 = vsub.s32 0, %v5377
      %v5380 = vsel %vm5378, %v5379, %v5377
      %v5381 = vclz %v5380
      %v5382 = vsub.s32 %v5381, 2
      %vm5383 = vcmp.gt.s32.totalorder 0, %v5382
      %v5384 = vsel %vm5383, 0, %v5382
      %v5385 = vsub.s32 32, %v5384
      %v5386 = vshll.u32 %v5377, %v5384
      %v5387 = vshrl.u32 %v5369, %v5385
      %v5388 = vor.u32 %v5386, %v5387
      %v5389 = vsub.s32 4294967266, %v5384
      %v5390 = vadd.s32 %v5389, 127
      %v5391 = vshll.u32 %v5390, 23
      %v5392 = vor.u32 4788187, %v5391
      %v5393 = vand.u32 2147483647, %v5392
      %v5395 = vcvt.s32.f32 %v5388
      %v5396 = vmul.f32 %v5395, %v5393
      %v5397 = vxor.u32 %v5396, 2147483648
      %v5398 = vsel %vm5315, %v5397, %v5396
      %v5399 = vsub.s32 4, %v5375
      %v5400 = vsel %vm5315, %v5399, %v5375
      %v5401 = vsel %vm5314, %v747, %v5398
      %v5402 = vsel %vm5314, 0, %v5400
      %v5403 = vcosq.f32.pop %v5401
      %v5404 = vsinq.f32.pop %v5401
      %vm5405 = vweird.f32 %v747
      %v5406 = vadd.s32 %v5402, 3
      %v5407 = vand.u32 %v5406, 3
      %vm5408 = vcmp.lt.s32.totalorder %v5407, 2
      %vm5409 = vcmp.eq.s32.totalorder %v5407, 0
      %v5410 = vxor.u32 %v5404, 2147483648
      %v5411 = vsel %vm5409, %v5403, %v5410
      %vm5412 = vcmp.eq.s32.totalorder %v5407, 2
      %v5413 = vxor.u32 %v5403, 2147483648
      %v5414 = vsel %vm5412, %v5413, %v5404
      %v5415 = vsel %vm5408, %v5411, %v5414
      %v5416 = vsel %vm5405, nan, %v5415
      %v5417 = vand.u32 2147483647, %v748
      %vm5418 = vcmp.le.f32.partialorder %v5417, 0.7853982
      %vm5419 = vcmp.lt.s32.totalorder %v748, 0
      %v5420 = vand.u32 %v748, 2139095040
      %v5421 = vshrl.u32 %v5420, 23
      %v5422 = vsub.s32 %v5421, 127
      %v5423 = vand.u32 2147483647, %v748
      %v5424 = vand.u32 %v5423, 8388607
      %v5425 = vor.u32 %v5424, 8388608
      %v5426 = vsub.s32 0, %v5425
      %v5427 = vadd.s32 %v5422, 1
      %vm5428 = vcmp.gt.s32.totalorder %v5427, 0
      %v5429 = vsel %vm5428, %v5427, 0
      %v5430 = vshrl.u32 %v5429, 5
      %v5431 = vand.u32 %v5429, 31
      %v5432 = vsub.s32 32, %v5431
      %v5433 = vshrl.u32 683565275, %v5432
      %v5434 = vshll.u32 683565275, %v5431
      %v5435 = vshrl.u32 2475754826, %v5432
      %v5436 = vor.u32 %v5434, %v5435
      %v5437 = vshll.u32 2475754826, %v5431
      %v5438 = vshrl.u32 2131351028, %v5432
      %v5439 = vor.u32 %v5437, %v5438
      %v5440 = vshll.u32 2131351028, %v5431
      %v5441 = vshrl.u32 2102212464, %v5432
      %v5442 = vor.u32 %v5440, %v5441
      %v5443 = vshll.u32 2102212464, %v5431
      %v5444 = vshrl.u32 920167782, %v5432
      %v5445 = vor.u32 %v5443, %v5444
      %v5446 = vshll.u32 920167782, %v5431
      %v5447 = vshrl.u32 1326507024, %v5432
      %v5448 = vor.u32 %v5446, %v5447
      %vm5449 = vcmp.lt.s32.totalorder %v5430, 1
      %vm5450 = vcmp.lt.s32.totalorder %v5430, 2
      %vm5451 = vcmp.lt.s32.totalorder %v5430, 3
      %vm5452 = vcmp.lt.s32.totalorder %v5430, 4
      %v5453 = vsel %vm5449, %v5433, %v5436
      %v5454 = vsel %vm5452, %v5442, 2102212464
      %v5455 = vsel %vm5451, %v5439, %v5454
      %v5456 = vsel %vm5450, %v5453, %v5455
      %v5457 = vsel %vm5449, %v5436, %v5439
      %v5458 = vsel %vm5452, %v5445, 920167782
      %v5459 = vsel %vm5451, %v5442, %v5458
      %v5460 = vsel %vm5450, %v5457, %v5459
      %v5461 = vsel %vm5449, %v5439, %v5442
      %v5462 = vsel %vm5452, %v5448, 1326507024
      %v5463 = vsel %vm5451, %v5445, %v5462
      %v5464 = vsel %vm5450, %v5461, %v5463
      %v5465 = vshll.u32 %v5425, 8
      %v5466 = vmul.u32.u64.compose %v5465, %v5464
      %v5467 = vextract.low.u32 %v5466
      %v5468 = vextract.high.u32 %v5466
      %v5469 = vmul.u32.u64.compose %v5465, %v5460
      %v5470 = vextract.low.u32 %v5469
      %v5471 = vextract.high.u32 %v5469
      %v5472 = vmul.u32 %v5465, %v5456
      %v5473 = vadd.s32 %v5468, %v5470
      %vm5474 = vc.u32 %v5468, %v5470
      %v5475 = vadd.s32 %v5471, 1
      %v5476 = vsel %vm5474, %v5475, %v5471
      %v5477 = vadd.s32 %v5472, %v5476
      %v5478 = vadd.s32 %v5477, 536870912
      %v5479 = vshrl.u32 %v5478, 30
      %v5480 = vshll.u32 %v5479, 30
      %v5481 = vsub.s32 %v5477, %v5480
      %vm5482 = vcmp.lt.s32.totalorder %v5481, 0
      %v5483 = vsub.s32 0, %v5481
      %v5484 = vsel %vm5482, %v5483, %v5481
      %v5485 = vclz %v5484
      %v5486 = vsub.s32 %v5485, 2
      %vm5487 = vcmp.gt.s32.totalorder 0, %v5486
      %v5488 = vsel %vm5487, 0, %v5486
      %v5489 = vsub.s32 32, %v5488
      %v5490 = vshll.u32 %v5481, %v5488
      %v5491 = vshrl.u32 %v5473, %v5489
      %v5492 = vor.u32 %v5490, %v5491
      %v5493 = vsub.s32 4294967266, %v5488
      %v5494 = vadd.s32 %v5493, 127
      %v5495 = vshll.u32 %v5494, 23
      %v5496 = vor.u32 4788187, %v5495
      %v5497 = vand.u32 2147483647, %v5496
      %v5499 = vcvt.s32.f32 %v5492
      %v5500 = vmul.f32 %v5499, %v5497
      %v5501 = vxor.u32 %v5500, 2147483648
      %v5502 = vsel %vm5419, %v5501, %v5500
      %v5503 = vsub.s32 4, %v5479
      %v5504 = vsel %vm5419, %v5503, %v5479
      %v5505 = vsel %vm5418, %v748, %v5502
      %v5506 = vsel %vm5418, 0, %v5504
      %v5507 = vcosq.f32.pop %v5505
      %v5508 = vsinq.f32.pop %v5505
      %vm5509 = vweird.f32 %v748
      %v5510 = vadd.s32 %v5506, 3
      %v5511 = vand.u32 %v5510, 3
      %vm5512 = vcmp.lt.s32.totalorder %v5511, 2
      %vm5513 = vcmp.eq.s32.totalorder %v5511, 0
      %v5514 = vxor.u32 %v5508, 2147483648
      %v5515 = vsel %vm5513, %v5507, %v5514
      %vm5516 = vcmp.eq.s32.totalorder %v5511, 2
      %v5517 = vxor.u32 %v5507, 2147483648
      %v5518 = vsel %vm5516, %v5517, %v5508
      %v5519 = vsel %vm5512, %v5515, %v5518
      %v5520 = vsel %vm5509, nan, %v5519
      %v5521 = vand.u32 2147483647, %v749
      %vm5522 = vcmp.le.f32.partialorder %v5521, 0.7853982
      %vm5523 = vcmp.lt.s32.totalorder %v749, 0
      %v5524 = vand.u32 %v749, 2139095040
      %v5525 = vshrl.u32 %v5524, 23
      %v5526 = vsub.s32 %v5525, 127
      %v5527 = vand.u32 2147483647, %v749
      %v5528 = vand.u32 %v5527, 8388607
      %v5529 = vor.u32 %v5528, 8388608
      %v5530 = vsub.s32 0, %v5529
      %v5531 = vadd.s32 %v5526, 1
      %vm5532 = vcmp.gt.s32.totalorder %v5531, 0
      %v5533 = vsel %vm5532, %v5531, 0
      %v5534 = vshrl.u32 %v5533, 5
      %v5535 = vand.u32 %v5533, 31
      %v5536 = vsub.s32 32, %v5535
      %v5537 = vshrl.u32 683565275, %v5536
      %v5538 = vshll.u32 683565275, %v5535
      %v5539 = vshrl.u32 2475754826, %v5536
      %v5540 = vor.u32 %v5538, %v5539
      %v5541 = vshll.u32 2475754826, %v5535
      %v5542 = vshrl.u32 2131351028, %v5536
      %v5543 = vor.u32 %v5541, %v5542
      %v5544 = vshll.u32 2131351028, %v5535
      %v5545 = vshrl.u32 2102212464, %v5536
      %v5546 = vor.u32 %v5544, %v5545
      %v5547 = vshll.u32 2102212464, %v5535
      %v5548 = vshrl.u32 920167782, %v5536
      %v5549 = vor.u32 %v5547, %v5548
      %v5550 = vshll.u32 920167782, %v5535
      %v5551 = vshrl.u32 1326507024, %v5536
      %v5552 = vor.u32 %v5550, %v5551
      %vm5553 = vcmp.lt.s32.totalorder %v5534, 1
      %vm5554 = vcmp.lt.s32.totalorder %v5534, 2
      %vm5555 = vcmp.lt.s32.totalorder %v5534, 3
      %vm5556 = vcmp.lt.s32.totalorder %v5534, 4
      %v5557 = vsel %vm5553, %v5537, %v5540
      %v5558 = vsel %vm5556, %v5546, 2102212464
      %v5559 = vsel %vm5555, %v5543, %v5558
      %v5560 = vsel %vm5554, %v5557, %v5559
      %v5561 = vsel %vm5553, %v5540, %v5543
      %v5562 = vsel %vm5556, %v5549, 920167782
      %v5563 = vsel %vm5555, %v5546, %v5562
      %v5564 = vsel %vm5554, %v5561, %v5563
      %v5565 = vsel %vm5553, %v5543, %v5546
      %v5566 = vsel %vm5556, %v5552, 1326507024
      %v5567 = vsel %vm5555, %v5549, %v5566
      %v5568 = vsel %vm5554, %v5565, %v5567
      %v5569 = vshll.u32 %v5529, 8
      %v5570 = vmul.u32.u64.compose %v5569, %v5568
      %v5571 = vextract.low.u32 %v5570
      %v5572 = vextract.high.u32 %v5570
      %v5573 = vmul.u32.u64.compose %v5569, %v5564
      %v5574 = vextract.low.u32 %v5573
      %v5575 = vextract.high.u32 %v5573
      %v5576 = vmul.u32 %v5569, %v5560
      %v5577 = vadd.s32 %v5572, %v5574
      %vm5578 = vc.u32 %v5572, %v5574
      %v5579 = vadd.s32 %v5575, 1
      %v5580 = vsel %vm5578, %v5579, %v5575
      %v5581 = vadd.s32 %v5576, %v5580
      %v5582 = vadd.s32 %v5581, 536870912
      %v5583 = vshrl.u32 %v5582, 30
      %v5584 = vshll.u32 %v5583, 30
      %v5585 = vsub.s32 %v5581, %v5584
      %vm5586 = vcmp.lt.s32.totalorder %v5585, 0
      %v5587 = vsub.s32 0, %v5585
      %v5588 = vsel %vm5586, %v5587, %v5585
      %v5589 = vclz %v5588
      %v5590 = vsub.s32 %v5589, 2
      %vm5591 = vcmp.gt.s32.totalorder 0, %v5590
      %v5592 = vsel %vm5591, 0, %v5590
      %v5593 = vsub.s32 32, %v5592
      %v5594 = vshll.u32 %v5585, %v5592
      %v5595 = vshrl.u32 %v5577, %v5593
      %v5596 = vor.u32 %v5594, %v5595
      %v5597 = vsub.s32 4294967266, %v5592
      %v5598 = vadd.s32 %v5597, 127
      %v5599 = vshll.u32 %v5598, 23
      %v5600 = vor.u32 4788187, %v5599
      %v5601 = vand.u32 2147483647, %v5600
      %v5603 = vcvt.s32.f32 %v5596
      %v5604 = vmul.f32 %v5603, %v5601
      %v5605 = vxor.u32 %v5604, 2147483648
      %v5606 = vsel %vm5523, %v5605, %v5604
      %v5607 = vsub.s32 4, %v5583
      %v5608 = vsel %vm5523, %v5607, %v5583
      %v5609 = vsel %vm5522, %v749, %v5606
      %v5610 = vsel %vm5522, 0, %v5608
      %v5611 = vcosq.f32.pop %v5609
      %v5612 = vsinq.f32.pop %v5609
      %vm5613 = vweird.f32 %v749
      %v5614 = vadd.s32 %v5610, 3
      %v5615 = vand.u32 %v5614, 3
      %vm5616 = vcmp.lt.s32.totalorder %v5615, 2
      %vm5617 = vcmp.eq.s32.totalorder %v5615, 0
      %v5618 = vxor.u32 %v5612, 2147483648
      %v5619 = vsel %vm5617, %v5611, %v5618
      %vm5620 = vcmp.eq.s32.totalorder %v5615, 2
      %v5621 = vxor.u32 %v5611, 2147483648
      %v5622 = vsel %vm5620, %v5621, %v5612
      %v5623 = vsel %vm5616, %v5619, %v5622
      %v5624 = vsel %vm5613, nan, %v5623
      %v5625 = vand.u32 2147483647, %v750
      %vm5626 = vcmp.le.f32.partialorder %v5625, 0.7853982
      %vm5627 = vcmp.lt.s32.totalorder %v750, 0
      %v5628 = vand.u32 %v750, 2139095040
      %v5629 = vshrl.u32 %v5628, 23
      %v5630 = vsub.s32 %v5629, 127
      %v5631 = vand.u32 2147483647, %v750
      %v5632 = vand.u32 %v5631, 8388607
      %v5633 = vor.u32 %v5632, 8388608
      %v5634 = vsub.s32 0, %v5633
      %v5635 = vadd.s32 %v5630, 1
      %vm5636 = vcmp.gt.s32.totalorder %v5635, 0
      %v5637 = vsel %vm5636, %v5635, 0
      %v5638 = vshrl.u32 %v5637, 5
      %v5639 = vand.u32 %v5637, 31
      %v5640 = vsub.s32 32, %v5639
      %v5641 = vshrl.u32 683565275, %v5640
      %v5642 = vshll.u32 683565275, %v5639
      %v5643 = vshrl.u32 2475754826, %v5640
      %v5644 = vor.u32 %v5642, %v5643
      %v5645 = vshll.u32 2475754826, %v5639
      %v5646 = vshrl.u32 2131351028, %v5640
      %v5647 = vor.u32 %v5645, %v5646
      %v5648 = vshll.u32 2131351028, %v5639
      %v5649 = vshrl.u32 2102212464, %v5640
      %v5650 = vor.u32 %v5648, %v5649
      %v5651 = vshll.u32 2102212464, %v5639
      %v5652 = vshrl.u32 920167782, %v5640
      %v5653 = vor.u32 %v5651, %v5652
      %v5654 = vshll.u32 920167782, %v5639
      %v5655 = vshrl.u32 1326507024, %v5640
      %v5656 = vor.u32 %v5654, %v5655
      %vm5657 = vcmp.lt.s32.totalorder %v5638, 1
      %vm5658 = vcmp.lt.s32.totalorder %v5638, 2
      %vm5659 = vcmp.lt.s32.totalorder %v5638, 3
      %vm5660 = vcmp.lt.s32.totalorder %v5638, 4
      %v5661 = vsel %vm5657, %v5641, %v5644
      %v5662 = vsel %vm5660, %v5650, 2102212464
      %v5663 = vsel %vm5659, %v5647, %v5662
      %v5664 = vsel %vm5658, %v5661, %v5663
      %v5665 = vsel %vm5657, %v5644, %v5647
      %v5666 = vsel %vm5660, %v5653, 920167782
      %v5667 = vsel %vm5659, %v5650, %v5666
      %v5668 = vsel %vm5658, %v5665, %v5667
      %v5669 = vsel %vm5657, %v5647, %v5650
      %v5670 = vsel %vm5660, %v5656, 1326507024
      %v5671 = vsel %vm5659, %v5653, %v5670
      %v5672 = vsel %vm5658, %v5669, %v5671
      %v5673 = vshll.u32 %v5633, 8
      %v5674 = vmul.u32.u64.compose %v5673, %v5672
      %v5675 = vextract.low.u32 %v5674
      %v5676 = vextract.high.u32 %v5674
      %v5677 = vmul.u32.u64.compose %v5673, %v5668
      %v5678 = vextract.low.u32 %v5677
      %v5679 = vextract.high.u32 %v5677
      %v5680 = vmul.u32 %v5673, %v5664
      %v5681 = vadd.s32 %v5676, %v5678
      %vm5682 = vc.u32 %v5676, %v5678
      %v5683 = vadd.s32 %v5679, 1
      %v5684 = vsel %vm5682, %v5683, %v5679
      %v5685 = vadd.s32 %v5680, %v5684
      %v5686 = vadd.s32 %v5685, 536870912
      %v5687 = vshrl.u32 %v5686, 30
      %v5688 = vshll.u32 %v5687, 30
      %v5689 = vsub.s32 %v5685, %v5688
      %vm5690 = vcmp.lt.s32.totalorder %v5689, 0
      %v5691 = vsub.s32 0, %v5689
      %v5692 = vsel %vm5690, %v5691, %v5689
      %v5693 = vclz %v5692
      %v5694 = vsub.s32 %v5693, 2
      %vm5695 = vcmp.gt.s32.totalorder 0, %v5694
      %v5696 = vsel %vm5695, 0, %v5694
      %v5697 = vsub.s32 32, %v5696
      %v5698 = vshll.u32 %v5689, %v5696
      %v5699 = vshrl.u32 %v5681, %v5697
      %v5700 = vor.u32 %v5698, %v5699
      %v5701 = vsub.s32 4294967266, %v5696
      %v5702 = vadd.s32 %v5701, 127
      %v5703 = vshll.u32 %v5702, 23
      %v5704 = vor.u32 4788187, %v5703
      %v5705 = vand.u32 2147483647, %v5704
      %v5707 = vcvt.s32.f32 %v5700
      %v5708 = vmul.f32 %v5707, %v5705
      %v5709 = vxor.u32 %v5708, 2147483648
      %v5710 = vsel %vm5627, %v5709, %v5708
      %v5711 = vsub.s32 4, %v5687
      %v5712 = vsel %vm5627, %v5711, %v5687
      %v5713 = vsel %vm5626, %v750, %v5710
      %v5714 = vsel %vm5626, 0, %v5712
      %v5715 = vcosq.f32.pop %v5713
      %v5716 = vsinq.f32.pop %v5713
      %vm5717 = vweird.f32 %v750
      %v5718 = vadd.s32 %v5714, 3
      %v5719 = vand.u32 %v5718, 3
      %vm5720 = vcmp.lt.s32.totalorder %v5719, 2
      %vm5721 = vcmp.eq.s32.totalorder %v5719, 0
      %v5722 = vxor.u32 %v5716, 2147483648
      %v5723 = vsel %vm5721, %v5715, %v5722
      %vm5724 = vcmp.eq.s32.totalorder %v5719, 2
      %v5725 = vxor.u32 %v5715, 2147483648
      %v5726 = vsel %vm5724, %v5725, %v5716
      %v5727 = vsel %vm5720, %v5723, %v5726
      %v5728 = vsel %vm5717, nan, %v5727
      %v5729 = vand.u32 2147483647, %v751
      %vm5730 = vcmp.le.f32.partialorder %v5729, 0.7853982
      %vm5731 = vcmp.lt.s32.totalorder %v751, 0
      %v5732 = vand.u32 %v751, 2139095040
      %v5733 = vshrl.u32 %v5732, 23
      %v5734 = vsub.s32 %v5733, 127
      %v5735 = vand.u32 2147483647, %v751
      %v5736 = vand.u32 %v5735, 8388607
      %v5737 = vor.u32 %v5736, 8388608
      %v5738 = vsub.s32 0, %v5737
      %v5739 = vadd.s32 %v5734, 1
      %vm5740 = vcmp.gt.s32.totalorder %v5739, 0
      %v5741 = vsel %vm5740, %v5739, 0
      %v5742 = vshrl.u32 %v5741, 5
      %v5743 = vand.u32 %v5741, 31
      %v5744 = vsub.s32 32, %v5743
      %v5745 = vshrl.u32 683565275, %v5744
      %v5746 = vshll.u32 683565275, %v5743
      %v5747 = vshrl.u32 2475754826, %v5744
      %v5748 = vor.u32 %v5746, %v5747
      %v5749 = vshll.u32 2475754826, %v5743
      %v5750 = vshrl.u32 2131351028, %v5744
      %v5751 = vor.u32 %v5749, %v5750
      %v5752 = vshll.u32 2131351028, %v5743
      %v5753 = vshrl.u32 2102212464, %v5744
      %v5754 = vor.u32 %v5752, %v5753
      %v5755 = vshll.u32 2102212464, %v5743
      %v5756 = vshrl.u32 920167782, %v5744
      %v5757 = vor.u32 %v5755, %v5756
      %v5758 = vshll.u32 920167782, %v5743
      %v5759 = vshrl.u32 1326507024, %v5744
      %v5760 = vor.u32 %v5758, %v5759
      %vm5761 = vcmp.lt.s32.totalorder %v5742, 1
      %vm5762 = vcmp.lt.s32.totalorder %v5742, 2
      %vm5763 = vcmp.lt.s32.totalorder %v5742, 3
      %vm5764 = vcmp.lt.s32.totalorder %v5742, 4
      %v5765 = vsel %vm5761, %v5745, %v5748
      %v5766 = vsel %vm5764, %v5754, 2102212464
      %v5767 = vsel %vm5763, %v5751, %v5766
      %v5768 = vsel %vm5762, %v5765, %v5767
      %v5769 = vsel %vm5761, %v5748, %v5751
      %v5770 = vsel %vm5764, %v5757, 920167782
      %v5771 = vsel %vm5763, %v5754, %v5770
      %v5772 = vsel %vm5762, %v5769, %v5771
      %v5773 = vsel %vm5761, %v5751, %v5754
      %v5774 = vsel %vm5764, %v5760, 1326507024
      %v5775 = vsel %vm5763, %v5757, %v5774
      %v5776 = vsel %vm5762, %v5773, %v5775
      %v5777 = vshll.u32 %v5737, 8
      %v5778 = vmul.u32.u64.compose %v5777, %v5776
      %v5779 = vextract.low.u32 %v5778
      %v5780 = vextract.high.u32 %v5778
      %v5781 = vmul.u32.u64.compose %v5777, %v5772
      %v5782 = vextract.low.u32 %v5781
      %v5783 = vextract.high.u32 %v5781
      %v5784 = vmul.u32 %v5777, %v5768
      %v5785 = vadd.s32 %v5780, %v5782
      %vm5786 = vc.u32 %v5780, %v5782
      %v5787 = vadd.s32 %v5783, 1
      %v5788 = vsel %vm5786, %v5787, %v5783
      %v5789 = vadd.s32 %v5784, %v5788
      %v5790 = vadd.s32 %v5789, 536870912
      %v5791 = vshrl.u32 %v5790, 30
      %v5792 = vshll.u32 %v5791, 30
      %v5793 = vsub.s32 %v5789, %v5792
      %vm5794 = vcmp.lt.s32.totalorder %v5793, 0
      %v5795 = vsub.s32 0, %v5793
      %v5796 = vsel %vm5794, %v5795, %v5793
      %v5797 = vclz %v5796
      %v5798 = vsub.s32 %v5797, 2
      %vm5799 = vcmp.gt.s32.totalorder 0, %v5798
      %v5800 = vsel %vm5799, 0, %v5798
      %v5801 = vsub.s32 32, %v5800
      %v5802 = vshll.u32 %v5793, %v5800
      %v5803 = vshrl.u32 %v5785, %v5801
      %v5804 = vor.u32 %v5802, %v5803
      %v5805 = vsub.s32 4294967266, %v5800
      %v5806 = vadd.s32 %v5805, 127
      %v5807 = vshll.u32 %v5806, 23
      %v5808 = vor.u32 4788187, %v5807
      %v5809 = vand.u32 2147483647, %v5808
      %v5811 = vcvt.s32.f32 %v5804
      %v5812 = vmul.f32 %v5811, %v5809
      %v5813 = vxor.u32 %v5812, 2147483648
      %v5814 = vsel %vm5731, %v5813, %v5812
      %v5815 = vsub.s32 4, %v5791
      %v5816 = vsel %vm5731, %v5815, %v5791
      %v5817 = vsel %vm5730, %v751, %v5814
      %v5818 = vsel %vm5730, 0, %v5816
      %v5819 = vcosq.f32.pop %v5817
      %v5820 = vsinq.f32.pop %v5817
      %vm5821 = vweird.f32 %v751
      %v5822 = vadd.s32 %v5818, 3
      %v5823 = vand.u32 %v5822, 3
      %vm5824 = vcmp.lt.s32.totalorder %v5823, 2
      %vm5825 = vcmp.eq.s32.totalorder %v5823, 0
      %v5826 = vxor.u32 %v5820, 2147483648
      %v5827 = vsel %vm5825, %v5819, %v5826
      %vm5828 = vcmp.eq.s32.totalorder %v5823, 2
      %v5829 = vxor.u32 %v5819, 2147483648
      %v5830 = vsel %vm5828, %v5829, %v5820
      %v5831 = vsel %vm5824, %v5827, %v5830
      %v5832 = vsel %vm5821, nan, %v5831
      %v5833 = vand.u32 2147483647, %v752
      %vm5834 = vcmp.le.f32.partialorder %v5833, 0.7853982
      %vm5835 = vcmp.lt.s32.totalorder %v752, 0
      %v5836 = vand.u32 %v752, 2139095040
      %v5837 = vshrl.u32 %v5836, 23
      %v5838 = vsub.s32 %v5837, 127
      %v5839 = vand.u32 2147483647, %v752
      %v5840 = vand.u32 %v5839, 8388607
      %v5841 = vor.u32 %v5840, 8388608
      %v5842 = vsub.s32 0, %v5841
      %v5843 = vadd.s32 %v5838, 1
      %vm5844 = vcmp.gt.s32.totalorder %v5843, 0
      %v5845 = vsel %vm5844, %v5843, 0
      %v5846 = vshrl.u32 %v5845, 5
      %v5847 = vand.u32 %v5845, 31
      %v5848 = vsub.s32 32, %v5847
      %v5849 = vshrl.u32 683565275, %v5848
      %v5850 = vshll.u32 683565275, %v5847
      %v5851 = vshrl.u32 2475754826, %v5848
      %v5852 = vor.u32 %v5850, %v5851
      %v5853 = vshll.u32 2475754826, %v5847
      %v5854 = vshrl.u32 2131351028, %v5848
      %v5855 = vor.u32 %v5853, %v5854
      %v5856 = vshll.u32 2131351028, %v5847
      %v5857 = vshrl.u32 2102212464, %v5848
      %v5858 = vor.u32 %v5856, %v5857
      %v5859 = vshll.u32 2102212464, %v5847
      %v5860 = vshrl.u32 920167782, %v5848
      %v5861 = vor.u32 %v5859, %v5860
      %v5862 = vshll.u32 920167782, %v5847
      %v5863 = vshrl.u32 1326507024, %v5848
      %v5864 = vor.u32 %v5862, %v5863
      %vm5865 = vcmp.lt.s32.totalorder %v5846, 1
      %vm5866 = vcmp.lt.s32.totalorder %v5846, 2
      %vm5867 = vcmp.lt.s32.totalorder %v5846, 3
      %vm5868 = vcmp.lt.s32.totalorder %v5846, 4
      %v5869 = vsel %vm5865, %v5849, %v5852
      %v5870 = vsel %vm5868, %v5858, 2102212464
      %v5871 = vsel %vm5867, %v5855, %v5870
      %v5872 = vsel %vm5866, %v5869, %v5871
      %v5873 = vsel %vm5865, %v5852, %v5855
      %v5874 = vsel %vm5868, %v5861, 920167782
      %v5875 = vsel %vm5867, %v5858, %v5874
      %v5876 = vsel %vm5866, %v5873, %v5875
      %v5877 = vsel %vm5865, %v5855, %v5858
      %v5878 = vsel %vm5868, %v5864, 1326507024
      %v5879 = vsel %vm5867, %v5861, %v5878
      %v5880 = vsel %vm5866, %v5877, %v5879
      %v5881 = vshll.u32 %v5841, 8
      %v5882 = vmul.u32.u64.compose %v5881, %v5880
      %v5883 = vextract.low.u32 %v5882
      %v5884 = vextract.high.u32 %v5882
      %v5885 = vmul.u32.u64.compose %v5881, %v5876
      %v5886 = vextract.low.u32 %v5885
      %v5887 = vextract.high.u32 %v5885
      %v5888 = vmul.u32 %v5881, %v5872
      %v5889 = vadd.s32 %v5884, %v5886
      %vm5890 = vc.u32 %v5884, %v5886
      %v5891 = vadd.s32 %v5887, 1
      %v5892 = vsel %vm5890, %v5891, %v5887
      %v5893 = vadd.s32 %v5888, %v5892
      %v5894 = vadd.s32 %v5893, 536870912
      %v5895 = vshrl.u32 %v5894, 30
      %v5896 = vshll.u32 %v5895, 30
      %v5897 = vsub.s32 %v5893, %v5896
      %vm5898 = vcmp.lt.s32.totalorder %v5897, 0
      %v5899 = vsub.s32 0, %v5897
      %v5900 = vsel %vm5898, %v5899, %v5897
      %v5901 = vclz %v5900
      %v5902 = vsub.s32 %v5901, 2
      %vm5903 = vcmp.gt.s32.totalorder 0, %v5902
      %v5904 = vsel %vm5903, 0, %v5902
      %v5905 = vsub.s32 32, %v5904
      %v5906 = vshll.u32 %v5897, %v5904
      %v5907 = vshrl.u32 %v5889, %v5905
      %v5908 = vor.u32 %v5906, %v5907
      %v5909 = vsub.s32 4294967266, %v5904
      %v5910 = vadd.s32 %v5909, 127
      %v5911 = vshll.u32 %v5910, 23
      %v5912 = vor.u32 4788187, %v5911
      %v5913 = vand.u32 2147483647, %v5912
      %v5915 = vcvt.s32.f32 %v5908
      %v5916 = vmul.f32 %v5915, %v5913
      %v5917 = vxor.u32 %v5916, 2147483648
      %v5918 = vsel %vm5835, %v5917, %v5916
      %v5919 = vsub.s32 4, %v5895
      %v5920 = vsel %vm5835, %v5919, %v5895
      %v5921 = vsel %vm5834, %v752, %v5918
      %v5922 = vsel %vm5834, 0, %v5920
      %v5923 = vcosq.f32.pop %v5921
      %v5924 = vsinq.f32.pop %v5921
      %vm5925 = vweird.f32 %v752
      %v5926 = vadd.s32 %v5922, 3
      %v5927 = vand.u32 %v5926, 3
      %vm5928 = vcmp.lt.s32.totalorder %v5927, 2
      %vm5929 = vcmp.eq.s32.totalorder %v5927, 0
      %v5930 = vxor.u32 %v5924, 2147483648
      %v5931 = vsel %vm5929, %v5923, %v5930
      %vm5932 = vcmp.eq.s32.totalorder %v5927, 2
      %v5933 = vxor.u32 %v5923, 2147483648
      %v5934 = vsel %vm5932, %v5933, %v5924
      %v5935 = vsel %vm5928, %v5931, %v5934
      %v5936 = vsel %vm5925, nan, %v5935
      %v5937 = vand.u32 2147483647, %v753
      %vm5938 = vcmp.le.f32.partialorder %v5937, 0.7853982
      %vm5939 = vcmp.lt.s32.totalorder %v753, 0
      %v5940 = vand.u32 %v753, 2139095040
      %v5941 = vshrl.u32 %v5940, 23
      %v5942 = vsub.s32 %v5941, 127
      %v5943 = vand.u32 2147483647, %v753
      %v5944 = vand.u32 %v5943, 8388607
      %v5945 = vor.u32 %v5944, 8388608
      %v5946 = vsub.s32 0, %v5945
      %v5947 = vadd.s32 %v5942, 1
      %vm5948 = vcmp.gt.s32.totalorder %v5947, 0
      %v5949 = vsel %vm5948, %v5947, 0
      %v5950 = vshrl.u32 %v5949, 5
      %v5951 = vand.u32 %v5949, 31
      %v5952 = vsub.s32 32, %v5951
      %v5953 = vshrl.u32 683565275, %v5952
      %v5954 = vshll.u32 683565275, %v5951
      %v5955 = vshrl.u32 2475754826, %v5952
      %v5956 = vor.u32 %v5954, %v5955
      %v5957 = vshll.u32 2475754826, %v5951
      %v5958 = vshrl.u32 2131351028, %v5952
      %v5959 = vor.u32 %v5957, %v5958
      %v5960 = vshll.u32 2131351028, %v5951
      %v5961 = vshrl.u32 2102212464, %v5952
      %v5962 = vor.u32 %v5960, %v5961
      %v5963 = vshll.u32 2102212464, %v5951
      %v5964 = vshrl.u32 920167782, %v5952
      %v5965 = vor.u32 %v5963, %v5964
      %v5966 = vshll.u32 920167782, %v5951
      %v5967 = vshrl.u32 1326507024, %v5952
      %v5968 = vor.u32 %v5966, %v5967
      %vm5969 = vcmp.lt.s32.totalorder %v5950, 1
      %vm5970 = vcmp.lt.s32.totalorder %v5950, 2
      %vm5971 = vcmp.lt.s32.totalorder %v5950, 3
      %vm5972 = vcmp.lt.s32.totalorder %v5950, 4
      %v5973 = vsel %vm5969, %v5953, %v5956
      %v5974 = vsel %vm5972, %v5962, 2102212464
      %v5975 = vsel %vm5971, %v5959, %v5974
      %v5976 = vsel %vm5970, %v5973, %v5975
      %v5977 = vsel %vm5969, %v5956, %v5959
      %v5978 = vsel %vm5972, %v5965, 920167782
      %v5979 = vsel %vm5971, %v5962, %v5978
      %v5980 = vsel %vm5970, %v5977, %v5979
      %v5981 = vsel %vm5969, %v5959, %v5962
      %v5982 = vsel %vm5972, %v5968, 1326507024
      %v5983 = vsel %vm5971, %v5965, %v5982
      %v5984 = vsel %vm5970, %v5981, %v5983
      %v5985 = vshll.u32 %v5945, 8
      %v5986 = vmul.u32.u64.compose %v5985, %v5984
      %v5987 = vextract.low.u32 %v5986
      %v5988 = vextract.high.u32 %v5986
      %v5989 = vmul.u32.u64.compose %v5985, %v5980
      %v5990 = vextract.low.u32 %v5989
      %v5991 = vextract.high.u32 %v5989
      %v5992 = vmul.u32 %v5985, %v5976
      %v5993 = vadd.s32 %v5988, %v5990
      %vm5994 = vc.u32 %v5988, %v5990
      %v5995 = vadd.s32 %v5991, 1
      %v5996 = vsel %vm5994, %v5995, %v5991
      %v5997 = vadd.s32 %v5992, %v5996
      %v5998 = vadd.s32 %v5997, 536870912
      %v5999 = vshrl.u32 %v5998, 30
      %v6000 = vshll.u32 %v5999, 30
      %v6001 = vsub.s32 %v5997, %v6000
      %vm6002 = vcmp.lt.s32.totalorder %v6001, 0
      %v6003 = vsub.s32 0, %v6001
      %v6004 = vsel %vm6002, %v6003, %v6001
      %v6005 = vclz %v6004
      %v6006 = vsub.s32 %v6005, 2
      %vm6007 = vcmp.gt.s32.totalorder 0, %v6006
      %v6008 = vsel %vm6007, 0, %v6006
      %v6009 = vsub.s32 32, %v6008
      %v6010 = vshll.u32 %v6001, %v6008
      %v6011 = vshrl.u32 %v5993, %v6009
      %v6012 = vor.u32 %v6010, %v6011
      %v6013 = vsub.s32 4294967266, %v6008
      %v6014 = vadd.s32 %v6013, 127
      %v6015 = vshll.u32 %v6014, 23
      %v6016 = vor.u32 4788187, %v6015
      %v6017 = vand.u32 2147483647, %v6016
      %v6019 = vcvt.s32.f32 %v6012
      %v6020 = vmul.f32 %v6019, %v6017
      %v6021 = vxor.u32 %v6020, 2147483648
      %v6022 = vsel %vm5939, %v6021, %v6020
      %v6023 = vsub.s32 4, %v5999
      %v6024 = vsel %vm5939, %v6023, %v5999
      %v6025 = vsel %vm5938, %v753, %v6022
      %v6026 = vsel %vm5938, 0, %v6024
      %v6027 = vcosq.f32.pop %v6025
      %v6028 = vsinq.f32.pop %v6025
      %vm6029 = vweird.f32 %v753
      %v6030 = vadd.s32 %v6026, 3
      %v6031 = vand.u32 %v6030, 3
      %vm6032 = vcmp.lt.s32.totalorder %v6031, 2
      %vm6033 = vcmp.eq.s32.totalorder %v6031, 0
      %v6034 = vxor.u32 %v6028, 2147483648
      %v6035 = vsel %vm6033, %v6027, %v6034
      %vm6036 = vcmp.eq.s32.totalorder %v6031, 2
      %v6037 = vxor.u32 %v6027, 2147483648
      %v6038 = vsel %vm6036, %v6037, %v6028
      %v6039 = vsel %vm6032, %v6035, %v6038
      %v6040 = vsel %vm6029, nan, %v6039
      %v6041 = vand.u32 2147483647, %v754
      %vm6042 = vcmp.le.f32.partialorder %v6041, 0.7853982
      %vm6043 = vcmp.lt.s32.totalorder %v754, 0
      %v6044 = vand.u32 %v754, 2139095040
      %v6045 = vshrl.u32 %v6044, 23
      %v6046 = vsub.s32 %v6045, 127
      %v6047 = vand.u32 2147483647, %v754
      %v6048 = vand.u32 %v6047, 8388607
      %v6049 = vor.u32 %v6048, 8388608
      %v6050 = vsub.s32 0, %v6049
      %v6051 = vadd.s32 %v6046, 1
      %vm6052 = vcmp.gt.s32.totalorder %v6051, 0
      %v6053 = vsel %vm6052, %v6051, 0
      %v6054 = vshrl.u32 %v6053, 5
      %v6055 = vand.u32 %v6053, 31
      %v6056 = vsub.s32 32, %v6055
      %v6057 = vshrl.u32 683565275, %v6056
      %v6058 = vshll.u32 683565275, %v6055
      %v6059 = vshrl.u32 2475754826, %v6056
      %v6060 = vor.u32 %v6058, %v6059
      %v6061 = vshll.u32 2475754826, %v6055
      %v6062 = vshrl.u32 2131351028, %v6056
      %v6063 = vor.u32 %v6061, %v6062
      %v6064 = vshll.u32 2131351028, %v6055
      %v6065 = vshrl.u32 2102212464, %v6056
      %v6066 = vor.u32 %v6064, %v6065
      %v6067 = vshll.u32 2102212464, %v6055
      %v6068 = vshrl.u32 920167782, %v6056
      %v6069 = vor.u32 %v6067, %v6068
      %v6070 = vshll.u32 920167782, %v6055
      %v6071 = vshrl.u32 1326507024, %v6056
      %v6072 = vor.u32 %v6070, %v6071
      %vm6073 = vcmp.lt.s32.totalorder %v6054, 1
      %vm6074 = vcmp.lt.s32.totalorder %v6054, 2
      %vm6075 = vcmp.lt.s32.totalorder %v6054, 3
      %vm6076 = vcmp.lt.s32.totalorder %v6054, 4
      %v6077 = vsel %vm6073, %v6057, %v6060
      %v6078 = vsel %vm6076, %v6066, 2102212464
      %v6079 = vsel %vm6075, %v6063, %v6078
      %v6080 = vsel %vm6074, %v6077, %v6079
      %v6081 = vsel %vm6073, %v6060, %v6063
      %v6082 = vsel %vm6076, %v6069, 920167782
      %v6083 = vsel %vm6075, %v6066, %v6082
      %v6084 = vsel %vm6074, %v6081, %v6083
      %v6085 = vsel %vm6073, %v6063, %v6066
      %v6086 = vsel %vm6076, %v6072, 1326507024
      %v6087 = vsel %vm6075, %v6069, %v6086
      %v6088 = vsel %vm6074, %v6085, %v6087
      %v6089 = vshll.u32 %v6049, 8
      %v6090 = vmul.u32.u64.compose %v6089, %v6088
      %v6091 = vextract.low.u32 %v6090
      %v6092 = vextract.high.u32 %v6090
      %v6093 = vmul.u32.u64.compose %v6089, %v6084
      %v6094 = vextract.low.u32 %v6093
      %v6095 = vextract.high.u32 %v6093
      %v6096 = vmul.u32 %v6089, %v6080
      %v6097 = vadd.s32 %v6092, %v6094
      %vm6098 = vc.u32 %v6092, %v6094
      %v6099 = vadd.s32 %v6095, 1
      %v6100 = vsel %vm6098, %v6099, %v6095
      %v6101 = vadd.s32 %v6096, %v6100
      %v6102 = vadd.s32 %v6101, 536870912
      %v6103 = vshrl.u32 %v6102, 30
      %v6104 = vshll.u32 %v6103, 30
      %v6105 = vsub.s32 %v6101, %v6104
      %vm6106 = vcmp.lt.s32.totalorder %v6105, 0
      %v6107 = vsub.s32 0, %v6105
      %v6108 = vsel %vm6106, %v6107, %v6105
      %v6109 = vclz %v6108
      %v6110 = vsub.s32 %v6109, 2
      %vm6111 = vcmp.gt.s32.totalorder 0, %v6110
      %v6112 = vsel %vm6111, 0, %v6110
      %v6113 = vsub.s32 32, %v6112
      %v6114 = vshll.u32 %v6105, %v6112
      %v6115 = vshrl.u32 %v6097, %v6113
      %v6116 = vor.u32 %v6114, %v6115
      %v6117 = vsub.s32 4294967266, %v6112
      %v6118 = vadd.s32 %v6117, 127
      %v6119 = vshll.u32 %v6118, 23
      %v6120 = vor.u32 4788187, %v6119
      %v6121 = vand.u32 2147483647, %v6120
      %v6123 = vcvt.s32.f32 %v6116
      %v6124 = vmul.f32 %v6123, %v6121
      %v6125 = vxor.u32 %v6124, 2147483648
      %v6126 = vsel %vm6043, %v6125, %v6124
      %v6127 = vsub.s32 4, %v6103
      %v6128 = vsel %vm6043, %v6127, %v6103
      %v6129 = vsel %vm6042, %v754, %v6126
      %v6130 = vsel %vm6042, 0, %v6128
      %v6131 = vcosq.f32.pop %v6129
      %v6132 = vsinq.f32.pop %v6129
      %vm6133 = vweird.f32 %v754
      %v6134 = vadd.s32 %v6130, 3
      %v6135 = vand.u32 %v6134, 3
      %vm6136 = vcmp.lt.s32.totalorder %v6135, 2
      %vm6137 = vcmp.eq.s32.totalorder %v6135, 0
      %v6138 = vxor.u32 %v6132, 2147483648
      %v6139 = vsel %vm6137, %v6131, %v6138
      %vm6140 = vcmp.eq.s32.totalorder %v6135, 2
      %v6141 = vxor.u32 %v6131, 2147483648
      %v6142 = vsel %vm6140, %v6141, %v6132
      %v6143 = vsel %vm6136, %v6139, %v6142
      %v6144 = vsel %vm6133, nan, %v6143
      %v6145 = vand.u32 2147483647, %v755
      %vm6146 = vcmp.le.f32.partialorder %v6145, 0.7853982
      %vm6147 = vcmp.lt.s32.totalorder %v755, 0
      %v6148 = vand.u32 %v755, 2139095040
      %v6149 = vshrl.u32 %v6148, 23
      %v6150 = vsub.s32 %v6149, 127
      %v6151 = vand.u32 2147483647, %v755
      %v6152 = vand.u32 %v6151, 8388607
      %v6153 = vor.u32 %v6152, 8388608
      %v6154 = vsub.s32 0, %v6153
      %v6155 = vadd.s32 %v6150, 1
      %vm6156 = vcmp.gt.s32.totalorder %v6155, 0
      %v6157 = vsel %vm6156, %v6155, 0
      %v6158 = vshrl.u32 %v6157, 5
      %v6159 = vand.u32 %v6157, 31
      %v6160 = vsub.s32 32, %v6159
      %v6161 = vshrl.u32 683565275, %v6160
      %v6162 = vshll.u32 683565275, %v6159
      %v6163 = vshrl.u32 2475754826, %v6160
      %v6164 = vor.u32 %v6162, %v6163
      %v6165 = vshll.u32 2475754826, %v6159
      %v6166 = vshrl.u32 2131351028, %v6160
      %v6167 = vor.u32 %v6165, %v6166
      %v6168 = vshll.u32 2131351028, %v6159
      %v6169 = vshrl.u32 2102212464, %v6160
      %v6170 = vor.u32 %v6168, %v6169
      %v6171 = vshll.u32 2102212464, %v6159
      %v6172 = vshrl.u32 920167782, %v6160
      %v6173 = vor.u32 %v6171, %v6172
      %v6174 = vshll.u32 920167782, %v6159
      %v6175 = vshrl.u32 1326507024, %v6160
      %v6176 = vor.u32 %v6174, %v6175
      %vm6177 = vcmp.lt.s32.totalorder %v6158, 1
      %vm6178 = vcmp.lt.s32.totalorder %v6158, 2
      %vm6179 = vcmp.lt.s32.totalorder %v6158, 3
      %vm6180 = vcmp.lt.s32.totalorder %v6158, 4
      %v6181 = vsel %vm6177, %v6161, %v6164
      %v6182 = vsel %vm6180, %v6170, 2102212464
      %v6183 = vsel %vm6179, %v6167, %v6182
      %v6184 = vsel %vm6178, %v6181, %v6183
      %v6185 = vsel %vm6177, %v6164, %v6167
      %v6186 = vsel %vm6180, %v6173, 920167782
      %v6187 = vsel %vm6179, %v6170, %v6186
      %v6188 = vsel %vm6178, %v6185, %v6187
      %v6189 = vsel %vm6177, %v6167, %v6170
      %v6190 = vsel %vm6180, %v6176, 1326507024
      %v6191 = vsel %vm6179, %v6173, %v6190
      %v6192 = vsel %vm6178, %v6189, %v6191
      %v6193 = vshll.u32 %v6153, 8
      %v6194 = vmul.u32.u64.compose %v6193, %v6192
      %v6195 = vextract.low.u32 %v6194
      %v6196 = vextract.high.u32 %v6194
      %v6197 = vmul.u32.u64.compose %v6193, %v6188
      %v6198 = vextract.low.u32 %v6197
      %v6199 = vextract.high.u32 %v6197
      %v6200 = vmul.u32 %v6193, %v6184
      %v6201 = vadd.s32 %v6196, %v6198
      %vm6202 = vc.u32 %v6196, %v6198
      %v6203 = vadd.s32 %v6199, 1
      %v6204 = vsel %vm6202, %v6203, %v6199
      %v6205 = vadd.s32 %v6200, %v6204
      %v6206 = vadd.s32 %v6205, 536870912
      %v6207 = vshrl.u32 %v6206, 30
      %v6208 = vshll.u32 %v6207, 30
      %v6209 = vsub.s32 %v6205, %v6208
      %vm6210 = vcmp.lt.s32.totalorder %v6209, 0
      %v6211 = vsub.s32 0, %v6209
      %v6212 = vsel %vm6210, %v6211, %v6209
      %v6213 = vclz %v6212
      %v6214 = vsub.s32 %v6213, 2
      %vm6215 = vcmp.gt.s32.totalorder 0, %v6214
      %v6216 = vsel %vm6215, 0, %v6214
      %v6217 = vsub.s32 32, %v6216
      %v6218 = vshll.u32 %v6209, %v6216
      %v6219 = vshrl.u32 %v6201, %v6217
      %v6220 = vor.u32 %v6218, %v6219
      %v6221 = vsub.s32 4294967266, %v6216
      %v6222 = vadd.s32 %v6221, 127
      %v6223 = vshll.u32 %v6222, 23
      %v6224 = vor.u32 4788187, %v6223
      %v6225 = vand.u32 2147483647, %v6224
      %v6227 = vcvt.s32.f32 %v6220
      %v6228 = vmul.f32 %v6227, %v6225
      %v6229 = vxor.u32 %v6228, 2147483648
      %v6230 = vsel %vm6147, %v6229, %v6228
      %v6231 = vsub.s32 4, %v6207
      %v6232 = vsel %vm6147, %v6231, %v6207
      %v6233 = vsel %vm6146, %v755, %v6230
      %v6234 = vsel %vm6146, 0, %v6232
      %v6235 = vcosq.f32.pop %v6233
      %v6236 = vsinq.f32.pop %v6233
      %vm6237 = vweird.f32 %v755
      %v6238 = vadd.s32 %v6234, 3
      %v6239 = vand.u32 %v6238, 3
      %vm6240 = vcmp.lt.s32.totalorder %v6239, 2
      %vm6241 = vcmp.eq.s32.totalorder %v6239, 0
      %v6242 = vxor.u32 %v6236, 2147483648
      %v6243 = vsel %vm6241, %v6235, %v6242
      %vm6244 = vcmp.eq.s32.totalorder %v6239, 2
      %v6245 = vxor.u32 %v6235, 2147483648
      %v6246 = vsel %vm6244, %v6245, %v6236
      %v6247 = vsel %vm6240, %v6243, %v6246
      %v6248 = vsel %vm6237, nan, %v6247
      %v6249 = vand.u32 2147483647, %v756
      %vm6250 = vcmp.le.f32.partialorder %v6249, 0.7853982
      %vm6251 = vcmp.lt.s32.totalorder %v756, 0
      %v6252 = vand.u32 %v756, 2139095040
      %v6253 = vshrl.u32 %v6252, 23
      %v6254 = vsub.s32 %v6253, 127
      %v6255 = vand.u32 2147483647, %v756
      %v6256 = vand.u32 %v6255, 8388607
      %v6257 = vor.u32 %v6256, 8388608
      %v6258 = vsub.s32 0, %v6257
      %v6259 = vadd.s32 %v6254, 1
      %vm6260 = vcmp.gt.s32.totalorder %v6259, 0
      %v6261 = vsel %vm6260, %v6259, 0
      %v6262 = vshrl.u32 %v6261, 5
      %v6263 = vand.u32 %v6261, 31
      %v6264 = vsub.s32 32, %v6263
      %v6265 = vshrl.u32 683565275, %v6264
      %v6266 = vshll.u32 683565275, %v6263
      %v6267 = vshrl.u32 2475754826, %v6264
      %v6268 = vor.u32 %v6266, %v6267
      %v6269 = vshll.u32 2475754826, %v6263
      %v6270 = vshrl.u32 2131351028, %v6264
      %v6271 = vor.u32 %v6269, %v6270
      %v6272 = vshll.u32 2131351028, %v6263
      %v6273 = vshrl.u32 2102212464, %v6264
      %v6274 = vor.u32 %v6272, %v6273
      %v6275 = vshll.u32 2102212464, %v6263
      %v6276 = vshrl.u32 920167782, %v6264
      %v6277 = vor.u32 %v6275, %v6276
      %v6278 = vshll.u32 920167782, %v6263
      %v6279 = vshrl.u32 1326507024, %v6264
      %v6280 = vor.u32 %v6278, %v6279
      %vm6281 = vcmp.lt.s32.totalorder %v6262, 1
      %vm6282 = vcmp.lt.s32.totalorder %v6262, 2
      %vm6283 = vcmp.lt.s32.totalorder %v6262, 3
      %vm6284 = vcmp.lt.s32.totalorder %v6262, 4
      %v6285 = vsel %vm6281, %v6265, %v6268
      %v6286 = vsel %vm6284, %v6274, 2102212464
      %v6287 = vsel %vm6283, %v6271, %v6286
      %v6288 = vsel %vm6282, %v6285, %v6287
      %v6289 = vsel %vm6281, %v6268, %v6271
      %v6290 = vsel %vm6284, %v6277, 920167782
      %v6291 = vsel %vm6283, %v6274, %v6290
      %v6292 = vsel %vm6282, %v6289, %v6291
      %v6293 = vsel %vm6281, %v6271, %v6274
      %v6294 = vsel %vm6284, %v6280, 1326507024
      %v6295 = vsel %vm6283, %v6277, %v6294
      %v6296 = vsel %vm6282, %v6293, %v6295
      %v6297 = vshll.u32 %v6257, 8
      %v6298 = vmul.u32.u64.compose %v6297, %v6296
      %v6299 = vextract.low.u32 %v6298
      %v6300 = vextract.high.u32 %v6298
      %v6301 = vmul.u32.u64.compose %v6297, %v6292
      %v6302 = vextract.low.u32 %v6301
      %v6303 = vextract.high.u32 %v6301
      %v6304 = vmul.u32 %v6297, %v6288
      %v6305 = vadd.s32 %v6300, %v6302
      %vm6306 = vc.u32 %v6300, %v6302
      %v6307 = vadd.s32 %v6303, 1
      %v6308 = vsel %vm6306, %v6307, %v6303
      %v6309 = vadd.s32 %v6304, %v6308
      %v6310 = vadd.s32 %v6309, 536870912
      %v6311 = vshrl.u32 %v6310, 30
      %v6312 = vshll.u32 %v6311, 30
      %v6313 = vsub.s32 %v6309, %v6312
      %vm6314 = vcmp.lt.s32.totalorder %v6313, 0
      %v6315 = vsub.s32 0, %v6313
      %v6316 = vsel %vm6314, %v6315, %v6313
      %v6317 = vclz %v6316
      %v6318 = vsub.s32 %v6317, 2
      %vm6319 = vcmp.gt.s32.totalorder 0, %v6318
      %v6320 = vsel %vm6319, 0, %v6318
      %v6321 = vsub.s32 32, %v6320
      %v6322 = vshll.u32 %v6313, %v6320
      %v6323 = vshrl.u32 %v6305, %v6321
      %v6324 = vor.u32 %v6322, %v6323
      %v6325 = vsub.s32 4294967266, %v6320
      %v6326 = vadd.s32 %v6325, 127
      %v6327 = vshll.u32 %v6326, 23
      %v6328 = vor.u32 4788187, %v6327
      %v6329 = vand.u32 2147483647, %v6328
      %v6331 = vcvt.s32.f32 %v6324
      %v6332 = vmul.f32 %v6331, %v6329
      %v6333 = vxor.u32 %v6332, 2147483648
      %v6334 = vsel %vm6251, %v6333, %v6332
      %v6335 = vsub.s32 4, %v6311
      %v6336 = vsel %vm6251, %v6335, %v6311
      %v6337 = vsel %vm6250, %v756, %v6334
      %v6338 = vsel %vm6250, 0, %v6336
      %v6339 = vcosq.f32.pop %v6337
      %v6340 = vsinq.f32.pop %v6337
      %vm6341 = vweird.f32 %v756
      %v6342 = vadd.s32 %v6338, 3
      %v6343 = vand.u32 %v6342, 3
      %vm6344 = vcmp.lt.s32.totalorder %v6343, 2
      %vm6345 = vcmp.eq.s32.totalorder %v6343, 0
      %v6346 = vxor.u32 %v6340, 2147483648
      %v6347 = vsel %vm6345, %v6339, %v6346
      %vm6348 = vcmp.eq.s32.totalorder %v6343, 2
      %v6349 = vxor.u32 %v6339, 2147483648
      %v6350 = vsel %vm6348, %v6349, %v6340
      %v6351 = vsel %vm6344, %v6347, %v6350
      %v6352 = vsel %vm6341, nan, %v6351
      %v6353 = vand.u32 2147483647, %v757
      %vm6354 = vcmp.le.f32.partialorder %v6353, 0.7853982
      %vm6355 = vcmp.lt.s32.totalorder %v757, 0
      %v6356 = vand.u32 %v757, 2139095040
      %v6357 = vshrl.u32 %v6356, 23
      %v6358 = vsub.s32 %v6357, 127
      %v6359 = vand.u32 2147483647, %v757
      %v6360 = vand.u32 %v6359, 8388607
      %v6361 = vor.u32 %v6360, 8388608
      %v6362 = vsub.s32 0, %v6361
      %v6363 = vadd.s32 %v6358, 1
      %vm6364 = vcmp.gt.s32.totalorder %v6363, 0
      %v6365 = vsel %vm6364, %v6363, 0
      %v6366 = vshrl.u32 %v6365, 5
      %v6367 = vand.u32 %v6365, 31
      %v6368 = vsub.s32 32, %v6367
      %v6369 = vshrl.u32 683565275, %v6368
      %v6370 = vshll.u32 683565275, %v6367
      %v6371 = vshrl.u32 2475754826, %v6368
      %v6372 = vor.u32 %v6370, %v6371
      %v6373 = vshll.u32 2475754826, %v6367
      %v6374 = vshrl.u32 2131351028, %v6368
      %v6375 = vor.u32 %v6373, %v6374
      %v6376 = vshll.u32 2131351028, %v6367
      %v6377 = vshrl.u32 2102212464, %v6368
      %v6378 = vor.u32 %v6376, %v6377
      %v6379 = vshll.u32 2102212464, %v6367
      %v6380 = vshrl.u32 920167782, %v6368
      %v6381 = vor.u32 %v6379, %v6380
      %v6382 = vshll.u32 920167782, %v6367
      %v6383 = vshrl.u32 1326507024, %v6368
      %v6384 = vor.u32 %v6382, %v6383
      %vm6385 = vcmp.lt.s32.totalorder %v6366, 1
      %vm6386 = vcmp.lt.s32.totalorder %v6366, 2
      %vm6387 = vcmp.lt.s32.totalorder %v6366, 3
      %vm6388 = vcmp.lt.s32.totalorder %v6366, 4
      %v6389 = vsel %vm6385, %v6369, %v6372
      %v6390 = vsel %vm6388, %v6378, 2102212464
      %v6391 = vsel %vm6387, %v6375, %v6390
      %v6392 = vsel %vm6386, %v6389, %v6391
      %v6393 = vsel %vm6385, %v6372, %v6375
      %v6394 = vsel %vm6388, %v6381, 920167782
      %v6395 = vsel %vm6387, %v6378, %v6394
      %v6396 = vsel %vm6386, %v6393, %v6395
      %v6397 = vsel %vm6385, %v6375, %v6378
      %v6398 = vsel %vm6388, %v6384, 1326507024
      %v6399 = vsel %vm6387, %v6381, %v6398
      %v6400 = vsel %vm6386, %v6397, %v6399
      %v6401 = vshll.u32 %v6361, 8
      %v6402 = vmul.u32.u64.compose %v6401, %v6400
      %v6403 = vextract.low.u32 %v6402
      %v6404 = vextract.high.u32 %v6402
      %v6405 = vmul.u32.u64.compose %v6401, %v6396
      %v6406 = vextract.low.u32 %v6405
      %v6407 = vextract.high.u32 %v6405
      %v6408 = vmul.u32 %v6401, %v6392
      %v6409 = vadd.s32 %v6404, %v6406
      %vm6410 = vc.u32 %v6404, %v6406
      %v6411 = vadd.s32 %v6407, 1
      %v6412 = vsel %vm6410, %v6411, %v6407
      %v6413 = vadd.s32 %v6408, %v6412
      %v6414 = vadd.s32 %v6413, 536870912
      %v6415 = vshrl.u32 %v6414, 30
      %v6416 = vshll.u32 %v6415, 30
      %v6417 = vsub.s32 %v6413, %v6416
      %vm6418 = vcmp.lt.s32.totalorder %v6417, 0
      %v6419 = vsub.s32 0, %v6417
      %v6420 = vsel %vm6418, %v6419, %v6417
      %v6421 = vclz %v6420
      %v6422 = vsub.s32 %v6421, 2
      %vm6423 = vcmp.gt.s32.totalorder 0, %v6422
      %v6424 = vsel %vm6423, 0, %v6422
      %v6425 = vsub.s32 32, %v6424
      %v6426 = vshll.u32 %v6417, %v6424
      %v6427 = vshrl.u32 %v6409, %v6425
      %v6428 = vor.u32 %v6426, %v6427
      %v6429 = vsub.s32 4294967266, %v6424
      %v6430 = vadd.s32 %v6429, 127
      %v6431 = vshll.u32 %v6430, 23
      %v6432 = vor.u32 4788187, %v6431
      %v6433 = vand.u32 2147483647, %v6432
      %v6435 = vcvt.s32.f32 %v6428
      %v6436 = vmul.f32 %v6435, %v6433
      %v6437 = vxor.u32 %v6436, 2147483648
      %v6438 = vsel %vm6355, %v6437, %v6436
      %v6439 = vsub.s32 4, %v6415
      %v6440 = vsel %vm6355, %v6439, %v6415
      %v6441 = vsel %vm6354, %v757, %v6438
      %v6442 = vsel %vm6354, 0, %v6440
      %v6443 = vcosq.f32.pop %v6441
      %v6444 = vsinq.f32.pop %v6441
      %vm6445 = vweird.f32 %v757
      %v6446 = vadd.s32 %v6442, 3
      %v6447 = vand.u32 %v6446, 3
      %vm6448 = vcmp.lt.s32.totalorder %v6447, 2
      %vm6449 = vcmp.eq.s32.totalorder %v6447, 0
      %v6450 = vxor.u32 %v6444, 2147483648
      %v6451 = vsel %vm6449, %v6443, %v6450
      %vm6452 = vcmp.eq.s32.totalorder %v6447, 2
      %v6453 = vxor.u32 %v6443, 2147483648
      %v6454 = vsel %vm6452, %v6453, %v6444
      %v6455 = vsel %vm6448, %v6451, %v6454
      %v6456 = vsel %vm6445, nan, %v6455
      %v6457 = vand.u32 2147483647, %v758
      %vm6458 = vcmp.le.f32.partialorder %v6457, 0.7853982
      %vm6459 = vcmp.lt.s32.totalorder %v758, 0
      %v6460 = vand.u32 %v758, 2139095040
      %v6461 = vshrl.u32 %v6460, 23
      %v6462 = vsub.s32 %v6461, 127
      %v6463 = vand.u32 2147483647, %v758
      %v6464 = vand.u32 %v6463, 8388607
      %v6465 = vor.u32 %v6464, 8388608
      %v6466 = vsub.s32 0, %v6465
      %v6467 = vadd.s32 %v6462, 1
      %vm6468 = vcmp.gt.s32.totalorder %v6467, 0
      %v6469 = vsel %vm6468, %v6467, 0
      %v6470 = vshrl.u32 %v6469, 5
      %v6471 = vand.u32 %v6469, 31
      %v6472 = vsub.s32 32, %v6471
      %v6473 = vshrl.u32 683565275, %v6472
      %v6474 = vshll.u32 683565275, %v6471
      %v6475 = vshrl.u32 2475754826, %v6472
      %v6476 = vor.u32 %v6474, %v6475
      %v6477 = vshll.u32 2475754826, %v6471
      %v6478 = vshrl.u32 2131351028, %v6472
      %v6479 = vor.u32 %v6477, %v6478
      %v6480 = vshll.u32 2131351028, %v6471
      %v6481 = vshrl.u32 2102212464, %v6472
      %v6482 = vor.u32 %v6480, %v6481
      %v6483 = vshll.u32 2102212464, %v6471
      %v6484 = vshrl.u32 920167782, %v6472
      %v6485 = vor.u32 %v6483, %v6484
      %v6486 = vshll.u32 920167782, %v6471
      %v6487 = vshrl.u32 1326507024, %v6472
      %v6488 = vor.u32 %v6486, %v6487
      %vm6489 = vcmp.lt.s32.totalorder %v6470, 1
      %vm6490 = vcmp.lt.s32.totalorder %v6470, 2
      %vm6491 = vcmp.lt.s32.totalorder %v6470, 3
      %vm6492 = vcmp.lt.s32.totalorder %v6470, 4
      %v6493 = vsel %vm6489, %v6473, %v6476
      %v6494 = vsel %vm6492, %v6482, 2102212464
      %v6495 = vsel %vm6491, %v6479, %v6494
      %v6496 = vsel %vm6490, %v6493, %v6495
      %v6497 = vsel %vm6489, %v6476, %v6479
      %v6498 = vsel %vm6492, %v6485, 920167782
      %v6499 = vsel %vm6491, %v6482, %v6498
      %v6500 = vsel %vm6490, %v6497, %v6499
      %v6501 = vsel %vm6489, %v6479, %v6482
      %v6502 = vsel %vm6492, %v6488, 1326507024
      %v6503 = vsel %vm6491, %v6485, %v6502
      %v6504 = vsel %vm6490, %v6501, %v6503
      %v6505 = vshll.u32 %v6465, 8
      %v6506 = vmul.u32.u64.compose %v6505, %v6504
      %v6507 = vextract.low.u32 %v6506
      %v6508 = vextract.high.u32 %v6506
      %v6509 = vmul.u32.u64.compose %v6505, %v6500
      %v6510 = vextract.low.u32 %v6509
      %v6511 = vextract.high.u32 %v6509
      %v6512 = vmul.u32 %v6505, %v6496
      %v6513 = vadd.s32 %v6508, %v6510
      %vm6514 = vc.u32 %v6508, %v6510
      %v6515 = vadd.s32 %v6511, 1
      %v6516 = vsel %vm6514, %v6515, %v6511
      %v6517 = vadd.s32 %v6512, %v6516
      %v6518 = vadd.s32 %v6517, 536870912
      %v6519 = vshrl.u32 %v6518, 30
      %v6520 = vshll.u32 %v6519, 30
      %v6521 = vsub.s32 %v6517, %v6520
      %vm6522 = vcmp.lt.s32.totalorder %v6521, 0
      %v6523 = vsub.s32 0, %v6521
      %v6524 = vsel %vm6522, %v6523, %v6521
      %v6525 = vclz %v6524
      %v6526 = vsub.s32 %v6525, 2
      %vm6527 = vcmp.gt.s32.totalorder 0, %v6526
      %v6528 = vsel %vm6527, 0, %v6526
      %v6529 = vsub.s32 32, %v6528
      %v6530 = vshll.u32 %v6521, %v6528
      %v6531 = vshrl.u32 %v6513, %v6529
      %v6532 = vor.u32 %v6530, %v6531
      %v6533 = vsub.s32 4294967266, %v6528
      %v6534 = vadd.s32 %v6533, 127
      %v6535 = vshll.u32 %v6534, 23
      %v6536 = vor.u32 4788187, %v6535
      %v6537 = vand.u32 2147483647, %v6536
      %v6539 = vcvt.s32.f32 %v6532
      %v6540 = vmul.f32 %v6539, %v6537
      %v6541 = vxor.u32 %v6540, 2147483648
      %v6542 = vsel %vm6459, %v6541, %v6540
      %v6543 = vsub.s32 4, %v6519
      %v6544 = vsel %vm6459, %v6543, %v6519
      %v6545 = vsel %vm6458, %v758, %v6542
      %v6546 = vsel %vm6458, 0, %v6544
      %v6547 = vcosq.f32.pop %v6545
      %v6548 = vsinq.f32.pop %v6545
      %vm6549 = vweird.f32 %v758
      %v6550 = vadd.s32 %v6546, 3
      %v6551 = vand.u32 %v6550, 3
      %vm6552 = vcmp.lt.s32.totalorder %v6551, 2
      %vm6553 = vcmp.eq.s32.totalorder %v6551, 0
      %v6554 = vxor.u32 %v6548, 2147483648
      %v6555 = vsel %vm6553, %v6547, %v6554
      %vm6556 = vcmp.eq.s32.totalorder %v6551, 2
      %v6557 = vxor.u32 %v6547, 2147483648
      %v6558 = vsel %vm6556, %v6557, %v6548
      %v6559 = vsel %vm6552, %v6555, %v6558
      %v6560 = vsel %vm6549, nan, %v6559
      %v6561 = vand.u32 2147483647, %v759
      %vm6562 = vcmp.le.f32.partialorder %v6561, 0.7853982
      %vm6563 = vcmp.lt.s32.totalorder %v759, 0
      %v6564 = vand.u32 %v759, 2139095040
      %v6565 = vshrl.u32 %v6564, 23
      %v6566 = vsub.s32 %v6565, 127
      %v6567 = vand.u32 2147483647, %v759
      %v6568 = vand.u32 %v6567, 8388607
      %v6569 = vor.u32 %v6568, 8388608
      %v6570 = vsub.s32 0, %v6569
      %v6571 = vadd.s32 %v6566, 1
      %vm6572 = vcmp.gt.s32.totalorder %v6571, 0
      %v6573 = vsel %vm6572, %v6571, 0
      %v6574 = vshrl.u32 %v6573, 5
      %v6575 = vand.u32 %v6573, 31
      %v6576 = vsub.s32 32, %v6575
      %v6577 = vshrl.u32 683565275, %v6576
      %v6578 = vshll.u32 683565275, %v6575
      %v6579 = vshrl.u32 2475754826, %v6576
      %v6580 = vor.u32 %v6578, %v6579
      %v6581 = vshll.u32 2475754826, %v6575
      %v6582 = vshrl.u32 2131351028, %v6576
      %v6583 = vor.u32 %v6581, %v6582
      %v6584 = vshll.u32 2131351028, %v6575
      %v6585 = vshrl.u32 2102212464, %v6576
      %v6586 = vor.u32 %v6584, %v6585
      %v6587 = vshll.u32 2102212464, %v6575
      %v6588 = vshrl.u32 920167782, %v6576
      %v6589 = vor.u32 %v6587, %v6588
      %v6590 = vshll.u32 920167782, %v6575
      %v6591 = vshrl.u32 1326507024, %v6576
      %v6592 = vor.u32 %v6590, %v6591
      %vm6593 = vcmp.lt.s32.totalorder %v6574, 1
      %vm6594 = vcmp.lt.s32.totalorder %v6574, 2
      %vm6595 = vcmp.lt.s32.totalorder %v6574, 3
      %vm6596 = vcmp.lt.s32.totalorder %v6574, 4
      %v6597 = vsel %vm6593, %v6577, %v6580
      %v6598 = vsel %vm6596, %v6586, 2102212464
      %v6599 = vsel %vm6595, %v6583, %v6598
      %v6600 = vsel %vm6594, %v6597, %v6599
      %v6601 = vsel %vm6593, %v6580, %v6583
      %v6602 = vsel %vm6596, %v6589, 920167782
      %v6603 = vsel %vm6595, %v6586, %v6602
      %v6604 = vsel %vm6594, %v6601, %v6603
      %v6605 = vsel %vm6593, %v6583, %v6586
      %v6606 = vsel %vm6596, %v6592, 1326507024
      %v6607 = vsel %vm6595, %v6589, %v6606
      %v6608 = vsel %vm6594, %v6605, %v6607
      %v6609 = vshll.u32 %v6569, 8
      %v6610 = vmul.u32.u64.compose %v6609, %v6608
      %v6611 = vextract.low.u32 %v6610
      %v6612 = vextract.high.u32 %v6610
      %v6613 = vmul.u32.u64.compose %v6609, %v6604
      %v6614 = vextract.low.u32 %v6613
      %v6615 = vextract.high.u32 %v6613
      %v6616 = vmul.u32 %v6609, %v6600
      %v6617 = vadd.s32 %v6612, %v6614
      %vm6618 = vc.u32 %v6612, %v6614
      %v6619 = vadd.s32 %v6615, 1
      %v6620 = vsel %vm6618, %v6619, %v6615
      %v6621 = vadd.s32 %v6616, %v6620
      %v6622 = vadd.s32 %v6621, 536870912
      %v6623 = vshrl.u32 %v6622, 30
      %v6624 = vshll.u32 %v6623, 30
      %v6625 = vsub.s32 %v6621, %v6624
      %vm6626 = vcmp.lt.s32.totalorder %v6625, 0
      %v6627 = vsub.s32 0, %v6625
      %v6628 = vsel %vm6626, %v6627, %v6625
      %v6629 = vclz %v6628
      %v6630 = vsub.s32 %v6629, 2
      %vm6631 = vcmp.gt.s32.totalorder 0, %v6630
      %v6632 = vsel %vm6631, 0, %v6630
      %v6633 = vsub.s32 32, %v6632
      %v6634 = vshll.u32 %v6625, %v6632
      %v6635 = vshrl.u32 %v6617, %v6633
      %v6636 = vor.u32 %v6634, %v6635
      %v6637 = vsub.s32 4294967266, %v6632
      %v6638 = vadd.s32 %v6637, 127
      %v6639 = vshll.u32 %v6638, 23
      %v6640 = vor.u32 4788187, %v6639
      %v6641 = vand.u32 2147483647, %v6640
      %v6643 = vcvt.s32.f32 %v6636
      %v6644 = vmul.f32 %v6643, %v6641
      %v6645 = vxor.u32 %v6644, 2147483648
      %v6646 = vsel %vm6563, %v6645, %v6644
      %v6647 = vsub.s32 4, %v6623
      %v6648 = vsel %vm6563, %v6647, %v6623
      %v6649 = vsel %vm6562, %v759, %v6646
      %v6650 = vsel %vm6562, 0, %v6648
      %v6651 = vcosq.f32.pop %v6649
      %v6652 = vsinq.f32.pop %v6649
      %vm6653 = vweird.f32 %v759
      %v6654 = vadd.s32 %v6650, 3
      %v6655 = vand.u32 %v6654, 3
      %vm6656 = vcmp.lt.s32.totalorder %v6655, 2
      %vm6657 = vcmp.eq.s32.totalorder %v6655, 0
      %v6658 = vxor.u32 %v6652, 2147483648
      %v6659 = vsel %vm6657, %v6651, %v6658
      %vm6660 = vcmp.eq.s32.totalorder %v6655, 2
      %v6661 = vxor.u32 %v6651, 2147483648
      %v6662 = vsel %vm6660, %v6661, %v6652
      %v6663 = vsel %vm6656, %v6659, %v6662
      %v6664 = vsel %vm6653, nan, %v6663
      %v6665 = vand.u32 2147483647, %v760
      %vm6666 = vcmp.le.f32.partialorder %v6665, 0.7853982
      %vm6667 = vcmp.lt.s32.totalorder %v760, 0
      %v6668 = vand.u32 %v760, 2139095040
      %v6669 = vshrl.u32 %v6668, 23
      %v6670 = vsub.s32 %v6669, 127
      %v6671 = vand.u32 2147483647, %v760
      %v6672 = vand.u32 %v6671, 8388607
      %v6673 = vor.u32 %v6672, 8388608
      %v6674 = vsub.s32 0, %v6673
      %v6675 = vadd.s32 %v6670, 1
      %vm6676 = vcmp.gt.s32.totalorder %v6675, 0
      %v6677 = vsel %vm6676, %v6675, 0
      %v6678 = vshrl.u32 %v6677, 5
      %v6679 = vand.u32 %v6677, 31
      %v6680 = vsub.s32 32, %v6679
      %v6681 = vshrl.u32 683565275, %v6680
      %v6682 = vshll.u32 683565275, %v6679
      %v6683 = vshrl.u32 2475754826, %v6680
      %v6684 = vor.u32 %v6682, %v6683
      %v6685 = vshll.u32 2475754826, %v6679
      %v6686 = vshrl.u32 2131351028, %v6680
      %v6687 = vor.u32 %v6685, %v6686
      %v6688 = vshll.u32 2131351028, %v6679
      %v6689 = vshrl.u32 2102212464, %v6680
      %v6690 = vor.u32 %v6688, %v6689
      %v6691 = vshll.u32 2102212464, %v6679
      %v6692 = vshrl.u32 920167782, %v6680
      %v6693 = vor.u32 %v6691, %v6692
      %v6694 = vshll.u32 920167782, %v6679
      %v6695 = vshrl.u32 1326507024, %v6680
      %v6696 = vor.u32 %v6694, %v6695
      %vm6697 = vcmp.lt.s32.totalorder %v6678, 1
      %vm6698 = vcmp.lt.s32.totalorder %v6678, 2
      %vm6699 = vcmp.lt.s32.totalorder %v6678, 3
      %vm6700 = vcmp.lt.s32.totalorder %v6678, 4
      %v6701 = vsel %vm6697, %v6681, %v6684
      %v6702 = vsel %vm6700, %v6690, 2102212464
      %v6703 = vsel %vm6699, %v6687, %v6702
      %v6704 = vsel %vm6698, %v6701, %v6703
      %v6705 = vsel %vm6697, %v6684, %v6687
      %v6706 = vsel %vm6700, %v6693, 920167782
      %v6707 = vsel %vm6699, %v6690, %v6706
      %v6708 = vsel %vm6698, %v6705, %v6707
      %v6709 = vsel %vm6697, %v6687, %v6690
      %v6710 = vsel %vm6700, %v6696, 1326507024
      %v6711 = vsel %vm6699, %v6693, %v6710
      %v6712 = vsel %vm6698, %v6709, %v6711
      %v6713 = vshll.u32 %v6673, 8
      %v6714 = vmul.u32.u64.compose %v6713, %v6712
      %v6715 = vextract.low.u32 %v6714
      %v6716 = vextract.high.u32 %v6714
      %v6717 = vmul.u32.u64.compose %v6713, %v6708
      %v6718 = vextract.low.u32 %v6717
      %v6719 = vextract.high.u32 %v6717
      %v6720 = vmul.u32 %v6713, %v6704
      %v6721 = vadd.s32 %v6716, %v6718
      %vm6722 = vc.u32 %v6716, %v6718
      %v6723 = vadd.s32 %v6719, 1
      %v6724 = vsel %vm6722, %v6723, %v6719
      %v6725 = vadd.s32 %v6720, %v6724
      %v6726 = vadd.s32 %v6725, 536870912
      %v6727 = vshrl.u32 %v6726, 30
      %v6728 = vshll.u32 %v6727, 30
      %v6729 = vsub.s32 %v6725, %v6728
      %vm6730 = vcmp.lt.s32.totalorder %v6729, 0
      %v6731 = vsub.s32 0, %v6729
      %v6732 = vsel %vm6730, %v6731, %v6729
      %v6733 = vclz %v6732
      %v6734 = vsub.s32 %v6733, 2
      %vm6735 = vcmp.gt.s32.totalorder 0, %v6734
      %v6736 = vsel %vm6735, 0, %v6734
      %v6737 = vsub.s32 32, %v6736
      %v6738 = vshll.u32 %v6729, %v6736
      %v6739 = vshrl.u32 %v6721, %v6737
      %v6740 = vor.u32 %v6738, %v6739
      %v6741 = vsub.s32 4294967266, %v6736
      %v6742 = vadd.s32 %v6741, 127
      %v6743 = vshll.u32 %v6742, 23
      %v6744 = vor.u32 4788187, %v6743
      %v6745 = vand.u32 2147483647, %v6744
      %v6747 = vcvt.s32.f32 %v6740
      %v6748 = vmul.f32 %v6747, %v6745
      %v6749 = vxor.u32 %v6748, 2147483648
      %v6750 = vsel %vm6667, %v6749, %v6748
      %v6751 = vsub.s32 4, %v6727
      %v6752 = vsel %vm6667, %v6751, %v6727
      %v6753 = vsel %vm6666, %v760, %v6750
      %v6754 = vsel %vm6666, 0, %v6752
      %v6755 = vcosq.f32.pop %v6753
      %v6756 = vsinq.f32.pop %v6753
      %vm6757 = vweird.f32 %v760
      %v6758 = vadd.s32 %v6754, 3
      %v6759 = vand.u32 %v6758, 3
      %vm6760 = vcmp.lt.s32.totalorder %v6759, 2
      %vm6761 = vcmp.eq.s32.totalorder %v6759, 0
      %v6762 = vxor.u32 %v6756, 2147483648
      %v6763 = vsel %vm6761, %v6755, %v6762
      %vm6764 = vcmp.eq.s32.totalorder %v6759, 2
      %v6765 = vxor.u32 %v6755, 2147483648
      %v6766 = vsel %vm6764, %v6765, %v6756
      %v6767 = vsel %vm6760, %v6763, %v6766
      %v6768 = vsel %vm6757, nan, %v6767
      %v6769 = vand.u32 2147483647, %v761
      %vm6770 = vcmp.le.f32.partialorder %v6769, 0.7853982
      %vm6771 = vcmp.lt.s32.totalorder %v761, 0
      %v6772 = vand.u32 %v761, 2139095040
      %v6773 = vshrl.u32 %v6772, 23
      %v6774 = vsub.s32 %v6773, 127
      %v6775 = vand.u32 2147483647, %v761
      %v6776 = vand.u32 %v6775, 8388607
      %v6777 = vor.u32 %v6776, 8388608
      %v6778 = vsub.s32 0, %v6777
      %v6779 = vadd.s32 %v6774, 1
      %vm6780 = vcmp.gt.s32.totalorder %v6779, 0
      %v6781 = vsel %vm6780, %v6779, 0
      %v6782 = vshrl.u32 %v6781, 5
      %v6783 = vand.u32 %v6781, 31
      %v6784 = vsub.s32 32, %v6783
      %v6785 = vshrl.u32 683565275, %v6784
      %v6786 = vshll.u32 683565275, %v6783
      %v6787 = vshrl.u32 2475754826, %v6784
      %v6788 = vor.u32 %v6786, %v6787
      %v6789 = vshll.u32 2475754826, %v6783
      %v6790 = vshrl.u32 2131351028, %v6784
      %v6791 = vor.u32 %v6789, %v6790
      %v6792 = vshll.u32 2131351028, %v6783
      %v6793 = vshrl.u32 2102212464, %v6784
      %v6794 = vor.u32 %v6792, %v6793
      %v6795 = vshll.u32 2102212464, %v6783
      %v6796 = vshrl.u32 920167782, %v6784
      %v6797 = vor.u32 %v6795, %v6796
      %v6798 = vshll.u32 920167782, %v6783
      %v6799 = vshrl.u32 1326507024, %v6784
      %v6800 = vor.u32 %v6798, %v6799
      %vm6801 = vcmp.lt.s32.totalorder %v6782, 1
      %vm6802 = vcmp.lt.s32.totalorder %v6782, 2
      %vm6803 = vcmp.lt.s32.totalorder %v6782, 3
      %vm6804 = vcmp.lt.s32.totalorder %v6782, 4
      %v6805 = vsel %vm6801, %v6785, %v6788
      %v6806 = vsel %vm6804, %v6794, 2102212464
      %v6807 = vsel %vm6803, %v6791, %v6806
      %v6808 = vsel %vm6802, %v6805, %v6807
      %v6809 = vsel %vm6801, %v6788, %v6791
      %v6810 = vsel %vm6804, %v6797, 920167782
      %v6811 = vsel %vm6803, %v6794, %v6810
      %v6812 = vsel %vm6802, %v6809, %v6811
      %v6813 = vsel %vm6801, %v6791, %v6794
      %v6814 = vsel %vm6804, %v6800, 1326507024
      %v6815 = vsel %vm6803, %v6797, %v6814
      %v6816 = vsel %vm6802, %v6813, %v6815
      %v6817 = vshll.u32 %v6777, 8
      %v6818 = vmul.u32.u64.compose %v6817, %v6816
      %v6819 = vextract.low.u32 %v6818
      %v6820 = vextract.high.u32 %v6818
      %v6821 = vmul.u32.u64.compose %v6817, %v6812
      %v6822 = vextract.low.u32 %v6821
      %v6823 = vextract.high.u32 %v6821
      %v6824 = vmul.u32 %v6817, %v6808
      %v6825 = vadd.s32 %v6820, %v6822
      %vm6826 = vc.u32 %v6820, %v6822
      %v6827 = vadd.s32 %v6823, 1
      %v6828 = vsel %vm6826, %v6827, %v6823
      %v6829 = vadd.s32 %v6824, %v6828
      %v6830 = vadd.s32 %v6829, 536870912
      %v6831 = vshrl.u32 %v6830, 30
      %v6832 = vshll.u32 %v6831, 30
      %v6833 = vsub.s32 %v6829, %v6832
      %vm6834 = vcmp.lt.s32.totalorder %v6833, 0
      %v6835 = vsub.s32 0, %v6833
      %v6836 = vsel %vm6834, %v6835, %v6833
      %v6837 = vclz %v6836
      %v6838 = vsub.s32 %v6837, 2
      %vm6839 = vcmp.gt.s32.totalorder 0, %v6838
      %v6840 = vsel %vm6839, 0, %v6838
      %v6841 = vsub.s32 32, %v6840
      %v6842 = vshll.u32 %v6833, %v6840
      %v6843 = vshrl.u32 %v6825, %v6841
      %v6844 = vor.u32 %v6842, %v6843
      %v6845 = vsub.s32 4294967266, %v6840
      %v6846 = vadd.s32 %v6845, 127
      %v6847 = vshll.u32 %v6846, 23
      %v6848 = vor.u32 4788187, %v6847
      %v6849 = vand.u32 2147483647, %v6848
      %v6851 = vcvt.s32.f32 %v6844
      %v6852 = vmul.f32 %v6851, %v6849
      %v6853 = vxor.u32 %v6852, 2147483648
      %v6854 = vsel %vm6771, %v6853, %v6852
      %v6855 = vsub.s32 4, %v6831
      %v6856 = vsel %vm6771, %v6855, %v6831
      %v6857 = vsel %vm6770, %v761, %v6854
      %v6858 = vsel %vm6770, 0, %v6856
      %v6859 = vcosq.f32.pop %v6857
      %v6860 = vsinq.f32.pop %v6857
      %vm6861 = vweird.f32 %v761
      %v6862 = vadd.s32 %v6858, 3
      %v6863 = vand.u32 %v6862, 3
      %vm6864 = vcmp.lt.s32.totalorder %v6863, 2
      %vm6865 = vcmp.eq.s32.totalorder %v6863, 0
      %v6866 = vxor.u32 %v6860, 2147483648
      %v6867 = vsel %vm6865, %v6859, %v6866
      %vm6868 = vcmp.eq.s32.totalorder %v6863, 2
      %v6869 = vxor.u32 %v6859, 2147483648
      %v6870 = vsel %vm6868, %v6869, %v6860
      %v6871 = vsel %vm6864, %v6867, %v6870
      %v6872 = vsel %vm6861, nan, %v6871
      %v6873 = vand.u32 2147483647, %v762
      %vm6874 = vcmp.le.f32.partialorder %v6873, 0.7853982
      %vm6875 = vcmp.lt.s32.totalorder %v762, 0
      %v6876 = vand.u32 %v762, 2139095040
      %v6877 = vshrl.u32 %v6876, 23
      %v6878 = vsub.s32 %v6877, 127
      %v6879 = vand.u32 2147483647, %v762
      %v6880 = vand.u32 %v6879, 8388607
      %v6881 = vor.u32 %v6880, 8388608
      %v6882 = vsub.s32 0, %v6881
      %v6883 = vadd.s32 %v6878, 1
      %vm6884 = vcmp.gt.s32.totalorder %v6883, 0
      %v6885 = vsel %vm6884, %v6883, 0
      %v6886 = vshrl.u32 %v6885, 5
      %v6887 = vand.u32 %v6885, 31
      %v6888 = vsub.s32 32, %v6887
      %v6889 = vshrl.u32 683565275, %v6888
      %v6890 = vshll.u32 683565275, %v6887
      %v6891 = vshrl.u32 2475754826, %v6888
      %v6892 = vor.u32 %v6890, %v6891
      %v6893 = vshll.u32 2475754826, %v6887
      %v6894 = vshrl.u32 2131351028, %v6888
      %v6895 = vor.u32 %v6893, %v6894
      %v6896 = vshll.u32 2131351028, %v6887
      %v6897 = vshrl.u32 2102212464, %v6888
      %v6898 = vor.u32 %v6896, %v6897
      %v6899 = vshll.u32 2102212464, %v6887
      %v6900 = vshrl.u32 920167782, %v6888
      %v6901 = vor.u32 %v6899, %v6900
      %v6902 = vshll.u32 920167782, %v6887
      %v6903 = vshrl.u32 1326507024, %v6888
      %v6904 = vor.u32 %v6902, %v6903
      %vm6905 = vcmp.lt.s32.totalorder %v6886, 1
      %vm6906 = vcmp.lt.s32.totalorder %v6886, 2
      %vm6907 = vcmp.lt.s32.totalorder %v6886, 3
      %vm6908 = vcmp.lt.s32.totalorder %v6886, 4
      %v6909 = vsel %vm6905, %v6889, %v6892
      %v6910 = vsel %vm6908, %v6898, 2102212464
      %v6911 = vsel %vm6907, %v6895, %v6910
      %v6912 = vsel %vm6906, %v6909, %v6911
      %v6913 = vsel %vm6905, %v6892, %v6895
      %v6914 = vsel %vm6908, %v6901, 920167782
      %v6915 = vsel %vm6907, %v6898, %v6914
      %v6916 = vsel %vm6906, %v6913, %v6915
      %v6917 = vsel %vm6905, %v6895, %v6898
      %v6918 = vsel %vm6908, %v6904, 1326507024
      %v6919 = vsel %vm6907, %v6901, %v6918
      %v6920 = vsel %vm6906, %v6917, %v6919
      %v6921 = vshll.u32 %v6881, 8
      %v6922 = vmul.u32.u64.compose %v6921, %v6920
      %v6923 = vextract.low.u32 %v6922
      %v6924 = vextract.high.u32 %v6922
      %v6925 = vmul.u32.u64.compose %v6921, %v6916
      %v6926 = vextract.low.u32 %v6925
      %v6927 = vextract.high.u32 %v6925
      %v6928 = vmul.u32 %v6921, %v6912
      %v6929 = vadd.s32 %v6924, %v6926
      %vm6930 = vc.u32 %v6924, %v6926
      %v6931 = vadd.s32 %v6927, 1
      %v6932 = vsel %vm6930, %v6931, %v6927
      %v6933 = vadd.s32 %v6928, %v6932
      %v6934 = vadd.s32 %v6933, 536870912
      %v6935 = vshrl.u32 %v6934, 30
      %v6936 = vshll.u32 %v6935, 30
      %v6937 = vsub.s32 %v6933, %v6936
      %vm6938 = vcmp.lt.s32.totalorder %v6937, 0
      %v6939 = vsub.s32 0, %v6937
      %v6940 = vsel %vm6938, %v6939, %v6937
      %v6941 = vclz %v6940
      %v6942 = vsub.s32 %v6941, 2
      %vm6943 = vcmp.gt.s32.totalorder 0, %v6942
      %v6944 = vsel %vm6943, 0, %v6942
      %v6945 = vsub.s32 32, %v6944
      %v6946 = vshll.u32 %v6937, %v6944
      %v6947 = vshrl.u32 %v6929, %v6945
      %v6948 = vor.u32 %v6946, %v6947
      %v6949 = vsub.s32 4294967266, %v6944
      %v6950 = vadd.s32 %v6949, 127
      %v6951 = vshll.u32 %v6950, 23
      %v6952 = vor.u32 4788187, %v6951
      %v6953 = vand.u32 2147483647, %v6952
      %v6955 = vcvt.s32.f32 %v6948
      %v6956 = vmul.f32 %v6955, %v6953
      %v6957 = vxor.u32 %v6956, 2147483648
      %v6958 = vsel %vm6875, %v6957, %v6956
      %v6959 = vsub.s32 4, %v6935
      %v6960 = vsel %vm6875, %v6959, %v6935
      %v6961 = vsel %vm6874, %v762, %v6958
      %v6962 = vsel %vm6874, 0, %v6960
      %v6963 = vcosq.f32.pop %v6961
      %v6964 = vsinq.f32.pop %v6961
      %vm6965 = vweird.f32 %v762
      %v6966 = vadd.s32 %v6962, 3
      %v6967 = vand.u32 %v6966, 3
      %vm6968 = vcmp.lt.s32.totalorder %v6967, 2
      %vm6969 = vcmp.eq.s32.totalorder %v6967, 0
      %v6970 = vxor.u32 %v6964, 2147483648
      %v6971 = vsel %vm6969, %v6963, %v6970
      %vm6972 = vcmp.eq.s32.totalorder %v6967, 2
      %v6973 = vxor.u32 %v6963, 2147483648
      %v6974 = vsel %vm6972, %v6973, %v6964
      %v6975 = vsel %vm6968, %v6971, %v6974
      %v6976 = vsel %vm6965, nan, %v6975
      %v6977 = vand.u32 2147483647, %v763
      %vm6978 = vcmp.le.f32.partialorder %v6977, 0.7853982
      %vm6979 = vcmp.lt.s32.totalorder %v763, 0
      %v6980 = vand.u32 %v763, 2139095040
      %v6981 = vshrl.u32 %v6980, 23
      %v6982 = vsub.s32 %v6981, 127
      %v6983 = vand.u32 2147483647, %v763
      %v6984 = vand.u32 %v6983, 8388607
      %v6985 = vor.u32 %v6984, 8388608
      %v6986 = vsub.s32 0, %v6985
      %v6987 = vadd.s32 %v6982, 1
      %vm6988 = vcmp.gt.s32.totalorder %v6987, 0
      %v6989 = vsel %vm6988, %v6987, 0
      %v6990 = vshrl.u32 %v6989, 5
      %v6991 = vand.u32 %v6989, 31
      %v6992 = vsub.s32 32, %v6991
      %v6993 = vshrl.u32 683565275, %v6992
      %v6994 = vshll.u32 683565275, %v6991
      %v6995 = vshrl.u32 2475754826, %v6992
      %v6996 = vor.u32 %v6994, %v6995
      %v6997 = vshll.u32 2475754826, %v6991
      %v6998 = vshrl.u32 2131351028, %v6992
      %v6999 = vor.u32 %v6997, %v6998
      %v7000 = vshll.u32 2131351028, %v6991
      %v7001 = vshrl.u32 2102212464, %v6992
      %v7002 = vor.u32 %v7000, %v7001
      %v7003 = vshll.u32 2102212464, %v6991
      %v7004 = vshrl.u32 920167782, %v6992
      %v7005 = vor.u32 %v7003, %v7004
      %v7006 = vshll.u32 920167782, %v6991
      %v7007 = vshrl.u32 1326507024, %v6992
      %v7008 = vor.u32 %v7006, %v7007
      %vm7009 = vcmp.lt.s32.totalorder %v6990, 1
      %vm7010 = vcmp.lt.s32.totalorder %v6990, 2
      %vm7011 = vcmp.lt.s32.totalorder %v6990, 3
      %vm7012 = vcmp.lt.s32.totalorder %v6990, 4
      %v7013 = vsel %vm7009, %v6993, %v6996
      %v7014 = vsel %vm7012, %v7002, 2102212464
      %v7015 = vsel %vm7011, %v6999, %v7014
      %v7016 = vsel %vm7010, %v7013, %v7015
      %v7017 = vsel %vm7009, %v6996, %v6999
      %v7018 = vsel %vm7012, %v7005, 920167782
      %v7019 = vsel %vm7011, %v7002, %v7018
      %v7020 = vsel %vm7010, %v7017, %v7019
      %v7021 = vsel %vm7009, %v6999, %v7002
      %v7022 = vsel %vm7012, %v7008, 1326507024
      %v7023 = vsel %vm7011, %v7005, %v7022
      %v7024 = vsel %vm7010, %v7021, %v7023
      %v7025 = vshll.u32 %v6985, 8
      %v7026 = vmul.u32.u64.compose %v7025, %v7024
      %v7027 = vextract.low.u32 %v7026
      %v7028 = vextract.high.u32 %v7026
      %v7029 = vmul.u32.u64.compose %v7025, %v7020
      %v7030 = vextract.low.u32 %v7029
      %v7031 = vextract.high.u32 %v7029
      %v7032 = vmul.u32 %v7025, %v7016
      %v7033 = vadd.s32 %v7028, %v7030
      %vm7034 = vc.u32 %v7028, %v7030
      %v7035 = vadd.s32 %v7031, 1
      %v7036 = vsel %vm7034, %v7035, %v7031
      %v7037 = vadd.s32 %v7032, %v7036
      %v7038 = vadd.s32 %v7037, 536870912
      %v7039 = vshrl.u32 %v7038, 30
      %v7040 = vshll.u32 %v7039, 30
      %v7041 = vsub.s32 %v7037, %v7040
      %vm7042 = vcmp.lt.s32.totalorder %v7041, 0
      %v7043 = vsub.s32 0, %v7041
      %v7044 = vsel %vm7042, %v7043, %v7041
      %v7045 = vclz %v7044
      %v7046 = vsub.s32 %v7045, 2
      %vm7047 = vcmp.gt.s32.totalorder 0, %v7046
      %v7048 = vsel %vm7047, 0, %v7046
      %v7049 = vsub.s32 32, %v7048
      %v7050 = vshll.u32 %v7041, %v7048
      %v7051 = vshrl.u32 %v7033, %v7049
      %v7052 = vor.u32 %v7050, %v7051
      %v7053 = vsub.s32 4294967266, %v7048
      %v7054 = vadd.s32 %v7053, 127
      %v7055 = vshll.u32 %v7054, 23
      %v7056 = vor.u32 4788187, %v7055
      %v7057 = vand.u32 2147483647, %v7056
      %v7059 = vcvt.s32.f32 %v7052
      %v7060 = vmul.f32 %v7059, %v7057
      %v7061 = vxor.u32 %v7060, 2147483648
      %v7062 = vsel %vm6979, %v7061, %v7060
      %v7063 = vsub.s32 4, %v7039
      %v7064 = vsel %vm6979, %v7063, %v7039
      %v7065 = vsel %vm6978, %v763, %v7062
      %v7066 = vsel %vm6978, 0, %v7064
      %v7067 = vcosq.f32.pop %v7065
      %v7068 = vsinq.f32.pop %v7065
      %vm7069 = vweird.f32 %v763
      %v7070 = vadd.s32 %v7066, 3
      %v7071 = vand.u32 %v7070, 3
      %vm7072 = vcmp.lt.s32.totalorder %v7071, 2
      %vm7073 = vcmp.eq.s32.totalorder %v7071, 0
      %v7074 = vxor.u32 %v7068, 2147483648
      %v7075 = vsel %vm7073, %v7067, %v7074
      %vm7076 = vcmp.eq.s32.totalorder %v7071, 2
      %v7077 = vxor.u32 %v7067, 2147483648
      %v7078 = vsel %vm7076, %v7077, %v7068
      %v7079 = vsel %vm7072, %v7075, %v7078
      %v7080 = vsel %vm7069, nan, %v7079
      %v7081 = vand.u32 2147483647, %v764
      %vm7082 = vcmp.le.f32.partialorder %v7081, 0.7853982
      %vm7083 = vcmp.lt.s32.totalorder %v764, 0
      %v7084 = vand.u32 %v764, 2139095040
      %v7085 = vshrl.u32 %v7084, 23
      %v7086 = vsub.s32 %v7085, 127
      %v7087 = vand.u32 2147483647, %v764
      %v7088 = vand.u32 %v7087, 8388607
      %v7089 = vor.u32 %v7088, 8388608
      %v7090 = vsub.s32 0, %v7089
      %v7091 = vadd.s32 %v7086, 1
      %vm7092 = vcmp.gt.s32.totalorder %v7091, 0
      %v7093 = vsel %vm7092, %v7091, 0
      %v7094 = vshrl.u32 %v7093, 5
      %v7095 = vand.u32 %v7093, 31
      %v7096 = vsub.s32 32, %v7095
      %v7097 = vshrl.u32 683565275, %v7096
      %v7098 = vshll.u32 683565275, %v7095
      %v7099 = vshrl.u32 2475754826, %v7096
      %v7100 = vor.u32 %v7098, %v7099
      %v7101 = vshll.u32 2475754826, %v7095
      %v7102 = vshrl.u32 2131351028, %v7096
      %v7103 = vor.u32 %v7101, %v7102
      %v7104 = vshll.u32 2131351028, %v7095
      %v7105 = vshrl.u32 2102212464, %v7096
      %v7106 = vor.u32 %v7104, %v7105
      %v7107 = vshll.u32 2102212464, %v7095
      %v7108 = vshrl.u32 920167782, %v7096
      %v7109 = vor.u32 %v7107, %v7108
      %v7110 = vshll.u32 920167782, %v7095
      %v7111 = vshrl.u32 1326507024, %v7096
      %v7112 = vor.u32 %v7110, %v7111
      %vm7113 = vcmp.lt.s32.totalorder %v7094, 1
      %vm7114 = vcmp.lt.s32.totalorder %v7094, 2
      %vm7115 = vcmp.lt.s32.totalorder %v7094, 3
      %vm7116 = vcmp.lt.s32.totalorder %v7094, 4
      %v7117 = vsel %vm7113, %v7097, %v7100
      %v7118 = vsel %vm7116, %v7106, 2102212464
      %v7119 = vsel %vm7115, %v7103, %v7118
      %v7120 = vsel %vm7114, %v7117, %v7119
      %v7121 = vsel %vm7113, %v7100, %v7103
      %v7122 = vsel %vm7116, %v7109, 920167782
      %v7123 = vsel %vm7115, %v7106, %v7122
      %v7124 = vsel %vm7114, %v7121, %v7123
      %v7125 = vsel %vm7113, %v7103, %v7106
      %v7126 = vsel %vm7116, %v7112, 1326507024
      %v7127 = vsel %vm7115, %v7109, %v7126
      %v7128 = vsel %vm7114, %v7125, %v7127
      %v7129 = vshll.u32 %v7089, 8
      %v7130 = vmul.u32.u64.compose %v7129, %v7128
      %v7131 = vextract.low.u32 %v7130
      %v7132 = vextract.high.u32 %v7130
      %v7133 = vmul.u32.u64.compose %v7129, %v7124
      %v7134 = vextract.low.u32 %v7133
      %v7135 = vextract.high.u32 %v7133
      %v7136 = vmul.u32 %v7129, %v7120
      %v7137 = vadd.s32 %v7132, %v7134
      %vm7138 = vc.u32 %v7132, %v7134
      %v7139 = vadd.s32 %v7135, 1
      %v7140 = vsel %vm7138, %v7139, %v7135
      %v7141 = vadd.s32 %v7136, %v7140
      %v7142 = vadd.s32 %v7141, 536870912
      %v7143 = vshrl.u32 %v7142, 30
      %v7144 = vshll.u32 %v7143, 30
      %v7145 = vsub.s32 %v7141, %v7144
      %vm7146 = vcmp.lt.s32.totalorder %v7145, 0
      %v7147 = vsub.s32 0, %v7145
      %v7148 = vsel %vm7146, %v7147, %v7145
      %v7149 = vclz %v7148
      %v7150 = vsub.s32 %v7149, 2
      %vm7151 = vcmp.gt.s32.totalorder 0, %v7150
      %v7152 = vsel %vm7151, 0, %v7150
      %v7153 = vsub.s32 32, %v7152
      %v7154 = vshll.u32 %v7145, %v7152
      %v7155 = vshrl.u32 %v7137, %v7153
      %v7156 = vor.u32 %v7154, %v7155
      %v7157 = vsub.s32 4294967266, %v7152
      %v7158 = vadd.s32 %v7157, 127
      %v7159 = vshll.u32 %v7158, 23
      %v7160 = vor.u32 4788187, %v7159
      %v7161 = vand.u32 2147483647, %v7160
      %v7163 = vcvt.s32.f32 %v7156
      %v7164 = vmul.f32 %v7163, %v7161
      %v7165 = vxor.u32 %v7164, 2147483648
      %v7166 = vsel %vm7083, %v7165, %v7164
      %v7167 = vsub.s32 4, %v7143
      %v7168 = vsel %vm7083, %v7167, %v7143
      %v7169 = vsel %vm7082, %v764, %v7166
      %v7170 = vsel %vm7082, 0, %v7168
      %v7171 = vcosq.f32.pop %v7169
      %v7172 = vsinq.f32.pop %v7169
      %vm7173 = vweird.f32 %v764
      %v7174 = vadd.s32 %v7170, 3
      %v7175 = vand.u32 %v7174, 3
      %vm7176 = vcmp.lt.s32.totalorder %v7175, 2
      %vm7177 = vcmp.eq.s32.totalorder %v7175, 0
      %v7178 = vxor.u32 %v7172, 2147483648
      %v7179 = vsel %vm7177, %v7171, %v7178
      %vm7180 = vcmp.eq.s32.totalorder %v7175, 2
      %v7181 = vxor.u32 %v7171, 2147483648
      %v7182 = vsel %vm7180, %v7181, %v7172
      %v7183 = vsel %vm7176, %v7179, %v7182
      %v7184 = vsel %vm7173, nan, %v7183
      %v7185 = vand.u32 2147483647, %v765
      %vm7186 = vcmp.le.f32.partialorder %v7185, 0.7853982
      %vm7187 = vcmp.lt.s32.totalorder %v765, 0
      %v7188 = vand.u32 %v765, 2139095040
      %v7189 = vshrl.u32 %v7188, 23
      %v7190 = vsub.s32 %v7189, 127
      %v7191 = vand.u32 2147483647, %v765
      %v7192 = vand.u32 %v7191, 8388607
      %v7193 = vor.u32 %v7192, 8388608
      %v7194 = vsub.s32 0, %v7193
      %v7195 = vadd.s32 %v7190, 1
      %vm7196 = vcmp.gt.s32.totalorder %v7195, 0
      %v7197 = vsel %vm7196, %v7195, 0
      %v7198 = vshrl.u32 %v7197, 5
      %v7199 = vand.u32 %v7197, 31
      %v7200 = vsub.s32 32, %v7199
      %v7201 = vshrl.u32 683565275, %v7200
      %v7202 = vshll.u32 683565275, %v7199
      %v7203 = vshrl.u32 2475754826, %v7200
      %v7204 = vor.u32 %v7202, %v7203
      %v7205 = vshll.u32 2475754826, %v7199
      %v7206 = vshrl.u32 2131351028, %v7200
      %v7207 = vor.u32 %v7205, %v7206
      %v7208 = vshll.u32 2131351028, %v7199
      %v7209 = vshrl.u32 2102212464, %v7200
      %v7210 = vor.u32 %v7208, %v7209
      %v7211 = vshll.u32 2102212464, %v7199
      %v7212 = vshrl.u32 920167782, %v7200
      %v7213 = vor.u32 %v7211, %v7212
      %v7214 = vshll.u32 920167782, %v7199
      %v7215 = vshrl.u32 1326507024, %v7200
      %v7216 = vor.u32 %v7214, %v7215
      %vm7217 = vcmp.lt.s32.totalorder %v7198, 1
      %vm7218 = vcmp.lt.s32.totalorder %v7198, 2
      %vm7219 = vcmp.lt.s32.totalorder %v7198, 3
      %vm7220 = vcmp.lt.s32.totalorder %v7198, 4
      %v7221 = vsel %vm7217, %v7201, %v7204
      %v7222 = vsel %vm7220, %v7210, 2102212464
      %v7223 = vsel %vm7219, %v7207, %v7222
      %v7224 = vsel %vm7218, %v7221, %v7223
      %v7225 = vsel %vm7217, %v7204, %v7207
      %v7226 = vsel %vm7220, %v7213, 920167782
      %v7227 = vsel %vm7219, %v7210, %v7226
      %v7228 = vsel %vm7218, %v7225, %v7227
      %v7229 = vsel %vm7217, %v7207, %v7210
      %v7230 = vsel %vm7220, %v7216, 1326507024
      %v7231 = vsel %vm7219, %v7213, %v7230
      %v7232 = vsel %vm7218, %v7229, %v7231
      %v7233 = vshll.u32 %v7193, 8
      %v7234 = vmul.u32.u64.compose %v7233, %v7232
      %v7235 = vextract.low.u32 %v7234
      %v7236 = vextract.high.u32 %v7234
      %v7237 = vmul.u32.u64.compose %v7233, %v7228
      %v7238 = vextract.low.u32 %v7237
      %v7239 = vextract.high.u32 %v7237
      %v7240 = vmul.u32 %v7233, %v7224
      %v7241 = vadd.s32 %v7236, %v7238
      %vm7242 = vc.u32 %v7236, %v7238
      %v7243 = vadd.s32 %v7239, 1
      %v7244 = vsel %vm7242, %v7243, %v7239
      %v7245 = vadd.s32 %v7240, %v7244
      %v7246 = vadd.s32 %v7245, 536870912
      %v7247 = vshrl.u32 %v7246, 30
      %v7248 = vshll.u32 %v7247, 30
      %v7249 = vsub.s32 %v7245, %v7248
      %vm7250 = vcmp.lt.s32.totalorder %v7249, 0
      %v7251 = vsub.s32 0, %v7249
      %v7252 = vsel %vm7250, %v7251, %v7249
      %v7253 = vclz %v7252
      %v7254 = vsub.s32 %v7253, 2
      %vm7255 = vcmp.gt.s32.totalorder 0, %v7254
      %v7256 = vsel %vm7255, 0, %v7254
      %v7257 = vsub.s32 32, %v7256
      %v7258 = vshll.u32 %v7249, %v7256
      %v7259 = vshrl.u32 %v7241, %v7257
      %v7260 = vor.u32 %v7258, %v7259
      %v7261 = vsub.s32 4294967266, %v7256
      %v7262 = vadd.s32 %v7261, 127
      %v7263 = vshll.u32 %v7262, 23
      %v7264 = vor.u32 4788187, %v7263
      %v7265 = vand.u32 2147483647, %v7264
      %v7267 = vcvt.s32.f32 %v7260
      %v7268 = vmul.f32 %v7267, %v7265
      %v7269 = vxor.u32 %v7268, 2147483648
      %v7270 = vsel %vm7187, %v7269, %v7268
      %v7271 = vsub.s32 4, %v7247
      %v7272 = vsel %vm7187, %v7271, %v7247
      %v7273 = vsel %vm7186, %v765, %v7270
      %v7274 = vsel %vm7186, 0, %v7272
      %v7275 = vcosq.f32.pop %v7273
      %v7276 = vsinq.f32.pop %v7273
      %vm7277 = vweird.f32 %v765
      %v7278 = vadd.s32 %v7274, 3
      %v7279 = vand.u32 %v7278, 3
      %vm7280 = vcmp.lt.s32.totalorder %v7279, 2
      %vm7281 = vcmp.eq.s32.totalorder %v7279, 0
      %v7282 = vxor.u32 %v7276, 2147483648
      %v7283 = vsel %vm7281, %v7275, %v7282
      %vm7284 = vcmp.eq.s32.totalorder %v7279, 2
      %v7285 = vxor.u32 %v7275, 2147483648
      %v7286 = vsel %vm7284, %v7285, %v7276
      %v7287 = vsel %vm7280, %v7283, %v7286
      %v7288 = vsel %vm7277, nan, %v7287
      %v7289 = vand.u32 2147483647, %v766
      %vm7290 = vcmp.le.f32.partialorder %v7289, 0.7853982
      %vm7291 = vcmp.lt.s32.totalorder %v766, 0
      %v7292 = vand.u32 %v766, 2139095040
      %v7293 = vshrl.u32 %v7292, 23
      %v7294 = vsub.s32 %v7293, 127
      %v7295 = vand.u32 2147483647, %v766
      %v7296 = vand.u32 %v7295, 8388607
      %v7297 = vor.u32 %v7296, 8388608
      %v7298 = vsub.s32 0, %v7297
      %v7299 = vadd.s32 %v7294, 1
      %vm7300 = vcmp.gt.s32.totalorder %v7299, 0
      %v7301 = vsel %vm7300, %v7299, 0
      %v7302 = vshrl.u32 %v7301, 5
      %v7303 = vand.u32 %v7301, 31
      %v7304 = vsub.s32 32, %v7303
      %v7305 = vshrl.u32 683565275, %v7304
      %v7306 = vshll.u32 683565275, %v7303
      %v7307 = vshrl.u32 2475754826, %v7304
      %v7308 = vor.u32 %v7306, %v7307
      %v7309 = vshll.u32 2475754826, %v7303
      %v7310 = vshrl.u32 2131351028, %v7304
      %v7311 = vor.u32 %v7309, %v7310
      %v7312 = vshll.u32 2131351028, %v7303
      %v7313 = vshrl.u32 2102212464, %v7304
      %v7314 = vor.u32 %v7312, %v7313
      %v7315 = vshll.u32 2102212464, %v7303
      %v7316 = vshrl.u32 920167782, %v7304
      %v7317 = vor.u32 %v7315, %v7316
      %v7318 = vshll.u32 920167782, %v7303
      %v7319 = vshrl.u32 1326507024, %v7304
      %v7320 = vor.u32 %v7318, %v7319
      %vm7321 = vcmp.lt.s32.totalorder %v7302, 1
      %vm7322 = vcmp.lt.s32.totalorder %v7302, 2
      %vm7323 = vcmp.lt.s32.totalorder %v7302, 3
      %vm7324 = vcmp.lt.s32.totalorder %v7302, 4
      %v7325 = vsel %vm7321, %v7305, %v7308
      %v7326 = vsel %vm7324, %v7314, 2102212464
      %v7327 = vsel %vm7323, %v7311, %v7326
      %v7328 = vsel %vm7322, %v7325, %v7327
      %v7329 = vsel %vm7321, %v7308, %v7311
      %v7330 = vsel %vm7324, %v7317, 920167782
      %v7331 = vsel %vm7323, %v7314, %v7330
      %v7332 = vsel %vm7322, %v7329, %v7331
      %v7333 = vsel %vm7321, %v7311, %v7314
      %v7334 = vsel %vm7324, %v7320, 1326507024
      %v7335 = vsel %vm7323, %v7317, %v7334
      %v7336 = vsel %vm7322, %v7333, %v7335
      %v7337 = vshll.u32 %v7297, 8
      %v7338 = vmul.u32.u64.compose %v7337, %v7336
      %v7339 = vextract.low.u32 %v7338
      %v7340 = vextract.high.u32 %v7338
      %v7341 = vmul.u32.u64.compose %v7337, %v7332
      %v7342 = vextract.low.u32 %v7341
      %v7343 = vextract.high.u32 %v7341
      %v7344 = vmul.u32 %v7337, %v7328
      %v7345 = vadd.s32 %v7340, %v7342
      %vm7346 = vc.u32 %v7340, %v7342
      %v7347 = vadd.s32 %v7343, 1
      %v7348 = vsel %vm7346, %v7347, %v7343
      %v7349 = vadd.s32 %v7344, %v7348
      %v7350 = vadd.s32 %v7349, 536870912
      %v7351 = vshrl.u32 %v7350, 30
      %v7352 = vshll.u32 %v7351, 30
      %v7353 = vsub.s32 %v7349, %v7352
      %vm7354 = vcmp.lt.s32.totalorder %v7353, 0
      %v7355 = vsub.s32 0, %v7353
      %v7356 = vsel %vm7354, %v7355, %v7353
      %v7357 = vclz %v7356
      %v7358 = vsub.s32 %v7357, 2
      %vm7359 = vcmp.gt.s32.totalorder 0, %v7358
      %v7360 = vsel %vm7359, 0, %v7358
      %v7361 = vsub.s32 32, %v7360
      %v7362 = vshll.u32 %v7353, %v7360
      %v7363 = vshrl.u32 %v7345, %v7361
      %v7364 = vor.u32 %v7362, %v7363
      %v7365 = vsub.s32 4294967266, %v7360
      %v7366 = vadd.s32 %v7365, 127
      %v7367 = vshll.u32 %v7366, 23
      %v7368 = vor.u32 4788187, %v7367
      %v7369 = vand.u32 2147483647, %v7368
      %v7371 = vcvt.s32.f32 %v7364
      %v7372 = vmul.f32 %v7371, %v7369
      %v7373 = vxor.u32 %v7372, 2147483648
      %v7374 = vsel %vm7291, %v7373, %v7372
      %v7375 = vsub.s32 4, %v7351
      %v7376 = vsel %vm7291, %v7375, %v7351
      %v7377 = vsel %vm7290, %v766, %v7374
      %v7378 = vsel %vm7290, 0, %v7376
      %v7379 = vcosq.f32.pop %v7377
      %v7380 = vsinq.f32.pop %v7377
      %vm7381 = vweird.f32 %v766
      %v7382 = vadd.s32 %v7378, 3
      %v7383 = vand.u32 %v7382, 3
      %vm7384 = vcmp.lt.s32.totalorder %v7383, 2
      %vm7385 = vcmp.eq.s32.totalorder %v7383, 0
      %v7386 = vxor.u32 %v7380, 2147483648
      %v7387 = vsel %vm7385, %v7379, %v7386
      %vm7388 = vcmp.eq.s32.totalorder %v7383, 2
      %v7389 = vxor.u32 %v7379, 2147483648
      %v7390 = vsel %vm7388, %v7389, %v7380
      %v7391 = vsel %vm7384, %v7387, %v7390
      %v7392 = vsel %vm7381, nan, %v7391
      %v7393 = vand.u32 2147483647, %v767
      %vm7394 = vcmp.le.f32.partialorder %v7393, 0.7853982
      %vm7395 = vcmp.lt.s32.totalorder %v767, 0
      %v7396 = vand.u32 %v767, 2139095040
      %v7397 = vshrl.u32 %v7396, 23
      %v7398 = vsub.s32 %v7397, 127
      %v7399 = vand.u32 2147483647, %v767
      %v7400 = vand.u32 %v7399, 8388607
      %v7401 = vor.u32 %v7400, 8388608
      %v7402 = vsub.s32 0, %v7401
      %v7403 = vadd.s32 %v7398, 1
      %vm7404 = vcmp.gt.s32.totalorder %v7403, 0
      %v7405 = vsel %vm7404, %v7403, 0
      %v7406 = vshrl.u32 %v7405, 5
      %v7407 = vand.u32 %v7405, 31
      %v7408 = vsub.s32 32, %v7407
      %v7409 = vshrl.u32 683565275, %v7408
      %v7410 = vshll.u32 683565275, %v7407
      %v7411 = vshrl.u32 2475754826, %v7408
      %v7412 = vor.u32 %v7410, %v7411
      %v7413 = vshll.u32 2475754826, %v7407
      %v7414 = vshrl.u32 2131351028, %v7408
      %v7415 = vor.u32 %v7413, %v7414
      %v7416 = vshll.u32 2131351028, %v7407
      %v7417 = vshrl.u32 2102212464, %v7408
      %v7418 = vor.u32 %v7416, %v7417
      %v7419 = vshll.u32 2102212464, %v7407
      %v7420 = vshrl.u32 920167782, %v7408
      %v7421 = vor.u32 %v7419, %v7420
      %v7422 = vshll.u32 920167782, %v7407
      %v7423 = vshrl.u32 1326507024, %v7408
      %v7424 = vor.u32 %v7422, %v7423
      %vm7425 = vcmp.lt.s32.totalorder %v7406, 1
      %vm7426 = vcmp.lt.s32.totalorder %v7406, 2
      %vm7427 = vcmp.lt.s32.totalorder %v7406, 3
      %vm7428 = vcmp.lt.s32.totalorder %v7406, 4
      %v7429 = vsel %vm7425, %v7409, %v7412
      %v7430 = vsel %vm7428, %v7418, 2102212464
      %v7431 = vsel %vm7427, %v7415, %v7430
      %v7432 = vsel %vm7426, %v7429, %v7431
      %v7433 = vsel %vm7425, %v7412, %v7415
      %v7434 = vsel %vm7428, %v7421, 920167782
      %v7435 = vsel %vm7427, %v7418, %v7434
      %v7436 = vsel %vm7426, %v7433, %v7435
      %v7437 = vsel %vm7425, %v7415, %v7418
      %v7438 = vsel %vm7428, %v7424, 1326507024
      %v7439 = vsel %vm7427, %v7421, %v7438
      %v7440 = vsel %vm7426, %v7437, %v7439
      %v7441 = vshll.u32 %v7401, 8
      %v7442 = vmul.u32.u64.compose %v7441, %v7440
      %v7443 = vextract.low.u32 %v7442
      %v7444 = vextract.high.u32 %v7442
      %v7445 = vmul.u32.u64.compose %v7441, %v7436
      %v7446 = vextract.low.u32 %v7445
      %v7447 = vextract.high.u32 %v7445
      %v7448 = vmul.u32 %v7441, %v7432
      %v7449 = vadd.s32 %v7444, %v7446
      %vm7450 = vc.u32 %v7444, %v7446
      %v7451 = vadd.s32 %v7447, 1
      %v7452 = vsel %vm7450, %v7451, %v7447
      %v7453 = vadd.s32 %v7448, %v7452
      %v7454 = vadd.s32 %v7453, 536870912
      %v7455 = vshrl.u32 %v7454, 30
      %v7456 = vshll.u32 %v7455, 30
      %v7457 = vsub.s32 %v7453, %v7456
      %vm7458 = vcmp.lt.s32.totalorder %v7457, 0
      %v7459 = vsub.s32 0, %v7457
      %v7460 = vsel %vm7458, %v7459, %v7457
      %v7461 = vclz %v7460
      %v7462 = vsub.s32 %v7461, 2
      %vm7463 = vcmp.gt.s32.totalorder 0, %v7462
      %v7464 = vsel %vm7463, 0, %v7462
      %v7465 = vsub.s32 32, %v7464
      %v7466 = vshll.u32 %v7457, %v7464
      %v7467 = vshrl.u32 %v7449, %v7465
      %v7468 = vor.u32 %v7466, %v7467
      %v7469 = vsub.s32 4294967266, %v7464
      %v7470 = vadd.s32 %v7469, 127
      %v7471 = vshll.u32 %v7470, 23
      %v7472 = vor.u32 4788187, %v7471
      %v7473 = vand.u32 2147483647, %v7472
      %v7475 = vcvt.s32.f32 %v7468
      %v7476 = vmul.f32 %v7475, %v7473
      %v7477 = vxor.u32 %v7476, 2147483648
      %v7478 = vsel %vm7395, %v7477, %v7476
      %v7479 = vsub.s32 4, %v7455
      %v7480 = vsel %vm7395, %v7479, %v7455
      %v7481 = vsel %vm7394, %v767, %v7478
      %v7482 = vsel %vm7394, 0, %v7480
      %v7483 = vcosq.f32.pop %v7481
      %v7484 = vsinq.f32.pop %v7481
      %vm7485 = vweird.f32 %v767
      %v7486 = vadd.s32 %v7482, 3
      %v7487 = vand.u32 %v7486, 3
      %vm7488 = vcmp.lt.s32.totalorder %v7487, 2
      %vm7489 = vcmp.eq.s32.totalorder %v7487, 0
      %v7490 = vxor.u32 %v7484, 2147483648
      %v7491 = vsel %vm7489, %v7483, %v7490
      %vm7492 = vcmp.eq.s32.totalorder %v7487, 2
      %v7493 = vxor.u32 %v7483, 2147483648
      %v7494 = vsel %vm7492, %v7493, %v7484
      %v7495 = vsel %vm7488, %v7491, %v7494
      %v7496 = vsel %vm7485, nan, %v7495
      %v7497 = vand.u32 2147483647, %v768
      %vm7498 = vcmp.le.f32.partialorder %v7497, 0.7853982
      %vm7499 = vcmp.lt.s32.totalorder %v768, 0
      %v7500 = vand.u32 %v768, 2139095040
      %v7501 = vshrl.u32 %v7500, 23
      %v7502 = vsub.s32 %v7501, 127
      %v7503 = vand.u32 2147483647, %v768
      %v7504 = vand.u32 %v7503, 8388607
      %v7505 = vor.u32 %v7504, 8388608
      %v7506 = vsub.s32 0, %v7505
      %v7507 = vadd.s32 %v7502, 1
      %vm7508 = vcmp.gt.s32.totalorder %v7507, 0
      %v7509 = vsel %vm7508, %v7507, 0
      %v7510 = vshrl.u32 %v7509, 5
      %v7511 = vand.u32 %v7509, 31
      %v7512 = vsub.s32 32, %v7511
      %v7513 = vshrl.u32 683565275, %v7512
      %v7514 = vshll.u32 683565275, %v7511
      %v7515 = vshrl.u32 2475754826, %v7512
      %v7516 = vor.u32 %v7514, %v7515
      %v7517 = vshll.u32 2475754826, %v7511
      %v7518 = vshrl.u32 2131351028, %v7512
      %v7519 = vor.u32 %v7517, %v7518
      %v7520 = vshll.u32 2131351028, %v7511
      %v7521 = vshrl.u32 2102212464, %v7512
      %v7522 = vor.u32 %v7520, %v7521
      %v7523 = vshll.u32 2102212464, %v7511
      %v7524 = vshrl.u32 920167782, %v7512
      %v7525 = vor.u32 %v7523, %v7524
      %v7526 = vshll.u32 920167782, %v7511
      %v7527 = vshrl.u32 1326507024, %v7512
      %v7528 = vor.u32 %v7526, %v7527
      %vm7529 = vcmp.lt.s32.totalorder %v7510, 1
      %vm7530 = vcmp.lt.s32.totalorder %v7510, 2
      %vm7531 = vcmp.lt.s32.totalorder %v7510, 3
      %vm7532 = vcmp.lt.s32.totalorder %v7510, 4
      %v7533 = vsel %vm7529, %v7513, %v7516
      %v7534 = vsel %vm7532, %v7522, 2102212464
      %v7535 = vsel %vm7531, %v7519, %v7534
      %v7536 = vsel %vm7530, %v7533, %v7535
      %v7537 = vsel %vm7529, %v7516, %v7519
      %v7538 = vsel %vm7532, %v7525, 920167782
      %v7539 = vsel %vm7531, %v7522, %v7538
      %v7540 = vsel %vm7530, %v7537, %v7539
      %v7541 = vsel %vm7529, %v7519, %v7522
      %v7542 = vsel %vm7532, %v7528, 1326507024
      %v7543 = vsel %vm7531, %v7525, %v7542
      %v7544 = vsel %vm7530, %v7541, %v7543
      %v7545 = vshll.u32 %v7505, 8
      %v7546 = vmul.u32.u64.compose %v7545, %v7544
      %v7547 = vextract.low.u32 %v7546
      %v7548 = vextract.high.u32 %v7546
      %v7549 = vmul.u32.u64.compose %v7545, %v7540
      %v7550 = vextract.low.u32 %v7549
      %v7551 = vextract.high.u32 %v7549
      %v7552 = vmul.u32 %v7545, %v7536
      %v7553 = vadd.s32 %v7548, %v7550
      %vm7554 = vc.u32 %v7548, %v7550
      %v7555 = vadd.s32 %v7551, 1
      %v7556 = vsel %vm7554, %v7555, %v7551
      %v7557 = vadd.s32 %v7552, %v7556
      %v7558 = vadd.s32 %v7557, 536870912
      %v7559 = vshrl.u32 %v7558, 30
      %v7560 = vshll.u32 %v7559, 30
      %v7561 = vsub.s32 %v7557, %v7560
      %vm7562 = vcmp.lt.s32.totalorder %v7561, 0
      %v7563 = vsub.s32 0, %v7561
      %v7564 = vsel %vm7562, %v7563, %v7561
      %v7565 = vclz %v7564
      %v7566 = vsub.s32 %v7565, 2
      %vm7567 = vcmp.gt.s32.totalorder 0, %v7566
      %v7568 = vsel %vm7567, 0, %v7566
      %v7569 = vsub.s32 32, %v7568
      %v7570 = vshll.u32 %v7561, %v7568
      %v7571 = vshrl.u32 %v7553, %v7569
      %v7572 = vor.u32 %v7570, %v7571
      %v7573 = vsub.s32 4294967266, %v7568
      %v7574 = vadd.s32 %v7573, 127
      %v7575 = vshll.u32 %v7574, 23
      %v7576 = vor.u32 4788187, %v7575
      %v7577 = vand.u32 2147483647, %v7576
      %v7579 = vcvt.s32.f32 %v7572
      %v7580 = vmul.f32 %v7579, %v7577
      %v7581 = vxor.u32 %v7580, 2147483648
      %v7582 = vsel %vm7499, %v7581, %v7580
      %v7583 = vsub.s32 4, %v7559
      %v7584 = vsel %vm7499, %v7583, %v7559
      %v7585 = vsel %vm7498, %v768, %v7582
      %v7586 = vsel %vm7498, 0, %v7584
      %v7587 = vcosq.f32.pop %v7585
      %v7588 = vsinq.f32.pop %v7585
      %vm7589 = vweird.f32 %v768
      %v7590 = vadd.s32 %v7586, 3
      %v7591 = vand.u32 %v7590, 3
      %vm7592 = vcmp.lt.s32.totalorder %v7591, 2
      %vm7593 = vcmp.eq.s32.totalorder %v7591, 0
      %v7594 = vxor.u32 %v7588, 2147483648
      %v7595 = vsel %vm7593, %v7587, %v7594
      %vm7596 = vcmp.eq.s32.totalorder %v7591, 2
      %v7597 = vxor.u32 %v7587, 2147483648
      %v7598 = vsel %vm7596, %v7597, %v7588
      %v7599 = vsel %vm7592, %v7595, %v7598
      %v7600 = vsel %vm7589, nan, %v7599
      %7602 = vset.pattern.permute.xlu0 0
      %7603 = vperm.xlu0 %7602, %v929
      %v7604 = vpop.permute.xlu0 %7603
      %7607 = vset.pattern.permute.xlu0 0
      %7608 = vperm.xlu0 %7607, %v930
      %v7609 = vpop.permute.xlu0 %7608
      %7612 = vset.pattern.permute.xlu0 0
      %7613 = vperm.xlu0 %7612, %v931
      %v7614 = vpop.permute.xlu0 %7613
      %7617 = vset.pattern.permute.xlu0 0
      %7618 = vperm.xlu0 %7617, %v932
      %v7619 = vpop.permute.xlu0 %7618
      %7622 = vset.pattern.permute.xlu0 0
      %7623 = vperm.xlu0 %7622, %v933
      %v7624 = vpop.permute.xlu0 %7623
      %7627 = vset.pattern.permute.xlu0 0
      %7628 = vperm.xlu0 %7627, %v934
      %v7629 = vpop.permute.xlu0 %7628
      %7632 = vset.pattern.permute.xlu0 0
      %7633 = vperm.xlu0 %7632, %v935
      %v7634 = vpop.permute.xlu0 %7633
      %7637 = vset.pattern.permute.xlu0 0
      %7638 = vperm.xlu0 %7637, %v936
      %v7639 = vpop.permute.xlu0 %7638
      %7642 = vset.pattern.permute.xlu0 0
      %7643 = vperm.xlu0 %7642, %v937
      %v7644 = vpop.permute.xlu0 %7643
      %7647 = vset.pattern.permute.xlu0 0
      %7648 = vperm.xlu0 %7647, %v938
      %v7649 = vpop.permute.xlu0 %7648
      %7652 = vset.pattern.permute.xlu0 0
      %7653 = vperm.xlu0 %7652, %v939
      %v7654 = vpop.permute.xlu0 %7653
      %7657 = vset.pattern.permute.xlu0 0
      %7658 = vperm.xlu0 %7657, %v940
      %v7659 = vpop.permute.xlu0 %7658
      %7662 = vset.pattern.permute.xlu0 0
      %7663 = vperm.xlu0 %7662, %v941
      %v7664 = vpop.permute.xlu0 %7663
      %7667 = vset.pattern.permute.xlu0 0
      %7668 = vperm.xlu0 %7667, %v942
      %v7669 = vpop.permute.xlu0 %7668
      %7672 = vset.pattern.permute.xlu0 0
      %7673 = vperm.xlu0 %7672, %v943
      %v7674 = vpop.permute.xlu0 %7673
      %7677 = vset.pattern.permute.xlu0 0
      %7678 = vperm.xlu0 %7677, %v944
      %v7679 = vpop.permute.xlu0 %7678
      %v7681 = vmul.f32 %v7604, %v1048
      %v7682 = vmul.f32 %v7604, %v1152
      %v7683 = vmul.f32 %v7604, %v1256
      %v7684 = vmul.f32 %v7604, %v1360
      %v7685 = vmul.f32 %v7609, %v1464
      %v7686 = vmul.f32 %v7609, %v1568
      %v7687 = vmul.f32 %v7609, %v1672
      %v7688 = vmul.f32 %v7609, %v1776
      %v7689 = vmul.f32 %v7614, %v1880
      %v7690 = vmul.f32 %v7614, %v1984
      %v7691 = vmul.f32 %v7614, %v2088
      %v7692 = vmul.f32 %v7614, %v2192
      %v7693 = vmul.f32 %v7619, %v2296
      %v7694 = vmul.f32 %v7619, %v2400
      %v7695 = vmul.f32 %v7619, %v2504
      %v7696 = vmul.f32 %v7619, %v2608
      %v7697 = vmul.f32 %v7624, %v2712
      %v7698 = vmul.f32 %v7624, %v2816
      %v7699 = vmul.f32 %v7624, %v2920
      %v7700 = vmul.f32 %v7624, %v3024
      %v7701 = vmul.f32 %v7629, %v3128
      %v7702 = vmul.f32 %v7629, %v3232
      %v7703 = vmul.f32 %v7629, %v3336
      %v7704 = vmul.f32 %v7629, %v3440
      %v7705 = vmul.f32 %v7634, %v3544
      %v7706 = vmul.f32 %v7634, %v3648
      %v7707 = vmul.f32 %v7634, %v3752
      %v7708 = vmul.f32 %v7634, %v3856
      %v7709 = vmul.f32 %v7639, %v3960
      %v7710 = vmul.f32 %v7639, %v4064
      %v7711 = vmul.f32 %v7639, %v4168
      %v7712 = vmul.f32 %v7639, %v4272
      %v7713 = vmul.f32 %v7644, %v4376
      %v7714 = vmul.f32 %v7644, %v4480
      %v7715 = vmul.f32 %v7644, %v4584
      %v7716 = vmul.f32 %v7644, %v4688
      %v7717 = vmul.f32 %v7649, %v4792
      %v7718 = vmul.f32 %v7649, %v4896
      %v7719 = vmul.f32 %v7649, %v5000
      %v7720 = vmul.f32 %v7649, %v5104
      %v7721 = vmul.f32 %v7654, %v5208
      %v7722 = vmul.f32 %v7654, %v5312
      %v7723 = vmul.f32 %v7654, %v5416
      %v7724 = vmul.f32 %v7654, %v5520
      %v7725 = vmul.f32 %v7659, %v5624
      %v7726 = vmul.f32 %v7659, %v5728
      %v7727 = vmul.f32 %v7659, %v5832
      %v7728 = vmul.f32 %v7659, %v5936
      %v7729 = vmul.f32 %v7664, %v6040
      %v7730 = vmul.f32 %v7664, %v6144
      %v7731 = vmul.f32 %v7664, %v6248
      %v7732 = vmul.f32 %v7664, %v6352
      %v7733 = vmul.f32 %v7669, %v6456
      %v7734 = vmul.f32 %v7669, %v6560
      %v7735 = vmul.f32 %v7669, %v6664
      %v7736 = vmul.f32 %v7669, %v6768
      %v7737 = vmul.f32 %v7674, %v6872
      %v7738 = vmul.f32 %v7674, %v6976
      %v7739 = vmul.f32 %v7674, %v7080
      %v7740 = vmul.f32 %v7674, %v7184
      %v7741 = vmul.f32 %v7679, %v7288
      %v7742 = vmul.f32 %v7679, %v7392
      %v7743 = vmul.f32 %v7679, %v7496
      %v7744 = vmul.f32 %v7679, %v7600
      %v7745 = vadd.f32 %v865, %v7681
      %v7746 = vadd.f32 %v866, %v7682
      %v7747 = vadd.f32 %v867, %v7683
      %v7748 = vadd.f32 %v868, %v7684
      %v7749 = vadd.f32 %v869, %v7685
      %v7750 = vadd.f32 %v870, %v7686
      %v7751 = vadd.f32 %v871, %v7687
      %v7752 = vadd.f32 %v872, %v7688
      %v7753 = vadd.f32 %v873, %v7689
      %v7754 = vadd.f32 %v874, %v7690
      %v7755 = vadd.f32 %v875, %v7691
      %v7756 = vadd.f32 %v876, %v7692
      %v7757 = vadd.f32 %v877, %v7693
      %v7758 = vadd.f32 %v878, %v7694
      %v7759 = vadd.f32 %v879, %v7695
      %v7760 = vadd.f32 %v880, %v7696
      %v7761 = vadd.f32 %v881, %v7697
      %v7762 = vadd.f32 %v882, %v7698
      %v7763 = vadd.f32 %v883, %v7699
      %v7764 = vadd.f32 %v884, %v7700
      %v7765 = vadd.f32 %v885, %v7701
      %v7766 = vadd.f32 %v886, %v7702
      %v7767 = vadd.f32 %v887, %v7703
      %v7768 = vadd.f32 %v888, %v7704
      %v7769 = vadd.f32 %v889, %v7705
      %v7770 = vadd.f32 %v890, %v7706
      %v7771 = vadd.f32 %v891, %v7707
      %v7772 = vadd.f32 %v892, %v7708
      %v7773 = vadd.f32 %v893, %v7709
      %v7774 = vadd.f32 %v894, %v7710
      %v7775 = vadd.f32 %v895, %v7711
      %v7776 = vadd.f32 %v896, %v7712
      %v7777 = vadd.f32 %v897, %v7713
      %v7778 = vadd.f32 %v898, %v7714
      %v7779 = vadd.f32 %v899, %v7715
      %v7780 = vadd.f32 %v900, %v7716
      %v7781 = vadd.f32 %v901, %v7717
      %v7782 = vadd.f32 %v902, %v7718
      %v7783 = vadd.f32 %v903, %v7719
      %v7784 = vadd.f32 %v904, %v7720
      %v7785 = vadd.f32 %v905, %v7721
      %v7786 = vadd.f32 %v906, %v7722
      %v7787 = vadd.f32 %v907, %v7723
      %v7788 = vadd.f32 %v908, %v7724
      %v7789 = vadd.f32 %v909, %v7725
      %v7790 = vadd.f32 %v910, %v7726
      %v7791 = vadd.f32 %v911, %v7727
      %v7792 = vadd.f32 %v912, %v7728
      %v7793 = vadd.f32 %v913, %v7729
      %v7794 = vadd.f32 %v914, %v7730
      %v7795 = vadd.f32 %v915, %v7731
      %v7796 = vadd.f32 %v916, %v7732
      %v7797 = vadd.f32 %v917, %v7733
      %v7798 = vadd.f32 %v918, %v7734
      %v7799 = vadd.f32 %v919, %v7735
      %v7800 = vadd.f32 %v920, %v7736
      %v7801 = vadd.f32 %v921, %v7737
      %v7802 = vadd.f32 %v922, %v7738
      %v7803 = vadd.f32 %v923, %v7739
      %v7804 = vadd.f32 %v924, %v7740
      %v7805 = vadd.f32 %v925, %v7741
      %v7806 = vadd.f32 %v926, %v7742
      %v7807 = vadd.f32 %v927, %v7743
      %v7808 = vadd.f32 %v928, %v7744
      %v7809 = vpack.c.bf16 %v7749, %v7745
      %v7810 = vpack.c.bf16 %v7750, %v7746
      %v7811 = vpack.c.bf16 %v7751, %v7747
      %v7812 = vpack.c.bf16 %v7752, %v7748
      %v7813 = vpack.c.bf16 %v7757, %v7753
      %v7814 = vpack.c.bf16 %v7758, %v7754
      %v7815 = vpack.c.bf16 %v7759, %v7755
      %v7816 = vpack.c.bf16 %v7760, %v7756
      %v7817 = vpack.c.bf16 %v7765, %v7761
      %v7818 = vpack.c.bf16 %v7766, %v7762
      %v7819 = vpack.c.bf16 %v7767, %v7763
      %v7820 = vpack.c.bf16 %v7768, %v7764
      %v7821 = vpack.c.bf16 %v7773, %v7769
      %v7822 = vpack.c.bf16 %v7774, %v7770
      %v7823 = vpack.c.bf16 %v7775, %v7771
      %v7824 = vpack.c.bf16 %v7776, %v7772
      %v7825 = vpack.c.bf16 %v7781, %v7777
      %v7826 = vpack.c.bf16 %v7782, %v7778
      %v7827 = vpack.c.bf16 %v7783, %v7779
      %v7828 = vpack.c.bf16 %v7784, %v7780
      %v7829 = vpack.c.bf16 %v7789, %v7785
      %v7830 = vpack.c.bf16 %v7790, %v7786
      %v7831 = vpack.c.bf16 %v7791, %v7787
      %v7832 = vpack.c.bf16 %v7792, %v7788
      %v7833 = vpack.c.bf16 %v7797, %v7793
      %v7834 = vpack.c.bf16 %v7798, %v7794
      %v7835 = vpack.c.bf16 %v7799, %v7795
      %v7836 = vpack.c.bf16 %v7800, %v7796
      %v7837 = vpack.c.bf16 %v7805, %v7801
      %v7838 = vpack.c.bf16 %v7806, %v7802
      %v7839 = vpack.c.bf16 %v7807, %v7803
      %v7840 = vpack.c.bf16 %v7808, %v7804
      %v7841 = vld [vmem:[%s5] sm:$0xf]
      %v7842 = vld [vmem:[%s5 + $0x4] sm:$0xf]
      %v7843 = vld [vmem:[%s5 + $0x8] sm:$0xf]
      %v7844 = vld [vmem:[%s5 + $0xc] sm:$0xf]
      %v7845 = vld [vmem:[%s5 + $0x10] sm:$0xf]
      %v7846 = vld [vmem:[%s5 + $0x14] sm:$0xf]
      %v7847 = vld [vmem:[%s5 + $0x18] sm:$0xf]
      %v7848 = vld [vmem:[%s5 + $0x1c] sm:$0xf]
      %v7849 = vld [vmem:[%s5 + $0x20] sm:$0xf]
      %v7850 = vld [vmem:[%s5 + $0x24] sm:$0xf]
      %v7851 = vld [vmem:[%s5 + $0x28] sm:$0xf]
      %v7852 = vld [vmem:[%s5 + $0x2c] sm:$0xf]
      %v7853 = vld [vmem:[%s5 + $0x30] sm:$0xf]
      %v7854 = vld [vmem:[%s5 + $0x34] sm:$0xf]
      %v7855 = vld [vmem:[%s5 + $0x38] sm:$0xf]
      %v7856 = vld [vmem:[%s5 + $0x3c] sm:$0xf]
      %v7857 = vld [vmem:[%s6] sm:$0xff]
      %v7858 = vld [vmem:[%s6 + $0x8] sm:$0xff]
      %v7859 = vld [vmem:[%s6 + $0x10] sm:$0xff]
      %v7860 = vld [vmem:[%s6 + $0x18] sm:$0xff]
      %v7861 = vld [vmem:[%s6 + $0x20] sm:$0xff]
      %v7862 = vld [vmem:[%s6 + $0x28] sm:$0xff]
      %v7863 = vld [vmem:[%s6 + $0x30] sm:$0xff]
      %v7864 = vld [vmem:[%s6 + $0x38] sm:$0xff]
      %v7865 = vld [vmem:[%s6 + $0x40] sm:$0xff]
      %v7866 = vld [vmem:[%s6 + $0x48] sm:$0xff]
      %v7867 = vld [vmem:[%s6 + $0x50] sm:$0xff]
      %v7868 = vld [vmem:[%s6 + $0x58] sm:$0xff]
      %v7869 = vld [vmem:[%s6 + $0x60] sm:$0xff]
      %v7870 = vld [vmem:[%s6 + $0x68] sm:$0xff]
      %v7871 = vld [vmem:[%s6 + $0x70] sm:$0xff]
      %v7872 = vld [vmem:[%s6 + $0x78] sm:$0xff]
      %7874 = vset.pattern.permute.xlu0 0
      %7875 = vperm.xlu0 %7874, %v7857
      %v7876 = vpop.permute.xlu0 %7875
      %7879 = vset.pattern.permute.xlu0 0
      %7880 = vperm.xlu0 %7879, %v7858
      %v7881 = vpop.permute.xlu0 %7880
      %7884 = vset.pattern.permute.xlu0 0
      %7885 = vperm.xlu0 %7884, %v7859
      %v7886 = vpop.permute.xlu0 %7885
      %7889 = vset.pattern.permute.xlu0 0
      %7890 = vperm.xlu0 %7889, %v7860
      %v7891 = vpop.permute.xlu0 %7890
      %7894 = vset.pattern.permute.xlu0 0
      %7895 = vperm.xlu0 %7894, %v7861
      %v7896 = vpop.permute.xlu0 %7895
      %7899 = vset.pattern.permute.xlu0 0
      %7900 = vperm.xlu0 %7899, %v7862
      %v7901 = vpop.permute.xlu0 %7900
      %7904 = vset.pattern.permute.xlu0 0
      %7905 = vperm.xlu0 %7904, %v7863
      %v7906 = vpop.permute.xlu0 %7905
      %7909 = vset.pattern.permute.xlu0 0
      %7910 = vperm.xlu0 %7909, %v7864
      %v7911 = vpop.permute.xlu0 %7910
      %7914 = vset.pattern.permute.xlu0 0
      %7915 = vperm.xlu0 %7914, %v7865
      %v7916 = vpop.permute.xlu0 %7915
      %7919 = vset.pattern.permute.xlu0 0
      %7920 = vperm.xlu0 %7919, %v7866
      %v7921 = vpop.permute.xlu0 %7920
      %7924 = vset.pattern.permute.xlu0 0
      %7925 = vperm.xlu0 %7924, %v7867
      %v7926 = vpop.permute.xlu0 %7925
      %7929 = vset.pattern.permute.xlu0 0
      %7930 = vperm.xlu0 %7929, %v7868
      %v7931 = vpop.permute.xlu0 %7930
      %7934 = vset.pattern.permute.xlu0 0
      %7935 = vperm.xlu0 %7934, %v7869
      %v7936 = vpop.permute.xlu0 %7935
      %7939 = vset.pattern.permute.xlu0 0
      %7940 = vperm.xlu0 %7939, %v7870
      %v7941 = vpop.permute.xlu0 %7940
      %7944 = vset.pattern.permute.xlu0 0
      %7945 = vperm.xlu0 %7944, %v7871
      %v7946 = vpop.permute.xlu0 %7945
      %7949 = vset.pattern.permute.xlu0 0
      %7950 = vperm.xlu0 %7949, %v7872
      %v7951 = vpop.permute.xlu0 %7950
      %v7969 = vunpack.c.l.b16 %v7841
      %v7970 = vunpack.c.l.b16 %v7842
      %v7971 = vunpack.c.l.b16 %v7843
      %v7972 = vunpack.c.l.b16 %v7844
      %v7973 = vunpack.c.l.b16 %v7845
      %v7974 = vunpack.c.l.b16 %v7846
      %v7975 = vunpack.c.l.b16 %v7847
      %v7976 = vunpack.c.l.b16 %v7848
      %v7977 = vunpack.c.l.b16 %v7849
      %v7978 = vunpack.c.l.b16 %v7850
      %v7979 = vunpack.c.l.b16 %v7851
      %v7980 = vunpack.c.l.b16 %v7852
      %v7981 = vunpack.c.l.b16 %v7853
      %v7982 = vunpack.c.l.b16 %v7854
      %v7983 = vunpack.c.l.b16 %v7855
      %v7984 = vunpack.c.l.b16 %v7856
      %v7985 = vpack.c.b16 %v7970, %v7969
      %v7986 = vpack.c.b16 %v7972, %v7971
      %v7987 = vpack.c.b16 %v7974, %v7973
      %v7988 = vpack.c.b16 %v7976, %v7975
      %v7989 = vpack.c.b16 %v7978, %v7977
      %v7990 = vpack.c.b16 %v7980, %v7979
      %v7991 = vpack.c.b16 %v7982, %v7981
      %v7992 = vpack.c.b16 %v7984, %v7983
      %8001 = vmatprep.subr.bf16.mxu0 %v7810
      %8002 = vmatpush1.bf16.msra.mxu0 %v7809
      %8003 = vmatprep.subr.bf16.mxu0 %v7814
      %8004 = vmatpush1.bf16.msra.mxu0 %v7813
      %8005 = vmatprep.subr.bf16.mxu0 %v7818
      %8006 = vmatpush1.bf16.msra.mxu0 %v7817
      %8007 = vmatprep.subr.bf16.mxu0 %v7822
      %8008 = vmatpush1.bf16.msra.mxu0 %v7821
      %8009 = vmatprep.subr.bf16.mxu0 %v7826
      %8010 = vmatpush1.bf16.msra.mxu0 %v7825
      %8011 = vmatprep.subr.bf16.mxu0 %v7830
      %8012 = vmatpush1.bf16.msra.mxu0 %v7829
      %8013 = vmatprep.subr.bf16.mxu0 %v7834
      %8014 = vmatpush1.bf16.msra.mxu0 %v7833
      %8015 = vmatprep.subr.bf16.mxu0 %v7838
      %8016 = vmatpush1.bf16.msra.mxu0 %v7837
      %8017 = vmatprep.subr.bf16.mxu0 0
      %8018 = vmatpush1.bf16.msra.mxu0 0
      %8019 = vmatprep.subr.bf16.mxu0 0
      %8020 = vmatpush1.bf16.msra.mxu0 0
      %8021 = vmatprep.subr.bf16.mxu0 0
      %8022 = vmatpush1.bf16.msra.mxu0 0
      %8023 = vmatprep.subr.bf16.mxu0 0
      %8024 = vmatpush1.bf16.msra.mxu0 0
      %8025 = vmatprep.subr.bf16.mxu0 0
      %8026 = vmatpush1.bf16.msra.mxu0 0
      %8027 = vmatprep.subr.bf16.mxu0 0
      %8028 = vmatpush1.bf16.msra.mxu0 0
      %8029 = vmatprep.subr.bf16.mxu0 0
      %8030 = vmatpush1.bf16.msra.mxu0 0
      %8031 = vmatprep.subr.bf16.mxu0 0
      %8032 = vmatpush1.bf16.msra.mxu0 0
      %8033 = vmatprep.mubr.bf16.mxu0 0
      %8034 = vmatmul.mubr.bf16.gmra.mrb[0].mxu0 %v7985
      %v8035 = vpop.f32.mrb[0].mxu0
      %v8036 = vadd.f32 %v7876, %v8035
      %v8037 = vpop.f32.mrb[0].mxu0
      %v8038 = vadd.f32 %v7876, %v8037
      %v8039 = vpop.f32.mrb[0].mxu0
      %v8040 = vadd.f32 %v7881, %v8039
      %v8041 = vpop.f32.mrb[0].mxu0
      %v8042 = vadd.f32 %v7881, %v8041
      %8043 = vmatprep.mubr.bf16.mxu0 0
      %8044 = vmatmul.mubr.bf16.gmra.mrb[0].mxu0 %v7986
      %v8045 = vpop.f32.mrb[0].mxu0
      %v8046 = vadd.f32 %v7886, %v8045
      %v8047 = vpop.f32.mrb[0].mxu0
      %v8048 = vadd.f32 %v7886, %v8047
      %v8049 = vpop.f32.mrb[0].mxu0
      %v8050 = vadd.f32 %v7891, %v8049
      %v8051 = vpop.f32.mrb[0].mxu0
      %v8052 = vadd.f32 %v7891, %v8051
      %8053 = vmatprep.mubr.bf16.mxu0 0
      %8054 = vmatmul.mubr.bf16.gmra.mrb[0].mxu0 %v7987
      %v8055 = vpop.f32.mrb[0].mxu0
      %v8056 = vadd.f32 %v7896, %v8055
      %v8057 = vpop.f32.mrb[0].mxu0
      %v8058 = vadd.f32 %v7896, %v8057
      %v8059 = vpop.f32.mrb[0].mxu0
      %v8060 = vadd.f32 %v7901, %v8059
      %v8061 = vpop.f32.mrb[0].mxu0
      %v8062 = vadd.f32 %v7901, %v8061
      %8063 = vmatprep.mubr.bf16.mxu0 0
      %8064 = vmatmul.mubr.bf16.gmra.mrb[0].mxu0 %v7988
      %v8065 = vpop.f32.mrb[0].mxu0
      %v8066 = vadd.f32 %v7906, %v8065
      %v8067 = vpop.f32.mrb[0].mxu0
      %v8068 = vadd.f32 %v7906, %v8067
      %v8069 = vpop.f32.mrb[0].mxu0
      %v8070 = vadd.f32 %v7911, %v8069
      %v8071 = vpop.f32.mrb[0].mxu0
      %v8072 = vadd.f32 %v7911, %v8071
      %8073 = vmatprep.mubr.bf16.mxu0 0
      %8074 = vmatmul.mubr.bf16.gmra.mrb[0].mxu0 %v7989
      %v8075 = vpop.f32.mrb[0].mxu0
      %v8076 = vadd.f32 %v7916, %v8075
      %v8077 = vpop.f32.mrb[0].mxu0
      %v8078 = vadd.f32 %v7916, %v8077
      %v8079 = vpop.f32.mrb[0].mxu0
      %v8080 = vadd.f32 %v7921, %v8079
      %v8081 = vpop.f32.mrb[0].mxu0
      %v8082 = vadd.f32 %v7921, %v8081
      %8083 = vmatprep.mubr.bf16.mxu0 0
      %8084 = vmatmul.mubr.bf16.gmra.mrb[0].mxu0 %v7990
      %v8085 = vpop.f32.mrb[0].mxu0
      %v8086 = vadd.f32 %v7926, %v8085
      %v8087 = vpop.f32.mrb[0].mxu0
      %v8088 = vadd.f32 %v7926, %v8087
      %v8089 = vpop.f32.mrb[0].mxu0
      %v8090 = vadd.f32 %v7931, %v8089
      %v8091 = vpop.f32.mrb[0].mxu0
      %v8092 = vadd.f32 %v7931, %v8091
      %8093 = vmatprep.mubr.bf16.mxu0 0
      %8094 = vmatmul.mubr.bf16.gmra.mrb[0].mxu0 %v7991
      %v8095 = vpop.f32.mrb[0].mxu0
      %v8096 = vadd.f32 %v7936, %v8095
      %v8097 = vpop.f32.mrb[0].mxu0
      %v8098 = vadd.f32 %v7936, %v8097
      %v8099 = vpop.f32.mrb[0].mxu0
      %v8100 = vadd.f32 %v7941, %v8099
      %v8101 = vpop.f32.mrb[0].mxu0
      %v8102 = vadd.f32 %v7941, %v8101
      %8103 = vmatprep.mubr.bf16.mxu0 0
      %8104 = vmatmul.mubr.bf16.gmra.mrb[0].mxu0 %v7992
      %v8105 = vpop.f32.mrb[0].mxu0
      %v8106 = vadd.f32 %v7946, %v8105
      %v8107 = vpop.f32.mrb[0].mxu0
      %v8108 = vadd.f32 %v7946, %v8107
      %v8109 = vpop.f32.mrb[0].mxu0
      %v8110 = vadd.f32 %v7951, %v8109
      %v8111 = vpop.f32.mrb[0].mxu0
      %v8112 = vadd.f32 %v7951, %v8111
      %8113 = vdwg.mxu0
      %8114 = vmatprep.subr.bf16.mxu0 %v7812
      %8115 = vmatpush1.bf16.msra.mxu0 %v7811
      %8116 = vmatprep.subr.bf16.mxu0 %v7816
      %8117 = vmatpush1.bf16.msra.mxu0 %v7815
      %8118 = vmatprep.subr.bf16.mxu0 %v7820
      %8119 = vmatpush1.bf16.msra.mxu0 %v7819
      %8120 = vmatprep.subr.bf16.mxu0 %v7824
      %8121 = vmatpush1.bf16.msra.mxu0 %v7823
      %8122 = vmatprep.subr.bf16.mxu0 %v7828
      %8123 = vmatpush1.bf16.msra.mxu0 %v7827
      %8124 = vmatprep.subr.bf16.mxu0 %v7832
      %8125 = vmatpush1.bf16.msra.mxu0 %v7831
      %8126 = vmatprep.subr.bf16.mxu0 %v7836
      %8127 = vmatpush1.bf16.msra.mxu0 %v7835
      %8128 = vmatprep.subr.bf16.mxu0 %v7840
      %8129 = vmatpush1.bf16.msra.mxu0 %v7839
      %8130 = vmatprep.subr.bf16.mxu0 0
      %8131 = vmatpush1.bf16.msra.mxu0 0
      %8132 = vmatprep.subr.bf16.mxu0 0
      %8133 = vmatpush1.bf16.msra.mxu0 0
      %8134 = vmatprep.subr.bf16.mxu0 0
      %8135 = vmatpush1.bf16.msra.mxu0 0
      %8136 = vmatprep.subr.bf16.mxu0 0
      %8137 = vmatpush1.bf16.msra.mxu0 0
      %8138 = vmatprep.subr.bf16.mxu0 0
      %8139 = vmatpush1.bf16.msra.mxu0 0
      %8140 = vmatprep.subr.bf16.mxu0 0
      %8141 = vmatpush1.bf16.msra.mxu0 0
      %8142 = vmatprep.subr.bf16.mxu0 0
      %8143 = vmatpush1.bf16.msra.mxu0 0
      %8144 = vmatprep.subr.bf16.mxu0 0
      %8145 = vmatpush1.bf16.msra.mxu0 0
      %8146 = vmatprep.mubr.bf16.mxu0 0
      %8147 = vmatmul.mubr.bf16.gmra.mrb[0].mxu0 %v7985
      %v8148 = vpop.f32.mrb[0].mxu0
      %v8149 = vadd.f32 %v7876, %v8148
      %v8150 = vpop.f32.mrb[0].mxu0
      %v8151 = vadd.f32 %v7876, %v8150
      %v8152 = vpop.f32.mrb[0].mxu0
      %v8153 = vadd.f32 %v7881, %v8152
      %v8154 = vpop.f32.mrb[0].mxu0
      %v8155 = vadd.f32 %v7881, %v8154
      %8156 = vmatprep.mubr.bf16.mxu0 0
      %8157 = vmatmul.mubr.bf16.gmra.mrb[0].mxu0 %v7986
      %v8158 = vpop.f32.mrb[0].mxu0
      %v8159 = vadd.f32 %v7886, %v8158
      %v8160 = vpop.f32.mrb[0].mxu0
      %v8161 = vadd.f32 %v7886, %v8160
      %v8162 = vpop.f32.mrb[0].mxu0
      %v8163 = vadd.f32 %v7891, %v8162
      %v8164 = vpop.f32.mrb[0].mxu0
      %v8165 = vadd.f32 %v7891, %v8164
      %8166 = vmatprep.mubr.bf16.mxu0 0
      %8167 = vmatmul.mubr.bf16.gmra.mrb[0].mxu0 %v7987
      %v8168 = vpop.f32.mrb[0].mxu0
      %v8169 = vadd.f32 %v7896, %v8168
      %v8170 = vpop.f32.mrb[0].mxu0
      %v8171 = vadd.f32 %v7896, %v8170
      %v8172 = vpop.f32.mrb[0].mxu0
      %v8173 = vadd.f32 %v7901, %v8172
      %v8174 = vpop.f32.mrb[0].mxu0
      %v8175 = vadd.f32 %v7901, %v8174
      %8176 = vmatprep.mubr.bf16.mxu0 0
      %8177 = vmatmul.mubr.bf16.gmra.mrb[0].mxu0 %v7988
      %v8178 = vpop.f32.mrb[0].mxu0
      %v8179 = vadd.f32 %v7906, %v8178
      %v8180 = vpop.f32.mrb[0].mxu0
      %v8181 = vadd.f32 %v7906, %v8180
      %v8182 = vpop.f32.mrb[0].mxu0
      %v8183 = vadd.f32 %v7911, %v8182
      %v8184 = vpop.f32.mrb[0].mxu0
      %v8185 = vadd.f32 %v7911, %v8184
      %8186 = vmatprep.mubr.bf16.mxu0 0
      %8187 = vmatmul.mubr.bf16.gmra.mrb[0].mxu0 %v7989
      %v8188 = vpop.f32.mrb[0].mxu0
      %v8189 = vadd.f32 %v7916, %v8188
      %v8190 = vpop.f32.mrb[0].mxu0
      %v8191 = vadd.f32 %v7916, %v8190
      %v8192 = vpop.f32.mrb[0].mxu0
      %v8193 = vadd.f32 %v7921, %v8192
      %v8194 = vpop.f32.mrb[0].mxu0
      %v8195 = vadd.f32 %v7921, %v8194
      %8196 = vmatprep.mubr.bf16.mxu0 0
      %8197 = vmatmul.mubr.bf16.gmra.mrb[0].mxu0 %v7990
      %v8198 = vpop.f32.mrb[0].mxu0
      %v8199 = vadd.f32 %v7926, %v8198
      %v8200 = vpop.f32.mrb[0].mxu0
      %v8201 = vadd.f32 %v7926, %v8200
      %v8202 = vpop.f32.mrb[0].mxu0
      %v8203 = vadd.f32 %v7931, %v8202
      %v8204 = vpop.f32.mrb[0].mxu0
      %v8205 = vadd.f32 %v7931, %v8204
      %8206 = vmatprep.mubr.bf16.mxu0 0
      %8207 = vmatmul.mubr.bf16.gmra.mrb[0].mxu0 %v7991
      %v8208 = vpop.f32.mrb[0].mxu0
      %v8209 = vadd.f32 %v7936, %v8208
      %v8210 = vpop.f32.mrb[0].mxu0
      %v8211 = vadd.f32 %v7936, %v8210
      %v8212 = vpop.f32.mrb[0].mxu0
      %v8213 = vadd.f32 %v7941, %v8212
      %v8214 = vpop.f32.mrb[0].mxu0
      %v8215 = vadd.f32 %v7941, %v8214
      %8216 = vmatprep.mubr.bf16.mxu0 0
      %8217 = vmatmul.mubr.bf16.gmra.mrb[0].mxu0 %v7992
      %v8218 = vpop.f32.mrb[0].mxu0
      %v8219 = vadd.f32 %v7946, %v8218
      %v8220 = vpop.f32.mrb[0].mxu0
      %v8221 = vadd.f32 %v7946, %v8220
      %v8222 = vpop.f32.mrb[0].mxu0
      %v8223 = vadd.f32 %v7951, %v8222
      %v8224 = vpop.f32.mrb[0].mxu0
      %v8225 = vadd.f32 %v7951, %v8224
      %8226 = vdwg.mxu0
      %v8227 = vmax.f32 %v8036, 0.0
      %v8228 = vmax.f32 %v8038, 0.0
      %v8229 = vmax.f32 %v8149, 0.0
      %v8230 = vmax.f32 %v8151, 0.0
      %v8231 = vmax.f32 %v8040, 0.0
      %v8232 = vmax.f32 %v8042, 0.0
      %v8233 = vmax.f32 %v8153, 0.0
      %v8234 = vmax.f32 %v8155, 0.0
      %v8235 = vmax.f32 %v8046, 0.0
      %v8236 = vmax.f32 %v8048, 0.0
      %v8237 = vmax.f32 %v8159, 0.0
      %v8238 = vmax.f32 %v8161, 0.0
      %v8239 = vmax.f32 %v8050, 0.0
      %v8240 = vmax.f32 %v8052, 0.0
      %v8241 = vmax.f32 %v8163, 0.0
      %v8242 = vmax.f32 %v8165, 0.0
      %v8243 = vmax.f32 %v8056, 0.0
      %v8244 = vmax.f32 %v8058, 0.0
      %v8245 = vmax.f32 %v8169, 0.0
      %v8246 = vmax.f32 %v8171, 0.0
      %v8247 = vmax.f32 %v8060, 0.0
      %v8248 = vmax.f32 %v8062, 0.0
      %v8249 = vmax.f32 %v8173, 0.0
      %v8250 = vmax.f32 %v8175, 0.0
      %v8251 = vmax.f32 %v8066, 0.0
      %v8252 = vmax.f32 %v8068, 0.0
      %v8253 = vmax.f32 %v8179, 0.0
      %v8254 = vmax.f32 %v8181, 0.0
      %v8255 = vmax.f32 %v8070, 0.0
      %v8256 = vmax.f32 %v8072, 0.0
      %v8257 = vmax.f32 %v8183, 0.0
      %v8258 = vmax.f32 %v8185, 0.0
      %v8259 = vmax.f32 %v8076, 0.0
      %v8260 = vmax.f32 %v8078, 0.0
      %v8261 = vmax.f32 %v8189, 0.0
      %v8262 = vmax.f32 %v8191, 0.0
      %v8263 = vmax.f32 %v8080, 0.0
      %v8264 = vmax.f32 %v8082, 0.0
      %v8265 = vmax.f32 %v8193, 0.0
      %v8266 = vmax.f32 %v8195, 0.0
      %v8267 = vmax.f32 %v8086, 0.0
      %v8268 = vmax.f32 %v8088, 0.0
      %v8269 = vmax.f32 %v8199, 0.0
      %v8270 = vmax.f32 %v8201, 0.0
      %v8271 = vmax.f32 %v8090, 0.0
      %v8272 = vmax.f32 %v8092, 0.0
      %v8273 = vmax.f32 %v8203, 0.0
      %v8274 = vmax.f32 %v8205, 0.0
      %v8275 = vmax.f32 %v8096, 0.0
      %v8276 = vmax.f32 %v8098, 0.0
      %v8277 = vmax.f32 %v8209, 0.0
      %v8278 = vmax.f32 %v8211, 0.0
      %v8279 = vmax.f32 %v8100, 0.0
      %v8280 = vmax.f32 %v8102, 0.0
      %v8281 = vmax.f32 %v8213, 0.0
      %v8282 = vmax.f32 %v8215, 0.0
      %v8283 = vmax.f32 %v8106, 0.0
      %v8284 = vmax.f32 %v8108, 0.0
      %v8285 = vmax.f32 %v8219, 0.0
      %v8286 = vmax.f32 %v8221, 0.0
      %v8287 = vmax.f32 %v8110, 0.0
      %v8288 = vmax.f32 %v8112, 0.0
      %v8289 = vmax.f32 %v8223, 0.0
      %v8290 = vmax.f32 %v8225, 0.0
      %v8291 = vpack.c.bf16 %v8231, %v8227
      %v8292 = vpack.c.bf16 %v8232, %v8228
      %v8293 = vpack.c.bf16 %v8233, %v8229
      %v8294 = vpack.c.bf16 %v8234, %v8230
      %v8295 = vpack.c.bf16 %v8239, %v8235
      %v8296 = vpack.c.bf16 %v8240, %v8236
      %v8297 = vpack.c.bf16 %v8241, %v8237
      %v8298 = vpack.c.bf16 %v8242, %v8238
      %v8299 = vpack.c.bf16 %v8247, %v8243
      %v8300 = vpack.c.bf16 %v8248, %v8244
      %v8301 = vpack.c.bf16 %v8249, %v8245
      %v8302 = vpack.c.bf16 %v8250, %v8246
      %v8303 = vpack.c.bf16 %v8255, %v8251
      %v8304 = vpack.c.bf16 %v8256, %v8252
      %v8305 = vpack.c.bf16 %v8257, %v8253
      %v8306 = vpack.c.bf16 %v8258, %v8254
      %v8307 = vpack.c.bf16 %v8263, %v8259
      %v8308 = vpack.c.bf16 %v8264, %v8260
      %v8309 = vpack.c.bf16 %v8265, %v8261
      %v8310 = vpack.c.bf16 %v8266, %v8262
      %v8311 = vpack.c.bf16 %v8271, %v8267
      %v8312 = vpack.c.bf16 %v8272, %v8268
      %v8313 = vpack.c.bf16 %v8273, %v8269
      %v8314 = vpack.c.bf16 %v8274, %v8270
      %v8315 = vpack.c.bf16 %v8279, %v8275
      %v8316 = vpack.c.bf16 %v8280, %v8276
      %v8317 = vpack.c.bf16 %v8281, %v8277
      %v8318 = vpack.c.bf16 %v8282, %v8278
      %v8319 = vpack.c.bf16 %v8287, %v8283
      %v8320 = vpack.c.bf16 %v8288, %v8284
      %v8321 = vpack.c.bf16 %v8289, %v8285
      %v8322 = vpack.c.bf16 %v8290, %v8286
      %v8323 = vld [vmem:[%s7] sm:$0xf]
      %v8324 = vld [vmem:[%s7 + $0x4] sm:$0xf]
      %v8325 = vld [vmem:[%s7 + $0x8] sm:$0xf]
      %v8326 = vld [vmem:[%s7 + $0xc] sm:$0xf]
      %v8327 = vld [vmem:[%s7 + $0x10] sm:$0xf]
      %v8328 = vld [vmem:[%s7 + $0x14] sm:$0xf]
      %v8329 = vld [vmem:[%s7 + $0x18] sm:$0xf]
      %v8330 = vld [vmem:[%s7 + $0x1c] sm:$0xf]
      %v8331 = vld [vmem:[%s7 + $0x20] sm:$0xf]
      %v8332 = vld [vmem:[%s7 + $0x24] sm:$0xf]
      %v8333 = vld [vmem:[%s7 + $0x28] sm:$0xf]
      %v8334 = vld [vmem:[%s7 + $0x2c] sm:$0xf]
      %v8335 = vld [vmem:[%s7 + $0x30] sm:$0xf]
      %v8336 = vld [vmem:[%s7 + $0x34] sm:$0xf]
      %v8337 = vld [vmem:[%s7 + $0x38] sm:$0xf]
      %v8338 = vld [vmem:[%s7 + $0x3c] sm:$0xf]
      %v8339 = vld [vmem:[%s8] sm:$0xff]
      %v8340 = vld [vmem:[%s8 + $0x8] sm:$0xff]
      %v8341 = vld [vmem:[%s8 + $0x10] sm:$0xff]
      %v8342 = vld [vmem:[%s8 + $0x18] sm:$0xff]
      %v8343 = vld [vmem:[%s8 + $0x20] sm:$0xff]
      %v8344 = vld [vmem:[%s8 + $0x28] sm:$0xff]
      %v8345 = vld [vmem:[%s8 + $0x30] sm:$0xff]
      %v8346 = vld [vmem:[%s8 + $0x38] sm:$0xff]
      %v8347 = vld [vmem:[%s8 + $0x40] sm:$0xff]
      %v8348 = vld [vmem:[%s8 + $0x48] sm:$0xff]
      %v8349 = vld [vmem:[%s8 + $0x50] sm:$0xff]
      %v8350 = vld [vmem:[%s8 + $0x58] sm:$0xff]
      %v8351 = vld [vmem:[%s8 + $0x60] sm:$0xff]
      %v8352 = vld [vmem:[%s8 + $0x68] sm:$0xff]
      %v8353 = vld [vmem:[%s8 + $0x70] sm:$0xff]
      %v8354 = vld [vmem:[%s8 + $0x78] sm:$0xff]
      %8356 = vset.pattern.permute.xlu0 0
      %8357 = vperm.xlu0 %8356, %v8339
      %v8358 = vpop.permute.xlu0 %8357
      %8361 = vset.pattern.permute.xlu0 0
      %8362 = vperm.xlu0 %8361, %v8340
      %v8363 = vpop.permute.xlu0 %8362
      %8366 = vset.pattern.permute.xlu0 0
      %8367 = vperm.xlu0 %8366, %v8341
      %v8368 = vpop.permute.xlu0 %8367
      %8371 = vset.pattern.permute.xlu0 0
      %8372 = vperm.xlu0 %8371, %v8342
      %v8373 = vpop.permute.xlu0 %8372
      %8376 = vset.pattern.permute.xlu0 0
      %8377 = vperm.xlu0 %8376, %v8343
      %v8378 = vpop.permute.xlu0 %8377
      %8381 = vset.pattern.permute.xlu0 0
      %8382 = vperm.xlu0 %8381, %v8344
      %v8383 = vpop.permute.xlu0 %8382
      %8386 = vset.pattern.permute.xlu0 0
      %8387 = vperm.xlu0 %8386, %v8345
      %v8388 = vpop.permute.xlu0 %8387
      %8391 = vset.pattern.permute.xlu0 0
      %8392 = vperm.xlu0 %8391, %v8346
      %v8393 = vpop.permute.xlu0 %8392
      %8396 = vset.pattern.permute.xlu0 0
      %8397 = vperm.xlu0 %8396, %v8347
      %v8398 = vpop.permute.xlu0 %8397
      %8401 = vset.pattern.permute.xlu0 0
      %8402 = vperm.xlu0 %8401, %v8348
      %v8403 = vpop.permute.xlu0 %8402
      %8406 = vset.pattern.permute.xlu0 0
      %8407 = vperm.xlu0 %8406, %v8349
      %v8408 = vpop.permute.xlu0 %8407
      %8411 = vset.pattern.permute.xlu0 0
      %8412 = vperm.xlu0 %8411, %v8350
      %v8413 = vpop.permute.xlu0 %8412
      %8416 = vset.pattern.permute.xlu0 0
      %8417 = vperm.xlu0 %8416, %v8351
      %v8418 = vpop.permute.xlu0 %8417
      %8421 = vset.pattern.permute.xlu0 0
      %8422 = vperm.xlu0 %8421, %v8352
      %v8423 = vpop.permute.xlu0 %8422
      %8426 = vset.pattern.permute.xlu0 0
      %8427 = vperm.xlu0 %8426, %v8353
      %v8428 = vpop.permute.xlu0 %8427
      %8431 = vset.pattern.permute.xlu0 0
      %8432 = vperm.xlu0 %8431, %v8354
      %v8433 = vpop.permute.xlu0 %8432
      %v8451 = vunpack.c.l.b16 %v8323
      %v8452 = vunpack.c.l.b16 %v8324
      %v8453 = vunpack.c.l.b16 %v8325
      %v8454 = vunpack.c.l.b16 %v8326
      %v8455 = vunpack.c.l.b16 %v8327
      %v8456 = vunpack.c.l.b16 %v8328
      %v8457 = vunpack.c.l.b16 %v8329
      %v8458 = vunpack.c.l.b16 %v8330
      %v8459 = vunpack.c.l.b16 %v8331
      %v8460 = vunpack.c.l.b16 %v8332
      %v8461 = vunpack.c.l.b16 %v8333
      %v8462 = vunpack.c.l.b16 %v8334
      %v8463 = vunpack.c.l.b16 %v8335
      %v8464 = vunpack.c.l.b16 %v8336
      %v8465 = vunpack.c.l.b16 %v8337
      %v8466 = vunpack.c.l.b16 %v8338
      %v8467 = vpack.c.b16 %v8452, %v8451
      %v8468 = vpack.c.b16 %v8454, %v8453
      %v8469 = vpack.c.b16 %v8456, %v8455
      %v8470 = vpack.c.b16 %v8458, %v8457
      %v8471 = vpack.c.b16 %v8460, %v8459
      %v8472 = vpack.c.b16 %v8462, %v8461
      %v8473 = vpack.c.b16 %v8464, %v8463
      %v8474 = vpack.c.b16 %v8466, %v8465
      %8483 = vmatprep.subr.bf16.mxu0 %v8292
      %8484 = vmatpush1.bf16.msra.mxu0 %v8291
      %8485 = vmatprep.subr.bf16.mxu0 %v8296
      %8486 = vmatpush1.bf16.msra.mxu0 %v8295
      %8487 = vmatprep.subr.bf16.mxu0 %v8300
      %8488 = vmatpush1.bf16.msra.mxu0 %v8299
      %8489 = vmatprep.subr.bf16.mxu0 %v8304
      %8490 = vmatpush1.bf16.msra.mxu0 %v8303
      %8491 = vmatprep.subr.bf16.mxu0 %v8308
      %8492 = vmatpush1.bf16.msra.mxu0 %v8307
      %8493 = vmatprep.subr.bf16.mxu0 %v8312
      %8494 = vmatpush1.bf16.msra.mxu0 %v8311
      %8495 = vmatprep.subr.bf16.mxu0 %v8316
      %8496 = vmatpush1.bf16.msra.mxu0 %v8315
      %8497 = vmatprep.subr.bf16.mxu0 %v8320
      %8498 = vmatpush1.bf16.msra.mxu0 %v8319
      %8499 = vmatprep.subr.bf16.mxu0 0
      %8500 = vmatpush1.bf16.msra.mxu0 0
      %8501 = vmatprep.subr.bf16.mxu0 0
      %8502 = vmatpush1.bf16.msra.mxu0 0
      %8503 = vmatprep.subr.bf16.mxu0 0
      %8504 = vmatpush1.bf16.msra.mxu0 0
      %8505 = vmatprep.subr.bf16.mxu0 0
      %8506 = vmatpush1.bf16.msra.mxu0 0
      %8507 = vmatprep.subr.bf16.mxu0 0
      %8508 = vmatpush1.bf16.msra.mxu0 0
      %8509 = vmatprep.subr.bf16.mxu0 0
      %8510 = vmatpush1.bf16.msra.mxu0 0
      %8511 = vmatprep.subr.bf16.mxu0 0
      %8512 = vmatpush1.bf16.msra.mxu0 0
      %8513 = vmatprep.subr.bf16.mxu0 0
      %8514 = vmatpush1.bf16.msra.mxu0 0
      %8515 = vmatprep.mubr.bf16.mxu0 0
      %8516 = vmatmul.mubr.bf16.gmra.mrb[0].mxu0 %v8467
      %v8517 = vpop.f32.mrb[0].mxu0
      %v8518 = vadd.f32 %v8358, %v8517
      %v8519 = vpop.f32.mrb[0].mxu0
      %v8520 = vadd.f32 %v8358, %v8519
      %v8521 = vpop.f32.mrb[0].mxu0
      %v8522 = vadd.f32 %v8363, %v8521
      %v8523 = vpop.f32.mrb[0].mxu0
      %v8524 = vadd.f32 %v8363, %v8523
      %8525 = vmatprep.mubr.bf16.mxu0 0
      %8526 = vmatmul.mubr.bf16.gmra.mrb[0].mxu0 %v8468
      %v8527 = vpop.f32.mrb[0].mxu0
      %v8528 = vadd.f32 %v8368, %v8527
      %v8529 = vpop.f32.mrb[0].mxu0
      %v8530 = vadd.f32 %v8368, %v8529
      %v8531 = vpop.f32.mrb[0].mxu0
      %v8532 = vadd.f32 %v8373, %v8531
      %v8533 = vpop.f32.mrb[0].mxu0
      %v8534 = vadd.f32 %v8373, %v8533
      %8535 = vmatprep.mubr.bf16.mxu0 0
      %8536 = vmatmul.mubr.bf16.gmra.mrb[0].mxu0 %v8469
      %v8537 = vpop.f32.mrb[0].mxu0
      %v8538 = vadd.f32 %v8378, %v8537
      %v8539 = vpop.f32.mrb[0].mxu0
      %v8540 = vadd.f32 %v8378, %v8539
      %v8541 = vpop.f32.mrb[0].mxu0
      %v8542 = vadd.f32 %v8383, %v8541
      %v8543 = vpop.f32.mrb[0].mxu0
      %v8544 = vadd.f32 %v8383, %v8543
      %8545 = vmatprep.mubr.bf16.mxu0 0
      %8546 = vmatmul.mubr.bf16.gmra.mrb[0].mxu0 %v8470
      %v8547 = vpop.f32.mrb[0].mxu0
      %v8548 = vadd.f32 %v8388, %v8547
      %v8549 = vpop.f32.mrb[0].mxu0
      %v8550 = vadd.f32 %v8388, %v8549
      %v8551 = vpop.f32.mrb[0].mxu0
      %v8552 = vadd.f32 %v8393, %v8551
      %v8553 = vpop.f32.mrb[0].mxu0
      %v8554 = vadd.f32 %v8393, %v8553
      %8555 = vmatprep.mubr.bf16.mxu0 0
      %8556 = vmatmul.mubr.bf16.gmra.mrb[0].mxu0 %v8471
      %v8557 = vpop.f32.mrb[0].mxu0
      %v8558 = vadd.f32 %v8398, %v8557
      %v8559 = vpop.f32.mrb[0].mxu0
      %v8560 = vadd.f32 %v8398, %v8559
      %v8561 = vpop.f32.mrb[0].mxu0
      %v8562 = vadd.f32 %v8403, %v8561
      %v8563 = vpop.f32.mrb[0].mxu0
      %v8564 = vadd.f32 %v8403, %v8563
      %8565 = vmatprep.mubr.bf16.mxu0 0
      %8566 = vmatmul.mubr.bf16.gmra.mrb[0].mxu0 %v8472
      %v8567 = vpop.f32.mrb[0].mxu0
      %v8568 = vadd.f32 %v8408, %v8567
      %v8569 = vpop.f32.mrb[0].mxu0
      %v8570 = vadd.f32 %v8408, %v8569
      %v8571 = vpop.f32.mrb[0].mxu0
      %v8572 = vadd.f32 %v8413, %v8571
      %v8573 = vpop.f32.mrb[0].mxu0
      %v8574 = vadd.f32 %v8413, %v8573
      %8575 = vmatprep.mubr.bf16.mxu0 0
      %8576 = vmatmul.mubr.bf16.gmra.mrb[0].mxu0 %v8473
      %v8577 = vpop.f32.mrb[0].mxu0
      %v8578 = vadd.f32 %v8418, %v8577
      %v8579 = vpop.f32.mrb[0].mxu0
      %v8580 = vadd.f32 %v8418, %v8579
      %v8581 = vpop.f32.mrb[0].mxu0
      %v8582 = vadd.f32 %v8423, %v8581
      %v8583 = vpop.f32.mrb[0].mxu0
      %v8584 = vadd.f32 %v8423, %v8583
      %8585 = vmatprep.mubr.bf16.mxu0 0
      %8586 = vmatmul.mubr.bf16.gmra.mrb[0].mxu0 %v8474
      %v8587 = vpop.f32.mrb[0].mxu0
      %v8588 = vadd.f32 %v8428, %v8587
      %v8589 = vpop.f32.mrb[0].mxu0
      %v8590 = vadd.f32 %v8428, %v8589
      %v8591 = vpop.f32.mrb[0].mxu0
      %v8592 = vadd.f32 %v8433, %v8591
      %v8593 = vpop.f32.mrb[0].mxu0
      %v8594 = vadd.f32 %v8433, %v8593
      %8595 = vdwg.mxu0
      %8596 = vmatprep.subr.bf16.mxu0 %v8294
      %8597 = vmatpush1.bf16.msra.mxu0 %v8293
      %8598 = vmatprep.subr.bf16.mxu0 %v8298
      %8599 = vmatpush1.bf16.msra.mxu0 %v8297
      %8600 = vmatprep.subr.bf16.mxu0 %v8302
      %8601 = vmatpush1.bf16.msra.mxu0 %v8301
      %8602 = vmatprep.subr.bf16.mxu0 %v8306
      %8603 = vmatpush1.bf16.msra.mxu0 %v8305
      %8604 = vmatprep.subr.bf16.mxu0 %v8310
      %8605 = vmatpush1.bf16.msra.mxu0 %v8309
      %8606 = vmatprep.subr.bf16.mxu0 %v8314
      %8607 = vmatpush1.bf16.msra.mxu0 %v8313
      %8608 = vmatprep.subr.bf16.mxu0 %v8318
      %8609 = vmatpush1.bf16.msra.mxu0 %v8317
      %8610 = vmatprep.subr.bf16.mxu0 %v8322
      %8611 = vmatpush1.bf16.msra.mxu0 %v8321
      %8612 = vmatprep.subr.bf16.mxu0 0
      %8613 = vmatpush1.bf16.msra.mxu0 0
      %8614 = vmatprep.subr.bf16.mxu0 0
      %8615 = vmatpush1.bf16.msra.mxu0 0
      %8616 = vmatprep.subr.bf16.mxu0 0
      %8617 = vmatpush1.bf16.msra.mxu0 0
      %8618 = vmatprep.subr.bf16.mxu0 0
      %8619 = vmatpush1.bf16.msra.mxu0 0
      %8620 = vmatprep.subr.bf16.mxu0 0
      %8621 = vmatpush1.bf16.msra.mxu0 0
      %8622 = vmatprep.subr.bf16.mxu0 0
      %8623 = vmatpush1.bf16.msra.mxu0 0
      %8624 = vmatprep.subr.bf16.mxu0 0
      %8625 = vmatpush1.bf16.msra.mxu0 0
      %8626 = vmatprep.subr.bf16.mxu0 0
      %8627 = vmatpush1.bf16.msra.mxu0 0
      %8628 = vmatprep.mubr.bf16.mxu0 0
      %8629 = vmatmul.mubr.bf16.gmra.mrb[0].mxu0 %v8467
      %v8630 = vpop.f32.mrb[0].mxu0
      %v8631 = vadd.f32 %v8358, %v8630
      %v8632 = vpop.f32.mrb[0].mxu0
      %v8633 = vadd.f32 %v8358, %v8632
      %v8634 = vpop.f32.mrb[0].mxu0
      %v8635 = vadd.f32 %v8363, %v8634
      %v8636 = vpop.f32.mrb[0].mxu0
      %v8637 = vadd.f32 %v8363, %v8636
      %8638 = vmatprep.mubr.bf16.mxu0 0
      %8639 = vmatmul.mubr.bf16.gmra.mrb[0].mxu0 %v8468
      %v8640 = vpop.f32.mrb[0].mxu0
      %v8641 = vadd.f32 %v8368, %v8640
      %v8642 = vpop.f32.mrb[0].mxu0
      %v8643 = vadd.f32 %v8368, %v8642
      %v8644 = vpop.f32.mrb[0].mxu0
      %v8645 = vadd.f32 %v8373, %v8644
      %v8646 = vpop.f32.mrb[0].mxu0
      %v8647 = vadd.f32 %v8373, %v8646
      %8648 = vmatprep.mubr.bf16.mxu0 0
      %8649 = vmatmul.mubr.bf16.gmra.mrb[0].mxu0 %v8469
      %v8650 = vpop.f32.mrb[0].mxu0
      %v8651 = vadd.f32 %v8378, %v8650
      %v8652 = vpop.f32.mrb[0].mxu0
      %v8653 = vadd.f32 %v8378, %v8652
      %v8654 = vpop.f32.mrb[0].mxu0
      %v8655 = vadd.f32 %v8383, %v8654
      %v8656 = vpop.f32.mrb[0].mxu0
      %v8657 = vadd.f32 %v8383, %v8656
      %8658 = vmatprep.mubr.bf16.mxu0 0
      %8659 = vmatmul.mubr.bf16.gmra.mrb[0].mxu0 %v8470
      %v8660 = vpop.f32.mrb[0].mxu0
      %v8661 = vadd.f32 %v8388, %v8660
      %v8662 = vpop.f32.mrb[0].mxu0
      %v8663 = vadd.f32 %v8388, %v8662
      %v8664 = vpop.f32.mrb[0].mxu0
      %v8665 = vadd.f32 %v8393, %v8664
      %v8666 = vpop.f32.mrb[0].mxu0
      %v8667 = vadd.f32 %v8393, %v8666
      %8668 = vmatprep.mubr.bf16.mxu0 0
      %8669 = vmatmul.mubr.bf16.gmra.mrb[0].mxu0 %v8471
      %v8670 = vpop.f32.mrb[0].mxu0
      %v8671 = vadd.f32 %v8398, %v8670
      %v8672 = vpop.f32.mrb[0].mxu0
      %v8673 = vadd.f32 %v8398, %v8672
      %v8674 = vpop.f32.mrb[0].mxu0
      %v8675 = vadd.f32 %v8403, %v8674
      %v8676 = vpop.f32.mrb[0].mxu0
      %v8677 = vadd.f32 %v8403, %v8676
      %8678 = vmatprep.mubr.bf16.mxu0 0
      %8679 = vmatmul.mubr.bf16.gmra.mrb[0].mxu0 %v8472
      %v8680 = vpop.f32.mrb[0].mxu0
      %v8681 = vadd.f32 %v8408, %v8680
      %v8682 = vpop.f32.mrb[0].mxu0
      %v8683 = vadd.f32 %v8408, %v8682
      %v8684 = vpop.f32.mrb[0].mxu0
      %v8685 = vadd.f32 %v8413, %v8684
      %v8686 = vpop.f32.mrb[0].mxu0
      %v8687 = vadd.f32 %v8413, %v8686
      %8688 = vmatprep.mubr.bf16.mxu0 0
      %8689 = vmatmul.mubr.bf16.gmra.mrb[0].mxu0 %v8473
      %v8690 = vpop.f32.mrb[0].mxu0
      %v8691 = vadd.f32 %v8418, %v8690
      %v8692 = vpop.f32.mrb[0].mxu0
      %v8693 = vadd.f32 %v8418, %v8692
      %v8694 = vpop.f32.mrb[0].mxu0
      %v8695 = vadd.f32 %v8423, %v8694
      %v8696 = vpop.f32.mrb[0].mxu0
      %v8697 = vadd.f32 %v8423, %v8696
      %8698 = vmatprep.mubr.bf16.mxu0 0
      %8699 = vmatmul.mubr.bf16.gmra.mrb[0].mxu0 %v8474
      %v8700 = vpop.f32.mrb[0].mxu0
      %v8701 = vadd.f32 %v8428, %v8700
      %v8702 = vpop.f32.mrb[0].mxu0
      %v8703 = vadd.f32 %v8428, %v8702
      %v8704 = vpop.f32.mrb[0].mxu0
      %v8705 = vadd.f32 %v8433, %v8704
      %v8706 = vpop.f32.mrb[0].mxu0
      %v8707 = vadd.f32 %v8433, %v8706
      %8708 = vdwg.mxu0
      %v8709 = vmax.f32 %v8518, 0.0
      %v8710 = vmax.f32 %v8520, 0.0
      %v8711 = vmax.f32 %v8631, 0.0
      %v8712 = vmax.f32 %v8633, 0.0
      %v8713 = vmax.f32 %v8522, 0.0
      %v8714 = vmax.f32 %v8524, 0.0
      %v8715 = vmax.f32 %v8635, 0.0
      %v8716 = vmax.f32 %v8637, 0.0
      %v8717 = vmax.f32 %v8528, 0.0
      %v8718 = vmax.f32 %v8530, 0.0
      %v8719 = vmax.f32 %v8641, 0.0
      %v8720 = vmax.f32 %v8643, 0.0
      %v8721 = vmax.f32 %v8532, 0.0
      %v8722 = vmax.f32 %v8534, 0.0
      %v8723 = vmax.f32 %v8645, 0.0
      %v8724 = vmax.f32 %v8647, 0.0
      %v8725 = vmax.f32 %v8538, 0.0
      %v8726 = vmax.f32 %v8540, 0.0
      %v8727 = vmax.f32 %v8651, 0.0
      %v8728 = vmax.f32 %v8653, 0.0
      %v8729 = vmax.f32 %v8542, 0.0
      %v8730 = vmax.f32 %v8544, 0.0
      %v8731 = vmax.f32 %v8655, 0.0
      %v8732 = vmax.f32 %v8657, 0.0
      %v8733 = vmax.f32 %v8548, 0.0
      %v8734 = vmax.f32 %v8550, 0.0
      %v8735 = vmax.f32 %v8661, 0.0
      %v8736 = vmax.f32 %v8663, 0.0
      %v8737 = vmax.f32 %v8552, 0.0
      %v8738 = vmax.f32 %v8554, 0.0
      %v8739 = vmax.f32 %v8665, 0.0
      %v8740 = vmax.f32 %v8667, 0.0
      %v8741 = vmax.f32 %v8558, 0.0
      %v8742 = vmax.f32 %v8560, 0.0
      %v8743 = vmax.f32 %v8671, 0.0
      %v8744 = vmax.f32 %v8673, 0.0
      %v8745 = vmax.f32 %v8562, 0.0
      %v8746 = vmax.f32 %v8564, 0.0
      %v8747 = vmax.f32 %v8675, 0.0
      %v8748 = vmax.f32 %v8677, 0.0
      %v8749 = vmax.f32 %v8568, 0.0
      %v8750 = vmax.f32 %v8570, 0.0
      %v8751 = vmax.f32 %v8681, 0.0
      %v8752 = vmax.f32 %v8683, 0.0
      %v8753 = vmax.f32 %v8572, 0.0
      %v8754 = vmax.f32 %v8574, 0.0
      %v8755 = vmax.f32 %v8685, 0.0
      %v8756 = vmax.f32 %v8687, 0.0
      %v8757 = vmax.f32 %v8578, 0.0
      %v8758 = vmax.f32 %v8580, 0.0
      %v8759 = vmax.f32 %v8691, 0.0
      %v8760 = vmax.f32 %v8693, 0.0
      %v8761 = vmax.f32 %v8582, 0.0
      %v8762 = vmax.f32 %v8584, 0.0
      %v8763 = vmax.f32 %v8695, 0.0
      %v8764 = vmax.f32 %v8697, 0.0
      %v8765 = vmax.f32 %v8588, 0.0
      %v8766 = vmax.f32 %v8590, 0.0
      %v8767 = vmax.f32 %v8701, 0.0
      %v8768 = vmax.f32 %v8703, 0.0
      %v8769 = vmax.f32 %v8592, 0.0
      %v8770 = vmax.f32 %v8594, 0.0
      %v8771 = vmax.f32 %v8705, 0.0
      %v8772 = vmax.f32 %v8707, 0.0
      %v8773 = vpack.c.bf16 %v8713, %v8709
      %v8774 = vpack.c.bf16 %v8714, %v8710
      %v8775 = vpack.c.bf16 %v8715, %v8711
      %v8776 = vpack.c.bf16 %v8716, %v8712
      %v8777 = vpack.c.bf16 %v8721, %v8717
      %v8778 = vpack.c.bf16 %v8722, %v8718
      %v8779 = vpack.c.bf16 %v8723, %v8719
      %v8780 = vpack.c.bf16 %v8724, %v8720
      %v8781 = vpack.c.bf16 %v8729, %v8725
      %v8782 = vpack.c.bf16 %v8730, %v8726
      %v8783 = vpack.c.bf16 %v8731, %v8727
      %v8784 = vpack.c.bf16 %v8732, %v8728
      %v8785 = vpack.c.bf16 %v8737, %v8733
      %v8786 = vpack.c.bf16 %v8738, %v8734
      %v8787 = vpack.c.bf16 %v8739, %v8735
      %v8788 = vpack.c.bf16 %v8740, %v8736
      %v8789 = vpack.c.bf16 %v8745, %v8741
      %v8790 = vpack.c.bf16 %v8746, %v8742
      %v8791 = vpack.c.bf16 %v8747, %v8743
      %v8792 = vpack.c.bf16 %v8748, %v8744
      %v8793 = vpack.c.bf16 %v8753, %v8749
      %v8794 = vpack.c.bf16 %v8754, %v8750
      %v8795 = vpack.c.bf16 %v8755, %v8751
      %v8796 = vpack.c.bf16 %v8756, %v8752
      %v8797 = vpack.c.bf16 %v8761, %v8757
      %v8798 = vpack.c.bf16 %v8762, %v8758
      %v8799 = vpack.c.bf16 %v8763, %v8759
      %v8800 = vpack.c.bf16 %v8764, %v8760
      %v8801 = vpack.c.bf16 %v8769, %v8765
      %v8802 = vpack.c.bf16 %v8770, %v8766
      %v8803 = vpack.c.bf16 %v8771, %v8767
      %v8804 = vpack.c.bf16 %v8772, %v8768
      %v8805 = vld [vmem:[%s9] sm:$0xf]
      %v8806 = vld [vmem:[%s9 + $0x4] sm:$0xf]
      %v8807 = vld [vmem:[%s9 + $0x8] sm:$0xf]
      %v8808 = vld [vmem:[%s9 + $0xc] sm:$0xf]
      %v8809 = vld [vmem:[%s9 + $0x10] sm:$0xf]
      %v8810 = vld [vmem:[%s9 + $0x14] sm:$0xf]
      %v8811 = vld [vmem:[%s9 + $0x18] sm:$0xf]
      %v8812 = vld [vmem:[%s9 + $0x1c] sm:$0xf]
      %v8813 = vld [vmem:[%s9 + $0x20] sm:$0xf]
      %v8814 = vld [vmem:[%s9 + $0x24] sm:$0xf]
      %v8815 = vld [vmem:[%s9 + $0x28] sm:$0xf]
      %v8816 = vld [vmem:[%s9 + $0x2c] sm:$0xf]
      %v8817 = vld [vmem:[%s9 + $0x30] sm:$0xf]
      %v8818 = vld [vmem:[%s9 + $0x34] sm:$0xf]
      %v8819 = vld [vmem:[%s9 + $0x38] sm:$0xf]
      %v8820 = vld [vmem:[%s9 + $0x3c] sm:$0xf]
      %v8821 = vld [vmem:[%s10] sm:$0xff]
      %v8822 = vld [vmem:[%s10 + $0x8] sm:$0xff]
      %v8823 = vld [vmem:[%s10 + $0x10] sm:$0xff]
      %v8824 = vld [vmem:[%s10 + $0x18] sm:$0xff]
      %v8825 = vld [vmem:[%s10 + $0x20] sm:$0xff]
      %v8826 = vld [vmem:[%s10 + $0x28] sm:$0xff]
      %v8827 = vld [vmem:[%s10 + $0x30] sm:$0xff]
      %v8828 = vld [vmem:[%s10 + $0x38] sm:$0xff]
      %v8829 = vld [vmem:[%s10 + $0x40] sm:$0xff]
      %v8830 = vld [vmem:[%s10 + $0x48] sm:$0xff]
      %v8831 = vld [vmem:[%s10 + $0x50] sm:$0xff]
      %v8832 = vld [vmem:[%s10 + $0x58] sm:$0xff]
      %v8833 = vld [vmem:[%s10 + $0x60] sm:$0xff]
      %v8834 = vld [vmem:[%s10 + $0x68] sm:$0xff]
      %v8835 = vld [vmem:[%s10 + $0x70] sm:$0xff]
      %v8836 = vld [vmem:[%s10 + $0x78] sm:$0xff]
      %8838 = vset.pattern.permute.xlu0 0
      %8839 = vperm.xlu0 %8838, %v8821
      %v8840 = vpop.permute.xlu0 %8839
      %8843 = vset.pattern.permute.xlu0 0
      %8844 = vperm.xlu0 %8843, %v8822
      %v8845 = vpop.permute.xlu0 %8844
      %8848 = vset.pattern.permute.xlu0 0
      %8849 = vperm.xlu0 %8848, %v8823
      %v8850 = vpop.permute.xlu0 %8849
      %8853 = vset.pattern.permute.xlu0 0
      %8854 = vperm.xlu0 %8853, %v8824
      %v8855 = vpop.permute.xlu0 %8854
      %8858 = vset.pattern.permute.xlu0 0
      %8859 = vperm.xlu0 %8858, %v8825
      %v8860 = vpop.permute.xlu0 %8859
      %8863 = vset.pattern.permute.xlu0 0
      %8864 = vperm.xlu0 %8863, %v8826
      %v8865 = vpop.permute.xlu0 %8864
      %8868 = vset.pattern.permute.xlu0 0
      %8869 = vperm.xlu0 %8868, %v8827
      %v8870 = vpop.permute.xlu0 %8869
      %8873 = vset.pattern.permute.xlu0 0
      %8874 = vperm.xlu0 %8873, %v8828
      %v8875 = vpop.permute.xlu0 %8874
      %8878 = vset.pattern.permute.xlu0 0
      %8879 = vperm.xlu0 %8878, %v8829
      %v8880 = vpop.permute.xlu0 %8879
      %8883 = vset.pattern.permute.xlu0 0
      %8884 = vperm.xlu0 %8883, %v8830
      %v8885 = vpop.permute.xlu0 %8884
      %8888 = vset.pattern.permute.xlu0 0
      %8889 = vperm.xlu0 %8888, %v8831
      %v8890 = vpop.permute.xlu0 %8889
      %8893 = vset.pattern.permute.xlu0 0
      %8894 = vperm.xlu0 %8893, %v8832
      %v8895 = vpop.permute.xlu0 %8894
      %8898 = vset.pattern.permute.xlu0 0
      %8899 = vperm.xlu0 %8898, %v8833
      %v8900 = vpop.permute.xlu0 %8899
      %8903 = vset.pattern.permute.xlu0 0
      %8904 = vperm.xlu0 %8903, %v8834
      %v8905 = vpop.permute.xlu0 %8904
      %8908 = vset.pattern.permute.xlu0 0
      %8909 = vperm.xlu0 %8908, %v8835
      %v8910 = vpop.permute.xlu0 %8909
      %8913 = vset.pattern.permute.xlu0 0
      %8914 = vperm.xlu0 %8913, %v8836
      %v8915 = vpop.permute.xlu0 %8914
      %v8933 = vunpack.c.l.b16 %v8805
      %v8934 = vunpack.c.l.b16 %v8806
      %v8935 = vunpack.c.l.b16 %v8807
      %v8936 = vunpack.c.l.b16 %v8808
      %v8937 = vunpack.c.l.b16 %v8809
      %v8938 = vunpack.c.l.b16 %v8810
      %v8939 = vunpack.c.l.b16 %v8811
      %v8940 = vunpack.c.l.b16 %v8812
      %v8941 = vunpack.c.l.b16 %v8813
      %v8942 = vunpack.c.l.b16 %v8814
      %v8943 = vunpack.c.l.b16 %v8815
      %v8944 = vunpack.c.l.b16 %v8816
      %v8945 = vunpack.c.l.b16 %v8817
      %v8946 = vunpack.c.l.b16 %v8818
      %v8947 = vunpack.c.l.b16 %v8819
      %v8948 = vunpack.c.l.b16 %v8820
      %v8949 = vpack.c.b16 %v8934, %v8933
      %v8950 = vpack.c.b16 %v8936, %v8935
      %v8951 = vpack.c.b16 %v8938, %v8937
      %v8952 = vpack.c.b16 %v8940, %v8939
      %v8953 = vpack.c.b16 %v8942, %v8941
      %v8954 = vpack.c.b16 %v8944, %v8943
      %v8955 = vpack.c.b16 %v8946, %v8945
      %v8956 = vpack.c.b16 %v8948, %v8947
      %8965 = vmatprep.subr.bf16.mxu0 %v8774
      %8966 = vmatpush1.bf16.msra.mxu0 %v8773
      %8967 = vmatprep.subr.bf16.mxu0 %v8778
      %8968 = vmatpush1.bf16.msra.mxu0 %v8777
      %8969 = vmatprep.subr.bf16.mxu0 %v8782
      %8970 = vmatpush1.bf16.msra.mxu0 %v8781
      %8971 = vmatprep.subr.bf16.mxu0 %v8786
      %8972 = vmatpush1.bf16.msra.mxu0 %v8785
      %8973 = vmatprep.subr.bf16.mxu0 %v8790
      %8974 = vmatpush1.bf16.msra.mxu0 %v8789
      %8975 = vmatprep.subr.bf16.mxu0 %v8794
      %8976 = vmatpush1.bf16.msra.mxu0 %v8793
      %8977 = vmatprep.subr.bf16.mxu0 %v8798
      %8978 = vmatpush1.bf16.msra.mxu0 %v8797
      %8979 = vmatprep.subr.bf16.mxu0 %v8802
      %8980 = vmatpush1.bf16.msra.mxu0 %v8801
      %8981 = vmatprep.subr.bf16.mxu0 0
      %8982 = vmatpush1.bf16.msra.mxu0 0
      %8983 = vmatprep.subr.bf16.mxu0 0
      %8984 = vmatpush1.bf16.msra.mxu0 0
      %8985 = vmatprep.subr.bf16.mxu0 0
      %8986 = vmatpush1.bf16.msra.mxu0 0
      %8987 = vmatprep.subr.bf16.mxu0 0
      %8988 = vmatpush1.bf16.msra.mxu0 0
      %8989 = vmatprep.subr.bf16.mxu0 0
      %8990 = vmatpush1.bf16.msra.mxu0 0
      %8991 = vmatprep.subr.bf16.mxu0 0
      %8992 = vmatpush1.bf16.msra.mxu0 0
      %8993 = vmatprep.subr.bf16.mxu0 0
      %8994 = vmatpush1.bf16.msra.mxu0 0
      %8995 = vmatprep.subr.bf16.mxu0 0
      %8996 = vmatpush1.bf16.msra.mxu0 0
      %8997 = vmatprep.mubr.bf16.mxu0 0
      %8998 = vmatmul.mubr.bf16.gmra.mrb[0].mxu0 %v8949
      %v8999 = vpop.f32.mrb[0].mxu0
      %v9000 = vadd.f32 %v8840, %v8999
      %v9001 = vpop.f32.mrb[0].mxu0
      %v9002 = vadd.f32 %v8840, %v9001
      %v9003 = vpop.f32.mrb[0].mxu0
      %v9004 = vadd.f32 %v8845, %v9003
      %v9005 = vpop.f32.mrb[0].mxu0
      %v9006 = vadd.f32 %v8845, %v9005
      %9007 = vmatprep.mubr.bf16.mxu0 0
      %9008 = vmatmul.mubr.bf16.gmra.mrb[0].mxu0 %v8950
      %v9009 = vpop.f32.mrb[0].mxu0
      %v9010 = vadd.f32 %v8850, %v9009
      %v9011 = vpop.f32.mrb[0].mxu0
      %v9012 = vadd.f32 %v8850, %v9011
      %v9013 = vpop.f32.mrb[0].mxu0
      %v9014 = vadd.f32 %v8855, %v9013
      %v9015 = vpop.f32.mrb[0].mxu0
      %v9016 = vadd.f32 %v8855, %v9015
      %9017 = vmatprep.mubr.bf16.mxu0 0
      %9018 = vmatmul.mubr.bf16.gmra.mrb[0].mxu0 %v8951
      %v9019 = vpop.f32.mrb[0].mxu0
      %v9020 = vadd.f32 %v8860, %v9019
      %v9021 = vpop.f32.mrb[0].mxu0
      %v9022 = vadd.f32 %v8860, %v9021
      %v9023 = vpop.f32.mrb[0].mxu0
      %v9024 = vadd.f32 %v8865, %v9023
      %v9025 = vpop.f32.mrb[0].mxu0
      %v9026 = vadd.f32 %v8865, %v9025
      %9027 = vmatprep.mubr.bf16.mxu0 0
      %9028 = vmatmul.mubr.bf16.gmra.mrb[0].mxu0 %v8952
      %v9029 = vpop.f32.mrb[0].mxu0
      %v9030 = vadd.f32 %v8870, %v9029
      %v9031 = vpop.f32.mrb[0].mxu0
      %v9032 = vadd.f32 %v8870, %v9031
      %v9033 = vpop.f32.mrb[0].mxu0
      %v9034 = vadd.f32 %v8875, %v9033
      %v9035 = vpop.f32.mrb[0].mxu0
      %v9036 = vadd.f32 %v8875, %v9035
      %9037 = vmatprep.mubr.bf16.mxu0 0
      %9038 = vmatmul.mubr.bf16.gmra.mrb[0].mxu0 %v8953
      %v9039 = vpop.f32.mrb[0].mxu0
      %v9040 = vadd.f32 %v8880, %v9039
      %v9041 = vpop.f32.mrb[0].mxu0
      %v9042 = vadd.f32 %v8880, %v9041
      %v9043 = vpop.f32.mrb[0].mxu0
      %v9044 = vadd.f32 %v8885, %v9043
      %v9045 = vpop.f32.mrb[0].mxu0
      %v9046 = vadd.f32 %v8885, %v9045
      %9047 = vmatprep.mubr.bf16.mxu0 0
      %9048 = vmatmul.mubr.bf16.gmra.mrb[0].mxu0 %v8954
      %v9049 = vpop.f32.mrb[0].mxu0
      %v9050 = vadd.f32 %v8890, %v9049
      %v9051 = vpop.f32.mrb[0].mxu0
      %v9052 = vadd.f32 %v8890, %v9051
      %v9053 = vpop.f32.mrb[0].mxu0
      %v9054 = vadd.f32 %v8895, %v9053
      %v9055 = vpop.f32.mrb[0].mxu0
      %v9056 = vadd.f32 %v8895, %v9055
      %9057 = vmatprep.mubr.bf16.mxu0 0
      %9058 = vmatmul.mubr.bf16.gmra.mrb[0].mxu0 %v8955
      %v9059 = vpop.f32.mrb[0].mxu0
      %v9060 = vadd.f32 %v8900, %v9059
      %v9061 = vpop.f32.mrb[0].mxu0
      %v9062 = vadd.f32 %v8900, %v9061
      %v9063 = vpop.f32.mrb[0].mxu0
      %v9064 = vadd.f32 %v8905, %v9063
      %v9065 = vpop.f32.mrb[0].mxu0
      %v9066 = vadd.f32 %v8905, %v9065
      %9067 = vmatprep.mubr.bf16.mxu0 0
      %9068 = vmatmul.mubr.bf16.gmra.mrb[0].mxu0 %v8956
      %v9069 = vpop.f32.mrb[0].mxu0
      %v9070 = vadd.f32 %v8910, %v9069
      %v9071 = vpop.f32.mrb[0].mxu0
      %v9072 = vadd.f32 %v8910, %v9071
      %v9073 = vpop.f32.mrb[0].mxu0
      %v9074 = vadd.f32 %v8915, %v9073
      %v9075 = vpop.f32.mrb[0].mxu0
      %v9076 = vadd.f32 %v8915, %v9075
      %9077 = vdwg.mxu0
      %9078 = vmatprep.subr.bf16.mxu0 %v8776
      %9079 = vmatpush1.bf16.msra.mxu0 %v8775
      %9080 = vmatprep.subr.bf16.mxu0 %v8780
      %9081 = vmatpush1.bf16.msra.mxu0 %v8779
      %9082 = vmatprep.subr.bf16.mxu0 %v8784
      %9083 = vmatpush1.bf16.msra.mxu0 %v8783
      %9084 = vmatprep.subr.bf16.mxu0 %v8788
      %9085 = vmatpush1.bf16.msra.mxu0 %v8787
      %9086 = vmatprep.subr.bf16.mxu0 %v8792
      %9087 = vmatpush1.bf16.msra.mxu0 %v8791
      %9088 = vmatprep.subr.bf16.mxu0 %v8796
      %9089 = vmatpush1.bf16.msra.mxu0 %v8795
      %9090 = vmatprep.subr.bf16.mxu0 %v8800
      %9091 = vmatpush1.bf16.msra.mxu0 %v8799
      %9092 = vmatprep.subr.bf16.mxu0 %v8804
      %9093 = vmatpush1.bf16.msra.mxu0 %v8803
      %9094 = vmatprep.subr.bf16.mxu0 0
      %9095 = vmatpush1.bf16.msra.mxu0 0
      %9096 = vmatprep.subr.bf16.mxu0 0
      %9097 = vmatpush1.bf16.msra.mxu0 0
      %9098 = vmatprep.subr.bf16.mxu0 0
      %9099 = vmatpush1.bf16.msra.mxu0 0
      %9100 = vmatprep.subr.bf16.mxu0 0
      %9101 = vmatpush1.bf16.msra.mxu0 0
      %9102 = vmatprep.subr.bf16.mxu0 0
      %9103 = vmatpush1.bf16.msra.mxu0 0
      %9104 = vmatprep.subr.bf16.mxu0 0
      %9105 = vmatpush1.bf16.msra.mxu0 0
      %9106 = vmatprep.subr.bf16.mxu0 0
      %9107 = vmatpush1.bf16.msra.mxu0 0
      %9108 = vmatprep.subr.bf16.mxu0 0
      %9109 = vmatpush1.bf16.msra.mxu0 0
      %9110 = vmatprep.mubr.bf16.mxu0 0
      %9111 = vmatmul.mubr.bf16.gmra.mrb[0].mxu0 %v8949
      %v9112 = vpop.f32.mrb[0].mxu0
      %v9113 = vadd.f32 %v8840, %v9112
      %v9114 = vpop.f32.mrb[0].mxu0
      %v9115 = vadd.f32 %v8840, %v9114
      %v9116 = vpop.f32.mrb[0].mxu0
      %v9117 = vadd.f32 %v8845, %v9116
      %v9118 = vpop.f32.mrb[0].mxu0
      %v9119 = vadd.f32 %v8845, %v9118
      %9120 = vmatprep.mubr.bf16.mxu0 0
      %9121 = vmatmul.mubr.bf16.gmra.mrb[0].mxu0 %v8950
      %v9122 = vpop.f32.mrb[0].mxu0
      %v9123 = vadd.f32 %v8850, %v9122
      %v9124 = vpop.f32.mrb[0].mxu0
      %v9125 = vadd.f32 %v8850, %v9124
      %v9126 = vpop.f32.mrb[0].mxu0
      %v9127 = vadd.f32 %v8855, %v9126
      %v9128 = vpop.f32.mrb[0].mxu0
      %v9129 = vadd.f32 %v8855, %v9128
      %9130 = vmatprep.mubr.bf16.mxu0 0
      %9131 = vmatmul.mubr.bf16.gmra.mrb[0].mxu0 %v8951
      %v9132 = vpop.f32.mrb[0].mxu0
      %v9133 = vadd.f32 %v8860, %v9132
      %v9134 = vpop.f32.mrb[0].mxu0
      %v9135 = vadd.f32 %v8860, %v9134
      %v9136 = vpop.f32.mrb[0].mxu0
      %v9137 = vadd.f32 %v8865, %v9136
      %v9138 = vpop.f32.mrb[0].mxu0
      %v9139 = vadd.f32 %v8865, %v9138
      %9140 = vmatprep.mubr.bf16.mxu0 0
      %9141 = vmatmul.mubr.bf16.gmra.mrb[0].mxu0 %v8952
      %v9142 = vpop.f32.mrb[0].mxu0
      %v9143 = vadd.f32 %v8870, %v9142
      %v9144 = vpop.f32.mrb[0].mxu0
      %v9145 = vadd.f32 %v8870, %v9144
      %v9146 = vpop.f32.mrb[0].mxu0
      %v9147 = vadd.f32 %v8875, %v9146
      %v9148 = vpop.f32.mrb[0].mxu0
      %v9149 = vadd.f32 %v8875, %v9148
      %9150 = vmatprep.mubr.bf16.mxu0 0
      %9151 = vmatmul.mubr.bf16.gmra.mrb[0].mxu0 %v8953
      %v9152 = vpop.f32.mrb[0].mxu0
      %v9153 = vadd.f32 %v8880, %v9152
      %v9154 = vpop.f32.mrb[0].mxu0
      %v9155 = vadd.f32 %v8880, %v9154
      %v9156 = vpop.f32.mrb[0].mxu0
      %v9157 = vadd.f32 %v8885, %v9156
      %v9158 = vpop.f32.mrb[0].mxu0
      %v9159 = vadd.f32 %v8885, %v9158
      %9160 = vmatprep.mubr.bf16.mxu0 0
      %9161 = vmatmul.mubr.bf16.gmra.mrb[0].mxu0 %v8954
      %v9162 = vpop.f32.mrb[0].mxu0
      %v9163 = vadd.f32 %v8890, %v9162
      %v9164 = vpop.f32.mrb[0].mxu0
      %v9165 = vadd.f32 %v8890, %v9164
      %v9166 = vpop.f32.mrb[0].mxu0
      %v9167 = vadd.f32 %v8895, %v9166
      %v9168 = vpop.f32.mrb[0].mxu0
      %v9169 = vadd.f32 %v8895, %v9168
      %9170 = vmatprep.mubr.bf16.mxu0 0
      %9171 = vmatmul.mubr.bf16.gmra.mrb[0].mxu0 %v8955
      %v9172 = vpop.f32.mrb[0].mxu0
      %v9173 = vadd.f32 %v8900, %v9172
      %v9174 = vpop.f32.mrb[0].mxu0
      %v9175 = vadd.f32 %v8900, %v9174
      %v9176 = vpop.f32.mrb[0].mxu0
      %v9177 = vadd.f32 %v8905, %v9176
      %v9178 = vpop.f32.mrb[0].mxu0
      %v9179 = vadd.f32 %v8905, %v9178
      %9180 = vmatprep.mubr.bf16.mxu0 0
      %9181 = vmatmul.mubr.bf16.gmra.mrb[0].mxu0 %v8956
      %v9182 = vpop.f32.mrb[0].mxu0
      %v9183 = vadd.f32 %v8910, %v9182
      %v9184 = vpop.f32.mrb[0].mxu0
      %v9185 = vadd.f32 %v8910, %v9184
      %v9186 = vpop.f32.mrb[0].mxu0
      %v9187 = vadd.f32 %v8915, %v9186
      %v9188 = vpop.f32.mrb[0].mxu0
      %v9189 = vadd.f32 %v8915, %v9188
      %9190 = vdwg.mxu0
      %v9191 = vmax.f32 %v9000, 0.0
      %v9192 = vmax.f32 %v9002, 0.0
      %v9193 = vmax.f32 %v9113, 0.0
      %v9194 = vmax.f32 %v9115, 0.0
      %v9195 = vmax.f32 %v9004, 0.0
      %v9196 = vmax.f32 %v9006, 0.0
      %v9197 = vmax.f32 %v9117, 0.0
      %v9198 = vmax.f32 %v9119, 0.0
      %v9199 = vmax.f32 %v9010, 0.0
      %v9200 = vmax.f32 %v9012, 0.0
      %v9201 = vmax.f32 %v9123, 0.0
      %v9202 = vmax.f32 %v9125, 0.0
      %v9203 = vmax.f32 %v9014, 0.0
      %v9204 = vmax.f32 %v9016, 0.0
      %v9205 = vmax.f32 %v9127, 0.0
      %v9206 = vmax.f32 %v9129, 0.0
      %v9207 = vmax.f32 %v9020, 0.0
      %v9208 = vmax.f32 %v9022, 0.0
      %v9209 = vmax.f32 %v9133, 0.0
      %v9210 = vmax.f32 %v9135, 0.0
      %v9211 = vmax.f32 %v9024, 0.0
      %v9212 = vmax.f32 %v9026, 0.0
      %v9213 = vmax.f32 %v9137, 0.0
      %v9214 = vmax.f32 %v9139, 0.0
      %v9215 = vmax.f32 %v9030, 0.0
      %v9216 = vmax.f32 %v9032, 0.0
      %v9217 = vmax.f32 %v9143, 0.0
      %v9218 = vmax.f32 %v9145, 0.0
      %v9219 = vmax.f32 %v9034, 0.0
      %v9220 = vmax.f32 %v9036, 0.0
      %v9221 = vmax.f32 %v9147, 0.0
      %v9222 = vmax.f32 %v9149, 0.0
      %v9223 = vmax.f32 %v9040, 0.0
      %v9224 = vmax.f32 %v9042, 0.0
      %v9225 = vmax.f32 %v9153, 0.0
      %v9226 = vmax.f32 %v9155, 0.0
      %v9227 = vmax.f32 %v9044, 0.0
      %v9228 = vmax.f32 %v9046, 0.0
      %v9229 = vmax.f32 %v9157, 0.0
      %v9230 = vmax.f32 %v9159, 0.0
      %v9231 = vmax.f32 %v9050, 0.0
      %v9232 = vmax.f32 %v9052, 0.0
      %v9233 = vmax.f32 %v9163, 0.0
      %v9234 = vmax.f32 %v9165, 0.0
      %v9235 = vmax.f32 %v9054, 0.0
      %v9236 = vmax.f32 %v9056, 0.0
      %v9237 = vmax.f32 %v9167, 0.0
      %v9238 = vmax.f32 %v9169, 0.0
      %v9239 = vmax.f32 %v9060, 0.0
      %v9240 = vmax.f32 %v9062, 0.0
      %v9241 = vmax.f32 %v9173, 0.0
      %v9242 = vmax.f32 %v9175, 0.0
      %v9243 = vmax.f32 %v9064, 0.0
      %v9244 = vmax.f32 %v9066, 0.0
      %v9245 = vmax.f32 %v9177, 0.0
      %v9246 = vmax.f32 %v9179, 0.0
      %v9247 = vmax.f32 %v9070, 0.0
      %v9248 = vmax.f32 %v9072, 0.0
      %v9249 = vmax.f32 %v9183, 0.0
      %v9250 = vmax.f32 %v9185, 0.0
      %v9251 = vmax.f32 %v9074, 0.0
      %v9252 = vmax.f32 %v9076, 0.0
      %v9253 = vmax.f32 %v9187, 0.0
      %v9254 = vmax.f32 %v9189, 0.0
      %v9255 = vpack.c.bf16 %v9195, %v9191
      %v9256 = vpack.c.bf16 %v9196, %v9192
      %v9257 = vpack.c.bf16 %v9197, %v9193
      %v9258 = vpack.c.bf16 %v9198, %v9194
      %v9259 = vpack.c.bf16 %v9203, %v9199
      %v9260 = vpack.c.bf16 %v9204, %v9200
      %v9261 = vpack.c.bf16 %v9205, %v9201
      %v9262 = vpack.c.bf16 %v9206, %v9202
      %v9263 = vpack.c.bf16 %v9211, %v9207
      %v9264 = vpack.c.bf16 %v9212, %v9208
      %v9265 = vpack.c.bf16 %v9213, %v9209
      %v9266 = vpack.c.bf16 %v9214, %v9210
      %v9267 = vpack.c.bf16 %v9219, %v9215
      %v9268 = vpack.c.bf16 %v9220, %v9216
      %v9269 = vpack.c.bf16 %v9221, %v9217
      %v9270 = vpack.c.bf16 %v9222, %v9218
      %v9271 = vpack.c.bf16 %v9227, %v9223
      %v9272 = vpack.c.bf16 %v9228, %v9224
      %v9273 = vpack.c.bf16 %v9229, %v9225
      %v9274 = vpack.c.bf16 %v9230, %v9226
      %v9275 = vpack.c.bf16 %v9235, %v9231
      %v9276 = vpack.c.bf16 %v9236, %v9232
      %v9277 = vpack.c.bf16 %v9237, %v9233
      %v9278 = vpack.c.bf16 %v9238, %v9234
      %v9279 = vpack.c.bf16 %v9243, %v9239
      %v9280 = vpack.c.bf16 %v9244, %v9240
      %v9281 = vpack.c.bf16 %v9245, %v9241
      %v9282 = vpack.c.bf16 %v9246, %v9242
      %v9283 = vpack.c.bf16 %v9251, %v9247
      %v9284 = vpack.c.bf16 %v9252, %v9248
      %v9285 = vpack.c.bf16 %v9253, %v9249
      %v9286 = vpack.c.bf16 %v9254, %v9250
      %v9287 = vld [vmem:[%s11] sm:$0xf]
      %v9288 = vld [vmem:[%s12] sm:$0xff]
      %9290 = vset.pattern.permute.xlu0 0
      %9291 = vperm.xlu0 %9290, %v9288
      %v9292 = vpop.permute.xlu0 %9291
      %9294 = vmatprep.subr.bf16.mxu0 %v9256
      %9295 = vmatpush1.bf16.msra.mxu0 %v9255
      %9296 = vmatprep.subr.bf16.mxu0 %v9260
      %9297 = vmatpush1.bf16.msra.mxu0 %v9259
      %9298 = vmatprep.subr.bf16.mxu0 %v9264
      %9299 = vmatpush1.bf16.msra.mxu0 %v9263
      %9300 = vmatprep.subr.bf16.mxu0 %v9268
      %9301 = vmatpush1.bf16.msra.mxu0 %v9267
      %9302 = vmatprep.subr.bf16.mxu0 %v9272
      %9303 = vmatpush1.bf16.msra.mxu0 %v9271
      %9304 = vmatprep.subr.bf16.mxu0 %v9276
      %9305 = vmatpush1.bf16.msra.mxu0 %v9275
      %9306 = vmatprep.subr.bf16.mxu0 %v9280
      %9307 = vmatpush1.bf16.msra.mxu0 %v9279
      %9308 = vmatprep.subr.bf16.mxu0 %v9284
      %9309 = vmatpush1.bf16.msra.mxu0 %v9283
      %9310 = vmatprep.subr.bf16.mxu0 0
      %9311 = vmatpush1.bf16.msra.mxu0 0
      %9312 = vmatprep.subr.bf16.mxu0 0
      %9313 = vmatpush1.bf16.msra.mxu0 0
      %9314 = vmatprep.subr.bf16.mxu0 0
      %9315 = vmatpush1.bf16.msra.mxu0 0
      %9316 = vmatprep.subr.bf16.mxu0 0
      %9317 = vmatpush1.bf16.msra.mxu0 0
      %9318 = vmatprep.subr.bf16.mxu0 0
      %9319 = vmatpush1.bf16.msra.mxu0 0
      %9320 = vmatprep.subr.bf16.mxu0 0
      %9321 = vmatpush1.bf16.msra.mxu0 0
      %9322 = vmatprep.subr.bf16.mxu0 0
      %9323 = vmatpush1.bf16.msra.mxu0 0
      %9324 = vmatprep.subr.bf16.mxu0 0
      %9325 = vmatpush1.bf16.msra.mxu0 0
      %9326 = vmatprep.mubr.bf16.mxu0 0
      %9327 = vmatmul.mubr.bf16.gmra.mrb[0].mxu0 %v9287
      %v9328 = vpop.f32.mrb[0].mxu0
      %v9329 = vadd.f32 %v9292, %v9328
      %v9330 = vpop.f32.mrb[0].mxu0
      %v9331 = vadd.f32 %v9292, %v9330
      %v9332 = vpop.f32.mrb[0].mxu0
      %v9333 = vpop.f32.mrb[0].mxu0
      %9334 = vdwg.mxu0
      %9335 = vmatprep.subr.bf16.mxu0 %v9258
      %9336 = vmatpush1.bf16.msra.mxu0 %v9257
      %9337 = vmatprep.subr.bf16.mxu0 %v9262
      %9338 = vmatpush1.bf16.msra.mxu0 %v9261
      %9339 = vmatprep.subr.bf16.mxu0 %v9266
      %9340 = vmatpush1.bf16.msra.mxu0 %v9265
      %9341 = vmatprep.subr.bf16.mxu0 %v9270
      %9342 = vmatpush1.bf16.msra.mxu0 %v9269
      %9343 = vmatprep.subr.bf16.mxu0 %v9274
      %9344 = vmatpush1.bf16.msra.mxu0 %v9273
      %9345 = vmatprep.subr.bf16.mxu0 %v9278
      %9346 = vmatpush1.bf16.msra.mxu0 %v9277
      %9347 = vmatprep.subr.bf16.mxu0 %v9282
      %9348 = vmatpush1.bf16.msra.mxu0 %v9281
      %9349 = vmatprep.subr.bf16.mxu0 %v9286
      %9350 = vmatpush1.bf16.msra.mxu0 %v9285
      %9351 = vmatprep.subr.bf16.mxu0 0
      %9352 = vmatpush1.bf16.msra.mxu0 0
      %9353 = vmatprep.subr.bf16.mxu0 0
      %9354 = vmatpush1.bf16.msra.mxu0 0
      %9355 = vmatprep.subr.bf16.mxu0 0
      %9356 = vmatpush1.bf16.msra.mxu0 0
      %9357 = vmatprep.subr.bf16.mxu0 0
      %9358 = vmatpush1.bf16.msra.mxu0 0
      %9359 = vmatprep.subr.bf16.mxu0 0
      %9360 = vmatpush1.bf16.msra.mxu0 0
      %9361 = vmatprep.subr.bf16.mxu0 0
      %9362 = vmatpush1.bf16.msra.mxu0 0
      %9363 = vmatprep.subr.bf16.mxu0 0
      %9364 = vmatpush1.bf16.msra.mxu0 0
      %9365 = vmatprep.subr.bf16.mxu0 0
      %9366 = vmatpush1.bf16.msra.mxu0 0
      %9367 = vmatprep.mubr.bf16.mxu0 0
      %9368 = vmatmul.mubr.bf16.gmra.mrb[0].mxu0 %v9287
      %v9369 = vpop.f32.mrb[0].mxu0
      %v9370 = vadd.f32 %v9292, %v9369
      %v9371 = vpop.f32.mrb[0].mxu0
      %v9372 = vadd.f32 %v9292, %v9371
      %v9373 = vpop.f32.mrb[0].mxu0
      %v9374 = vpop.f32.mrb[0].mxu0
      %9375 = vdwg.mxu0
      %9376 = vst [vmem:[%s442] sm:$0xff] %v9329
      %9377 = vst [vmem:[%s442 + $0x8] sm:$0xff] %v9331
      %9378 = vst [vmem:[%s442 + $0x10] sm:$0xff] %v9370
      %9379 = vst [vmem:[%s442 + $0x18] sm:$0xff] %v9372
      %s9380 = smul.u32 4, %s24
      %p9381 = scmp.lt.s32.totalorder %s9380, 15
      %s9382 = scalar_select %p9381, %s9380, 15
      %s9383 = smul.addr %s9382, 8
      %s9384 = scalar_lea.vmem %s13, %s9383
      // Predicated region
      $region73: #{simple_nerf_forward.1} parent=71 // pred_check
        %p9385 = pneg %p320
      $region74: #{simple_nerf_forward.1} parent=71 // pred_check_branch
        %9387 = sbr.rel (%p9385) target = $region76
      $region75: #{simple_nerf_forward.1} parent=71 // pred_region
        %s9388 = smul.u32 4, %s24
      $region76: #{simple_nerf_forward.1} parent=71 // pred_fallthru
        _
    $region72: #{simple_nerf_forward.1} parent=5 // pred_fallthru
      _
    %p9389 = scmp.le.s32.totalorder 2, %s19
    // Predicated region
    $region77: #{simple_nerf_forward.1} parent=5 // pred_check
      %p9390 = pneg %p9389
    $region78: #{simple_nerf_forward.1} parent=5 // pred_check_branch
      %9392 = sbr.rel (%p9390) target = $region80
    $region79: #{simple_nerf_forward.1} parent=5 // pred_region
      %s9393 = ssub.s32 %s19, 2
      // Predicated region
      $region81: #{simple_nerf_forward.1} parent=79 // pred_check
        %p9394 = pneg %p326
      $region82: #{simple_nerf_forward.1} parent=79 // pred_check_branch
        %9396 = sbr.rel (%p9394) target = $region84
      $region83: #{simple_nerf_forward.1} parent=79 // pred_region
        %s9397 = smul.u32 4, %s25
        %p9398 = scmp.lt.s32.totalorder %s9397, 15
        %s9399 = scalar_select %p9398, %s9397, 15
        %s9400 = smul.addr %s9399, 8
        %s9401 = scalar_lea.vmem %s13, %s9400
      $region84: #{simple_nerf_forward.1} parent=79 // pred_fallthru
        _
    $region80: #{simple_nerf_forward.1} parent=5 // pred_fallthru
      _
  $region6: #{simple_nerf_forward.1} parent=0 // loop_footer
    %s23 = sadd.s32 1, %s19
  $region7: #{simple_nerf_forward.1} parent=0 // loop_footer_branch
    %18 = sbr.rel target = $region3
  $region8: #{simple_nerf_forward.1} parent=0 // loop_exit
    _

</llo_original>
